<compile_context>
chip_gen: v5e
topology: v5e:2x2
jax: 0.10.0
libtpu: 0.0.40
codegen_flags: <defaults>
</compile_context>

<pallas_src>
import functools

import jax
import jax.numpy as jnp
import numpy as np
from jax.experimental import pallas as pl
from jax.experimental.pallas import tpu as pltpu


# -----------------------------------------------------------------------------
# Fused conv(5x5, pad 2) + bias + ReLU + maxpool(3, stride 2) kernel.
# -----------------------------------------------------------------------------
def _fused_conv_relu_pool_kernel(p_ref, w_ref, b_ref, o_ref, *, B, Hc, Wp, Cout):
    # p_ref: (3, B, Hc*Wp, K) bf16 im2col patches; axis 0 indexes the three
    #        conv columns {2*wo, 2*wo+1, 2*wo+2} of each pooling window.
    # w_ref: (K, Cout) bf16 folded conv weights (tap order kh, kw, cin).
    # b_ref: (1, Cout) f32 bias.
    # o_ref: (B, Hp, Wp, Cout) f32 pooled output; row Hp-1 / col Wp-1 are
    #        ragged-edge garbage the caller discards.
    Hp = Hc // 2
    K = p_ref.shape[-1]
    S = Hc * Wp                                               # rows per (k, image)

    # Collapse leading dims (S % 8 == 0 -> layout-free) and run ONE MXU matmul.
    p = p_ref[...].reshape(3 * B * S, K)
    y = jnp.dot(p, w_ref[...], preferred_element_type=jnp.float32)
    y = jnp.maximum(y + b_ref[...], 0.0)                      # bias + ReLU (f32 VPU)

    # ---- maxpool along W: the 3 window columns live on the leading "k" axis.
    y3 = y.reshape(3, B * S, Cout)                            # B*S % 8 == 0
    wmax = jnp.maximum(jnp.maximum(y3[0], y3[1]), y3[2])      # (B*S, C), rows=(b,h,wo)

    # ---- maxpool along H: even/odd conv rows via a leading-dim split.
    z = wmax.reshape(B * Hp, 2, Wp, Cout)                     # Wp % 8 == 0
    ze = z[:, 0]                                              # conv rows 0,2,...,Hc-2
    zo = z[:, 1]                                              # conv rows 1,3,...,Hc-1
    ze_next = jnp.concatenate([ze[1:], ze[-1:]], axis=0)      # conv rows 2,4,... (shifted)
    pooled = jnp.maximum(jnp.maximum(ze, zo), ze_next)        # (B*Hp, Wp, C)

    o_ref[...] = pooled.reshape(B, Hp, Wp, Cout)


def fused_conv_relu_pool(patches, wmat, bias, *, Hc, Wp, block_n):
    # patches: (3, N, Hc*Wp, K) bf16; wmat: (K, Cout) bf16; bias: (1, Cout) f32.
    _, N, S, K = patches.shape
    Cout = wmat.shape[1]
    Hp = Hc // 2
    kern = functools.partial(_fused_conv_relu_pool_kernel,
                             B=block_n, Hc=Hc, Wp=Wp, Cout=Cout)
    return pl.pallas_call(
        kern,
        out_shape=jax.ShapeDtypeStruct((N, Hp, Wp, Cout), jnp.float32),
        grid=(N // block_n,),
        in_specs=[
            pl.BlockSpec((3, block_n, S, K), lambda n: (0, n, 0, 0)),
            pl.BlockSpec((K, Cout), lambda n: (0, 0)),      # weights stay resident
            pl.BlockSpec((1, Cout), lambda n: (0, 0)),
        ],
        out_specs=pl.BlockSpec((block_n, Hp, Wp, Cout), lambda n: (n, 0, 0, 0)),
        compiler_params=pltpu.CompilerParams(
            dimension_semantics=("parallel",),
            vmem_limit_bytes=32 * 1024 * 1024),
    )(patches, wmat, bias)


def _pool_ready_patches(x_valid, *, Hc, Wp, pad):
    """im2col for a 5x5 / pad-2 conv evaluated at rows h in [0, Hc) and columns
    w = 2*wo + k (wo in [0, Wp), k in {0,1,2}), i.e. exactly the positions the
    3x3/stride-2 maxpool needs.  Returns bf16 patches (3, N, Hc*Wp, 25*Cin);
    tap order (kh, kw, cin) matches the weight matrix from prepare_params."""
    N, _, _, Cin = x_valid.shape
    xp = jnp.pad(x_valid, ((0, 0), pad[0], pad[1], (0, 0))).astype(jnp.bfloat16)
    per_k = []
    for k in range(3):
        taps = []
        for kh in range(5):
            for kw in range(5):
                c0 = k + kw
                taps.append(xp[:, kh:kh + Hc, c0:c0 + 2 * Wp - 1:2, :])  # (N,Hc,Wp,Cin)
        pk = jnp.concatenate(taps, axis=-1)                              # (N,Hc,Wp,25*Cin)
        per_k.append(pk.reshape(N, Hc * Wp, 25 * Cin))
    return jnp.stack(per_k, axis=0)                                      # (3,N,Hc*Wp,25*Cin)


# -----------------------------------------------------------------------------
# Fused linear1 -> dropout(identity, eval) -> linear2 head, tiled over N.
# -----------------------------------------------------------------------------
def _mlp_kernel(x_ref, w1_ref, b1_ref, w2_ref, b2_ref, o_ref):
    h = jnp.dot(x_ref[...], w1_ref[...],
                preferred_element_type=jnp.float32) + b1_ref[...]
    # TODO(synk): nn.Dropout(0.5) is identity in eval mode; train-mode random
    # masking is not implemented here.
    o_ref[...] = (jnp.dot(h.astype(jnp.bfloat16), w2_ref[...],
                          preferred_element_type=jnp.float32)
                  + b2_ref[...]).astype(o_ref.dtype)


def mlp_head(x, w1, b1, w2, b2):
    N, F = x.shape
    Hh = w1.shape[1]
    O = w2.shape[1]
    tm = 128 if N >= 128 else max(8, -(-N // 8) * 8)
    Np = -(-N // tm) * tm
    if Np != N:
        x = jnp.pad(x, ((0, Np - N), (0, 0)))
    out = pl.pallas_call(
        _mlp_kernel,
        out_shape=jax.ShapeDtypeStruct((Np, O), jnp.float32),
        grid=(Np // tm,),
        in_specs=[
            pl.BlockSpec((tm, F), lambda i: (i, 0)),
            pl.BlockSpec((F, Hh), lambda i: (0, 0)),
            pl.BlockSpec((1, Hh), lambda i: (0, 0)),
            pl.BlockSpec((Hh, O), lambda i: (0, 0)),
            pl.BlockSpec((1, O), lambda i: (0, 0)),
        ],
        out_specs=pl.BlockSpec((tm, O), lambda i: (i, 0)),
        compiler_params=pltpu.CompilerParams(
            dimension_semantics=("parallel",),
            vmem_limit_bytes=32 * 1024 * 1024),
    )(x, w1, b1, w2, b2)
    return out[:N]


# -----------------------------------------------------------------------------
# Parameters (deterministic, PyTorch-shaped), one-time prep, and forward pass.
# -----------------------------------------------------------------------------
def init_params(key, num_class=50):
    ks = jax.random.split(key, 8)
    s = 0.05
    return dict(
        conv1_w=jax.random.normal(ks[0], (64, 3, 5, 5), jnp.float32) * s,
        conv1_b=jax.random.normal(ks[1], (64,), jnp.float32) * s,
        conv2_w=jax.random.normal(ks[2], (64, 64, 5, 5), jnp.float32) * s,
        conv2_b=jax.random.normal(ks[3], (64,), jnp.float32) * s,
        lin1_w=jax.random.normal(ks[4], (128, 7 * 7 * 64), jnp.float32) * s,
        lin1_b=jax.random.normal(ks[5], (128,), jnp.float32) * s,
        lin2_w=jax.random.normal(ks[6], (num_class, 128), jnp.float32) * s,
        lin2_b=jax.random.normal(ks[7], (num_class,), jnp.float32) * s,
    )


def prepare_params(params):
    """One-time conversion of PyTorch-layout weights into kernel-ready form."""
    def conv_wmat(w_oihw):
        cout, cin = w_oihw.shape[0], w_oihw.shape[1]
        # (Cout, Cin, 5, 5) -> (kh, kw, cin, Cout) -> (25*Cin, Cout)
        return (jnp.transpose(w_oihw, (2, 3, 1, 0))
                .reshape(25 * cin, cout).astype(jnp.bfloat16))

    # torch.flatten on NCHW yields (c, h, w)-ordered features; our activations
    # flatten as (h, w, c).  Permute linear1's columns once so the forward pass
    # needs no runtime transpose.
    nout = params["lin1_w"].shape[0]
    w1 = params["lin1_w"].reshape(nout, 64, 7, 7)           # (out, c, h, w)
    w1 = jnp.transpose(w1, (0, 2, 3, 1)).reshape(nout, 7 * 7 * 64)

    return dict(
        conv1_w=conv_wmat(params["conv1_w"]),
        conv1_b=params["conv1_b"].astype(jnp.float32).reshape(1, -1),
        conv2_w=conv_wmat(params["conv2_w"]),
        conv2_b=params["conv2_b"].astype(jnp.float32).reshape(1, -1),
        lin1_w=jnp.transpose(w1).astype(jnp.bfloat16),      # (3136, 128), HWC rows
        lin1_b=params["lin1_b"].astype(jnp.float32).reshape(1, -1),
        lin2_w=jnp.transpose(params["lin2_w"]).astype(jnp.bfloat16),  # (128, num_class)
        lin2_b=params["lin2_b"].astype(jnp.float32).reshape(1, -1),
    )


def _choose_block(n):
    for b in (8, 4, 2, 1):
        if n % b == 0:
            return b
    return 1


@jax.jit
def small_forward(pp, x_nchw):
    N = x_nchw.shape[0]
    bn = _choose_block(N)
    x = jnp.transpose(x_nchw, (0, 2, 3, 1)).astype(jnp.float32)        # NCHW -> NHWC

    # Layer 1: conv(3->64, 5x5, pad 2) + ReLU + maxpool(3, 2), fused.
    p1 = _pool_ready_patches(x, Hc=32, Wp=16, pad=((2, 2), (2, 3)))    # (3, N, 512, 75)
    a1 = fused_conv_relu_pool(p1, pp["conv1_w"], pp["conv1_b"],
                              Hc=32, Wp=16, block_n=bn)                # (N, 16, 16, 64)

    # Layer 2 (valid pooled region of layer 1 is [:, :15, :15, :]).
    p2 = _pool_ready_patches(a1[:, :15, :15, :], Hc=16, Wp=8,
                             pad=((2, 3), (2, 4)))                     # (3, N, 128, 1600)
    a2 = fused_conv_relu_pool(p2, pp["conv2_w"], pp["conv2_b"],
                              Hc=16, Wp=8, block_n=bn)                 # (N, 8, 8, 64)

    # Flatten the valid 7x7x64 region in (h, w, c) order; linear1's columns were
    # pre-permuted to match, so no runtime NCHW transpose is needed.
    xf = a2[:, :7, :7, :].reshape(N, 7 * 7 * 64).astype(jnp.bfloat16)
    return mlp_head(xf, pp["lin1_w"], pp["lin1_b"],
                    pp["lin2_w"], pp["lin2_b"])                        # (N, num_class)


# Pure-JAX reference used only to validate the Pallas pipeline.
def reference_forward(params, x_nchw):
    hi = jax.lax.Precision.HIGHEST
    x = jnp.transpose(x_nchw, (0, 2, 3, 1)).astype(jnp.float32)

    def conv(x, w_oihw, b):
        w = jnp.transpose(w_oihw, (2, 3, 1, 0))  # HWIO
        y = jax.lax.conv_general_dilated(
            x, w, (1, 1), ((2, 2), (2, 2)),
            dimension_numbers=("NHWC", "HWIO", "NHWC"), precision=hi)
        return jax.nn.relu(y + b)

    def pool(x):
        return jax.lax.reduce_window(x, -jnp.inf, jax.lax.max,
                                     (1, 3, 3, 1), (1, 2, 2, 1), "VALID")

    x = pool(conv(x, params["conv1_w"], params["conv1_b"]))
    x = pool(conv(x, params["conv2_w"], params["conv2_b"]))
    xf = jnp.transpose(x, (0, 3, 1, 2)).reshape(x.shape[0], -1)
    h = jnp.dot(xf, params["lin1_w"].T, precision=hi) + params["lin1_b"]
    return jnp.dot(h, params["lin2_w"].T, precision=hi) + params["lin2_b"]


if __name__ == "__main__":
    key = jax.random.PRNGKey(0)
    kp, kx = jax.random.split(key)
    params = init_params(kp, num_class=50)
    prepped = prepare_params(params)
    # The module structure (linear1 expects 7*7*64 features) implies 32x32 RGB input.
    x = jax.random.normal(kx, (2, 3, 32, 32), jnp.float32)  # NCHW, like PyTorch

    out = jax.block_until_ready(small_forward(prepped, x))
    assert out.shape == (2, 50), out.shape

    ref = reference_forward(params, x)
    # Loosened tolerance accounts for bf16 MXU operands (f32 accumulation).
    np.testing.assert_allclose(np.asarray(out), np.asarray(ref),
                               rtol=5e-2, atol=1e-1)

    print("KERNEL_OK")
</pallas_src>

<mosaic_0001>
module attributes {stable_mosaic.version = 11 : i64} {
  func.func @_fused_conv_relu_pool_kernel(%arg0: i32, %arg1: memref<3x2x512x75xbf16, #tpu.memory_space<vmem>>, %arg2: memref<75x64xbf16, #tpu.memory_space<vmem>>, %arg3: memref<1x64xf32, #tpu.memory_space<vmem>>, %arg4: memref<2x16x16x64xf32, #tpu.memory_space<vmem>>) attributes {dimension_semantics = [#tpu.dimension_semantics<parallel>], iteration_bounds = array<i64: 1>, scalar_prefetch = 0 : i64, scratch_operands = 0 : i64, tpu.core_type = #tpu.core_type<tc>, window_params = [{transform_indices = @transform_0, window_bounds = array<i64: 3, 2, 512, 75>}, {pipeline_mode = #tpu.pipeline_mode<synchronous>, transform_indices = @transform_1, window_bounds = array<i64: 75, 64>}, {pipeline_mode = #tpu.pipeline_mode<synchronous>, transform_indices = @transform_2, window_bounds = array<i64: 1, 64>}, {transform_indices = @transform_3, window_bounds = array<i64: 2, 16, 16, 64>}]} {
    %c0 = arith.constant 0 : index
    %c0_0 = arith.constant 0 : index
    %c0_1 = arith.constant 0 : index
    %c0_2 = arith.constant 0 : index
    %0 = vector.load %arg1[%c0, %c0_0, %c0_1, %c0_2] : memref<3x2x512x75xbf16, #tpu.memory_space<vmem>>, vector<3x2x512x75xbf16>
    %1 = vector.shape_cast %0 : vector<3x2x512x75xbf16> to vector<3072x75xbf16>
    %c0_3 = arith.constant 0 : index
    %c0_4 = arith.constant 0 : index
    %2 = vector.load %arg2[%c0_3, %c0_4] : memref<75x64xbf16, #tpu.memory_space<vmem>>, vector<75x64xbf16>
    %cst = arith.constant dense<0.000000e+00> : vector<3072x64xf32>
    %3 = tpu.matmul %1, %2, %cst {dimension_numbers = #tpu.dot_dimension_numbers<[1], [0], [0], [1], [0, 0, 1, 1], [], []>} : vector<3072x75xbf16>, vector<75x64xbf16>, vector<3072x64xf32> -> vector<3072x64xf32>
    %c0_5 = arith.constant 0 : index
    %c0_6 = arith.constant 0 : index
    %4 = vector.load %arg3[%c0_5, %c0_6] : memref<1x64xf32, #tpu.memory_space<vmem>>, vector<1x64xf32>
    %5 = vector.broadcast %4 : vector<1x64xf32> to vector<3072x64xf32>
    %6 = arith.addf %3, %5 : vector<3072x64xf32>
    %cst_7 = arith.constant 0.000000e+00 : f32
    %7 = vector.broadcast %cst_7 : f32 to vector<3072x64xf32>
    %8 = arith.maximumf %6, %7 : vector<3072x64xf32>
    %9 = vector.shape_cast %8 : vector<3072x64xf32> to vector<3x1024x64xf32>
    %10 = vector.extract_strided_slice %9 {offsets = [0, 0, 0], sizes = [1, 1024, 64], strides = [1, 1, 1]} : vector<3x1024x64xf32> to vector<1x1024x64xf32>
    %11 = vector.shape_cast %10 : vector<1x1024x64xf32> to vector<1024x64xf32>
    %12 = vector.extract_strided_slice %9 {offsets = [1, 0, 0], sizes = [1, 1024, 64], strides = [1, 1, 1]} : vector<3x1024x64xf32> to vector<1x1024x64xf32>
    %13 = vector.shape_cast %12 : vector<1x1024x64xf32> to vector<1024x64xf32>
    %14 = arith.maximumf %11, %13 : vector<1024x64xf32>
    %15 = vector.extract_strided_slice %9 {offsets = [2, 0, 0], sizes = [1, 1024, 64], strides = [1, 1, 1]} : vector<3x1024x64xf32> to vector<1x1024x64xf32>
    %16 = vector.shape_cast %15 : vector<1x1024x64xf32> to vector<1024x64xf32>
    %17 = arith.maximumf %14, %16 : vector<1024x64xf32>
    %18 = vector.shape_cast %17 : vector<1024x64xf32> to vector<32x2x16x64xf32>
    %19 = vector.extract_strided_slice %18 {offsets = [0, 0, 0, 0], sizes = [32, 1, 16, 64], strides = [1, 1, 1, 1]} : vector<32x2x16x64xf32> to vector<32x1x16x64xf32>
    %20 = vector.shape_cast %19 : vector<32x1x16x64xf32> to vector<32x16x64xf32>
    %21 = vector.extract_strided_slice %18 {offsets = [0, 1, 0, 0], sizes = [32, 1, 16, 64], strides = [1, 1, 1, 1]} : vector<32x2x16x64xf32> to vector<32x1x16x64xf32>
    %22 = vector.shape_cast %21 : vector<32x1x16x64xf32> to vector<32x16x64xf32>
    %23 = vector.extract_strided_slice %20 {offsets = [1, 0, 0], sizes = [31, 16, 64], strides = [1, 1, 1]} : vector<32x16x64xf32> to vector<31x16x64xf32>
    %24 = vector.extract_strided_slice %20 {offsets = [31, 0, 0], sizes = [1, 16, 64], strides = [1, 1, 1]} : vector<32x16x64xf32> to vector<1x16x64xf32>
    %25 = tpu.concatenate %23, %24 in 0 : vector<31x16x64xf32>, vector<1x16x64xf32> -> vector<32x16x64xf32>
    %26 = arith.maximumf %20, %22 : vector<32x16x64xf32>
    %27 = arith.maximumf %26, %25 : vector<32x16x64xf32>
    %28 = vector.shape_cast %27 : vector<32x16x64xf32> to vector<2x16x16x64xf32>
    %c0_8 = arith.constant 0 : index
    %c0_9 = arith.constant 0 : index
    %c0_10 = arith.constant 0 : index
    %c0_11 = arith.constant 0 : index
    %29 = vector.load %arg4[%c0_8, %c0_9, %c0_10, %c0_11] : memref<2x16x16x64xf32, #tpu.memory_space<vmem>>, vector<2x16x16x64xf32>
    tpu.vector_store %arg4[%c0_8, %c0_9, %c0_10, %c0_11], %28 {strides = array<i32>} : memref<2x16x16x64xf32, #tpu.memory_space<vmem>>, vector<2x16x16x64xf32>,
    return
  }
  func.func @transform_0(%arg0: i32) -> (i32, i32, i32, i32) {
    %c0_i32 = arith.constant 0 : i32
    %c0_i32_0 = arith.constant 0 : i32
    %c0_i32_1 = arith.constant 0 : i32
    %c0_i32_2 = arith.constant 0 : i32
    return %c0_i32, %arg0, %c0_i32_0, %c0_i32_1 : i32, i32, i32, i32
  }
  func.func @transform_1(%arg0: i32) -> (i32, i32) {
    %c0_i32 = arith.constant 0 : i32
    %c0_i32_0 = arith.constant 0 : i32
    %c0_i32_1 = arith.constant 0 : i32
    return %c0_i32, %c0_i32_0 : i32, i32
  }
  func.func @transform_2(%arg0: i32) -> (i32, i32) {
    %c0_i32 = arith.constant 0 : i32
    %c0_i32_0 = arith.constant 0 : i32
    %c0_i32_1 = arith.constant 0 : i32
    return %c0_i32, %c0_i32_0 : i32, i32
  }
  func.func @transform_3(%arg0: i32) -> (i32, i32, i32, i32) {
    %c0_i32 = arith.constant 0 : i32
    %c0_i32_0 = arith.constant 0 : i32
    %c0_i32_1 = arith.constant 0 : i32
    %c0_i32_2 = arith.constant 0 : i32
    return %arg0, %c0_i32, %c0_i32_0, %c0_i32_1 : i32, i32, i32, i32
  }
}

module attributes {stable_mosaic.version = 11 : i64} {
  func.func @_fused_conv_relu_pool_kernel(%arg0: i32, %arg1: memref<3x2x128x1600xbf16, #tpu.memory_space<vmem>>, %arg2: memref<1600x64xbf16, #tpu.memory_space<vmem>>, %arg3: memref<1x64xf32, #tpu.memory_space<vmem>>, %arg4: memref<2x8x8x64xf32, #tpu.memory_space<vmem>>) attributes {dimension_semantics = [#tpu.dimension_semantics<parallel>], iteration_bounds = array<i64: 1>, scalar_prefetch = 0 : i64, scratch_operands = 0 : i64, tpu.core_type = #tpu.core_type<tc>, window_params = [{transform_indices = @transform_0, window_bounds = array<i64: 3, 2, 128, 1600>}, {pipeline_mode = #tpu.pipeline_mode<synchronous>, transform_indices = @transform_1, window_bounds = array<i64: 1600, 64>}, {pipeline_mode = #tpu.pipeline_mode<synchronous>, transform_indices = @transform_2, window_bounds = array<i64: 1, 64>}, {transform_indices = @transform_3, window_bounds = array<i64: 2, 8, 8, 64>}]} {
    %c0 = arith.constant 0 : index
    %c0_0 = arith.constant 0 : index
    %c0_1 = arith.constant 0 : index
    %c0_2 = arith.constant 0 : index
    %0 = vector.load %arg1[%c0, %c0_0, %c0_1, %c0_2] : memref<3x2x128x1600xbf16, #tpu.memory_space<vmem>>, vector<3x2x128x1600xbf16>
    %1 = vector.shape_cast %0 : vector<3x2x128x1600xbf16> to vector<768x1600xbf16>
    %c0_3 = arith.constant 0 : index
    %c0_4 = arith.constant 0 : index
    %2 = vector.load %arg2[%c0_3, %c0_4] : memref<1600x64xbf16, #tpu.memory_space<vmem>>, vector<1600x64xbf16>
    %cst = arith.constant dense<0.000000e+00> : vector<768x64xf32>
    %3 = tpu.matmul %1, %2, %cst {dimension_numbers = #tpu.dot_dimension_numbers<[1], [0], [0], [1], [0, 0, 1, 1], [], []>} : vector<768x1600xbf16>, vector<1600x64xbf16>, vector<768x64xf32> -> vector<768x64xf32>
    %c0_5 = arith.constant 0 : index
    %c0_6 = arith.constant 0 : index
    %4 = vector.load %arg3[%c0_5, %c0_6] : memref<1x64xf32, #tpu.memory_space<vmem>>, vector<1x64xf32>
    %5 = vector.broadcast %4 : vector<1x64xf32> to vector<768x64xf32>
    %6 = arith.addf %3, %5 : vector<768x64xf32>
    %cst_7 = arith.constant 0.000000e+00 : f32
    %7 = vector.broadcast %cst_7 : f32 to vector<768x64xf32>
    %8 = arith.maximumf %6, %7 : vector<768x64xf32>
    %9 = vector.shape_cast %8 : vector<768x64xf32> to vector<3x256x64xf32>
    %10 = vector.extract_strided_slice %9 {offsets = [0, 0, 0], sizes = [1, 256, 64], strides = [1, 1, 1]} : vector<3x256x64xf32> to vector<1x256x64xf32>
    %11 = vector.shape_cast %10 : vector<1x256x64xf32> to vector<256x64xf32>
    %12 = vector.extract_strided_slice %9 {offsets = [1, 0, 0], sizes = [1, 256, 64], strides = [1, 1, 1]} : vector<3x256x64xf32> to vector<1x256x64xf32>
    %13 = vector.shape_cast %12 : vector<1x256x64xf32> to vector<256x64xf32>
    %14 = arith.maximumf %11, %13 : vector<256x64xf32>
    %15 = vector.extract_strided_slice %9 {offsets = [2, 0, 0], sizes = [1, 256, 64], strides = [1, 1, 1]} : vector<3x256x64xf32> to vector<1x256x64xf32>
    %16 = vector.shape_cast %15 : vector<1x256x64xf32> to vector<256x64xf32>
    %17 = arith.maximumf %14, %16 : vector<256x64xf32>
    %18 = vector.shape_cast %17 : vector<256x64xf32> to vector<16x2x8x64xf32>
    %19 = vector.extract_strided_slice %18 {offsets = [0, 0, 0, 0], sizes = [16, 1, 8, 64], strides = [1, 1, 1, 1]} : vector<16x2x8x64xf32> to vector<16x1x8x64xf32>
    %20 = vector.shape_cast %19 : vector<16x1x8x64xf32> to vector<16x8x64xf32>
    %21 = vector.extract_strided_slice %18 {offsets = [0, 1, 0, 0], sizes = [16, 1, 8, 64], strides = [1, 1, 1, 1]} : vector<16x2x8x64xf32> to vector<16x1x8x64xf32>
    %22 = vector.shape_cast %21 : vector<16x1x8x64xf32> to vector<16x8x64xf32>
    %23 = vector.extract_strided_slice %20 {offsets = [1, 0, 0], sizes = [15, 8, 64], strides = [1, 1, 1]} : vector<16x8x64xf32> to vector<15x8x64xf32>
    %24 = vector.extract_strided_slice %20 {offsets = [15, 0, 0], sizes = [1, 8, 64], strides = [1, 1, 1]} : vector<16x8x64xf32> to vector<1x8x64xf32>
    %25 = tpu.concatenate %23, %24 in 0 : vector<15x8x64xf32>, vector<1x8x64xf32> -> vector<16x8x64xf32>
    %26 = arith.maximumf %20, %22 : vector<16x8x64xf32>
    %27 = arith.maximumf %26, %25 : vector<16x8x64xf32>
    %28 = vector.shape_cast %27 : vector<16x8x64xf32> to vector<2x8x8x64xf32>
    %c0_8 = arith.constant 0 : index
    %c0_9 = arith.constant 0 : index
    %c0_10 = arith.constant 0 : index
    %c0_11 = arith.constant 0 : index
    %29 = vector.load %arg4[%c0_8, %c0_9, %c0_10, %c0_11] : memref<2x8x8x64xf32, #tpu.memory_space<vmem>>, vector<2x8x8x64xf32>
    tpu.vector_store %arg4[%c0_8, %c0_9, %c0_10, %c0_11], %28 {strides = array<i32>} : memref<2x8x8x64xf32, #tpu.memory_space<vmem>>, vector<2x8x8x64xf32>,
    return
  }
  func.func @transform_0(%arg0: i32) -> (i32, i32, i32, i32) {
    %c0_i32 = arith.constant 0 : i32
    %c0_i32_0 = arith.constant 0 : i32
    %c0_i32_1 = arith.constant 0 : i32
    %c0_i32_2 = arith.constant 0 : i32
    return %c0_i32, %arg0, %c0_i32_0, %c0_i32_1 : i32, i32, i32, i32
  }
  func.func @transform_1(%arg0: i32) -> (i32, i32) {
    %c0_i32 = arith.constant 0 : i32
    %c0_i32_0 = arith.constant 0 : i32
    %c0_i32_1 = arith.constant 0 : i32
    return %c0_i32, %c0_i32_0 : i32, i32
  }
  func.func @transform_2(%arg0: i32) -> (i32, i32) {
    %c0_i32 = arith.constant 0 : i32
    %c0_i32_0 = arith.constant 0 : i32
    %c0_i32_1 = arith.constant 0 : i32
    return %c0_i32, %c0_i32_0 : i32, i32
  }
  func.func @transform_3(%arg0: i32) -> (i32, i32, i32, i32) {
    %c0_i32 = arith.constant 0 : i32
    %c0_i32_0 = arith.constant 0 : i32
    %c0_i32_1 = arith.constant 0 : i32
    %c0_i32_2 = arith.constant 0 : i32
    return %arg0, %c0_i32, %c0_i32_0, %c0_i32_1 : i32, i32, i32, i32
  }
}

module attributes {stable_mosaic.version = 11 : i64} {
  func.func @_mlp_kernel(%arg0: i32, %arg1: memref<8x3136xbf16, #tpu.memory_space<vmem>>, %arg2: memref<3136x128xbf16, #tpu.memory_space<vmem>>, %arg3: memref<1x128xf32, #tpu.memory_space<vmem>>, %arg4: memref<128x50xbf16, #tpu.memory_space<vmem>>, %arg5: memref<1x50xf32, #tpu.memory_space<vmem>>, %arg6: memref<8x50xf32, #tpu.memory_space<vmem>>) attributes {dimension_semantics = [#tpu.dimension_semantics<parallel>], iteration_bounds = array<i64: 1>, scalar_prefetch = 0 : i64, scratch_operands = 0 : i64, tpu.core_type = #tpu.core_type<tc>, window_params = [{transform_indices = @transform_0, window_bounds = array<i64: 8, 3136>}, {pipeline_mode = #tpu.pipeline_mode<synchronous>, transform_indices = @transform_1, window_bounds = array<i64: 3136, 128>}, {pipeline_mode = #tpu.pipeline_mode<synchronous>, transform_indices = @transform_2, window_bounds = array<i64: 1, 128>}, {pipeline_mode = #tpu.pipeline_mode<synchronous>, transform_indices = @transform_3, window_bounds = array<i64: 128, 50>}, {pipeline_mode = #tpu.pipeline_mode<synchronous>, transform_indices = @transform_4, window_bounds = array<i64: 1, 50>}, {transform_indices = @transform_5, window_bounds = array<i64: 8, 50>}]} {
    %c0 = arith.constant 0 : index
    %c0_0 = arith.constant 0 : index
    %0 = vector.load %arg1[%c0, %c0_0] : memref<8x3136xbf16, #tpu.memory_space<vmem>>, vector<8x3136xbf16>
    %c0_1 = arith.constant 0 : index
    %c0_2 = arith.constant 0 : index
    %1 = vector.load %arg2[%c0_1, %c0_2] : memref<3136x128xbf16, #tpu.memory_space<vmem>>, vector<3136x128xbf16>
    %cst = arith.constant dense<0.000000e+00> : vector<8x128xf32>
    %2 = tpu.matmul %0, %1, %cst {dimension_numbers = #tpu.dot_dimension_numbers<[1], [0], [0], [1], [0, 0, 1, 1], [], []>} : vector<8x3136xbf16>, vector<3136x128xbf16>, vector<8x128xf32> -> vector<8x128xf32>
    %c0_3 = arith.constant 0 : index
    %c0_4 = arith.constant 0 : index
    %3 = vector.load %arg3[%c0_3, %c0_4] : memref<1x128xf32, #tpu.memory_space<vmem>>, vector<1x128xf32>
    %4 = vector.broadcast %3 : vector<1x128xf32> to vector<8x128xf32>
    %5 = arith.addf %2, %4 : vector<8x128xf32>
    %6 = arith.truncf %5 : vector<8x128xf32> to vector<8x128xbf16>
    %c0_5 = arith.constant 0 : index
    %c0_6 = arith.constant 0 : index
    %7 = vector.load %arg4[%c0_5, %c0_6] : memref<128x50xbf16, #tpu.memory_space<vmem>>, vector<128x50xbf16>
    %cst_7 = arith.constant dense<0.000000e+00> : vector<8x50xf32>
    %8 = tpu.matmul %6, %7, %cst_7 {dimension_numbers = #tpu.dot_dimension_numbers<[1], [0], [0], [1], [0, 0, 1, 1], [], []>} : vector<8x128xbf16>, vector<128x50xbf16>, vector<8x50xf32> -> vector<8x50xf32>
    %c0_8 = arith.constant 0 : index
    %c0_9 = arith.constant 0 : index
    %9 = vector.load %arg5[%c0_8, %c0_9] : memref<1x50xf32, #tpu.memory_space<vmem>>, vector<1x50xf32>
    %10 = vector.broadcast %9 : vector<1x50xf32> to vector<8x50xf32>
    %11 = arith.addf %8, %10 : vector<8x50xf32>
    %c0_10 = arith.constant 0 : index
    %c0_11 = arith.constant 0 : index
    %12 = vector.load %arg6[%c0_10, %c0_11] : memref<8x50xf32, #tpu.memory_space<vmem>>, vector<8x50xf32>
    tpu.vector_store %arg6[%c0_10, %c0_11], %11 {strides = array<i32>} : memref<8x50xf32, #tpu.memory_space<vmem>>, vector<8x50xf32>,
    return
  }
  func.func @transform_0(%arg0: i32) -> (i32, i32) {
    %c0_i32 = arith.constant 0 : i32
    %c0_i32_0 = arith.constant 0 : i32
    return %arg0, %c0_i32 : i32, i32
  }
  func.func @transform_1(%arg0: i32) -> (i32, i32) {
    %c0_i32 = arith.constant 0 : i32
    %c0_i32_0 = arith.constant 0 : i32
    %c0_i32_1 = arith.constant 0 : i32
    return %c0_i32, %c0_i32_0 : i32, i32
  }
  func.func @transform_2(%arg0: i32) -> (i32, i32) {
    %c0_i32 = arith.constant 0 : i32
    %c0_i32_0 = arith.constant 0 : i32
    %c0_i32_1 = arith.constant 0 : i32
    return %c0_i32, %c0_i32_0 : i32, i32
  }
  func.func @transform_3(%arg0: i32) -> (i32, i32) {
    %c0_i32 = arith.constant 0 : i32
    %c0_i32_0 = arith.constant 0 : i32
    %c0_i32_1 = arith.constant 0 : i32
    return %c0_i32, %c0_i32_0 : i32, i32
  }
  func.func @transform_4(%arg0: i32) -> (i32, i32) {
    %c0_i32 = arith.constant 0 : i32
    %c0_i32_0 = arith.constant 0 : i32
    %c0_i32_1 = arith.constant 0 : i32
    return %c0_i32, %c0_i32_0 : i32, i32
  }
  func.func @transform_5(%arg0: i32) -> (i32, i32) {
    %c0_i32 = arith.constant 0 : i32
    %c0_i32_0 = arith.constant 0 : i32
    return %arg0, %c0_i32 : i32, i32
  }
}

</mosaic_0001>

<llo_original>
// kernel: small_forward.3
$region0: #{small_forward.3}
  #allocation0 [shape = 'u32[]', space=smem, size = 0x4, offset = 0x4, fixed_abs, tag = 'smem constant byte address 0x4 - core index']
  #allocation1 [shape = 'u32[72,128]{1,0:T(1,128)}', space=vmem, size = 0x9000, scoped, tag = 'internal scratch']
  %s0 = inlined_call_operand.vmem [shape: bf16[3,2,512,75], index: 0, kind: input, shape index: {}]
  %s1 = inlined_call_operand.vmem [shape: bf16[75,64], index: 1, kind: input, shape index: {}]
  %s2 = inlined_call_operand.vmem [shape: f32[1,64], index: 2, kind: input, shape index: {}]
  %s3 = inlined_call_operand.vmem [shape: f32[2,16,16,64], index: 3, kind: output, shape index: {}]
  %s4 = sld [smem:[#allocation0]]
  $region22: #{small_forward.3} parent=0
    _
  %s6 = ssub.s32 1, %s4
  %s7 = scalar_select 0, %s6, %s4
  // Predicated region
  $region2: #{small_forward.3} parent=0 // pred_check
    _
  $region3: #{small_forward.3} parent=0 // pred_check_branch
    %9 = sbr.rel (0) target = $region5
  $region4: #{small_forward.3} parent=0 // pred_region
    _
  $region5: #{small_forward.3} parent=0 // pred_fallthru
    _
  // Predicated region
  $region6: #{small_forward.3} parent=0 // pred_check
    _
  $region7: #{small_forward.3} parent=0 // pred_check_branch
    %11 = sbr.rel (0) target = $region9
  $region8: #{small_forward.3} parent=0 // pred_region
    _
  $region9: #{small_forward.3} parent=0 // pred_fallthru
    _
  // Predicated region
  $region10: #{small_forward.3} parent=0 // pred_check
    _
  $region11: #{small_forward.3} parent=0 // pred_check_branch
    %13 = sbr.rel (0) target = $region13
  $region12: #{small_forward.3} parent=0 // pred_region
    _
  $region13: #{small_forward.3} parent=0 // pred_fallthru
    _
  %v15 = vld [vmem:[%s0] sm:$0xf]
  %v16 = vld [vmem:[%s0 + $0x4] sm:$0xf]
  %v17 = vld [vmem:[%s0 + $0x8] sm:$0xf]
  %v18 = vld [vmem:[%s0 + $0xc] sm:$0xf]
  %v19 = vld [vmem:[%s0 + $0x10] sm:$0xf]
  %v20 = vld [vmem:[%s0 + $0x14] sm:$0xf]
  %v21 = vld [vmem:[%s0 + $0x18] sm:$0xf]
  %v22 = vld [vmem:[%s0 + $0x1c] sm:$0xf]
  %v23 = vld [vmem:[%s0 + $0x20] sm:$0xf]
  %v24 = vld [vmem:[%s0 + $0x24] sm:$0xf]
  %v25 = vld [vmem:[%s0 + $0x28] sm:$0xf]
  %v26 = vld [vmem:[%s0 + $0x2c] sm:$0xf]
  %v27 = vld [vmem:[%s0 + $0x30] sm:$0xf]
  %v28 = vld [vmem:[%s0 + $0x34] sm:$0xf]
  %v29 = vld [vmem:[%s0 + $0x38] sm:$0xf]
  %v30 = vld [vmem:[%s0 + $0x3c] sm:$0xf]
  %v31 = vld [vmem:[%s0 + $0x40] sm:$0xf]
  %v32 = vld [vmem:[%s0 + $0x44] sm:$0xf]
  %v33 = vld [vmem:[%s0 + $0x48] sm:$0xf]
  %v34 = vld [vmem:[%s0 + $0x4c] sm:$0xf]
  %v35 = vld [vmem:[%s0 + $0x50] sm:$0xf]
  %v36 = vld [vmem:[%s0 + $0x54] sm:$0xf]
  %v37 = vld [vmem:[%s0 + $0x58] sm:$0xf]
  %v38 = vld [vmem:[%s0 + $0x5c] sm:$0xf]
  %v39 = vld [vmem:[%s0 + $0x60] sm:$0xf]
  %v40 = vld [vmem:[%s0 + $0x64] sm:$0xf]
  %v41 = vld [vmem:[%s0 + $0x68] sm:$0xf]
  %v42 = vld [vmem:[%s0 + $0x6c] sm:$0xf]
  %v43 = vld [vmem:[%s0 + $0x70] sm:$0xf]
  %v44 = vld [vmem:[%s0 + $0x74] sm:$0xf]
  %v45 = vld [vmem:[%s0 + $0x78] sm:$0xf]
  %v46 = vld [vmem:[%s0 + $0x7c] sm:$0xf]
  %v47 = vld [vmem:[%s0 + $0x80] sm:$0xf]
  %v48 = vld [vmem:[%s0 + $0x84] sm:$0xf]
  %v49 = vld [vmem:[%s0 + $0x88] sm:$0xf]
  %v50 = vld [vmem:[%s0 + $0x8c] sm:$0xf]
  %v51 = vld [vmem:[%s0 + $0x90] sm:$0xf]
  %v52 = vld [vmem:[%s0 + $0x94] sm:$0xf]
  %v53 = vld [vmem:[%s0 + $0x98] sm:$0xf]
  %v54 = vld [vmem:[%s0 + $0x9c] sm:$0xf]
  %v55 = vld [vmem:[%s0 + $0xa0] sm:$0xf]
  %v56 = vld [vmem:[%s0 + $0xa4] sm:$0xf]
  %v57 = vld [vmem:[%s0 + $0xa8] sm:$0xf]
  %v58 = vld [vmem:[%s0 + $0xac] sm:$0xf]
  %v59 = vld [vmem:[%s0 + $0xb0] sm:$0xf]
  %v60 = vld [vmem:[%s0 + $0xb4] sm:$0xf]
  %v61 = vld [vmem:[%s0 + $0xb8] sm:$0xf]
  %v62 = vld [vmem:[%s0 + $0xbc] sm:$0xf]
  %v63 = vld [vmem:[%s0 + $0xc0] sm:$0xf]
  %v64 = vld [vmem:[%s0 + $0xc4] sm:$0xf]
  %v65 = vld [vmem:[%s0 + $0xc8] sm:$0xf]
  %v66 = vld [vmem:[%s0 + $0xcc] sm:$0xf]
  %v67 = vld [vmem:[%s0 + $0xd0] sm:$0xf]
  %v68 = vld [vmem:[%s0 + $0xd4] sm:$0xf]
  %v69 = vld [vmem:[%s0 + $0xd8] sm:$0xf]
  %v70 = vld [vmem:[%s0 + $0xdc] sm:$0xf]
  %v71 = vld [vmem:[%s0 + $0xe0] sm:$0xf]
  %v72 = vld [vmem:[%s0 + $0xe4] sm:$0xf]
  %v73 = vld [vmem:[%s0 + $0xe8] sm:$0xf]
  %v74 = vld [vmem:[%s0 + $0xec] sm:$0xf]
  %v75 = vld [vmem:[%s0 + $0xf0] sm:$0xf]
  %v76 = vld [vmem:[%s0 + $0xf4] sm:$0xf]
  %v77 = vld [vmem:[%s0 + $0xf8] sm:$0xf]
  %v78 = vld [vmem:[%s0 + $0xfc] sm:$0xf]
  %v79 = vld [vmem:[%s0 + $0x100] sm:$0xf]
  %v80 = vld [vmem:[%s0 + $0x104] sm:$0xf]
  %v81 = vld [vmem:[%s0 + $0x108] sm:$0xf]
  %v82 = vld [vmem:[%s0 + $0x10c] sm:$0xf]
  %v83 = vld [vmem:[%s0 + $0x110] sm:$0xf]
  %v84 = vld [vmem:[%s0 + $0x114] sm:$0xf]
  %v85 = vld [vmem:[%s0 + $0x118] sm:$0xf]
  %v86 = vld [vmem:[%s0 + $0x11c] sm:$0xf]
  %v87 = vld [vmem:[%s0 + $0x120] sm:$0xf]
  %v88 = vld [vmem:[%s0 + $0x124] sm:$0xf]
  %v89 = vld [vmem:[%s0 + $0x128] sm:$0xf]
  %v90 = vld [vmem:[%s0 + $0x12c] sm:$0xf]
  %v91 = vld [vmem:[%s0 + $0x130] sm:$0xf]
  %v92 = vld [vmem:[%s0 + $0x134] sm:$0xf]
  %v93 = vld [vmem:[%s0 + $0x138] sm:$0xf]
  %v94 = vld [vmem:[%s0 + $0x13c] sm:$0xf]
  %v95 = vld [vmem:[%s0 + $0x140] sm:$0xf]
  %v96 = vld [vmem:[%s0 + $0x144] sm:$0xf]
  %v97 = vld [vmem:[%s0 + $0x148] sm:$0xf]
  %v98 = vld [vmem:[%s0 + $0x14c] sm:$0xf]
  %v99 = vld [vmem:[%s0 + $0x150] sm:$0xf]
  %v100 = vld [vmem:[%s0 + $0x154] sm:$0xf]
  %v101 = vld [vmem:[%s0 + $0x158] sm:$0xf]
  %v102 = vld [vmem:[%s0 + $0x15c] sm:$0xf]
  %v103 = vld [vmem:[%s0 + $0x160] sm:$0xf]
  %v104 = vld [vmem:[%s0 + $0x164] sm:$0xf]
  %v105 = vld [vmem:[%s0 + $0x168] sm:$0xf]
  %v106 = vld [vmem:[%s0 + $0x16c] sm:$0xf]
  %v107 = vld [vmem:[%s0 + $0x170] sm:$0xf]
  %v108 = vld [vmem:[%s0 + $0x174] sm:$0xf]
  %v109 = vld [vmem:[%s0 + $0x178] sm:$0xf]
  %v110 = vld [vmem:[%s0 + $0x17c] sm:$0xf]
  %v111 = vld [vmem:[%s0 + $0x180] sm:$0xf]
  %v112 = vld [vmem:[%s0 + $0x184] sm:$0xf]
  %v113 = vld [vmem:[%s0 + $0x188] sm:$0xf]
  %v114 = vld [vmem:[%s0 + $0x18c] sm:$0xf]
  %v115 = vld [vmem:[%s0 + $0x190] sm:$0xf]
  %v116 = vld [vmem:[%s0 + $0x194] sm:$0xf]
  %v117 = vld [vmem:[%s0 + $0x198] sm:$0xf]
  %v118 = vld [vmem:[%s0 + $0x19c] sm:$0xf]
  %v119 = vld [vmem:[%s0 + $0x1a0] sm:$0xf]
  %v120 = vld [vmem:[%s0 + $0x1a4] sm:$0xf]
  %v121 = vld [vmem:[%s0 + $0x1a8] sm:$0xf]
  %v122 = vld [vmem:[%s0 + $0x1ac] sm:$0xf]
  %v123 = vld [vmem:[%s0 + $0x1b0] sm:$0xf]
  %v124 = vld [vmem:[%s0 + $0x1b4] sm:$0xf]
  %v125 = vld [vmem:[%s0 + $0x1b8] sm:$0xf]
  %v126 = vld [vmem:[%s0 + $0x1bc] sm:$0xf]
  %v127 = vld [vmem:[%s0 + $0x1c0] sm:$0xf]
  %v128 = vld [vmem:[%s0 + $0x1c4] sm:$0xf]
  %v129 = vld [vmem:[%s0 + $0x1c8] sm:$0xf]
  %v130 = vld [vmem:[%s0 + $0x1cc] sm:$0xf]
  %v131 = vld [vmem:[%s0 + $0x1d0] sm:$0xf]
  %v132 = vld [vmem:[%s0 + $0x1d4] sm:$0xf]
  %v133 = vld [vmem:[%s0 + $0x1d8] sm:$0xf]
  %v134 = vld [vmem:[%s0 + $0x1dc] sm:$0xf]
  %v135 = vld [vmem:[%s0 + $0x1e0] sm:$0xf]
  %v136 = vld [vmem:[%s0 + $0x1e4] sm:$0xf]
  %v137 = vld [vmem:[%s0 + $0x1e8] sm:$0xf]
  %v138 = vld [vmem:[%s0 + $0x1ec] sm:$0xf]
  %v139 = vld [vmem:[%s0 + $0x1f0] sm:$0xf]
  %v140 = vld [vmem:[%s0 + $0x1f4] sm:$0xf]
  %v141 = vld [vmem:[%s0 + $0x1f8] sm:$0xf]
  %v142 = vld [vmem:[%s0 + $0x1fc] sm:$0xf]
  %v143 = vld [vmem:[%s0 + $0x200] sm:$0xf]
  %v144 = vld [vmem:[%s0 + $0x204] sm:$0xf]
  %v145 = vld [vmem:[%s0 + $0x208] sm:$0xf]
  %v146 = vld [vmem:[%s0 + $0x20c] sm:$0xf]
  %v147 = vld [vmem:[%s0 + $0x210] sm:$0xf]
  %v148 = vld [vmem:[%s0 + $0x214] sm:$0xf]
  %v149 = vld [vmem:[%s0 + $0x218] sm:$0xf]
  %v150 = vld [vmem:[%s0 + $0x21c] sm:$0xf]
  %v151 = vld [vmem:[%s0 + $0x220] sm:$0xf]
  %v152 = vld [vmem:[%s0 + $0x224] sm:$0xf]
  %v153 = vld [vmem:[%s0 + $0x228] sm:$0xf]
  %v154 = vld [vmem:[%s0 + $0x22c] sm:$0xf]
  %v155 = vld [vmem:[%s0 + $0x230] sm:$0xf]
  %v156 = vld [vmem:[%s0 + $0x234] sm:$0xf]
  %v157 = vld [vmem:[%s0 + $0x238] sm:$0xf]
  %v158 = vld [vmem:[%s0 + $0x23c] sm:$0xf]
  %v159 = vld [vmem:[%s0 + $0x240] sm:$0xf]
  %v160 = vld [vmem:[%s0 + $0x244] sm:$0xf]
  %v161 = vld [vmem:[%s0 + $0x248] sm:$0xf]
  %v162 = vld [vmem:[%s0 + $0x24c] sm:$0xf]
  %v163 = vld [vmem:[%s0 + $0x250] sm:$0xf]
  %v164 = vld [vmem:[%s0 + $0x254] sm:$0xf]
  %v165 = vld [vmem:[%s0 + $0x258] sm:$0xf]
  %v166 = vld [vmem:[%s0 + $0x25c] sm:$0xf]
  %v167 = vld [vmem:[%s0 + $0x260] sm:$0xf]
  %v168 = vld [vmem:[%s0 + $0x264] sm:$0xf]
  %v169 = vld [vmem:[%s0 + $0x268] sm:$0xf]
  %v170 = vld [vmem:[%s0 + $0x26c] sm:$0xf]
  %v171 = vld [vmem:[%s0 + $0x270] sm:$0xf]
  %v172 = vld [vmem:[%s0 + $0x274] sm:$0xf]
  %v173 = vld [vmem:[%s0 + $0x278] sm:$0xf]
  %v174 = vld [vmem:[%s0 + $0x27c] sm:$0xf]
  %v175 = vld [vmem:[%s0 + $0x280] sm:$0xf]
  %v176 = vld [vmem:[%s0 + $0x284] sm:$0xf]
  %v177 = vld [vmem:[%s0 + $0x288] sm:$0xf]
  %v178 = vld [vmem:[%s0 + $0x28c] sm:$0xf]
  %v179 = vld [vmem:[%s0 + $0x290] sm:$0xf]
  %v180 = vld [vmem:[%s0 + $0x294] sm:$0xf]
  %v181 = vld [vmem:[%s0 + $0x298] sm:$0xf]
  %v182 = vld [vmem:[%s0 + $0x29c] sm:$0xf]
  %v183 = vld [vmem:[%s0 + $0x2a0] sm:$0xf]
  %v184 = vld [vmem:[%s0 + $0x2a4] sm:$0xf]
  %v185 = vld [vmem:[%s0 + $0x2a8] sm:$0xf]
  %v186 = vld [vmem:[%s0 + $0x2ac] sm:$0xf]
  %v187 = vld [vmem:[%s0 + $0x2b0] sm:$0xf]
  %v188 = vld [vmem:[%s0 + $0x2b4] sm:$0xf]
  %v189 = vld [vmem:[%s0 + $0x2b8] sm:$0xf]
  %v190 = vld [vmem:[%s0 + $0x2bc] sm:$0xf]
  %v191 = vld [vmem:[%s0 + $0x2c0] sm:$0xf]
  %v192 = vld [vmem:[%s0 + $0x2c4] sm:$0xf]
  %v193 = vld [vmem:[%s0 + $0x2c8] sm:$0xf]
  %v194 = vld [vmem:[%s0 + $0x2cc] sm:$0xf]
  %v195 = vld [vmem:[%s0 + $0x2d0] sm:$0xf]
  %v196 = vld [vmem:[%s0 + $0x2d4] sm:$0xf]
  %v197 = vld [vmem:[%s0 + $0x2d8] sm:$0xf]
  %v198 = vld [vmem:[%s0 + $0x2dc] sm:$0xf]
  %v199 = vld [vmem:[%s0 + $0x2e0] sm:$0xf]
  %v200 = vld [vmem:[%s0 + $0x2e4] sm:$0xf]
  %v201 = vld [vmem:[%s0 + $0x2e8] sm:$0xf]
  %v202 = vld [vmem:[%s0 + $0x2ec] sm:$0xf]
  %v203 = vld [vmem:[%s0 + $0x2f0] sm:$0xf]
  %v204 = vld [vmem:[%s0 + $0x2f4] sm:$0xf]
  %v205 = vld [vmem:[%s0 + $0x2f8] sm:$0xf]
  %v206 = vld [vmem:[%s0 + $0x2fc] sm:$0xf]
  %v207 = vld [vmem:[%s0 + $0x300] sm:$0xf]
  %v208 = vld [vmem:[%s0 + $0x304] sm:$0xf]
  %v209 = vld [vmem:[%s0 + $0x308] sm:$0xf]
  %v210 = vld [vmem:[%s0 + $0x30c] sm:$0xf]
  %v211 = vld [vmem:[%s0 + $0x310] sm:$0xf]
  %v212 = vld [vmem:[%s0 + $0x314] sm:$0xf]
  %v213 = vld [vmem:[%s0 + $0x318] sm:$0xf]
  %v214 = vld [vmem:[%s0 + $0x31c] sm:$0xf]
  %v215 = vld [vmem:[%s0 + $0x320] sm:$0xf]
  %v216 = vld [vmem:[%s0 + $0x324] sm:$0xf]
  %v217 = vld [vmem:[%s0 + $0x328] sm:$0xf]
  %v218 = vld [vmem:[%s0 + $0x32c] sm:$0xf]
  %v219 = vld [vmem:[%s0 + $0x330] sm:$0xf]
  %v220 = vld [vmem:[%s0 + $0x334] sm:$0xf]
  %v221 = vld [vmem:[%s0 + $0x338] sm:$0xf]
  %v222 = vld [vmem:[%s0 + $0x33c] sm:$0xf]
  %v223 = vld [vmem:[%s0 + $0x340] sm:$0xf]
  %v224 = vld [vmem:[%s0 + $0x344] sm:$0xf]
  %v225 = vld [vmem:[%s0 + $0x348] sm:$0xf]
  %v226 = vld [vmem:[%s0 + $0x34c] sm:$0xf]
  %v227 = vld [vmem:[%s0 + $0x350] sm:$0xf]
  %v228 = vld [vmem:[%s0 + $0x354] sm:$0xf]
  %v229 = vld [vmem:[%s0 + $0x358] sm:$0xf]
  %v230 = vld [vmem:[%s0 + $0x35c] sm:$0xf]
  %v231 = vld [vmem:[%s0 + $0x360] sm:$0xf]
  %v232 = vld [vmem:[%s0 + $0x364] sm:$0xf]
  %v233 = vld [vmem:[%s0 + $0x368] sm:$0xf]
  %v234 = vld [vmem:[%s0 + $0x36c] sm:$0xf]
  %v235 = vld [vmem:[%s0 + $0x370] sm:$0xf]
  %v236 = vld [vmem:[%s0 + $0x374] sm:$0xf]
  %v237 = vld [vmem:[%s0 + $0x378] sm:$0xf]
  %v238 = vld [vmem:[%s0 + $0x37c] sm:$0xf]
  %v239 = vld [vmem:[%s0 + $0x380] sm:$0xf]
  %v240 = vld [vmem:[%s0 + $0x384] sm:$0xf]
  %v241 = vld [vmem:[%s0 + $0x388] sm:$0xf]
  %v242 = vld [vmem:[%s0 + $0x38c] sm:$0xf]
  %v243 = vld [vmem:[%s0 + $0x390] sm:$0xf]
  %v244 = vld [vmem:[%s0 + $0x394] sm:$0xf]
  %v245 = vld [vmem:[%s0 + $0x398] sm:$0xf]
  %v246 = vld [vmem:[%s0 + $0x39c] sm:$0xf]
  %v247 = vld [vmem:[%s0 + $0x3a0] sm:$0xf]
  %v248 = vld [vmem:[%s0 + $0x3a4] sm:$0xf]
  %v249 = vld [vmem:[%s0 + $0x3a8] sm:$0xf]
  %v250 = vld [vmem:[%s0 + $0x3ac] sm:$0xf]
  %v251 = vld [vmem:[%s0 + $0x3b0] sm:$0xf]
  %v252 = vld [vmem:[%s0 + $0x3b4] sm:$0xf]
  %v253 = vld [vmem:[%s0 + $0x3b8] sm:$0xf]
  %v254 = vld [vmem:[%s0 + $0x3bc] sm:$0xf]
  %v255 = vld [vmem:[%s0 + $0x3c0] sm:$0xf]
  %v256 = vld [vmem:[%s0 + $0x3c4] sm:$0xf]
  %v257 = vld [vmem:[%s0 + $0x3c8] sm:$0xf]
  %v258 = vld [vmem:[%s0 + $0x3cc] sm:$0xf]
  %v259 = vld [vmem:[%s0 + $0x3d0] sm:$0xf]
  %v260 = vld [vmem:[%s0 + $0x3d4] sm:$0xf]
  %v261 = vld [vmem:[%s0 + $0x3d8] sm:$0xf]
  %v262 = vld [vmem:[%s0 + $0x3dc] sm:$0xf]
  %v263 = vld [vmem:[%s0 + $0x3e0] sm:$0xf]
  %v264 = vld [vmem:[%s0 + $0x3e4] sm:$0xf]
  %v265 = vld [vmem:[%s0 + $0x3e8] sm:$0xf]
  %v266 = vld [vmem:[%s0 + $0x3ec] sm:$0xf]
  %v267 = vld [vmem:[%s0 + $0x3f0] sm:$0xf]
  %v268 = vld [vmem:[%s0 + $0x3f4] sm:$0xf]
  %v269 = vld [vmem:[%s0 + $0x3f8] sm:$0xf]
  %v270 = vld [vmem:[%s0 + $0x3fc] sm:$0xf]
  %v271 = vld [vmem:[%s0 + $0x400] sm:$0xf]
  %v272 = vld [vmem:[%s0 + $0x404] sm:$0xf]
  %v273 = vld [vmem:[%s0 + $0x408] sm:$0xf]
  %v274 = vld [vmem:[%s0 + $0x40c] sm:$0xf]
  %v275 = vld [vmem:[%s0 + $0x410] sm:$0xf]
  %v276 = vld [vmem:[%s0 + $0x414] sm:$0xf]
  %v277 = vld [vmem:[%s0 + $0x418] sm:$0xf]
  %v278 = vld [vmem:[%s0 + $0x41c] sm:$0xf]
  %v279 = vld [vmem:[%s0 + $0x420] sm:$0xf]
  %v280 = vld [vmem:[%s0 + $0x424] sm:$0xf]
  %v281 = vld [vmem:[%s0 + $0x428] sm:$0xf]
  %v282 = vld [vmem:[%s0 + $0x42c] sm:$0xf]
  %v283 = vld [vmem:[%s0 + $0x430] sm:$0xf]
  %v284 = vld [vmem:[%s0 + $0x434] sm:$0xf]
  %v285 = vld [vmem:[%s0 + $0x438] sm:$0xf]
  %v286 = vld [vmem:[%s0 + $0x43c] sm:$0xf]
  %v287 = vld [vmem:[%s0 + $0x440] sm:$0xf]
  %v288 = vld [vmem:[%s0 + $0x444] sm:$0xf]
  %v289 = vld [vmem:[%s0 + $0x448] sm:$0xf]
  %v290 = vld [vmem:[%s0 + $0x44c] sm:$0xf]
  %v291 = vld [vmem:[%s0 + $0x450] sm:$0xf]
  %v292 = vld [vmem:[%s0 + $0x454] sm:$0xf]
  %v293 = vld [vmem:[%s0 + $0x458] sm:$0xf]
  %v294 = vld [vmem:[%s0 + $0x45c] sm:$0xf]
  %v295 = vld [vmem:[%s0 + $0x460] sm:$0xf]
  %v296 = vld [vmem:[%s0 + $0x464] sm:$0xf]
  %v297 = vld [vmem:[%s0 + $0x468] sm:$0xf]
  %v298 = vld [vmem:[%s0 + $0x46c] sm:$0xf]
  %v299 = vld [vmem:[%s0 + $0x470] sm:$0xf]
  %v300 = vld [vmem:[%s0 + $0x474] sm:$0xf]
  %v301 = vld [vmem:[%s0 + $0x478] sm:$0xf]
  %v302 = vld [vmem:[%s0 + $0x47c] sm:$0xf]
  %v303 = vld [vmem:[%s0 + $0x480] sm:$0xf]
  %v304 = vld [vmem:[%s0 + $0x484] sm:$0xf]
  %v305 = vld [vmem:[%s0 + $0x488] sm:$0xf]
  %v306 = vld [vmem:[%s0 + $0x48c] sm:$0xf]
  %v307 = vld [vmem:[%s0 + $0x490] sm:$0xf]
  %v308 = vld [vmem:[%s0 + $0x494] sm:$0xf]
  %v309 = vld [vmem:[%s0 + $0x498] sm:$0xf]
  %v310 = vld [vmem:[%s0 + $0x49c] sm:$0xf]
  %v311 = vld [vmem:[%s0 + $0x4a0] sm:$0xf]
  %v312 = vld [vmem:[%s0 + $0x4a4] sm:$0xf]
  %v313 = vld [vmem:[%s0 + $0x4a8] sm:$0xf]
  %v314 = vld [vmem:[%s0 + $0x4ac] sm:$0xf]
  %v315 = vld [vmem:[%s0 + $0x4b0] sm:$0xf]
  %v316 = vld [vmem:[%s0 + $0x4b4] sm:$0xf]
  %v317 = vld [vmem:[%s0 + $0x4b8] sm:$0xf]
  %v318 = vld [vmem:[%s0 + $0x4bc] sm:$0xf]
  %v319 = vld [vmem:[%s0 + $0x4c0] sm:$0xf]
  %v320 = vld [vmem:[%s0 + $0x4c4] sm:$0xf]
  %v321 = vld [vmem:[%s0 + $0x4c8] sm:$0xf]
  %v322 = vld [vmem:[%s0 + $0x4cc] sm:$0xf]
  %v323 = vld [vmem:[%s0 + $0x4d0] sm:$0xf]
  %v324 = vld [vmem:[%s0 + $0x4d4] sm:$0xf]
  %v325 = vld [vmem:[%s0 + $0x4d8] sm:$0xf]
  %v326 = vld [vmem:[%s0 + $0x4dc] sm:$0xf]
  %v327 = vld [vmem:[%s0 + $0x4e0] sm:$0xf]
  %v328 = vld [vmem:[%s0 + $0x4e4] sm:$0xf]
  %v329 = vld [vmem:[%s0 + $0x4e8] sm:$0xf]
  %v330 = vld [vmem:[%s0 + $0x4ec] sm:$0xf]
  %v331 = vld [vmem:[%s0 + $0x4f0] sm:$0xf]
  %v332 = vld [vmem:[%s0 + $0x4f4] sm:$0xf]
  %v333 = vld [vmem:[%s0 + $0x4f8] sm:$0xf]
  %v334 = vld [vmem:[%s0 + $0x4fc] sm:$0xf]
  %v335 = vld [vmem:[%s0 + $0x500] sm:$0xf]
  %v336 = vld [vmem:[%s0 + $0x504] sm:$0xf]
  %v337 = vld [vmem:[%s0 + $0x508] sm:$0xf]
  %v338 = vld [vmem:[%s0 + $0x50c] sm:$0xf]
  %v339 = vld [vmem:[%s0 + $0x510] sm:$0xf]
  %v340 = vld [vmem:[%s0 + $0x514] sm:$0xf]
  %v341 = vld [vmem:[%s0 + $0x518] sm:$0xf]
  %v342 = vld [vmem:[%s0 + $0x51c] sm:$0xf]
  %v343 = vld [vmem:[%s0 + $0x520] sm:$0xf]
  %v344 = vld [vmem:[%s0 + $0x524] sm:$0xf]
  %v345 = vld [vmem:[%s0 + $0x528] sm:$0xf]
  %v346 = vld [vmem:[%s0 + $0x52c] sm:$0xf]
  %v347 = vld [vmem:[%s0 + $0x530] sm:$0xf]
  %v348 = vld [vmem:[%s0 + $0x534] sm:$0xf]
  %v349 = vld [vmem:[%s0 + $0x538] sm:$0xf]
  %v350 = vld [vmem:[%s0 + $0x53c] sm:$0xf]
  %v351 = vld [vmem:[%s0 + $0x540] sm:$0xf]
  %v352 = vld [vmem:[%s0 + $0x544] sm:$0xf]
  %v353 = vld [vmem:[%s0 + $0x548] sm:$0xf]
  %v354 = vld [vmem:[%s0 + $0x54c] sm:$0xf]
  %v355 = vld [vmem:[%s0 + $0x550] sm:$0xf]
  %v356 = vld [vmem:[%s0 + $0x554] sm:$0xf]
  %v357 = vld [vmem:[%s0 + $0x558] sm:$0xf]
  %v358 = vld [vmem:[%s0 + $0x55c] sm:$0xf]
  %v359 = vld [vmem:[%s0 + $0x560] sm:$0xf]
  %v360 = vld [vmem:[%s0 + $0x564] sm:$0xf]
  %v361 = vld [vmem:[%s0 + $0x568] sm:$0xf]
  %v362 = vld [vmem:[%s0 + $0x56c] sm:$0xf]
  %v363 = vld [vmem:[%s0 + $0x570] sm:$0xf]
  %v364 = vld [vmem:[%s0 + $0x574] sm:$0xf]
  %v365 = vld [vmem:[%s0 + $0x578] sm:$0xf]
  %v366 = vld [vmem:[%s0 + $0x57c] sm:$0xf]
  %v367 = vld [vmem:[%s0 + $0x580] sm:$0xf]
  %v368 = vld [vmem:[%s0 + $0x584] sm:$0xf]
  %v369 = vld [vmem:[%s0 + $0x588] sm:$0xf]
  %v370 = vld [vmem:[%s0 + $0x58c] sm:$0xf]
  %v371 = vld [vmem:[%s0 + $0x590] sm:$0xf]
  %v372 = vld [vmem:[%s0 + $0x594] sm:$0xf]
  %v373 = vld [vmem:[%s0 + $0x598] sm:$0xf]
  %v374 = vld [vmem:[%s0 + $0x59c] sm:$0xf]
  %v375 = vld [vmem:[%s0 + $0x5a0] sm:$0xf]
  %v376 = vld [vmem:[%s0 + $0x5a4] sm:$0xf]
  %v377 = vld [vmem:[%s0 + $0x5a8] sm:$0xf]
  %v378 = vld [vmem:[%s0 + $0x5ac] sm:$0xf]
  %v379 = vld [vmem:[%s0 + $0x5b0] sm:$0xf]
  %v380 = vld [vmem:[%s0 + $0x5b4] sm:$0xf]
  %v381 = vld [vmem:[%s0 + $0x5b8] sm:$0xf]
  %v382 = vld [vmem:[%s0 + $0x5bc] sm:$0xf]
  %v383 = vld [vmem:[%s0 + $0x5c0] sm:$0xf]
  %v384 = vld [vmem:[%s0 + $0x5c4] sm:$0xf]
  %v385 = vld [vmem:[%s0 + $0x5c8] sm:$0xf]
  %v386 = vld [vmem:[%s0 + $0x5cc] sm:$0xf]
  %v387 = vld [vmem:[%s0 + $0x5d0] sm:$0xf]
  %v388 = vld [vmem:[%s0 + $0x5d4] sm:$0xf]
  %v389 = vld [vmem:[%s0 + $0x5d8] sm:$0xf]
  %v390 = vld [vmem:[%s0 + $0x5dc] sm:$0xf]
  %v391 = vld [vmem:[%s0 + $0x5e0] sm:$0xf]
  %v392 = vld [vmem:[%s0 + $0x5e4] sm:$0xf]
  %v393 = vld [vmem:[%s0 + $0x5e8] sm:$0xf]
  %v394 = vld [vmem:[%s0 + $0x5ec] sm:$0xf]
  %v395 = vld [vmem:[%s0 + $0x5f0] sm:$0xf]
  %v396 = vld [vmem:[%s0 + $0x5f4] sm:$0xf]
  %v397 = vld [vmem:[%s0 + $0x5f8] sm:$0xf]
  %v398 = vld [vmem:[%s0 + $0x5fc] sm:$0xf]
  %v399 = vld [vmem:[%s1] sm:$0xf]
  %v400 = vld [vmem:[%s1 + $0x4] sm:$0xf]
  %v401 = vld [vmem:[%s1 + $0x8] sm:$0xf]
  %v402 = vld [vmem:[%s1 + $0xc] sm:$0xf]
  %v403 = vld [vmem:[%s1 + $0x10] sm:$0xf]
  %v404 = vld [vmem:[%s1 + $0x14] sm:$0xf]
  %v405 = vld [vmem:[%s1 + $0x18] sm:$0xf]
  %v406 = vld [vmem:[%s1 + $0x1c] sm:$0xf]
  %v407 = vld [vmem:[%s1 + $0x20] sm:$0xf]
  %v408 = vld [vmem:[%s1 + $0x24] sm:$0x3]
  %v409 = vld [vmem:[%s2] sm:$0x1]
  %v411 = vperm.slane %v409, 0
  %v797 = vunpack.c.l.b16 %v15
  %v798 = vunpack.c.l.b16 %v16
  %v799 = vunpack.c.l.b16 %v17
  %v800 = vunpack.c.l.b16 %v18
  %v801 = vunpack.c.l.b16 %v19
  %v802 = vunpack.c.l.b16 %v20
  %v803 = vunpack.c.l.b16 %v21
  %v804 = vunpack.c.l.b16 %v22
  %v805 = vunpack.c.l.b16 %v23
  %v806 = vunpack.c.l.b16 %v24
  %v807 = vunpack.c.l.b16 %v25
  %v808 = vunpack.c.l.b16 %v26
  %v809 = vunpack.c.l.b16 %v27
  %v810 = vunpack.c.l.b16 %v28
  %v811 = vunpack.c.l.b16 %v29
  %v812 = vunpack.c.l.b16 %v30
  %v813 = vunpack.c.l.b16 %v31
  %v814 = vunpack.c.l.b16 %v32
  %v815 = vunpack.c.l.b16 %v33
  %v816 = vunpack.c.l.b16 %v34
  %v817 = vunpack.c.l.b16 %v35
  %v818 = vunpack.c.l.b16 %v36
  %v819 = vunpack.c.l.b16 %v37
  %v820 = vunpack.c.l.b16 %v38
  %v821 = vunpack.c.l.b16 %v39
  %v822 = vunpack.c.l.b16 %v40
  %v823 = vunpack.c.l.b16 %v41
  %v824 = vunpack.c.l.b16 %v42
  %v825 = vunpack.c.l.b16 %v43
  %v826 = vunpack.c.l.b16 %v44
  %v827 = vunpack.c.l.b16 %v45
  %v828 = vunpack.c.l.b16 %v46
  %v829 = vunpack.c.l.b16 %v47
  %v830 = vunpack.c.l.b16 %v48
  %v831 = vunpack.c.l.b16 %v49
  %v832 = vunpack.c.l.b16 %v50
  %v833 = vunpack.c.l.b16 %v51
  %v834 = vunpack.c.l.b16 %v52
  %v835 = vunpack.c.l.b16 %v53
  %v836 = vunpack.c.l.b16 %v54
  %v837 = vunpack.c.l.b16 %v55
  %v838 = vunpack.c.l.b16 %v56
  %v839 = vunpack.c.l.b16 %v57
  %v840 = vunpack.c.l.b16 %v58
  %v841 = vunpack.c.l.b16 %v59
  %v842 = vunpack.c.l.b16 %v60
  %v843 = vunpack.c.l.b16 %v61
  %v844 = vunpack.c.l.b16 %v62
  %v845 = vunpack.c.l.b16 %v63
  %v846 = vunpack.c.l.b16 %v64
  %v847 = vunpack.c.l.b16 %v65
  %v848 = vunpack.c.l.b16 %v66
  %v849 = vunpack.c.l.b16 %v67
  %v850 = vunpack.c.l.b16 %v68
  %v851 = vunpack.c.l.b16 %v69
  %v852 = vunpack.c.l.b16 %v70
  %v853 = vunpack.c.l.b16 %v71
  %v854 = vunpack.c.l.b16 %v72
  %v855 = vunpack.c.l.b16 %v73
  %v856 = vunpack.c.l.b16 %v74
  %v857 = vunpack.c.l.b16 %v75
  %v858 = vunpack.c.l.b16 %v76
  %v859 = vunpack.c.l.b16 %v77
  %v860 = vunpack.c.l.b16 %v78
  %v861 = vunpack.c.l.b16 %v79
  %v862 = vunpack.c.l.b16 %v80
  %v863 = vunpack.c.l.b16 %v81
  %v864 = vunpack.c.l.b16 %v82
  %v865 = vunpack.c.l.b16 %v83
  %v866 = vunpack.c.l.b16 %v84
  %v867 = vunpack.c.l.b16 %v85
  %v868 = vunpack.c.l.b16 %v86
  %v869 = vunpack.c.l.b16 %v87
  %v870 = vunpack.c.l.b16 %v88
  %v871 = vunpack.c.l.b16 %v89
  %v872 = vunpack.c.l.b16 %v90
  %v873 = vunpack.c.l.b16 %v91
  %v874 = vunpack.c.l.b16 %v92
  %v875 = vunpack.c.l.b16 %v93
  %v876 = vunpack.c.l.b16 %v94
  %v877 = vunpack.c.l.b16 %v95
  %v878 = vunpack.c.l.b16 %v96
  %v879 = vunpack.c.l.b16 %v97
  %v880 = vunpack.c.l.b16 %v98
  %v881 = vunpack.c.l.b16 %v99
  %v882 = vunpack.c.l.b16 %v100
  %v883 = vunpack.c.l.b16 %v101
  %v884 = vunpack.c.l.b16 %v102
  %v885 = vunpack.c.l.b16 %v103
  %v886 = vunpack.c.l.b16 %v104
  %v887 = vunpack.c.l.b16 %v105
  %v888 = vunpack.c.l.b16 %v106
  %v889 = vunpack.c.l.b16 %v107
  %v890 = vunpack.c.l.b16 %v108
  %v891 = vunpack.c.l.b16 %v109
  %v892 = vunpack.c.l.b16 %v110
  %v893 = vunpack.c.l.b16 %v111
  %v894 = vunpack.c.l.b16 %v112
  %v895 = vunpack.c.l.b16 %v113
  %v896 = vunpack.c.l.b16 %v114
  %v897 = vunpack.c.l.b16 %v115
  %v898 = vunpack.c.l.b16 %v116
  %v899 = vunpack.c.l.b16 %v117
  %v900 = vunpack.c.l.b16 %v118
  %v901 = vunpack.c.l.b16 %v119
  %v902 = vunpack.c.l.b16 %v120
  %v903 = vunpack.c.l.b16 %v121
  %v904 = vunpack.c.l.b16 %v122
  %v905 = vunpack.c.l.b16 %v123
  %v906 = vunpack.c.l.b16 %v124
  %v907 = vunpack.c.l.b16 %v125
  %v908 = vunpack.c.l.b16 %v126
  %v909 = vunpack.c.l.b16 %v127
  %v910 = vunpack.c.l.b16 %v128
  %v911 = vunpack.c.l.b16 %v129
  %v912 = vunpack.c.l.b16 %v130
  %v913 = vunpack.c.l.b16 %v131
  %v914 = vunpack.c.l.b16 %v132
  %v915 = vunpack.c.l.b16 %v133
  %v916 = vunpack.c.l.b16 %v134
  %v917 = vunpack.c.l.b16 %v135
  %v918 = vunpack.c.l.b16 %v136
  %v919 = vunpack.c.l.b16 %v137
  %v920 = vunpack.c.l.b16 %v138
  %v921 = vunpack.c.l.b16 %v139
  %v922 = vunpack.c.l.b16 %v140
  %v923 = vunpack.c.l.b16 %v141
  %v924 = vunpack.c.l.b16 %v142
  %v925 = vunpack.c.l.b16 %v143
  %v926 = vunpack.c.l.b16 %v144
  %v927 = vunpack.c.l.b16 %v145
  %v928 = vunpack.c.l.b16 %v146
  %v929 = vunpack.c.l.b16 %v147
  %v930 = vunpack.c.l.b16 %v148
  %v931 = vunpack.c.l.b16 %v149
  %v932 = vunpack.c.l.b16 %v150
  %v933 = vunpack.c.l.b16 %v151
  %v934 = vunpack.c.l.b16 %v152
  %v935 = vunpack.c.l.b16 %v153
  %v936 = vunpack.c.l.b16 %v154
  %v937 = vunpack.c.l.b16 %v155
  %v938 = vunpack.c.l.b16 %v156
  %v939 = vunpack.c.l.b16 %v157
  %v940 = vunpack.c.l.b16 %v158
  %v941 = vunpack.c.l.b16 %v159
  %v942 = vunpack.c.l.b16 %v160
  %v943 = vunpack.c.l.b16 %v161
  %v944 = vunpack.c.l.b16 %v162
  %v945 = vunpack.c.l.b16 %v163
  %v946 = vunpack.c.l.b16 %v164
  %v947 = vunpack.c.l.b16 %v165
  %v948 = vunpack.c.l.b16 %v166
  %v949 = vunpack.c.l.b16 %v167
  %v950 = vunpack.c.l.b16 %v168
  %v951 = vunpack.c.l.b16 %v169
  %v952 = vunpack.c.l.b16 %v170
  %v953 = vunpack.c.l.b16 %v171
  %v954 = vunpack.c.l.b16 %v172
  %v955 = vunpack.c.l.b16 %v173
  %v956 = vunpack.c.l.b16 %v174
  %v957 = vunpack.c.l.b16 %v175
  %v958 = vunpack.c.l.b16 %v176
  %v959 = vunpack.c.l.b16 %v177
  %v960 = vunpack.c.l.b16 %v178
  %v961 = vunpack.c.l.b16 %v179
  %v962 = vunpack.c.l.b16 %v180
  %v963 = vunpack.c.l.b16 %v181
  %v964 = vunpack.c.l.b16 %v182
  %v965 = vunpack.c.l.b16 %v183
  %v966 = vunpack.c.l.b16 %v184
  %v967 = vunpack.c.l.b16 %v185
  %v968 = vunpack.c.l.b16 %v186
  %v969 = vunpack.c.l.b16 %v187
  %v970 = vunpack.c.l.b16 %v188
  %v971 = vunpack.c.l.b16 %v189
  %v972 = vunpack.c.l.b16 %v190
  %v973 = vunpack.c.l.b16 %v191
  %v974 = vunpack.c.l.b16 %v192
  %v975 = vunpack.c.l.b16 %v193
  %v976 = vunpack.c.l.b16 %v194
  %v977 = vunpack.c.l.b16 %v195
  %v978 = vunpack.c.l.b16 %v196
  %v979 = vunpack.c.l.b16 %v197
  %v980 = vunpack.c.l.b16 %v198
  %v981 = vunpack.c.l.b16 %v199
  %v982 = vunpack.c.l.b16 %v200
  %v983 = vunpack.c.l.b16 %v201
  %v984 = vunpack.c.l.b16 %v202
  %v985 = vunpack.c.l.b16 %v203
  %v986 = vunpack.c.l.b16 %v204
  %v987 = vunpack.c.l.b16 %v205
  %v988 = vunpack.c.l.b16 %v206
  %v989 = vunpack.c.l.b16 %v207
  %v990 = vunpack.c.l.b16 %v208
  %v991 = vunpack.c.l.b16 %v209
  %v992 = vunpack.c.l.b16 %v210
  %v993 = vunpack.c.l.b16 %v211
  %v994 = vunpack.c.l.b16 %v212
  %v995 = vunpack.c.l.b16 %v213
  %v996 = vunpack.c.l.b16 %v214
  %v997 = vunpack.c.l.b16 %v215
  %v998 = vunpack.c.l.b16 %v216
  %v999 = vunpack.c.l.b16 %v217
  %v1000 = vunpack.c.l.b16 %v218
  %v1001 = vunpack.c.l.b16 %v219
  %v1002 = vunpack.c.l.b16 %v220
  %v1003 = vunpack.c.l.b16 %v221
  %v1004 = vunpack.c.l.b16 %v222
  %v1005 = vunpack.c.l.b16 %v223
  %v1006 = vunpack.c.l.b16 %v224
  %v1007 = vunpack.c.l.b16 %v225
  %v1008 = vunpack.c.l.b16 %v226
  %v1009 = vunpack.c.l.b16 %v227
  %v1010 = vunpack.c.l.b16 %v228
  %v1011 = vunpack.c.l.b16 %v229
  %v1012 = vunpack.c.l.b16 %v230
  %v1013 = vunpack.c.l.b16 %v231
  %v1014 = vunpack.c.l.b16 %v232
  %v1015 = vunpack.c.l.b16 %v233
  %v1016 = vunpack.c.l.b16 %v234
  %v1017 = vunpack.c.l.b16 %v235
  %v1018 = vunpack.c.l.b16 %v236
  %v1019 = vunpack.c.l.b16 %v237
  %v1020 = vunpack.c.l.b16 %v238
  %v1021 = vunpack.c.l.b16 %v239
  %v1022 = vunpack.c.l.b16 %v240
  %v1023 = vunpack.c.l.b16 %v241
  %v1024 = vunpack.c.l.b16 %v242
  %v1025 = vunpack.c.l.b16 %v243
  %v1026 = vunpack.c.l.b16 %v244
  %v1027 = vunpack.c.l.b16 %v245
  %v1028 = vunpack.c.l.b16 %v246
  %v1029 = vunpack.c.l.b16 %v247
  %v1030 = vunpack.c.l.b16 %v248
  %v1031 = vunpack.c.l.b16 %v249
  %v1032 = vunpack.c.l.b16 %v250
  %v1033 = vunpack.c.l.b16 %v251
  %v1034 = vunpack.c.l.b16 %v252
  %v1035 = vunpack.c.l.b16 %v253
  %v1036 = vunpack.c.l.b16 %v254
  %v1037 = vunpack.c.l.b16 %v255
  %v1038 = vunpack.c.l.b16 %v256
  %v1039 = vunpack.c.l.b16 %v257
  %v1040 = vunpack.c.l.b16 %v258
  %v1041 = vunpack.c.l.b16 %v259
  %v1042 = vunpack.c.l.b16 %v260
  %v1043 = vunpack.c.l.b16 %v261
  %v1044 = vunpack.c.l.b16 %v262
  %v1045 = vunpack.c.l.b16 %v263
  %v1046 = vunpack.c.l.b16 %v264
  %v1047 = vunpack.c.l.b16 %v265
  %v1048 = vunpack.c.l.b16 %v266
  %v1049 = vunpack.c.l.b16 %v267
  %v1050 = vunpack.c.l.b16 %v268
  %v1051 = vunpack.c.l.b16 %v269
  %v1052 = vunpack.c.l.b16 %v270
  %v1053 = vunpack.c.l.b16 %v271
  %v1054 = vunpack.c.l.b16 %v272
  %v1055 = vunpack.c.l.b16 %v273
  %v1056 = vunpack.c.l.b16 %v274
  %v1057 = vunpack.c.l.b16 %v275
  %v1058 = vunpack.c.l.b16 %v276
  %v1059 = vunpack.c.l.b16 %v277
  %v1060 = vunpack.c.l.b16 %v278
  %v1061 = vunpack.c.l.b16 %v279
  %v1062 = vunpack.c.l.b16 %v280
  %v1063 = vunpack.c.l.b16 %v281
  %v1064 = vunpack.c.l.b16 %v282
  %v1065 = vunpack.c.l.b16 %v283
  %v1066 = vunpack.c.l.b16 %v284
  %v1067 = vunpack.c.l.b16 %v285
  %v1068 = vunpack.c.l.b16 %v286
  %v1069 = vunpack.c.l.b16 %v287
  %v1070 = vunpack.c.l.b16 %v288
  %v1071 = vunpack.c.l.b16 %v289
  %v1072 = vunpack.c.l.b16 %v290
  %v1073 = vunpack.c.l.b16 %v291
  %v1074 = vunpack.c.l.b16 %v292
  %v1075 = vunpack.c.l.b16 %v293
  %v1076 = vunpack.c.l.b16 %v294
  %v1077 = vunpack.c.l.b16 %v295
  %v1078 = vunpack.c.l.b16 %v296
  %v1079 = vunpack.c.l.b16 %v297
  %v1080 = vunpack.c.l.b16 %v298
  %v1081 = vunpack.c.l.b16 %v299
  %v1082 = vunpack.c.l.b16 %v300
  %v1083 = vunpack.c.l.b16 %v301
  %v1084 = vunpack.c.l.b16 %v302
  %v1085 = vunpack.c.l.b16 %v303
  %v1086 = vunpack.c.l.b16 %v304
  %v1087 = vunpack.c.l.b16 %v305
  %v1088 = vunpack.c.l.b16 %v306
  %v1089 = vunpack.c.l.b16 %v307
  %v1090 = vunpack.c.l.b16 %v308
  %v1091 = vunpack.c.l.b16 %v309
  %v1092 = vunpack.c.l.b16 %v310
  %v1093 = vunpack.c.l.b16 %v311
  %v1094 = vunpack.c.l.b16 %v312
  %v1095 = vunpack.c.l.b16 %v313
  %v1096 = vunpack.c.l.b16 %v314
  %v1097 = vunpack.c.l.b16 %v315
  %v1098 = vunpack.c.l.b16 %v316
  %v1099 = vunpack.c.l.b16 %v317
  %v1100 = vunpack.c.l.b16 %v318
  %v1101 = vunpack.c.l.b16 %v319
  %v1102 = vunpack.c.l.b16 %v320
  %v1103 = vunpack.c.l.b16 %v321
  %v1104 = vunpack.c.l.b16 %v322
  %v1105 = vunpack.c.l.b16 %v323
  %v1106 = vunpack.c.l.b16 %v324
  %v1107 = vunpack.c.l.b16 %v325
  %v1108 = vunpack.c.l.b16 %v326
  %v1109 = vunpack.c.l.b16 %v327
  %v1110 = vunpack.c.l.b16 %v328
  %v1111 = vunpack.c.l.b16 %v329
  %v1112 = vunpack.c.l.b16 %v330
  %v1113 = vunpack.c.l.b16 %v331
  %v1114 = vunpack.c.l.b16 %v332
  %v1115 = vunpack.c.l.b16 %v333
  %v1116 = vunpack.c.l.b16 %v334
  %v1117 = vunpack.c.l.b16 %v335
  %v1118 = vunpack.c.l.b16 %v336
  %v1119 = vunpack.c.l.b16 %v337
  %v1120 = vunpack.c.l.b16 %v338
  %v1121 = vunpack.c.l.b16 %v339
  %v1122 = vunpack.c.l.b16 %v340
  %v1123 = vunpack.c.l.b16 %v341
  %v1124 = vunpack.c.l.b16 %v342
  %v1125 = vunpack.c.l.b16 %v343
  %v1126 = vunpack.c.l.b16 %v344
  %v1127 = vunpack.c.l.b16 %v345
  %v1128 = vunpack.c.l.b16 %v346
  %v1129 = vunpack.c.l.b16 %v347
  %v1130 = vunpack.c.l.b16 %v348
  %v1131 = vunpack.c.l.b16 %v349
  %v1132 = vunpack.c.l.b16 %v350
  %v1133 = vunpack.c.l.b16 %v351
  %v1134 = vunpack.c.l.b16 %v352
  %v1135 = vunpack.c.l.b16 %v353
  %v1136 = vunpack.c.l.b16 %v354
  %v1137 = vunpack.c.l.b16 %v355
  %v1138 = vunpack.c.l.b16 %v356
  %v1139 = vunpack.c.l.b16 %v357
  %v1140 = vunpack.c.l.b16 %v358
  %v1141 = vunpack.c.l.b16 %v359
  %v1142 = vunpack.c.l.b16 %v360
  %v1143 = vunpack.c.l.b16 %v361
  %v1144 = vunpack.c.l.b16 %v362
  %v1145 = vunpack.c.l.b16 %v363
  %v1146 = vunpack.c.l.b16 %v364
  %v1147 = vunpack.c.l.b16 %v365
  %v1148 = vunpack.c.l.b16 %v366
  %v1149 = vunpack.c.l.b16 %v367
  %v1150 = vunpack.c.l.b16 %v368
  %v1151 = vunpack.c.l.b16 %v369
  %v1152 = vunpack.c.l.b16 %v370
  %v1153 = vunpack.c.l.b16 %v371
  %v1154 = vunpack.c.l.b16 %v372
  %v1155 = vunpack.c.l.b16 %v373
  %v1156 = vunpack.c.l.b16 %v374
  %v1157 = vunpack.c.l.b16 %v375
  %v1158 = vunpack.c.l.b16 %v376
  %v1159 = vunpack.c.l.b16 %v377
  %v1160 = vunpack.c.l.b16 %v378
  %v1161 = vunpack.c.l.b16 %v379
  %v1162 = vunpack.c.l.b16 %v380
  %v1163 = vunpack.c.l.b16 %v381
  %v1164 = vunpack.c.l.b16 %v382
  %v1165 = vunpack.c.l.b16 %v383
  %v1166 = vunpack.c.l.b16 %v384
  %v1167 = vunpack.c.l.b16 %v385
  %v1168 = vunpack.c.l.b16 %v386
  %v1169 = vunpack.c.l.b16 %v387
  %v1170 = vunpack.c.l.b16 %v388
  %v1171 = vunpack.c.l.b16 %v389
  %v1172 = vunpack.c.l.b16 %v390
  %v1173 = vunpack.c.l.b16 %v391
  %v1174 = vunpack.c.l.b16 %v392
  %v1175 = vunpack.c.l.b16 %v393
  %v1176 = vunpack.c.l.b16 %v394
  %v1177 = vunpack.c.l.b16 %v395
  %v1178 = vunpack.c.l.b16 %v396
  %v1179 = vunpack.c.l.b16 %v397
  %v1180 = vunpack.c.l.b16 %v398
  %v1181 = vpack.c.b16 %v798, %v797
  %v1182 = vpack.c.b16 %v800, %v799
  %v1183 = vpack.c.b16 %v802, %v801
  %v1184 = vpack.c.b16 %v804, %v803
  %v1185 = vpack.c.b16 %v806, %v805
  %v1186 = vpack.c.b16 %v808, %v807
  %v1187 = vpack.c.b16 %v810, %v809
  %v1188 = vpack.c.b16 %v812, %v811
  %v1189 = vpack.c.b16 %v814, %v813
  %v1190 = vpack.c.b16 %v816, %v815
  %v1191 = vpack.c.b16 %v818, %v817
  %v1192 = vpack.c.b16 %v820, %v819
  %v1193 = vpack.c.b16 %v822, %v821
  %v1194 = vpack.c.b16 %v824, %v823
  %v1195 = vpack.c.b16 %v826, %v825
  %v1196 = vpack.c.b16 %v828, %v827
  %v1197 = vpack.c.b16 %v830, %v829
  %v1198 = vpack.c.b16 %v832, %v831
  %v1199 = vpack.c.b16 %v834, %v833
  %v1200 = vpack.c.b16 %v836, %v835
  %v1201 = vpack.c.b16 %v838, %v837
  %v1202 = vpack.c.b16 %v840, %v839
  %v1203 = vpack.c.b16 %v842, %v841
  %v1204 = vpack.c.b16 %v844, %v843
  %v1205 = vpack.c.b16 %v846, %v845
  %v1206 = vpack.c.b16 %v848, %v847
  %v1207 = vpack.c.b16 %v850, %v849
  %v1208 = vpack.c.b16 %v852, %v851
  %v1209 = vpack.c.b16 %v854, %v853
  %v1210 = vpack.c.b16 %v856, %v855
  %v1211 = vpack.c.b16 %v858, %v857
  %v1212 = vpack.c.b16 %v860, %v859
  %v1213 = vpack.c.b16 %v862, %v861
  %v1214 = vpack.c.b16 %v864, %v863
  %v1215 = vpack.c.b16 %v866, %v865
  %v1216 = vpack.c.b16 %v868, %v867
  %v1217 = vpack.c.b16 %v870, %v869
  %v1218 = vpack.c.b16 %v872, %v871
  %v1219 = vpack.c.b16 %v874, %v873
  %v1220 = vpack.c.b16 %v876, %v875
  %v1221 = vpack.c.b16 %v878, %v877
  %v1222 = vpack.c.b16 %v880, %v879
  %v1223 = vpack.c.b16 %v882, %v881
  %v1224 = vpack.c.b16 %v884, %v883
  %v1225 = vpack.c.b16 %v886, %v885
  %v1226 = vpack.c.b16 %v888, %v887
  %v1227 = vpack.c.b16 %v890, %v889
  %v1228 = vpack.c.b16 %v892, %v891
  %v1229 = vpack.c.b16 %v894, %v893
  %v1230 = vpack.c.b16 %v896, %v895
  %v1231 = vpack.c.b16 %v898, %v897
  %v1232 = vpack.c.b16 %v900, %v899
  %v1233 = vpack.c.b16 %v902, %v901
  %v1234 = vpack.c.b16 %v904, %v903
  %v1235 = vpack.c.b16 %v906, %v905
  %v1236 = vpack.c.b16 %v908, %v907
  %v1237 = vpack.c.b16 %v910, %v909
  %v1238 = vpack.c.b16 %v912, %v911
  %v1239 = vpack.c.b16 %v914, %v913
  %v1240 = vpack.c.b16 %v916, %v915
  %v1241 = vpack.c.b16 %v918, %v917
  %v1242 = vpack.c.b16 %v920, %v919
  %v1243 = vpack.c.b16 %v922, %v921
  %v1244 = vpack.c.b16 %v924, %v923
  %v1245 = vpack.c.b16 %v926, %v925
  %v1246 = vpack.c.b16 %v928, %v927
  %v1247 = vpack.c.b16 %v930, %v929
  %v1248 = vpack.c.b16 %v932, %v931
  %v1249 = vpack.c.b16 %v934, %v933
  %v1250 = vpack.c.b16 %v936, %v935
  %v1251 = vpack.c.b16 %v938, %v937
  %v1252 = vpack.c.b16 %v940, %v939
  %v1253 = vpack.c.b16 %v942, %v941
  %v1254 = vpack.c.b16 %v944, %v943
  %v1255 = vpack.c.b16 %v946, %v945
  %v1256 = vpack.c.b16 %v948, %v947
  %v1257 = vpack.c.b16 %v950, %v949
  %v1258 = vpack.c.b16 %v952, %v951
  %v1259 = vpack.c.b16 %v954, %v953
  %v1260 = vpack.c.b16 %v956, %v955
  %v1261 = vpack.c.b16 %v958, %v957
  %v1262 = vpack.c.b16 %v960, %v959
  %v1263 = vpack.c.b16 %v962, %v961
  %v1264 = vpack.c.b16 %v964, %v963
  %v1265 = vpack.c.b16 %v966, %v965
  %v1266 = vpack.c.b16 %v968, %v967
  %v1267 = vpack.c.b16 %v970, %v969
  %v1268 = vpack.c.b16 %v972, %v971
  %v1269 = vpack.c.b16 %v974, %v973
  %v1270 = vpack.c.b16 %v976, %v975
  %v1271 = vpack.c.b16 %v978, %v977
  %v1272 = vpack.c.b16 %v980, %v979
  %v1273 = vpack.c.b16 %v982, %v981
  %v1274 = vpack.c.b16 %v984, %v983
  %v1275 = vpack.c.b16 %v986, %v985
  %v1276 = vpack.c.b16 %v988, %v987
  %v1277 = vpack.c.b16 %v990, %v989
  %v1278 = vpack.c.b16 %v992, %v991
  %v1279 = vpack.c.b16 %v994, %v993
  %v1280 = vpack.c.b16 %v996, %v995
  %v1281 = vpack.c.b16 %v998, %v997
  %v1282 = vpack.c.b16 %v1000, %v999
  %v1283 = vpack.c.b16 %v1002, %v1001
  %v1284 = vpack.c.b16 %v1004, %v1003
  %v1285 = vpack.c.b16 %v1006, %v1005
  %v1286 = vpack.c.b16 %v1008, %v1007
  %v1287 = vpack.c.b16 %v1010, %v1009
  %v1288 = vpack.c.b16 %v1012, %v1011
  %v1289 = vpack.c.b16 %v1014, %v1013
  %v1290 = vpack.c.b16 %v1016, %v1015
  %v1291 = vpack.c.b16 %v1018, %v1017
  %v1292 = vpack.c.b16 %v1020, %v1019
  %v1293 = vpack.c.b16 %v1022, %v1021
  %v1294 = vpack.c.b16 %v1024, %v1023
  %v1295 = vpack.c.b16 %v1026, %v1025
  %v1296 = vpack.c.b16 %v1028, %v1027
  %v1297 = vpack.c.b16 %v1030, %v1029
  %v1298 = vpack.c.b16 %v1032, %v1031
  %v1299 = vpack.c.b16 %v1034, %v1033
  %v1300 = vpack.c.b16 %v1036, %v1035
  %v1301 = vpack.c.b16 %v1038, %v1037
  %v1302 = vpack.c.b16 %v1040, %v1039
  %v1303 = vpack.c.b16 %v1042, %v1041
  %v1304 = vpack.c.b16 %v1044, %v1043
  %v1305 = vpack.c.b16 %v1046, %v1045
  %v1306 = vpack.c.b16 %v1048, %v1047
  %v1307 = vpack.c.b16 %v1050, %v1049
  %v1308 = vpack.c.b16 %v1052, %v1051
  %v1309 = vpack.c.b16 %v1054, %v1053
  %v1310 = vpack.c.b16 %v1056, %v1055
  %v1311 = vpack.c.b16 %v1058, %v1057
  %v1312 = vpack.c.b16 %v1060, %v1059
  %v1313 = vpack.c.b16 %v1062, %v1061
  %v1314 = vpack.c.b16 %v1064, %v1063
  %v1315 = vpack.c.b16 %v1066, %v1065
  %v1316 = vpack.c.b16 %v1068, %v1067
  %v1317 = vpack.c.b16 %v1070, %v1069
  %v1318 = vpack.c.b16 %v1072, %v1071
  %v1319 = vpack.c.b16 %v1074, %v1073
  %v1320 = vpack.c.b16 %v1076, %v1075
  %v1321 = vpack.c.b16 %v1078, %v1077
  %v1322 = vpack.c.b16 %v1080, %v1079
  %v1323 = vpack.c.b16 %v1082, %v1081
  %v1324 = vpack.c.b16 %v1084, %v1083
  %v1325 = vpack.c.b16 %v1086, %v1085
  %v1326 = vpack.c.b16 %v1088, %v1087
  %v1327 = vpack.c.b16 %v1090, %v1089
  %v1328 = vpack.c.b16 %v1092, %v1091
  %v1329 = vpack.c.b16 %v1094, %v1093
  %v1330 = vpack.c.b16 %v1096, %v1095
  %v1331 = vpack.c.b16 %v1098, %v1097
  %v1332 = vpack.c.b16 %v1100, %v1099
  %v1333 = vpack.c.b16 %v1102, %v1101
  %v1334 = vpack.c.b16 %v1104, %v1103
  %v1335 = vpack.c.b16 %v1106, %v1105
  %v1336 = vpack.c.b16 %v1108, %v1107
  %v1337 = vpack.c.b16 %v1110, %v1109
  %v1338 = vpack.c.b16 %v1112, %v1111
  %v1339 = vpack.c.b16 %v1114, %v1113
  %v1340 = vpack.c.b16 %v1116, %v1115
  %v1341 = vpack.c.b16 %v1118, %v1117
  %v1342 = vpack.c.b16 %v1120, %v1119
  %v1343 = vpack.c.b16 %v1122, %v1121
  %v1344 = vpack.c.b16 %v1124, %v1123
  %v1345 = vpack.c.b16 %v1126, %v1125
  %v1346 = vpack.c.b16 %v1128, %v1127
  %v1347 = vpack.c.b16 %v1130, %v1129
  %v1348 = vpack.c.b16 %v1132, %v1131
  %v1349 = vpack.c.b16 %v1134, %v1133
  %v1350 = vpack.c.b16 %v1136, %v1135
  %v1351 = vpack.c.b16 %v1138, %v1137
  %v1352 = vpack.c.b16 %v1140, %v1139
  %v1353 = vpack.c.b16 %v1142, %v1141
  %v1354 = vpack.c.b16 %v1144, %v1143
  %v1355 = vpack.c.b16 %v1146, %v1145
  %v1356 = vpack.c.b16 %v1148, %v1147
  %v1357 = vpack.c.b16 %v1150, %v1149
  %v1358 = vpack.c.b16 %v1152, %v1151
  %v1359 = vpack.c.b16 %v1154, %v1153
  %v1360 = vpack.c.b16 %v1156, %v1155
  %v1361 = vpack.c.b16 %v1158, %v1157
  %v1362 = vpack.c.b16 %v1160, %v1159
  %v1363 = vpack.c.b16 %v1162, %v1161
  %v1364 = vpack.c.b16 %v1164, %v1163
  %v1365 = vpack.c.b16 %v1166, %v1165
  %v1366 = vpack.c.b16 %v1168, %v1167
  %v1367 = vpack.c.b16 %v1170, %v1169
  %v1368 = vpack.c.b16 %v1172, %v1171
  %v1369 = vpack.c.b16 %v1174, %v1173
  %v1370 = vpack.c.b16 %v1176, %v1175
  %v1371 = vpack.c.b16 %v1178, %v1177
  %v1372 = vpack.c.b16 %v1180, %v1179
  %v1383 = vunpack.c.l.b16 %v399
  %v1384 = vunpack.c.l.b16 %v400
  %v1385 = vunpack.c.l.b16 %v401
  %v1386 = vunpack.c.l.b16 %v402
  %v1387 = vunpack.c.l.b16 %v403
  %v1388 = vunpack.c.l.b16 %v404
  %v1389 = vunpack.c.l.b16 %v405
  %v1390 = vunpack.c.l.b16 %v406
  %v1391 = vunpack.c.l.b16 %v407
  %v1392 = vunpack.c.l.b16 %v408
  %v1393 = vpack.c.b16 %v1384, %v1383
  %v1394 = vpack.c.b16 %v1386, %v1385
  %v1395 = vpack.c.b16 %v1388, %v1387
  %v1396 = vpack.c.b16 %v1390, %v1389
  %v1397 = vpack.c.b16 %v1392, %v1391
  %vm1402 = vcmask 613376
  %v1404 = vsel %vm1402, %v1181, 0
  %v1407 = vsel %vm1402, %v1182, 0
  %v1410 = vsel %vm1402, %v1183, 0
  %v1413 = vsel %vm1402, %v1184, 0
  %v1416 = vsel %vm1402, %v1185, 0
  %v1419 = vsel %vm1402, %v1186, 0
  %v1422 = vsel %vm1402, %v1187, 0
  %v1425 = vsel %vm1402, %v1188, 0
  %v1428 = vsel %vm1402, %v1189, 0
  %v1431 = vsel %vm1402, %v1190, 0
  %v1434 = vsel %vm1402, %v1191, 0
  %v1437 = vsel %vm1402, %v1192, 0
  %v1440 = vsel %vm1402, %v1193, 0
  %v1443 = vsel %vm1402, %v1194, 0
  %v1446 = vsel %vm1402, %v1195, 0
  %v1449 = vsel %vm1402, %v1196, 0
  %v1452 = vsel %vm1402, %v1197, 0
  %v1455 = vsel %vm1402, %v1198, 0
  %v1458 = vsel %vm1402, %v1199, 0
  %v1461 = vsel %vm1402, %v1200, 0
  %v1464 = vsel %vm1402, %v1201, 0
  %v1467 = vsel %vm1402, %v1202, 0
  %v1470 = vsel %vm1402, %v1203, 0
  %v1473 = vsel %vm1402, %v1204, 0
  %v1476 = vsel %vm1402, %v1205, 0
  %v1479 = vsel %vm1402, %v1206, 0
  %v1482 = vsel %vm1402, %v1207, 0
  %v1485 = vsel %vm1402, %v1208, 0
  %v1488 = vsel %vm1402, %v1209, 0
  %v1491 = vsel %vm1402, %v1210, 0
  %v1494 = vsel %vm1402, %v1211, 0
  %v1497 = vsel %vm1402, %v1212, 0
  %v1500 = vsel %vm1402, %v1213, 0
  %v1503 = vsel %vm1402, %v1214, 0
  %v1506 = vsel %vm1402, %v1215, 0
  %v1509 = vsel %vm1402, %v1216, 0
  %v1512 = vsel %vm1402, %v1217, 0
  %v1515 = vsel %vm1402, %v1218, 0
  %v1518 = vsel %vm1402, %v1219, 0
  %v1521 = vsel %vm1402, %v1220, 0
  %v1524 = vsel %vm1402, %v1221, 0
  %v1527 = vsel %vm1402, %v1222, 0
  %v1530 = vsel %vm1402, %v1223, 0
  %v1533 = vsel %vm1402, %v1224, 0
  %v1536 = vsel %vm1402, %v1225, 0
  %v1539 = vsel %vm1402, %v1226, 0
  %v1542 = vsel %vm1402, %v1227, 0
  %v1545 = vsel %vm1402, %v1228, 0
  %v1548 = vsel %vm1402, %v1229, 0
  %v1551 = vsel %vm1402, %v1230, 0
  %v1554 = vsel %vm1402, %v1231, 0
  %v1557 = vsel %vm1402, %v1232, 0
  %v1560 = vsel %vm1402, %v1233, 0
  %v1563 = vsel %vm1402, %v1234, 0
  %v1566 = vsel %vm1402, %v1235, 0
  %v1569 = vsel %vm1402, %v1236, 0
  %v1572 = vsel %vm1402, %v1237, 0
  %v1575 = vsel %vm1402, %v1238, 0
  %v1578 = vsel %vm1402, %v1239, 0
  %v1581 = vsel %vm1402, %v1240, 0
  %v1584 = vsel %vm1402, %v1241, 0
  %v1587 = vsel %vm1402, %v1242, 0
  %v1590 = vsel %vm1402, %v1243, 0
  %v1593 = vsel %vm1402, %v1244, 0
  %v1596 = vsel %vm1402, %v1245, 0
  %v1599 = vsel %vm1402, %v1246, 0
  %v1602 = vsel %vm1402, %v1247, 0
  %v1605 = vsel %vm1402, %v1248, 0
  %v1608 = vsel %vm1402, %v1249, 0
  %v1611 = vsel %vm1402, %v1250, 0
  %v1614 = vsel %vm1402, %v1251, 0
  %v1617 = vsel %vm1402, %v1252, 0
  %v1620 = vsel %vm1402, %v1253, 0
  %v1623 = vsel %vm1402, %v1254, 0
  %v1626 = vsel %vm1402, %v1255, 0
  %v1629 = vsel %vm1402, %v1256, 0
  %v1632 = vsel %vm1402, %v1257, 0
  %v1635 = vsel %vm1402, %v1258, 0
  %v1638 = vsel %vm1402, %v1259, 0
  %v1641 = vsel %vm1402, %v1260, 0
  %v1644 = vsel %vm1402, %v1261, 0
  %v1647 = vsel %vm1402, %v1262, 0
  %v1650 = vsel %vm1402, %v1263, 0
  %v1653 = vsel %vm1402, %v1264, 0
  %v1656 = vsel %vm1402, %v1265, 0
  %v1659 = vsel %vm1402, %v1266, 0
  %v1662 = vsel %vm1402, %v1267, 0
  %v1665 = vsel %vm1402, %v1268, 0
  %v1668 = vsel %vm1402, %v1269, 0
  %v1671 = vsel %vm1402, %v1270, 0
  %v1674 = vsel %vm1402, %v1271, 0
  %v1677 = vsel %vm1402, %v1272, 0
  %v1680 = vsel %vm1402, %v1273, 0
  %v1683 = vsel %vm1402, %v1274, 0
  %v1686 = vsel %vm1402, %v1275, 0
  %v1689 = vsel %vm1402, %v1276, 0
  %v1692 = vsel %vm1402, %v1277, 0
  %v1695 = vsel %vm1402, %v1278, 0
  %v1698 = vsel %vm1402, %v1279, 0
  %v1701 = vsel %vm1402, %v1280, 0
  %v1704 = vsel %vm1402, %v1281, 0
  %v1707 = vsel %vm1402, %v1282, 0
  %v1710 = vsel %vm1402, %v1283, 0
  %v1713 = vsel %vm1402, %v1284, 0
  %v1716 = vsel %vm1402, %v1285, 0
  %v1719 = vsel %vm1402, %v1286, 0
  %v1722 = vsel %vm1402, %v1287, 0
  %v1725 = vsel %vm1402, %v1288, 0
  %v1728 = vsel %vm1402, %v1289, 0
  %v1731 = vsel %vm1402, %v1290, 0
  %v1734 = vsel %vm1402, %v1291, 0
  %v1737 = vsel %vm1402, %v1292, 0
  %v1740 = vsel %vm1402, %v1293, 0
  %v1743 = vsel %vm1402, %v1294, 0
  %v1746 = vsel %vm1402, %v1295, 0
  %v1749 = vsel %vm1402, %v1296, 0
  %v1752 = vsel %vm1402, %v1297, 0
  %v1755 = vsel %vm1402, %v1298, 0
  %v1758 = vsel %vm1402, %v1299, 0
  %v1761 = vsel %vm1402, %v1300, 0
  %v1764 = vsel %vm1402, %v1301, 0
  %v1767 = vsel %vm1402, %v1302, 0
  %v1770 = vsel %vm1402, %v1303, 0
  %v1773 = vsel %vm1402, %v1304, 0
  %v1776 = vsel %vm1402, %v1305, 0
  %v1779 = vsel %vm1402, %v1306, 0
  %v1782 = vsel %vm1402, %v1307, 0
  %v1785 = vsel %vm1402, %v1308, 0
  %v1788 = vsel %vm1402, %v1309, 0
  %v1791 = vsel %vm1402, %v1310, 0
  %v1794 = vsel %vm1402, %v1311, 0
  %v1797 = vsel %vm1402, %v1312, 0
  %v1800 = vsel %vm1402, %v1313, 0
  %v1803 = vsel %vm1402, %v1314, 0
  %v1806 = vsel %vm1402, %v1315, 0
  %v1809 = vsel %vm1402, %v1316, 0
  %v1812 = vsel %vm1402, %v1317, 0
  %v1815 = vsel %vm1402, %v1318, 0
  %v1818 = vsel %vm1402, %v1319, 0
  %v1821 = vsel %vm1402, %v1320, 0
  %v1824 = vsel %vm1402, %v1321, 0
  %v1827 = vsel %vm1402, %v1322, 0
  %v1830 = vsel %vm1402, %v1323, 0
  %v1833 = vsel %vm1402, %v1324, 0
  %v1836 = vsel %vm1402, %v1325, 0
  %v1839 = vsel %vm1402, %v1326, 0
  %v1842 = vsel %vm1402, %v1327, 0
  %v1845 = vsel %vm1402, %v1328, 0
  %v1848 = vsel %vm1402, %v1329, 0
  %v1851 = vsel %vm1402, %v1330, 0
  %v1854 = vsel %vm1402, %v1331, 0
  %v1857 = vsel %vm1402, %v1332, 0
  %v1860 = vsel %vm1402, %v1333, 0
  %v1863 = vsel %vm1402, %v1334, 0
  %v1866 = vsel %vm1402, %v1335, 0
  %v1869 = vsel %vm1402, %v1336, 0
  %v1872 = vsel %vm1402, %v1337, 0
  %v1875 = vsel %vm1402, %v1338, 0
  %v1878 = vsel %vm1402, %v1339, 0
  %v1881 = vsel %vm1402, %v1340, 0
  %v1884 = vsel %vm1402, %v1341, 0
  %v1887 = vsel %vm1402, %v1342, 0
  %v1890 = vsel %vm1402, %v1343, 0
  %v1893 = vsel %vm1402, %v1344, 0
  %v1896 = vsel %vm1402, %v1345, 0
  %v1899 = vsel %vm1402, %v1346, 0
  %v1902 = vsel %vm1402, %v1347, 0
  %v1905 = vsel %vm1402, %v1348, 0
  %v1908 = vsel %vm1402, %v1349, 0
  %v1911 = vsel %vm1402, %v1350, 0
  %v1914 = vsel %vm1402, %v1351, 0
  %v1917 = vsel %vm1402, %v1352, 0
  %v1920 = vsel %vm1402, %v1353, 0
  %v1923 = vsel %vm1402, %v1354, 0
  %v1926 = vsel %vm1402, %v1355, 0
  %v1929 = vsel %vm1402, %v1356, 0
  %v1932 = vsel %vm1402, %v1357, 0
  %v1935 = vsel %vm1402, %v1358, 0
  %v1938 = vsel %vm1402, %v1359, 0
  %v1941 = vsel %vm1402, %v1360, 0
  %v1944 = vsel %vm1402, %v1361, 0
  %v1947 = vsel %vm1402, %v1362, 0
  %v1950 = vsel %vm1402, %v1363, 0
  %v1953 = vsel %vm1402, %v1364, 0
  %v1956 = vsel %vm1402, %v1365, 0
  %v1959 = vsel %vm1402, %v1366, 0
  %v1962 = vsel %vm1402, %v1367, 0
  %v1965 = vsel %vm1402, %v1368, 0
  %v1968 = vsel %vm1402, %v1369, 0
  %v1971 = vsel %vm1402, %v1370, 0
  %v1974 = vsel %vm1402, %v1371, 0
  %v1977 = vsel %vm1402, %v1372, 0
  %vm1979 = vcmask 1044480
  %vm1980 = vcmask 1045504
  %v1981 = vsel %vm1979, 4294967295, 65535
  %v1982 = vsel %vm1980, %v1981, 0
  %v1984 = vand.u32 %v1397, %v1982
  %1986 = vmatpush.bf16.msra.mxu0 0
  %1987 = vmatpush.bf16.msra.mxu0 0
  %1988 = vmatpush.bf16.msra.mxu0 0
  %1989 = vmatpush.bf16.msra.mxu0 %v1984
  %1990 = vmatpush.bf16.msra.mxu0 %v1396
  %1991 = vmatpush.bf16.msra.mxu0 %v1395
  %1992 = vmatpush.bf16.msra.mxu0 %v1394
  %1993 = vmatpush.bf16.msra.mxu0 %v1393
  %1994 = vmatmul.bf16.gmra.mxu0 %v1404
  %v1995 = vpop.f32.mrf.mxu0
  %v1996 = vadd.f32 %v411, %v1995
  %v1997 = vpop.f32.mrf.mxu0
  %v1998 = vadd.f32 %v411, %v1997
  %1999 = vmatmul.bf16.gmra.mxu0 %v1407
  %v2000 = vpop.f32.mrf.mxu0
  %v2001 = vadd.f32 %v411, %v2000
  %v2002 = vpop.f32.mrf.mxu0
  %v2003 = vadd.f32 %v411, %v2002
  %2004 = vmatmul.bf16.gmra.mxu0 %v1410
  %v2005 = vpop.f32.mrf.mxu0
  %v2006 = vadd.f32 %v411, %v2005
  %v2007 = vpop.f32.mrf.mxu0
  %v2008 = vadd.f32 %v411, %v2007
  %2009 = vmatmul.bf16.gmra.mxu0 %v1413
  %v2010 = vpop.f32.mrf.mxu0
  %v2011 = vadd.f32 %v411, %v2010
  %v2012 = vpop.f32.mrf.mxu0
  %v2013 = vadd.f32 %v411, %v2012
  %2014 = vmatmul.bf16.gmra.mxu0 %v1416
  %v2015 = vpop.f32.mrf.mxu0
  %v2016 = vadd.f32 %v411, %v2015
  %v2017 = vpop.f32.mrf.mxu0
  %v2018 = vadd.f32 %v411, %v2017
  %2019 = vmatmul.bf16.gmra.mxu0 %v1419
  %v2020 = vpop.f32.mrf.mxu0
  %v2021 = vadd.f32 %v411, %v2020
  %v2022 = vpop.f32.mrf.mxu0
  %v2023 = vadd.f32 %v411, %v2022
  %2024 = vmatmul.bf16.gmra.mxu0 %v1422
  %v2025 = vpop.f32.mrf.mxu0
  %v2026 = vadd.f32 %v411, %v2025
  %v2027 = vpop.f32.mrf.mxu0
  %v2028 = vadd.f32 %v411, %v2027
  %2029 = vmatmul.bf16.gmra.mxu0 %v1425
  %v2030 = vpop.f32.mrf.mxu0
  %v2031 = vadd.f32 %v411, %v2030
  %v2032 = vpop.f32.mrf.mxu0
  %v2033 = vadd.f32 %v411, %v2032
  %2034 = vmatmul.bf16.gmra.mxu0 %v1428
  %v2035 = vpop.f32.mrf.mxu0
  %v2036 = vadd.f32 %v411, %v2035
  %v2037 = vpop.f32.mrf.mxu0
  %v2038 = vadd.f32 %v411, %v2037
  %2039 = vmatmul.bf16.gmra.mxu0 %v1431
  %v2040 = vpop.f32.mrf.mxu0
  %v2041 = vadd.f32 %v411, %v2040
  %v2042 = vpop.f32.mrf.mxu0
  %v2043 = vadd.f32 %v411, %v2042
  %2044 = vmatmul.bf16.gmra.mxu0 %v1434
  %v2045 = vpop.f32.mrf.mxu0
  %v2046 = vadd.f32 %v411, %v2045
  %v2047 = vpop.f32.mrf.mxu0
  %v2048 = vadd.f32 %v411, %v2047
  %2049 = vmatmul.bf16.gmra.mxu0 %v1437
  %v2050 = vpop.f32.mrf.mxu0
  %v2051 = vadd.f32 %v411, %v2050
  %v2052 = vpop.f32.mrf.mxu0
  %v2053 = vadd.f32 %v411, %v2052
  %2054 = vmatmul.bf16.gmra.mxu0 %v1440
  %v2055 = vpop.f32.mrf.mxu0
  %v2056 = vadd.f32 %v411, %v2055
  %v2057 = vpop.f32.mrf.mxu0
  %v2058 = vadd.f32 %v411, %v2057
  %2059 = vmatmul.bf16.gmra.mxu0 %v1443
  %v2060 = vpop.f32.mrf.mxu0
  %v2061 = vadd.f32 %v411, %v2060
  %v2062 = vpop.f32.mrf.mxu0
  %v2063 = vadd.f32 %v411, %v2062
  %2064 = vmatmul.bf16.gmra.mxu0 %v1446
  %v2065 = vpop.f32.mrf.mxu0
  %v2066 = vadd.f32 %v411, %v2065
  %v2067 = vpop.f32.mrf.mxu0
  %v2068 = vadd.f32 %v411, %v2067
  %2069 = vmatmul.bf16.gmra.mxu0 %v1449
  %v2070 = vpop.f32.mrf.mxu0
  %v2071 = vadd.f32 %v411, %v2070
  %v2072 = vpop.f32.mrf.mxu0
  %v2073 = vadd.f32 %v411, %v2072
  %2074 = vmatmul.bf16.gmra.mxu0 %v1452
  %v2075 = vpop.f32.mrf.mxu0
  %v2076 = vadd.f32 %v411, %v2075
  %v2077 = vpop.f32.mrf.mxu0
  %v2078 = vadd.f32 %v411, %v2077
  %2079 = vmatmul.bf16.gmra.mxu0 %v1455
  %v2080 = vpop.f32.mrf.mxu0
  %v2081 = vadd.f32 %v411, %v2080
  %v2082 = vpop.f32.mrf.mxu0
  %v2083 = vadd.f32 %v411, %v2082
  %2084 = vmatmul.bf16.gmra.mxu0 %v1458
  %v2085 = vpop.f32.mrf.mxu0
  %v2086 = vadd.f32 %v411, %v2085
  %v2087 = vpop.f32.mrf.mxu0
  %v2088 = vadd.f32 %v411, %v2087
  %2089 = vmatmul.bf16.gmra.mxu0 %v1461
  %v2090 = vpop.f32.mrf.mxu0
  %v2091 = vadd.f32 %v411, %v2090
  %v2092 = vpop.f32.mrf.mxu0
  %v2093 = vadd.f32 %v411, %v2092
  %2094 = vmatmul.bf16.gmra.mxu0 %v1464
  %v2095 = vpop.f32.mrf.mxu0
  %v2096 = vadd.f32 %v411, %v2095
  %v2097 = vpop.f32.mrf.mxu0
  %v2098 = vadd.f32 %v411, %v2097
  %2099 = vmatmul.bf16.gmra.mxu0 %v1467
  %v2100 = vpop.f32.mrf.mxu0
  %v2101 = vadd.f32 %v411, %v2100
  %v2102 = vpop.f32.mrf.mxu0
  %v2103 = vadd.f32 %v411, %v2102
  %2104 = vmatmul.bf16.gmra.mxu0 %v1470
  %v2105 = vpop.f32.mrf.mxu0
  %v2106 = vadd.f32 %v411, %v2105
  %v2107 = vpop.f32.mrf.mxu0
  %v2108 = vadd.f32 %v411, %v2107
  %2109 = vmatmul.bf16.gmra.mxu0 %v1473
  %v2110 = vpop.f32.mrf.mxu0
  %v2111 = vadd.f32 %v411, %v2110
  %v2112 = vpop.f32.mrf.mxu0
  %v2113 = vadd.f32 %v411, %v2112
  %2114 = vmatmul.bf16.gmra.mxu0 %v1476
  %v2115 = vpop.f32.mrf.mxu0
  %v2116 = vadd.f32 %v411, %v2115
  %v2117 = vpop.f32.mrf.mxu0
  %v2118 = vadd.f32 %v411, %v2117
  %2119 = vmatmul.bf16.gmra.mxu0 %v1479
  %v2120 = vpop.f32.mrf.mxu0
  %v2121 = vadd.f32 %v411, %v2120
  %v2122 = vpop.f32.mrf.mxu0
  %v2123 = vadd.f32 %v411, %v2122
  %2124 = vmatmul.bf16.gmra.mxu0 %v1482
  %v2125 = vpop.f32.mrf.mxu0
  %v2126 = vadd.f32 %v411, %v2125
  %v2127 = vpop.f32.mrf.mxu0
  %v2128 = vadd.f32 %v411, %v2127
  %2129 = vmatmul.bf16.gmra.mxu0 %v1485
  %v2130 = vpop.f32.mrf.mxu0
  %v2131 = vadd.f32 %v411, %v2130
  %v2132 = vpop.f32.mrf.mxu0
  %v2133 = vadd.f32 %v411, %v2132
  %2134 = vmatmul.bf16.gmra.mxu0 %v1488
  %v2135 = vpop.f32.mrf.mxu0
  %v2136 = vadd.f32 %v411, %v2135
  %v2137 = vpop.f32.mrf.mxu0
  %v2138 = vadd.f32 %v411, %v2137
  %2139 = vmatmul.bf16.gmra.mxu0 %v1491
  %v2140 = vpop.f32.mrf.mxu0
  %v2141 = vadd.f32 %v411, %v2140
  %v2142 = vpop.f32.mrf.mxu0
  %v2143 = vadd.f32 %v411, %v2142
  %2144 = vmatmul.bf16.gmra.mxu0 %v1494
  %v2145 = vpop.f32.mrf.mxu0
  %v2146 = vadd.f32 %v411, %v2145
  %v2147 = vpop.f32.mrf.mxu0
  %v2148 = vadd.f32 %v411, %v2147
  %2149 = vmatmul.bf16.gmra.mxu0 %v1497
  %v2150 = vpop.f32.mrf.mxu0
  %v2151 = vadd.f32 %v411, %v2150
  %v2152 = vpop.f32.mrf.mxu0
  %v2153 = vadd.f32 %v411, %v2152
  %2154 = vmatmul.bf16.gmra.mxu0 %v1500
  %v2155 = vpop.f32.mrf.mxu0
  %v2156 = vadd.f32 %v411, %v2155
  %v2157 = vpop.f32.mrf.mxu0
  %v2158 = vadd.f32 %v411, %v2157
  %2159 = vmatmul.bf16.gmra.mxu0 %v1503
  %v2160 = vpop.f32.mrf.mxu0
  %v2161 = vadd.f32 %v411, %v2160
  %v2162 = vpop.f32.mrf.mxu0
  %v2163 = vadd.f32 %v411, %v2162
  %2164 = vmatmul.bf16.gmra.mxu0 %v1506
  %v2165 = vpop.f32.mrf.mxu0
  %v2166 = vadd.f32 %v411, %v2165
  %v2167 = vpop.f32.mrf.mxu0
  %v2168 = vadd.f32 %v411, %v2167
  %2169 = vmatmul.bf16.gmra.mxu0 %v1509
  %v2170 = vpop.f32.mrf.mxu0
  %v2171 = vadd.f32 %v411, %v2170
  %v2172 = vpop.f32.mrf.mxu0
  %v2173 = vadd.f32 %v411, %v2172
  %2174 = vmatmul.bf16.gmra.mxu0 %v1512
  %v2175 = vpop.f32.mrf.mxu0
  %v2176 = vadd.f32 %v411, %v2175
  %v2177 = vpop.f32.mrf.mxu0
  %v2178 = vadd.f32 %v411, %v2177
  %2179 = vmatmul.bf16.gmra.mxu0 %v1515
  %v2180 = vpop.f32.mrf.mxu0
  %v2181 = vadd.f32 %v411, %v2180
  %v2182 = vpop.f32.mrf.mxu0
  %v2183 = vadd.f32 %v411, %v2182
  %2184 = vmatmul.bf16.gmra.mxu0 %v1518
  %v2185 = vpop.f32.mrf.mxu0
  %v2186 = vadd.f32 %v411, %v2185
  %v2187 = vpop.f32.mrf.mxu0
  %v2188 = vadd.f32 %v411, %v2187
  %2189 = vmatmul.bf16.gmra.mxu0 %v1521
  %v2190 = vpop.f32.mrf.mxu0
  %v2191 = vadd.f32 %v411, %v2190
  %v2192 = vpop.f32.mrf.mxu0
  %v2193 = vadd.f32 %v411, %v2192
  %2194 = vmatmul.bf16.gmra.mxu0 %v1524
  %v2195 = vpop.f32.mrf.mxu0
  %v2196 = vadd.f32 %v411, %v2195
  %v2197 = vpop.f32.mrf.mxu0
  %v2198 = vadd.f32 %v411, %v2197
  %2199 = vmatmul.bf16.gmra.mxu0 %v1527
  %v2200 = vpop.f32.mrf.mxu0
  %v2201 = vadd.f32 %v411, %v2200
  %v2202 = vpop.f32.mrf.mxu0
  %v2203 = vadd.f32 %v411, %v2202
  %2204 = vmatmul.bf16.gmra.mxu0 %v1530
  %v2205 = vpop.f32.mrf.mxu0
  %v2206 = vadd.f32 %v411, %v2205
  %v2207 = vpop.f32.mrf.mxu0
  %v2208 = vadd.f32 %v411, %v2207
  %2209 = vmatmul.bf16.gmra.mxu0 %v1533
  %v2210 = vpop.f32.mrf.mxu0
  %v2211 = vadd.f32 %v411, %v2210
  %v2212 = vpop.f32.mrf.mxu0
  %v2213 = vadd.f32 %v411, %v2212
  %2214 = vmatmul.bf16.gmra.mxu0 %v1536
  %v2215 = vpop.f32.mrf.mxu0
  %v2216 = vadd.f32 %v411, %v2215
  %v2217 = vpop.f32.mrf.mxu0
  %v2218 = vadd.f32 %v411, %v2217
  %2219 = vmatmul.bf16.gmra.mxu0 %v1539
  %v2220 = vpop.f32.mrf.mxu0
  %v2221 = vadd.f32 %v411, %v2220
  %v2222 = vpop.f32.mrf.mxu0
  %v2223 = vadd.f32 %v411, %v2222
  %2224 = vmatmul.bf16.gmra.mxu0 %v1542
  %v2225 = vpop.f32.mrf.mxu0
  %v2226 = vadd.f32 %v411, %v2225
  %v2227 = vpop.f32.mrf.mxu0
  %v2228 = vadd.f32 %v411, %v2227
  %2229 = vmatmul.bf16.gmra.mxu0 %v1545
  %v2230 = vpop.f32.mrf.mxu0
  %v2231 = vadd.f32 %v411, %v2230
  %v2232 = vpop.f32.mrf.mxu0
  %v2233 = vadd.f32 %v411, %v2232
  %2234 = vmatmul.bf16.gmra.mxu0 %v1548
  %v2235 = vpop.f32.mrf.mxu0
  %v2236 = vadd.f32 %v411, %v2235
  %v2237 = vpop.f32.mrf.mxu0
  %v2238 = vadd.f32 %v411, %v2237
  %2239 = vmatmul.bf16.gmra.mxu0 %v1551
  %v2240 = vpop.f32.mrf.mxu0
  %v2241 = vadd.f32 %v411, %v2240
  %v2242 = vpop.f32.mrf.mxu0
  %v2243 = vadd.f32 %v411, %v2242
  %2244 = vmatmul.bf16.gmra.mxu0 %v1554
  %v2245 = vpop.f32.mrf.mxu0
  %v2246 = vadd.f32 %v411, %v2245
  %v2247 = vpop.f32.mrf.mxu0
  %v2248 = vadd.f32 %v411, %v2247
  %2249 = vmatmul.bf16.gmra.mxu0 %v1557
  %v2250 = vpop.f32.mrf.mxu0
  %v2251 = vadd.f32 %v411, %v2250
  %v2252 = vpop.f32.mrf.mxu0
  %v2253 = vadd.f32 %v411, %v2252
  %2254 = vmatmul.bf16.gmra.mxu0 %v1560
  %v2255 = vpop.f32.mrf.mxu0
  %v2256 = vadd.f32 %v411, %v2255
  %v2257 = vpop.f32.mrf.mxu0
  %v2258 = vadd.f32 %v411, %v2257
  %2259 = vmatmul.bf16.gmra.mxu0 %v1563
  %v2260 = vpop.f32.mrf.mxu0
  %v2261 = vadd.f32 %v411, %v2260
  %v2262 = vpop.f32.mrf.mxu0
  %v2263 = vadd.f32 %v411, %v2262
  %2264 = vmatmul.bf16.gmra.mxu0 %v1566
  %v2265 = vpop.f32.mrf.mxu0
  %v2266 = vadd.f32 %v411, %v2265
  %v2267 = vpop.f32.mrf.mxu0
  %v2268 = vadd.f32 %v411, %v2267
  %2269 = vmatmul.bf16.gmra.mxu0 %v1569
  %v2270 = vpop.f32.mrf.mxu0
  %v2271 = vadd.f32 %v411, %v2270
  %v2272 = vpop.f32.mrf.mxu0
  %v2273 = vadd.f32 %v411, %v2272
  %2274 = vmatmul.bf16.gmra.mxu0 %v1572
  %v2275 = vpop.f32.mrf.mxu0
  %v2276 = vadd.f32 %v411, %v2275
  %v2277 = vpop.f32.mrf.mxu0
  %v2278 = vadd.f32 %v411, %v2277
  %2279 = vmatmul.bf16.gmra.mxu0 %v1575
  %v2280 = vpop.f32.mrf.mxu0
  %v2281 = vadd.f32 %v411, %v2280
  %v2282 = vpop.f32.mrf.mxu0
  %v2283 = vadd.f32 %v411, %v2282
  %2284 = vmatmul.bf16.gmra.mxu0 %v1578
  %v2285 = vpop.f32.mrf.mxu0
  %v2286 = vadd.f32 %v411, %v2285
  %v2287 = vpop.f32.mrf.mxu0
  %v2288 = vadd.f32 %v411, %v2287
  %2289 = vmatmul.bf16.gmra.mxu0 %v1581
  %v2290 = vpop.f32.mrf.mxu0
  %v2291 = vadd.f32 %v411, %v2290
  %v2292 = vpop.f32.mrf.mxu0
  %v2293 = vadd.f32 %v411, %v2292
  %2294 = vmatmul.bf16.gmra.mxu0 %v1584
  %v2295 = vpop.f32.mrf.mxu0
  %v2296 = vadd.f32 %v411, %v2295
  %v2297 = vpop.f32.mrf.mxu0
  %v2298 = vadd.f32 %v411, %v2297
  %2299 = vmatmul.bf16.gmra.mxu0 %v1587
  %v2300 = vpop.f32.mrf.mxu0
  %v2301 = vadd.f32 %v411, %v2300
  %v2302 = vpop.f32.mrf.mxu0
  %v2303 = vadd.f32 %v411, %v2302
  %2304 = vmatmul.bf16.gmra.mxu0 %v1590
  %v2305 = vpop.f32.mrf.mxu0
  %v2306 = vadd.f32 %v411, %v2305
  %v2307 = vpop.f32.mrf.mxu0
  %v2308 = vadd.f32 %v411, %v2307
  %2309 = vmatmul.bf16.gmra.mxu0 %v1593
  %v2310 = vpop.f32.mrf.mxu0
  %v2311 = vadd.f32 %v411, %v2310
  %v2312 = vpop.f32.mrf.mxu0
  %v2313 = vadd.f32 %v411, %v2312
  %2314 = vmatmul.bf16.gmra.mxu0 %v1596
  %v2315 = vpop.f32.mrf.mxu0
  %v2316 = vadd.f32 %v411, %v2315
  %v2317 = vpop.f32.mrf.mxu0
  %v2318 = vadd.f32 %v411, %v2317
  %2319 = vmatmul.bf16.gmra.mxu0 %v1599
  %v2320 = vpop.f32.mrf.mxu0
  %v2321 = vadd.f32 %v411, %v2320
  %v2322 = vpop.f32.mrf.mxu0
  %v2323 = vadd.f32 %v411, %v2322
  %2324 = vmatmul.bf16.gmra.mxu0 %v1602
  %v2325 = vpop.f32.mrf.mxu0
  %v2326 = vadd.f32 %v411, %v2325
  %v2327 = vpop.f32.mrf.mxu0
  %v2328 = vadd.f32 %v411, %v2327
  %2329 = vmatmul.bf16.gmra.mxu0 %v1605
  %v2330 = vpop.f32.mrf.mxu0
  %v2331 = vadd.f32 %v411, %v2330
  %v2332 = vpop.f32.mrf.mxu0
  %v2333 = vadd.f32 %v411, %v2332
  %2334 = vmatmul.bf16.gmra.mxu0 %v1608
  %v2335 = vpop.f32.mrf.mxu0
  %v2336 = vadd.f32 %v411, %v2335
  %v2337 = vpop.f32.mrf.mxu0
  %v2338 = vadd.f32 %v411, %v2337
  %2339 = vmatmul.bf16.gmra.mxu0 %v1611
  %v2340 = vpop.f32.mrf.mxu0
  %v2341 = vadd.f32 %v411, %v2340
  %v2342 = vpop.f32.mrf.mxu0
  %v2343 = vadd.f32 %v411, %v2342
  %2344 = vmatmul.bf16.gmra.mxu0 %v1614
  %v2345 = vpop.f32.mrf.mxu0
  %v2346 = vadd.f32 %v411, %v2345
  %v2347 = vpop.f32.mrf.mxu0
  %v2348 = vadd.f32 %v411, %v2347
  %2349 = vmatmul.bf16.gmra.mxu0 %v1617
  %v2350 = vpop.f32.mrf.mxu0
  %v2351 = vadd.f32 %v411, %v2350
  %v2352 = vpop.f32.mrf.mxu0
  %v2353 = vadd.f32 %v411, %v2352
  %2354 = vmatmul.bf16.gmra.mxu0 %v1620
  %v2355 = vpop.f32.mrf.mxu0
  %v2356 = vadd.f32 %v411, %v2355
  %v2357 = vpop.f32.mrf.mxu0
  %v2358 = vadd.f32 %v411, %v2357
  %2359 = vmatmul.bf16.gmra.mxu0 %v1623
  %v2360 = vpop.f32.mrf.mxu0
  %v2361 = vadd.f32 %v411, %v2360
  %v2362 = vpop.f32.mrf.mxu0
  %v2363 = vadd.f32 %v411, %v2362
  %2364 = vmatmul.bf16.gmra.mxu0 %v1626
  %v2365 = vpop.f32.mrf.mxu0
  %v2366 = vadd.f32 %v411, %v2365
  %v2367 = vpop.f32.mrf.mxu0
  %v2368 = vadd.f32 %v411, %v2367
  %2369 = vmatmul.bf16.gmra.mxu0 %v1629
  %v2370 = vpop.f32.mrf.mxu0
  %v2371 = vadd.f32 %v411, %v2370
  %v2372 = vpop.f32.mrf.mxu0
  %v2373 = vadd.f32 %v411, %v2372
  %2374 = vmatmul.bf16.gmra.mxu0 %v1632
  %v2375 = vpop.f32.mrf.mxu0
  %v2376 = vadd.f32 %v411, %v2375
  %v2377 = vpop.f32.mrf.mxu0
  %v2378 = vadd.f32 %v411, %v2377
  %2379 = vmatmul.bf16.gmra.mxu0 %v1635
  %v2380 = vpop.f32.mrf.mxu0
  %v2381 = vadd.f32 %v411, %v2380
  %v2382 = vpop.f32.mrf.mxu0
  %v2383 = vadd.f32 %v411, %v2382
  %2384 = vmatmul.bf16.gmra.mxu0 %v1638
  %v2385 = vpop.f32.mrf.mxu0
  %v2386 = vadd.f32 %v411, %v2385
  %v2387 = vpop.f32.mrf.mxu0
  %v2388 = vadd.f32 %v411, %v2387
  %2389 = vmatmul.bf16.gmra.mxu0 %v1641
  %v2390 = vpop.f32.mrf.mxu0
  %v2391 = vadd.f32 %v411, %v2390
  %v2392 = vpop.f32.mrf.mxu0
  %v2393 = vadd.f32 %v411, %v2392
  %2394 = vmatmul.bf16.gmra.mxu0 %v1644
  %v2395 = vpop.f32.mrf.mxu0
  %v2396 = vadd.f32 %v411, %v2395
  %v2397 = vpop.f32.mrf.mxu0
  %v2398 = vadd.f32 %v411, %v2397
  %2399 = vmatmul.bf16.gmra.mxu0 %v1647
  %v2400 = vpop.f32.mrf.mxu0
  %v2401 = vadd.f32 %v411, %v2400
  %v2402 = vpop.f32.mrf.mxu0
  %v2403 = vadd.f32 %v411, %v2402
  %2404 = vmatmul.bf16.gmra.mxu0 %v1650
  %v2405 = vpop.f32.mrf.mxu0
  %v2406 = vadd.f32 %v411, %v2405
  %v2407 = vpop.f32.mrf.mxu0
  %v2408 = vadd.f32 %v411, %v2407
  %2409 = vmatmul.bf16.gmra.mxu0 %v1653
  %v2410 = vpop.f32.mrf.mxu0
  %v2411 = vadd.f32 %v411, %v2410
  %v2412 = vpop.f32.mrf.mxu0
  %v2413 = vadd.f32 %v411, %v2412
  %2414 = vmatmul.bf16.gmra.mxu0 %v1656
  %v2415 = vpop.f32.mrf.mxu0
  %v2416 = vadd.f32 %v411, %v2415
  %v2417 = vpop.f32.mrf.mxu0
  %v2418 = vadd.f32 %v411, %v2417
  %2419 = vmatmul.bf16.gmra.mxu0 %v1659
  %v2420 = vpop.f32.mrf.mxu0
  %v2421 = vadd.f32 %v411, %v2420
  %v2422 = vpop.f32.mrf.mxu0
  %v2423 = vadd.f32 %v411, %v2422
  %2424 = vmatmul.bf16.gmra.mxu0 %v1662
  %v2425 = vpop.f32.mrf.mxu0
  %v2426 = vadd.f32 %v411, %v2425
  %v2427 = vpop.f32.mrf.mxu0
  %v2428 = vadd.f32 %v411, %v2427
  %2429 = vmatmul.bf16.gmra.mxu0 %v1665
  %v2430 = vpop.f32.mrf.mxu0
  %v2431 = vadd.f32 %v411, %v2430
  %v2432 = vpop.f32.mrf.mxu0
  %v2433 = vadd.f32 %v411, %v2432
  %2434 = vmatmul.bf16.gmra.mxu0 %v1668
  %v2435 = vpop.f32.mrf.mxu0
  %v2436 = vadd.f32 %v411, %v2435
  %v2437 = vpop.f32.mrf.mxu0
  %v2438 = vadd.f32 %v411, %v2437
  %2439 = vmatmul.bf16.gmra.mxu0 %v1671
  %v2440 = vpop.f32.mrf.mxu0
  %v2441 = vadd.f32 %v411, %v2440
  %v2442 = vpop.f32.mrf.mxu0
  %v2443 = vadd.f32 %v411, %v2442
  %2444 = vmatmul.bf16.gmra.mxu0 %v1674
  %v2445 = vpop.f32.mrf.mxu0
  %v2446 = vadd.f32 %v411, %v2445
  %v2447 = vpop.f32.mrf.mxu0
  %v2448 = vadd.f32 %v411, %v2447
  %2449 = vmatmul.bf16.gmra.mxu0 %v1677
  %v2450 = vpop.f32.mrf.mxu0
  %v2451 = vadd.f32 %v411, %v2450
  %v2452 = vpop.f32.mrf.mxu0
  %v2453 = vadd.f32 %v411, %v2452
  %2454 = vmatmul.bf16.gmra.mxu0 %v1680
  %v2455 = vpop.f32.mrf.mxu0
  %v2456 = vadd.f32 %v411, %v2455
  %v2457 = vpop.f32.mrf.mxu0
  %v2458 = vadd.f32 %v411, %v2457
  %2459 = vmatmul.bf16.gmra.mxu0 %v1683
  %v2460 = vpop.f32.mrf.mxu0
  %v2461 = vadd.f32 %v411, %v2460
  %v2462 = vpop.f32.mrf.mxu0
  %v2463 = vadd.f32 %v411, %v2462
  %2464 = vmatmul.bf16.gmra.mxu0 %v1686
  %v2465 = vpop.f32.mrf.mxu0
  %v2466 = vadd.f32 %v411, %v2465
  %v2467 = vpop.f32.mrf.mxu0
  %v2468 = vadd.f32 %v411, %v2467
  %2469 = vmatmul.bf16.gmra.mxu0 %v1689
  %v2470 = vpop.f32.mrf.mxu0
  %v2471 = vadd.f32 %v411, %v2470
  %v2472 = vpop.f32.mrf.mxu0
  %v2473 = vadd.f32 %v411, %v2472
  %2474 = vmatmul.bf16.gmra.mxu0 %v1692
  %v2475 = vpop.f32.mrf.mxu0
  %v2476 = vadd.f32 %v411, %v2475
  %v2477 = vpop.f32.mrf.mxu0
  %v2478 = vadd.f32 %v411, %v2477
  %2479 = vmatmul.bf16.gmra.mxu0 %v1695
  %v2480 = vpop.f32.mrf.mxu0
  %v2481 = vadd.f32 %v411, %v2480
  %v2482 = vpop.f32.mrf.mxu0
  %v2483 = vadd.f32 %v411, %v2482
  %2484 = vmatmul.bf16.gmra.mxu0 %v1698
  %v2485 = vpop.f32.mrf.mxu0
  %v2486 = vadd.f32 %v411, %v2485
  %v2487 = vpop.f32.mrf.mxu0
  %v2488 = vadd.f32 %v411, %v2487
  %2489 = vmatmul.bf16.gmra.mxu0 %v1701
  %v2490 = vpop.f32.mrf.mxu0
  %v2491 = vadd.f32 %v411, %v2490
  %v2492 = vpop.f32.mrf.mxu0
  %v2493 = vadd.f32 %v411, %v2492
  %2494 = vmatmul.bf16.gmra.mxu0 %v1704
  %v2495 = vpop.f32.mrf.mxu0
  %v2496 = vadd.f32 %v411, %v2495
  %v2497 = vpop.f32.mrf.mxu0
  %v2498 = vadd.f32 %v411, %v2497
  %2499 = vmatmul.bf16.gmra.mxu0 %v1707
  %v2500 = vpop.f32.mrf.mxu0
  %v2501 = vadd.f32 %v411, %v2500
  %v2502 = vpop.f32.mrf.mxu0
  %v2503 = vadd.f32 %v411, %v2502
  %2504 = vmatmul.bf16.gmra.mxu0 %v1710
  %v2505 = vpop.f32.mrf.mxu0
  %v2506 = vadd.f32 %v411, %v2505
  %v2507 = vpop.f32.mrf.mxu0
  %v2508 = vadd.f32 %v411, %v2507
  %2509 = vmatmul.bf16.gmra.mxu0 %v1713
  %v2510 = vpop.f32.mrf.mxu0
  %v2511 = vadd.f32 %v411, %v2510
  %v2512 = vpop.f32.mrf.mxu0
  %v2513 = vadd.f32 %v411, %v2512
  %2514 = vmatmul.bf16.gmra.mxu0 %v1716
  %v2515 = vpop.f32.mrf.mxu0
  %v2516 = vadd.f32 %v411, %v2515
  %v2517 = vpop.f32.mrf.mxu0
  %v2518 = vadd.f32 %v411, %v2517
  %2519 = vmatmul.bf16.gmra.mxu0 %v1719
  %v2520 = vpop.f32.mrf.mxu0
  %v2521 = vadd.f32 %v411, %v2520
  %v2522 = vpop.f32.mrf.mxu0
  %v2523 = vadd.f32 %v411, %v2522
  %2524 = vmatmul.bf16.gmra.mxu0 %v1722
  %v2525 = vpop.f32.mrf.mxu0
  %v2526 = vadd.f32 %v411, %v2525
  %v2527 = vpop.f32.mrf.mxu0
  %v2528 = vadd.f32 %v411, %v2527
  %2529 = vmatmul.bf16.gmra.mxu0 %v1725
  %v2530 = vpop.f32.mrf.mxu0
  %v2531 = vadd.f32 %v411, %v2530
  %v2532 = vpop.f32.mrf.mxu0
  %v2533 = vadd.f32 %v411, %v2532
  %2534 = vmatmul.bf16.gmra.mxu0 %v1728
  %v2535 = vpop.f32.mrf.mxu0
  %v2536 = vadd.f32 %v411, %v2535
  %v2537 = vpop.f32.mrf.mxu0
  %v2538 = vadd.f32 %v411, %v2537
  %2539 = vmatmul.bf16.gmra.mxu0 %v1731
  %v2540 = vpop.f32.mrf.mxu0
  %v2541 = vadd.f32 %v411, %v2540
  %v2542 = vpop.f32.mrf.mxu0
  %v2543 = vadd.f32 %v411, %v2542
  %2544 = vmatmul.bf16.gmra.mxu0 %v1734
  %v2545 = vpop.f32.mrf.mxu0
  %v2546 = vadd.f32 %v411, %v2545
  %v2547 = vpop.f32.mrf.mxu0
  %v2548 = vadd.f32 %v411, %v2547
  %2549 = vmatmul.bf16.gmra.mxu0 %v1737
  %v2550 = vpop.f32.mrf.mxu0
  %v2551 = vadd.f32 %v411, %v2550
  %v2552 = vpop.f32.mrf.mxu0
  %v2553 = vadd.f32 %v411, %v2552
  %2554 = vmatmul.bf16.gmra.mxu0 %v1740
  %v2555 = vpop.f32.mrf.mxu0
  %v2556 = vadd.f32 %v411, %v2555
  %v2557 = vpop.f32.mrf.mxu0
  %v2558 = vadd.f32 %v411, %v2557
  %2559 = vmatmul.bf16.gmra.mxu0 %v1743
  %v2560 = vpop.f32.mrf.mxu0
  %v2561 = vadd.f32 %v411, %v2560
  %v2562 = vpop.f32.mrf.mxu0
  %v2563 = vadd.f32 %v411, %v2562
  %2564 = vmatmul.bf16.gmra.mxu0 %v1746
  %v2565 = vpop.f32.mrf.mxu0
  %v2566 = vadd.f32 %v411, %v2565
  %v2567 = vpop.f32.mrf.mxu0
  %v2568 = vadd.f32 %v411, %v2567
  %2569 = vmatmul.bf16.gmra.mxu0 %v1749
  %v2570 = vpop.f32.mrf.mxu0
  %v2571 = vadd.f32 %v411, %v2570
  %v2572 = vpop.f32.mrf.mxu0
  %v2573 = vadd.f32 %v411, %v2572
  %2574 = vmatmul.bf16.gmra.mxu0 %v1752
  %v2575 = vpop.f32.mrf.mxu0
  %v2576 = vadd.f32 %v411, %v2575
  %v2577 = vpop.f32.mrf.mxu0
  %v2578 = vadd.f32 %v411, %v2577
  %2579 = vmatmul.bf16.gmra.mxu0 %v1755
  %v2580 = vpop.f32.mrf.mxu0
  %v2581 = vadd.f32 %v411, %v2580
  %v2582 = vpop.f32.mrf.mxu0
  %v2583 = vadd.f32 %v411, %v2582
  %2584 = vmatmul.bf16.gmra.mxu0 %v1758
  %v2585 = vpop.f32.mrf.mxu0
  %v2586 = vadd.f32 %v411, %v2585
  %v2587 = vpop.f32.mrf.mxu0
  %v2588 = vadd.f32 %v411, %v2587
  %2589 = vmatmul.bf16.gmra.mxu0 %v1761
  %v2590 = vpop.f32.mrf.mxu0
  %v2591 = vadd.f32 %v411, %v2590
  %v2592 = vpop.f32.mrf.mxu0
  %v2593 = vadd.f32 %v411, %v2592
  %2594 = vmatmul.bf16.gmra.mxu0 %v1764
  %v2595 = vpop.f32.mrf.mxu0
  %v2596 = vadd.f32 %v411, %v2595
  %v2597 = vpop.f32.mrf.mxu0
  %v2598 = vadd.f32 %v411, %v2597
  %2599 = vmatmul.bf16.gmra.mxu0 %v1767
  %v2600 = vpop.f32.mrf.mxu0
  %v2601 = vadd.f32 %v411, %v2600
  %v2602 = vpop.f32.mrf.mxu0
  %v2603 = vadd.f32 %v411, %v2602
  %2604 = vmatmul.bf16.gmra.mxu0 %v1770
  %v2605 = vpop.f32.mrf.mxu0
  %v2606 = vadd.f32 %v411, %v2605
  %v2607 = vpop.f32.mrf.mxu0
  %v2608 = vadd.f32 %v411, %v2607
  %2609 = vmatmul.bf16.gmra.mxu0 %v1773
  %v2610 = vpop.f32.mrf.mxu0
  %v2611 = vadd.f32 %v411, %v2610
  %v2612 = vpop.f32.mrf.mxu0
  %v2613 = vadd.f32 %v411, %v2612
  %2614 = vmatmul.bf16.gmra.mxu0 %v1776
  %v2615 = vpop.f32.mrf.mxu0
  %v2616 = vadd.f32 %v411, %v2615
  %v2617 = vpop.f32.mrf.mxu0
  %v2618 = vadd.f32 %v411, %v2617
  %2619 = vmatmul.bf16.gmra.mxu0 %v1779
  %v2620 = vpop.f32.mrf.mxu0
  %v2621 = vadd.f32 %v411, %v2620
  %v2622 = vpop.f32.mrf.mxu0
  %v2623 = vadd.f32 %v411, %v2622
  %2624 = vmatmul.bf16.gmra.mxu0 %v1782
  %v2625 = vpop.f32.mrf.mxu0
  %v2626 = vadd.f32 %v411, %v2625
  %v2627 = vpop.f32.mrf.mxu0
  %v2628 = vadd.f32 %v411, %v2627
  %2629 = vmatmul.bf16.gmra.mxu0 %v1785
  %v2630 = vpop.f32.mrf.mxu0
  %v2631 = vadd.f32 %v411, %v2630
  %v2632 = vpop.f32.mrf.mxu0
  %v2633 = vadd.f32 %v411, %v2632
  %2634 = vmatmul.bf16.gmra.mxu0 %v1788
  %v2635 = vpop.f32.mrf.mxu0
  %v2636 = vadd.f32 %v411, %v2635
  %v2637 = vpop.f32.mrf.mxu0
  %v2638 = vadd.f32 %v411, %v2637
  %2639 = vmatmul.bf16.gmra.mxu0 %v1791
  %v2640 = vpop.f32.mrf.mxu0
  %v2641 = vadd.f32 %v411, %v2640
  %v2642 = vpop.f32.mrf.mxu0
  %v2643 = vadd.f32 %v411, %v2642
  %2644 = vmatmul.bf16.gmra.mxu0 %v1794
  %v2645 = vpop.f32.mrf.mxu0
  %v2646 = vadd.f32 %v411, %v2645
  %v2647 = vpop.f32.mrf.mxu0
  %v2648 = vadd.f32 %v411, %v2647
  %2649 = vmatmul.bf16.gmra.mxu0 %v1797
  %v2650 = vpop.f32.mrf.mxu0
  %v2651 = vadd.f32 %v411, %v2650
  %v2652 = vpop.f32.mrf.mxu0
  %v2653 = vadd.f32 %v411, %v2652
  %2654 = vmatmul.bf16.gmra.mxu0 %v1800
  %v2655 = vpop.f32.mrf.mxu0
  %v2656 = vadd.f32 %v411, %v2655
  %v2657 = vpop.f32.mrf.mxu0
  %v2658 = vadd.f32 %v411, %v2657
  %2659 = vmatmul.bf16.gmra.mxu0 %v1803
  %v2660 = vpop.f32.mrf.mxu0
  %v2661 = vadd.f32 %v411, %v2660
  %v2662 = vpop.f32.mrf.mxu0
  %v2663 = vadd.f32 %v411, %v2662
  %2664 = vmatmul.bf16.gmra.mxu0 %v1806
  %v2665 = vpop.f32.mrf.mxu0
  %v2666 = vadd.f32 %v411, %v2665
  %v2667 = vpop.f32.mrf.mxu0
  %v2668 = vadd.f32 %v411, %v2667
  %2669 = vmatmul.bf16.gmra.mxu0 %v1809
  %v2670 = vpop.f32.mrf.mxu0
  %v2671 = vadd.f32 %v411, %v2670
  %v2672 = vpop.f32.mrf.mxu0
  %v2673 = vadd.f32 %v411, %v2672
  %2674 = vmatmul.bf16.gmra.mxu0 %v1812
  %v2675 = vpop.f32.mrf.mxu0
  %v2676 = vadd.f32 %v411, %v2675
  %v2677 = vpop.f32.mrf.mxu0
  %v2678 = vadd.f32 %v411, %v2677
  %2679 = vmatmul.bf16.gmra.mxu0 %v1815
  %v2680 = vpop.f32.mrf.mxu0
  %v2681 = vadd.f32 %v411, %v2680
  %v2682 = vpop.f32.mrf.mxu0
  %v2683 = vadd.f32 %v411, %v2682
  %2684 = vmatmul.bf16.gmra.mxu0 %v1818
  %v2685 = vpop.f32.mrf.mxu0
  %v2686 = vadd.f32 %v411, %v2685
  %v2687 = vpop.f32.mrf.mxu0
  %v2688 = vadd.f32 %v411, %v2687
  %2689 = vmatmul.bf16.gmra.mxu0 %v1821
  %v2690 = vpop.f32.mrf.mxu0
  %v2691 = vadd.f32 %v411, %v2690
  %v2692 = vpop.f32.mrf.mxu0
  %v2693 = vadd.f32 %v411, %v2692
  %2694 = vmatmul.bf16.gmra.mxu0 %v1824
  %v2695 = vpop.f32.mrf.mxu0
  %v2696 = vadd.f32 %v411, %v2695
  %v2697 = vpop.f32.mrf.mxu0
  %v2698 = vadd.f32 %v411, %v2697
  %2699 = vmatmul.bf16.gmra.mxu0 %v1827
  %v2700 = vpop.f32.mrf.mxu0
  %v2701 = vadd.f32 %v411, %v2700
  %v2702 = vpop.f32.mrf.mxu0
  %v2703 = vadd.f32 %v411, %v2702
  %2704 = vmatmul.bf16.gmra.mxu0 %v1830
  %v2705 = vpop.f32.mrf.mxu0
  %v2706 = vadd.f32 %v411, %v2705
  %v2707 = vpop.f32.mrf.mxu0
  %v2708 = vadd.f32 %v411, %v2707
  %2709 = vmatmul.bf16.gmra.mxu0 %v1833
  %v2710 = vpop.f32.mrf.mxu0
  %v2711 = vadd.f32 %v411, %v2710
  %v2712 = vpop.f32.mrf.mxu0
  %v2713 = vadd.f32 %v411, %v2712
  %2714 = vmatmul.bf16.gmra.mxu0 %v1836
  %v2715 = vpop.f32.mrf.mxu0
  %v2716 = vadd.f32 %v411, %v2715
  %v2717 = vpop.f32.mrf.mxu0
  %v2718 = vadd.f32 %v411, %v2717
  %2719 = vmatmul.bf16.gmra.mxu0 %v1839
  %v2720 = vpop.f32.mrf.mxu0
  %v2721 = vadd.f32 %v411, %v2720
  %v2722 = vpop.f32.mrf.mxu0
  %v2723 = vadd.f32 %v411, %v2722
  %2724 = vmatmul.bf16.gmra.mxu0 %v1842
  %v2725 = vpop.f32.mrf.mxu0
  %v2726 = vadd.f32 %v411, %v2725
  %v2727 = vpop.f32.mrf.mxu0
  %v2728 = vadd.f32 %v411, %v2727
  %2729 = vmatmul.bf16.gmra.mxu0 %v1845
  %v2730 = vpop.f32.mrf.mxu0
  %v2731 = vadd.f32 %v411, %v2730
  %v2732 = vpop.f32.mrf.mxu0
  %v2733 = vadd.f32 %v411, %v2732
  %2734 = vmatmul.bf16.gmra.mxu0 %v1848
  %v2735 = vpop.f32.mrf.mxu0
  %v2736 = vadd.f32 %v411, %v2735
  %v2737 = vpop.f32.mrf.mxu0
  %v2738 = vadd.f32 %v411, %v2737
  %2739 = vmatmul.bf16.gmra.mxu0 %v1851
  %v2740 = vpop.f32.mrf.mxu0
  %v2741 = vadd.f32 %v411, %v2740
  %v2742 = vpop.f32.mrf.mxu0
  %v2743 = vadd.f32 %v411, %v2742
  %2744 = vmatmul.bf16.gmra.mxu0 %v1854
  %v2745 = vpop.f32.mrf.mxu0
  %v2746 = vadd.f32 %v411, %v2745
  %v2747 = vpop.f32.mrf.mxu0
  %v2748 = vadd.f32 %v411, %v2747
  %2749 = vmatmul.bf16.gmra.mxu0 %v1857
  %v2750 = vpop.f32.mrf.mxu0
  %v2751 = vadd.f32 %v411, %v2750
  %v2752 = vpop.f32.mrf.mxu0
  %v2753 = vadd.f32 %v411, %v2752
  %2754 = vmatmul.bf16.gmra.mxu0 %v1860
  %v2755 = vpop.f32.mrf.mxu0
  %v2756 = vadd.f32 %v411, %v2755
  %v2757 = vpop.f32.mrf.mxu0
  %v2758 = vadd.f32 %v411, %v2757
  %2759 = vmatmul.bf16.gmra.mxu0 %v1863
  %v2760 = vpop.f32.mrf.mxu0
  %v2761 = vadd.f32 %v411, %v2760
  %v2762 = vpop.f32.mrf.mxu0
  %v2763 = vadd.f32 %v411, %v2762
  %2764 = vmatmul.bf16.gmra.mxu0 %v1866
  %v2765 = vpop.f32.mrf.mxu0
  %v2766 = vadd.f32 %v411, %v2765
  %v2767 = vpop.f32.mrf.mxu0
  %v2768 = vadd.f32 %v411, %v2767
  %2769 = vmatmul.bf16.gmra.mxu0 %v1869
  %v2770 = vpop.f32.mrf.mxu0
  %v2771 = vadd.f32 %v411, %v2770
  %v2772 = vpop.f32.mrf.mxu0
  %v2773 = vadd.f32 %v411, %v2772
  %2774 = vmatmul.bf16.gmra.mxu0 %v1872
  %v2775 = vpop.f32.mrf.mxu0
  %v2776 = vadd.f32 %v411, %v2775
  %v2777 = vpop.f32.mrf.mxu0
  %v2778 = vadd.f32 %v411, %v2777
  %2779 = vmatmul.bf16.gmra.mxu0 %v1875
  %v2780 = vpop.f32.mrf.mxu0
  %v2781 = vadd.f32 %v411, %v2780
  %v2782 = vpop.f32.mrf.mxu0
  %v2783 = vadd.f32 %v411, %v2782
  %2784 = vmatmul.bf16.gmra.mxu0 %v1878
  %v2785 = vpop.f32.mrf.mxu0
  %v2786 = vadd.f32 %v411, %v2785
  %v2787 = vpop.f32.mrf.mxu0
  %v2788 = vadd.f32 %v411, %v2787
  %2789 = vmatmul.bf16.gmra.mxu0 %v1881
  %v2790 = vpop.f32.mrf.mxu0
  %v2791 = vadd.f32 %v411, %v2790
  %v2792 = vpop.f32.mrf.mxu0
  %v2793 = vadd.f32 %v411, %v2792
  %2794 = vmatmul.bf16.gmra.mxu0 %v1884
  %v2795 = vpop.f32.mrf.mxu0
  %v2796 = vadd.f32 %v411, %v2795
  %v2797 = vpop.f32.mrf.mxu0
  %v2798 = vadd.f32 %v411, %v2797
  %2799 = vmatmul.bf16.gmra.mxu0 %v1887
  %v2800 = vpop.f32.mrf.mxu0
  %v2801 = vadd.f32 %v411, %v2800
  %v2802 = vpop.f32.mrf.mxu0
  %v2803 = vadd.f32 %v411, %v2802
  %2804 = vmatmul.bf16.gmra.mxu0 %v1890
  %v2805 = vpop.f32.mrf.mxu0
  %v2806 = vadd.f32 %v411, %v2805
  %v2807 = vpop.f32.mrf.mxu0
  %v2808 = vadd.f32 %v411, %v2807
  %2809 = vmatmul.bf16.gmra.mxu0 %v1893
  %v2810 = vpop.f32.mrf.mxu0
  %v2811 = vadd.f32 %v411, %v2810
  %v2812 = vpop.f32.mrf.mxu0
  %v2813 = vadd.f32 %v411, %v2812
  %2814 = vmatmul.bf16.gmra.mxu0 %v1896
  %v2815 = vpop.f32.mrf.mxu0
  %v2816 = vadd.f32 %v411, %v2815
  %v2817 = vpop.f32.mrf.mxu0
  %v2818 = vadd.f32 %v411, %v2817
  %2819 = vmatmul.bf16.gmra.mxu0 %v1899
  %v2820 = vpop.f32.mrf.mxu0
  %v2821 = vadd.f32 %v411, %v2820
  %v2822 = vpop.f32.mrf.mxu0
  %v2823 = vadd.f32 %v411, %v2822
  %2824 = vmatmul.bf16.gmra.mxu0 %v1902
  %v2825 = vpop.f32.mrf.mxu0
  %v2826 = vadd.f32 %v411, %v2825
  %v2827 = vpop.f32.mrf.mxu0
  %v2828 = vadd.f32 %v411, %v2827
  %2829 = vmatmul.bf16.gmra.mxu0 %v1905
  %v2830 = vpop.f32.mrf.mxu0
  %v2831 = vadd.f32 %v411, %v2830
  %v2832 = vpop.f32.mrf.mxu0
  %v2833 = vadd.f32 %v411, %v2832
  %2834 = vmatmul.bf16.gmra.mxu0 %v1908
  %v2835 = vpop.f32.mrf.mxu0
  %v2836 = vadd.f32 %v411, %v2835
  %v2837 = vpop.f32.mrf.mxu0
  %v2838 = vadd.f32 %v411, %v2837
  %2839 = vmatmul.bf16.gmra.mxu0 %v1911
  %v2840 = vpop.f32.mrf.mxu0
  %v2841 = vadd.f32 %v411, %v2840
  %v2842 = vpop.f32.mrf.mxu0
  %v2843 = vadd.f32 %v411, %v2842
  %2844 = vmatmul.bf16.gmra.mxu0 %v1914
  %v2845 = vpop.f32.mrf.mxu0
  %v2846 = vadd.f32 %v411, %v2845
  %v2847 = vpop.f32.mrf.mxu0
  %v2848 = vadd.f32 %v411, %v2847
  %2849 = vmatmul.bf16.gmra.mxu0 %v1917
  %v2850 = vpop.f32.mrf.mxu0
  %v2851 = vadd.f32 %v411, %v2850
  %v2852 = vpop.f32.mrf.mxu0
  %v2853 = vadd.f32 %v411, %v2852
  %2854 = vmatmul.bf16.gmra.mxu0 %v1920
  %v2855 = vpop.f32.mrf.mxu0
  %v2856 = vadd.f32 %v411, %v2855
  %v2857 = vpop.f32.mrf.mxu0
  %v2858 = vadd.f32 %v411, %v2857
  %2859 = vmatmul.bf16.gmra.mxu0 %v1923
  %v2860 = vpop.f32.mrf.mxu0
  %v2861 = vadd.f32 %v411, %v2860
  %v2862 = vpop.f32.mrf.mxu0
  %v2863 = vadd.f32 %v411, %v2862
  %2864 = vmatmul.bf16.gmra.mxu0 %v1926
  %v2865 = vpop.f32.mrf.mxu0
  %v2866 = vadd.f32 %v411, %v2865
  %v2867 = vpop.f32.mrf.mxu0
  %v2868 = vadd.f32 %v411, %v2867
  %2869 = vmatmul.bf16.gmra.mxu0 %v1929
  %v2870 = vpop.f32.mrf.mxu0
  %v2871 = vadd.f32 %v411, %v2870
  %v2872 = vpop.f32.mrf.mxu0
  %v2873 = vadd.f32 %v411, %v2872
  %2874 = vmatmul.bf16.gmra.mxu0 %v1932
  %v2875 = vpop.f32.mrf.mxu0
  %v2876 = vadd.f32 %v411, %v2875
  %v2877 = vpop.f32.mrf.mxu0
  %v2878 = vadd.f32 %v411, %v2877
  %2879 = vmatmul.bf16.gmra.mxu0 %v1935
  %v2880 = vpop.f32.mrf.mxu0
  %v2881 = vadd.f32 %v411, %v2880
  %v2882 = vpop.f32.mrf.mxu0
  %v2883 = vadd.f32 %v411, %v2882
  %2884 = vmatmul.bf16.gmra.mxu0 %v1938
  %v2885 = vpop.f32.mrf.mxu0
  %v2886 = vadd.f32 %v411, %v2885
  %v2887 = vpop.f32.mrf.mxu0
  %v2888 = vadd.f32 %v411, %v2887
  %2889 = vmatmul.bf16.gmra.mxu0 %v1941
  %v2890 = vpop.f32.mrf.mxu0
  %v2891 = vadd.f32 %v411, %v2890
  %v2892 = vpop.f32.mrf.mxu0
  %v2893 = vadd.f32 %v411, %v2892
  %2894 = vmatmul.bf16.gmra.mxu0 %v1944
  %v2895 = vpop.f32.mrf.mxu0
  %v2896 = vadd.f32 %v411, %v2895
  %v2897 = vpop.f32.mrf.mxu0
  %v2898 = vadd.f32 %v411, %v2897
  %2899 = vmatmul.bf16.gmra.mxu0 %v1947
  %v2900 = vpop.f32.mrf.mxu0
  %v2901 = vadd.f32 %v411, %v2900
  %v2902 = vpop.f32.mrf.mxu0
  %v2903 = vadd.f32 %v411, %v2902
  %2904 = vmatmul.bf16.gmra.mxu0 %v1950
  %v2905 = vpop.f32.mrf.mxu0
  %v2906 = vadd.f32 %v411, %v2905
  %v2907 = vpop.f32.mrf.mxu0
  %v2908 = vadd.f32 %v411, %v2907
  %2909 = vmatmul.bf16.gmra.mxu0 %v1953
  %v2910 = vpop.f32.mrf.mxu0
  %v2911 = vadd.f32 %v411, %v2910
  %v2912 = vpop.f32.mrf.mxu0
  %v2913 = vadd.f32 %v411, %v2912
  %2914 = vmatmul.bf16.gmra.mxu0 %v1956
  %v2915 = vpop.f32.mrf.mxu0
  %v2916 = vadd.f32 %v411, %v2915
  %v2917 = vpop.f32.mrf.mxu0
  %v2918 = vadd.f32 %v411, %v2917
  %2919 = vmatmul.bf16.gmra.mxu0 %v1959
  %v2920 = vpop.f32.mrf.mxu0
  %v2921 = vadd.f32 %v411, %v2920
  %v2922 = vpop.f32.mrf.mxu0
  %v2923 = vadd.f32 %v411, %v2922
  %2924 = vmatmul.bf16.gmra.mxu0 %v1962
  %v2925 = vpop.f32.mrf.mxu0
  %v2926 = vadd.f32 %v411, %v2925
  %v2927 = vpop.f32.mrf.mxu0
  %v2928 = vadd.f32 %v411, %v2927
  %2929 = vmatmul.bf16.gmra.mxu0 %v1965
  %v2930 = vpop.f32.mrf.mxu0
  %v2931 = vadd.f32 %v411, %v2930
  %v2932 = vpop.f32.mrf.mxu0
  %v2933 = vadd.f32 %v411, %v2932
  %2934 = vmatmul.bf16.gmra.mxu0 %v1968
  %v2935 = vpop.f32.mrf.mxu0
  %v2936 = vadd.f32 %v411, %v2935
  %v2937 = vpop.f32.mrf.mxu0
  %v2938 = vadd.f32 %v411, %v2937
  %2939 = vmatmul.bf16.gmra.mxu0 %v1971
  %v2940 = vpop.f32.mrf.mxu0
  %v2941 = vadd.f32 %v411, %v2940
  %v2942 = vpop.f32.mrf.mxu0
  %v2943 = vadd.f32 %v411, %v2942
  %2944 = vmatmul.bf16.gmra.mxu0 %v1974
  %v2945 = vpop.f32.mrf.mxu0
  %v2946 = vadd.f32 %v411, %v2945
  %v2947 = vpop.f32.mrf.mxu0
  %v2948 = vadd.f32 %v411, %v2947
  %2949 = vmatmul.bf16.gmra.mxu0 %v1977
  %v2950 = vpop.f32.mrf.mxu0
  %v2951 = vadd.f32 %v411, %v2950
  %v2952 = vpop.f32.mrf.mxu0
  %v2953 = vadd.f32 %v411, %v2952
  %2954 = vdwg.mxu0
  %v2955 = vmax.f32 %v1996, 0.0
  %v2956 = vmax.f32 %v1998, 0.0
  %v2957 = vmax.f32 %v2001, 0.0
  %v2958 = vmax.f32 %v2003, 0.0
  %v2959 = vmax.f32 %v2006, 0.0
  %v2960 = vmax.f32 %v2008, 0.0
  %v2961 = vmax.f32 %v2011, 0.0
  %v2962 = vmax.f32 %v2013, 0.0
  %v2963 = vmax.f32 %v2016, 0.0
  %v2964 = vmax.f32 %v2018, 0.0
  %v2965 = vmax.f32 %v2021, 0.0
  %v2966 = vmax.f32 %v2023, 0.0
  %v2967 = vmax.f32 %v2026, 0.0
  %v2968 = vmax.f32 %v2028, 0.0
  %v2969 = vmax.f32 %v2031, 0.0
  %v2970 = vmax.f32 %v2033, 0.0
  %v2971 = vmax.f32 %v2036, 0.0
  %v2972 = vmax.f32 %v2038, 0.0
  %v2973 = vmax.f32 %v2041, 0.0
  %v2974 = vmax.f32 %v2043, 0.0
  %v2975 = vmax.f32 %v2046, 0.0
  %v2976 = vmax.f32 %v2048, 0.0
  %v2977 = vmax.f32 %v2051, 0.0
  %v2978 = vmax.f32 %v2053, 0.0
  %v2979 = vmax.f32 %v2056, 0.0
  %v2980 = vmax.f32 %v2058, 0.0
  %v2981 = vmax.f32 %v2061, 0.0
  %v2982 = vmax.f32 %v2063, 0.0
  %v2983 = vmax.f32 %v2066, 0.0
  %v2984 = vmax.f32 %v2068, 0.0
  %v2985 = vmax.f32 %v2071, 0.0
  %v2986 = vmax.f32 %v2073, 0.0
  %v2987 = vmax.f32 %v2076, 0.0
  %v2988 = vmax.f32 %v2078, 0.0
  %v2989 = vmax.f32 %v2081, 0.0
  %v2990 = vmax.f32 %v2083, 0.0
  %v2991 = vmax.f32 %v2086, 0.0
  %v2992 = vmax.f32 %v2088, 0.0
  %v2993 = vmax.f32 %v2091, 0.0
  %v2994 = vmax.f32 %v2093, 0.0
  %v2995 = vmax.f32 %v2096, 0.0
  %v2996 = vmax.f32 %v2098, 0.0
  %v2997 = vmax.f32 %v2101, 0.0
  %v2998 = vmax.f32 %v2103, 0.0
  %v2999 = vmax.f32 %v2106, 0.0
  %v3000 = vmax.f32 %v2108, 0.0
  %v3001 = vmax.f32 %v2111, 0.0
  %v3002 = vmax.f32 %v2113, 0.0
  %v3003 = vmax.f32 %v2116, 0.0
  %v3004 = vmax.f32 %v2118, 0.0
  %v3005 = vmax.f32 %v2121, 0.0
  %v3006 = vmax.f32 %v2123, 0.0
  %v3007 = vmax.f32 %v2126, 0.0
  %v3008 = vmax.f32 %v2128, 0.0
  %v3009 = vmax.f32 %v2131, 0.0
  %v3010 = vmax.f32 %v2133, 0.0
  %v3011 = vmax.f32 %v2136, 0.0
  %v3012 = vmax.f32 %v2138, 0.0
  %v3013 = vmax.f32 %v2141, 0.0
  %v3014 = vmax.f32 %v2143, 0.0
  %v3015 = vmax.f32 %v2146, 0.0
  %v3016 = vmax.f32 %v2148, 0.0
  %v3017 = vmax.f32 %v2151, 0.0
  %v3018 = vmax.f32 %v2153, 0.0
  %v3019 = vmax.f32 %v2156, 0.0
  %v3020 = vmax.f32 %v2158, 0.0
  %v3021 = vmax.f32 %v2161, 0.0
  %v3022 = vmax.f32 %v2163, 0.0
  %v3023 = vmax.f32 %v2166, 0.0
  %v3024 = vmax.f32 %v2168, 0.0
  %v3025 = vmax.f32 %v2171, 0.0
  %v3026 = vmax.f32 %v2173, 0.0
  %v3027 = vmax.f32 %v2176, 0.0
  %v3028 = vmax.f32 %v2178, 0.0
  %v3029 = vmax.f32 %v2181, 0.0
  %v3030 = vmax.f32 %v2183, 0.0
  %v3031 = vmax.f32 %v2186, 0.0
  %v3032 = vmax.f32 %v2188, 0.0
  %v3033 = vmax.f32 %v2191, 0.0
  %v3034 = vmax.f32 %v2193, 0.0
  %v3035 = vmax.f32 %v2196, 0.0
  %v3036 = vmax.f32 %v2198, 0.0
  %v3037 = vmax.f32 %v2201, 0.0
  %v3038 = vmax.f32 %v2203, 0.0
  %v3039 = vmax.f32 %v2206, 0.0
  %v3040 = vmax.f32 %v2208, 0.0
  %v3041 = vmax.f32 %v2211, 0.0
  %v3042 = vmax.f32 %v2213, 0.0
  %v3043 = vmax.f32 %v2216, 0.0
  %v3044 = vmax.f32 %v2218, 0.0
  %v3045 = vmax.f32 %v2221, 0.0
  %v3046 = vmax.f32 %v2223, 0.0
  %v3047 = vmax.f32 %v2226, 0.0
  %v3048 = vmax.f32 %v2228, 0.0
  %v3049 = vmax.f32 %v2231, 0.0
  %v3050 = vmax.f32 %v2233, 0.0
  %v3051 = vmax.f32 %v2236, 0.0
  %v3052 = vmax.f32 %v2238, 0.0
  %v3053 = vmax.f32 %v2241, 0.0
  %v3054 = vmax.f32 %v2243, 0.0
  %v3055 = vmax.f32 %v2246, 0.0
  %v3056 = vmax.f32 %v2248, 0.0
  %v3057 = vmax.f32 %v2251, 0.0
  %v3058 = vmax.f32 %v2253, 0.0
  %v3059 = vmax.f32 %v2256, 0.0
  %v3060 = vmax.f32 %v2258, 0.0
  %v3061 = vmax.f32 %v2261, 0.0
  %v3062 = vmax.f32 %v2263, 0.0
  %v3063 = vmax.f32 %v2266, 0.0
  %v3064 = vmax.f32 %v2268, 0.0
  %v3065 = vmax.f32 %v2271, 0.0
  %v3066 = vmax.f32 %v2273, 0.0
  %v3067 = vmax.f32 %v2276, 0.0
  %v3068 = vmax.f32 %v2278, 0.0
  %v3069 = vmax.f32 %v2281, 0.0
  %v3070 = vmax.f32 %v2283, 0.0
  %v3071 = vmax.f32 %v2286, 0.0
  %v3072 = vmax.f32 %v2288, 0.0
  %v3073 = vmax.f32 %v2291, 0.0
  %v3074 = vmax.f32 %v2293, 0.0
  %v3075 = vmax.f32 %v2296, 0.0
  %v3076 = vmax.f32 %v2298, 0.0
  %v3077 = vmax.f32 %v2301, 0.0
  %v3078 = vmax.f32 %v2303, 0.0
  %v3079 = vmax.f32 %v2306, 0.0
  %v3080 = vmax.f32 %v2308, 0.0
  %v3081 = vmax.f32 %v2311, 0.0
  %v3082 = vmax.f32 %v2313, 0.0
  %v3083 = vmax.f32 %v2316, 0.0
  %v3084 = vmax.f32 %v2318, 0.0
  %v3085 = vmax.f32 %v2321, 0.0
  %v3086 = vmax.f32 %v2323, 0.0
  %v3087 = vmax.f32 %v2326, 0.0
  %v3088 = vmax.f32 %v2328, 0.0
  %v3089 = vmax.f32 %v2331, 0.0
  %v3090 = vmax.f32 %v2333, 0.0
  %v3091 = vmax.f32 %v2336, 0.0
  %v3092 = vmax.f32 %v2338, 0.0
  %v3093 = vmax.f32 %v2341, 0.0
  %v3094 = vmax.f32 %v2343, 0.0
  %v3095 = vmax.f32 %v2346, 0.0
  %v3096 = vmax.f32 %v2348, 0.0
  %v3097 = vmax.f32 %v2351, 0.0
  %v3098 = vmax.f32 %v2353, 0.0
  %v3099 = vmax.f32 %v2356, 0.0
  %v3100 = vmax.f32 %v2358, 0.0
  %v3101 = vmax.f32 %v2361, 0.0
  %v3102 = vmax.f32 %v2363, 0.0
  %v3103 = vmax.f32 %v2366, 0.0
  %v3104 = vmax.f32 %v2368, 0.0
  %v3105 = vmax.f32 %v2371, 0.0
  %v3106 = vmax.f32 %v2373, 0.0
  %v3107 = vmax.f32 %v2376, 0.0
  %v3108 = vmax.f32 %v2378, 0.0
  %v3109 = vmax.f32 %v2381, 0.0
  %v3110 = vmax.f32 %v2383, 0.0
  %v3111 = vmax.f32 %v2386, 0.0
  %v3112 = vmax.f32 %v2388, 0.0
  %v3113 = vmax.f32 %v2391, 0.0
  %v3114 = vmax.f32 %v2393, 0.0
  %v3115 = vmax.f32 %v2396, 0.0
  %v3116 = vmax.f32 %v2398, 0.0
  %v3117 = vmax.f32 %v2401, 0.0
  %v3118 = vmax.f32 %v2403, 0.0
  %v3119 = vmax.f32 %v2406, 0.0
  %v3120 = vmax.f32 %v2408, 0.0
  %v3121 = vmax.f32 %v2411, 0.0
  %v3122 = vmax.f32 %v2413, 0.0
  %v3123 = vmax.f32 %v2416, 0.0
  %v3124 = vmax.f32 %v2418, 0.0
  %v3125 = vmax.f32 %v2421, 0.0
  %v3126 = vmax.f32 %v2423, 0.0
  %v3127 = vmax.f32 %v2426, 0.0
  %v3128 = vmax.f32 %v2428, 0.0
  %v3129 = vmax.f32 %v2431, 0.0
  %v3130 = vmax.f32 %v2433, 0.0
  %v3131 = vmax.f32 %v2436, 0.0
  %v3132 = vmax.f32 %v2438, 0.0
  %v3133 = vmax.f32 %v2441, 0.0
  %v3134 = vmax.f32 %v2443, 0.0
  %v3135 = vmax.f32 %v2446, 0.0
  %v3136 = vmax.f32 %v2448, 0.0
  %v3137 = vmax.f32 %v2451, 0.0
  %v3138 = vmax.f32 %v2453, 0.0
  %v3139 = vmax.f32 %v2456, 0.0
  %v3140 = vmax.f32 %v2458, 0.0
  %v3141 = vmax.f32 %v2461, 0.0
  %v3142 = vmax.f32 %v2463, 0.0
  %v3143 = vmax.f32 %v2466, 0.0
  %v3144 = vmax.f32 %v2468, 0.0
  %v3145 = vmax.f32 %v2471, 0.0
  %v3146 = vmax.f32 %v2473, 0.0
  %v3147 = vmax.f32 %v2476, 0.0
  %v3148 = vmax.f32 %v2478, 0.0
  %v3149 = vmax.f32 %v2481, 0.0
  %v3150 = vmax.f32 %v2483, 0.0
  %v3151 = vmax.f32 %v2486, 0.0
  %v3152 = vmax.f32 %v2488, 0.0
  %v3153 = vmax.f32 %v2491, 0.0
  %v3154 = vmax.f32 %v2493, 0.0
  %v3155 = vmax.f32 %v2496, 0.0
  %v3156 = vmax.f32 %v2498, 0.0
  %v3157 = vmax.f32 %v2501, 0.0
  %v3158 = vmax.f32 %v2503, 0.0
  %v3159 = vmax.f32 %v2506, 0.0
  %v3160 = vmax.f32 %v2508, 0.0
  %v3161 = vmax.f32 %v2511, 0.0
  %v3162 = vmax.f32 %v2513, 0.0
  %v3163 = vmax.f32 %v2516, 0.0
  %v3164 = vmax.f32 %v2518, 0.0
  %v3165 = vmax.f32 %v2521, 0.0
  %v3166 = vmax.f32 %v2523, 0.0
  %v3167 = vmax.f32 %v2526, 0.0
  %v3168 = vmax.f32 %v2528, 0.0
  %v3169 = vmax.f32 %v2531, 0.0
  %v3170 = vmax.f32 %v2533, 0.0
  %v3171 = vmax.f32 %v2536, 0.0
  %v3172 = vmax.f32 %v2538, 0.0
  %v3173 = vmax.f32 %v2541, 0.0
  %v3174 = vmax.f32 %v2543, 0.0
  %v3175 = vmax.f32 %v2546, 0.0
  %v3176 = vmax.f32 %v2548, 0.0
  %v3177 = vmax.f32 %v2551, 0.0
  %v3178 = vmax.f32 %v2553, 0.0
  %v3179 = vmax.f32 %v2556, 0.0
  %v3180 = vmax.f32 %v2558, 0.0
  %v3181 = vmax.f32 %v2561, 0.0
  %v3182 = vmax.f32 %v2563, 0.0
  %v3183 = vmax.f32 %v2566, 0.0
  %v3184 = vmax.f32 %v2568, 0.0
  %v3185 = vmax.f32 %v2571, 0.0
  %v3186 = vmax.f32 %v2573, 0.0
  %v3187 = vmax.f32 %v2576, 0.0
  %v3188 = vmax.f32 %v2578, 0.0
  %v3189 = vmax.f32 %v2581, 0.0
  %v3190 = vmax.f32 %v2583, 0.0
  %v3191 = vmax.f32 %v2586, 0.0
  %v3192 = vmax.f32 %v2588, 0.0
  %v3193 = vmax.f32 %v2591, 0.0
  %v3194 = vmax.f32 %v2593, 0.0
  %v3195 = vmax.f32 %v2596, 0.0
  %v3196 = vmax.f32 %v2598, 0.0
  %v3197 = vmax.f32 %v2601, 0.0
  %v3198 = vmax.f32 %v2603, 0.0
  %v3199 = vmax.f32 %v2606, 0.0
  %v3200 = vmax.f32 %v2608, 0.0
  %v3201 = vmax.f32 %v2611, 0.0
  %v3202 = vmax.f32 %v2613, 0.0
  %v3203 = vmax.f32 %v2616, 0.0
  %v3204 = vmax.f32 %v2618, 0.0
  %v3205 = vmax.f32 %v2621, 0.0
  %v3206 = vmax.f32 %v2623, 0.0
  %v3207 = vmax.f32 %v2626, 0.0
  %v3208 = vmax.f32 %v2628, 0.0
  %v3209 = vmax.f32 %v2631, 0.0
  %v3210 = vmax.f32 %v2633, 0.0
  %v3211 = vmax.f32 %v2636, 0.0
  %v3212 = vmax.f32 %v2638, 0.0
  %v3213 = vmax.f32 %v2641, 0.0
  %v3214 = vmax.f32 %v2643, 0.0
  %v3215 = vmax.f32 %v2646, 0.0
  %v3216 = vmax.f32 %v2648, 0.0
  %v3217 = vmax.f32 %v2651, 0.0
  %v3218 = vmax.f32 %v2653, 0.0
  %v3219 = vmax.f32 %v2656, 0.0
  %v3220 = vmax.f32 %v2658, 0.0
  %v3221 = vmax.f32 %v2661, 0.0
  %v3222 = vmax.f32 %v2663, 0.0
  %v3223 = vmax.f32 %v2666, 0.0
  %v3224 = vmax.f32 %v2668, 0.0
  %v3225 = vmax.f32 %v2671, 0.0
  %v3226 = vmax.f32 %v2673, 0.0
  %v3227 = vmax.f32 %v2676, 0.0
  %v3228 = vmax.f32 %v2678, 0.0
  %v3229 = vmax.f32 %v2681, 0.0
  %v3230 = vmax.f32 %v2683, 0.0
  %v3231 = vmax.f32 %v2686, 0.0
  %v3232 = vmax.f32 %v2688, 0.0
  %v3233 = vmax.f32 %v2691, 0.0
  %v3234 = vmax.f32 %v2693, 0.0
  %v3235 = vmax.f32 %v2696, 0.0
  %v3236 = vmax.f32 %v2698, 0.0
  %v3237 = vmax.f32 %v2701, 0.0
  %v3238 = vmax.f32 %v2703, 0.0
  %v3239 = vmax.f32 %v2706, 0.0
  %v3240 = vmax.f32 %v2708, 0.0
  %v3241 = vmax.f32 %v2711, 0.0
  %v3242 = vmax.f32 %v2713, 0.0
  %v3243 = vmax.f32 %v2716, 0.0
  %v3244 = vmax.f32 %v2718, 0.0
  %v3245 = vmax.f32 %v2721, 0.0
  %v3246 = vmax.f32 %v2723, 0.0
  %v3247 = vmax.f32 %v2726, 0.0
  %v3248 = vmax.f32 %v2728, 0.0
  %v3249 = vmax.f32 %v2731, 0.0
  %v3250 = vmax.f32 %v2733, 0.0
  %v3251 = vmax.f32 %v2736, 0.0
  %v3252 = vmax.f32 %v2738, 0.0
  %v3253 = vmax.f32 %v2741, 0.0
  %v3254 = vmax.f32 %v2743, 0.0
  %v3255 = vmax.f32 %v2746, 0.0
  %v3256 = vmax.f32 %v2748, 0.0
  %v3257 = vmax.f32 %v2751, 0.0
  %v3258 = vmax.f32 %v2753, 0.0
  %v3259 = vmax.f32 %v2756, 0.0
  %v3260 = vmax.f32 %v2758, 0.0
  %v3261 = vmax.f32 %v2761, 0.0
  %v3262 = vmax.f32 %v2763, 0.0
  %v3263 = vmax.f32 %v2766, 0.0
  %v3264 = vmax.f32 %v2768, 0.0
  %v3265 = vmax.f32 %v2771, 0.0
  %v3266 = vmax.f32 %v2773, 0.0
  %v3267 = vmax.f32 %v2776, 0.0
  %v3268 = vmax.f32 %v2778, 0.0
  %v3269 = vmax.f32 %v2781, 0.0
  %v3270 = vmax.f32 %v2783, 0.0
  %v3271 = vmax.f32 %v2786, 0.0
  %v3272 = vmax.f32 %v2788, 0.0
  %v3273 = vmax.f32 %v2791, 0.0
  %v3274 = vmax.f32 %v2793, 0.0
  %v3275 = vmax.f32 %v2796, 0.0
  %v3276 = vmax.f32 %v2798, 0.0
  %v3277 = vmax.f32 %v2801, 0.0
  %v3278 = vmax.f32 %v2803, 0.0
  %v3279 = vmax.f32 %v2806, 0.0
  %v3280 = vmax.f32 %v2808, 0.0
  %v3281 = vmax.f32 %v2811, 0.0
  %v3282 = vmax.f32 %v2813, 0.0
  %v3283 = vmax.f32 %v2816, 0.0
  %v3284 = vmax.f32 %v2818, 0.0
  %v3285 = vmax.f32 %v2821, 0.0
  %v3286 = vmax.f32 %v2823, 0.0
  %v3287 = vmax.f32 %v2826, 0.0
  %v3288 = vmax.f32 %v2828, 0.0
  %v3289 = vmax.f32 %v2831, 0.0
  %v3290 = vmax.f32 %v2833, 0.0
  %v3291 = vmax.f32 %v2836, 0.0
  %v3292 = vmax.f32 %v2838, 0.0
  %v3293 = vmax.f32 %v2841, 0.0
  %v3294 = vmax.f32 %v2843, 0.0
  %v3295 = vmax.f32 %v2846, 0.0
  %v3296 = vmax.f32 %v2848, 0.0
  %v3297 = vmax.f32 %v2851, 0.0
  %v3298 = vmax.f32 %v2853, 0.0
  %v3299 = vmax.f32 %v2856, 0.0
  %v3300 = vmax.f32 %v2858, 0.0
  %v3301 = vmax.f32 %v2861, 0.0
  %v3302 = vmax.f32 %v2863, 0.0
  %v3303 = vmax.f32 %v2866, 0.0
  %v3304 = vmax.f32 %v2868, 0.0
  %v3305 = vmax.f32 %v2871, 0.0
  %v3306 = vmax.f32 %v2873, 0.0
  %v3307 = vmax.f32 %v2876, 0.0
  %v3308 = vmax.f32 %v2878, 0.0
  %v3309 = vmax.f32 %v2881, 0.0
  %v3310 = vmax.f32 %v2883, 0.0
  %v3311 = vmax.f32 %v2886, 0.0
  %v3312 = vmax.f32 %v2888, 0.0
  %v3313 = vmax.f32 %v2891, 0.0
  %v3314 = vmax.f32 %v2893, 0.0
  %v3315 = vmax.f32 %v2896, 0.0
  %v3316 = vmax.f32 %v2898, 0.0
  %v3317 = vmax.f32 %v2901, 0.0
  %v3318 = vmax.f32 %v2903, 0.0
  %v3319 = vmax.f32 %v2906, 0.0
  %v3320 = vmax.f32 %v2908, 0.0
  %v3321 = vmax.f32 %v2911, 0.0
  %v3322 = vmax.f32 %v2913, 0.0
  %v3323 = vmax.f32 %v2916, 0.0
  %v3324 = vmax.f32 %v2918, 0.0
  %v3325 = vmax.f32 %v2921, 0.0
  %v3326 = vmax.f32 %v2923, 0.0
  %v3327 = vmax.f32 %v2926, 0.0
  %v3328 = vmax.f32 %v2928, 0.0
  %v3329 = vmax.f32 %v2931, 0.0
  %v3330 = vmax.f32 %v2933, 0.0
  %v3331 = vmax.f32 %v2936, 0.0
  %v3332 = vmax.f32 %v2938, 0.0
  %v3333 = vmax.f32 %v2941, 0.0
  %v3334 = vmax.f32 %v2943, 0.0
  %v3335 = vmax.f32 %v2946, 0.0
  %v3336 = vmax.f32 %v2948, 0.0
  %v3337 = vmax.f32 %v2951, 0.0
  %v3338 = vmax.f32 %v2953, 0.0
  %v3339 = vmax.f32 %v2955, %v3083
  %v3340 = vmax.f32 %v2956, %v3084
  %v3341 = vmax.f32 %v2957, %v3085
  %v3342 = vmax.f32 %v2958, %v3086
  %v3343 = vmax.f32 %v2959, %v3087
  %v3344 = vmax.f32 %v2960, %v3088
  %v3345 = vmax.f32 %v2961, %v3089
  %v3346 = vmax.f32 %v2962, %v3090
  %v3347 = vmax.f32 %v2963, %v3091
  %v3348 = vmax.f32 %v2964, %v3092
  %v3349 = vmax.f32 %v2965, %v3093
  %v3350 = vmax.f32 %v2966, %v3094
  %v3351 = vmax.f32 %v2967, %v3095
  %v3352 = vmax.f32 %v2968, %v3096
  %v3353 = vmax.f32 %v2969, %v3097
  %v3354 = vmax.f32 %v2970, %v3098
  %v3355 = vmax.f32 %v2971, %v3099
  %v3356 = vmax.f32 %v2972, %v3100
  %v3357 = vmax.f32 %v2973, %v3101
  %v3358 = vmax.f32 %v2974, %v3102
  %v3359 = vmax.f32 %v2975, %v3103
  %v3360 = vmax.f32 %v2976, %v3104
  %v3361 = vmax.f32 %v2977, %v3105
  %v3362 = vmax.f32 %v2978, %v3106
  %v3363 = vmax.f32 %v2979, %v3107
  %v3364 = vmax.f32 %v2980, %v3108
  %v3365 = vmax.f32 %v2981, %v3109
  %v3366 = vmax.f32 %v2982, %v3110
  %v3367 = vmax.f32 %v2983, %v3111
  %v3368 = vmax.f32 %v2984, %v3112
  %v3369 = vmax.f32 %v2985, %v3113
  %v3370 = vmax.f32 %v2986, %v3114
  %v3371 = vmax.f32 %v2987, %v3115
  %v3372 = vmax.f32 %v2988, %v3116
  %v3373 = vmax.f32 %v2989, %v3117
  %v3374 = vmax.f32 %v2990, %v3118
  %v3375 = vmax.f32 %v2991, %v3119
  %v3376 = vmax.f32 %v2992, %v3120
  %v3377 = vmax.f32 %v2993, %v3121
  %v3378 = vmax.f32 %v2994, %v3122
  %v3379 = vmax.f32 %v2995, %v3123
  %v3380 = vmax.f32 %v2996, %v3124
  %v3381 = vmax.f32 %v2997, %v3125
  %v3382 = vmax.f32 %v2998, %v3126
  %v3383 = vmax.f32 %v2999, %v3127
  %v3384 = vmax.f32 %v3000, %v3128
  %v3385 = vmax.f32 %v3001, %v3129
  %v3386 = vmax.f32 %v3002, %v3130
  %v3387 = vmax.f32 %v3003, %v3131
  %v3388 = vmax.f32 %v3004, %v3132
  %v3389 = vmax.f32 %v3005, %v3133
  %v3390 = vmax.f32 %v3006, %v3134
  %v3391 = vmax.f32 %v3007, %v3135
  %v3392 = vmax.f32 %v3008, %v3136
  %v3393 = vmax.f32 %v3009, %v3137
  %v3394 = vmax.f32 %v3010, %v3138
  %v3395 = vmax.f32 %v3011, %v3139
  %v3396 = vmax.f32 %v3012, %v3140
  %v3397 = vmax.f32 %v3013, %v3141
  %v3398 = vmax.f32 %v3014, %v3142
  %v3399 = vmax.f32 %v3015, %v3143
  %v3400 = vmax.f32 %v3016, %v3144
  %v3401 = vmax.f32 %v3017, %v3145
  %v3402 = vmax.f32 %v3018, %v3146
  %v3403 = vmax.f32 %v3019, %v3147
  %v3404 = vmax.f32 %v3020, %v3148
  %v3405 = vmax.f32 %v3021, %v3149
  %v3406 = vmax.f32 %v3022, %v3150
  %v3407 = vmax.f32 %v3023, %v3151
  %v3408 = vmax.f32 %v3024, %v3152
  %v3409 = vmax.f32 %v3025, %v3153
  %v3410 = vmax.f32 %v3026, %v3154
  %v3411 = vmax.f32 %v3027, %v3155
  %v3412 = vmax.f32 %v3028, %v3156
  %v3413 = vmax.f32 %v3029, %v3157
  %v3414 = vmax.f32 %v3030, %v3158
  %v3415 = vmax.f32 %v3031, %v3159
  %v3416 = vmax.f32 %v3032, %v3160
  %v3417 = vmax.f32 %v3033, %v3161
  %v3418 = vmax.f32 %v3034, %v3162
  %v3419 = vmax.f32 %v3035, %v3163
  %v3420 = vmax.f32 %v3036, %v3164
  %v3421 = vmax.f32 %v3037, %v3165
  %v3422 = vmax.f32 %v3038, %v3166
  %v3423 = vmax.f32 %v3039, %v3167
  %v3424 = vmax.f32 %v3040, %v3168
  %v3425 = vmax.f32 %v3041, %v3169
  %v3426 = vmax.f32 %v3042, %v3170
  %v3427 = vmax.f32 %v3043, %v3171
  %v3428 = vmax.f32 %v3044, %v3172
  %v3429 = vmax.f32 %v3045, %v3173
  %v3430 = vmax.f32 %v3046, %v3174
  %v3431 = vmax.f32 %v3047, %v3175
  %v3432 = vmax.f32 %v3048, %v3176
  %v3433 = vmax.f32 %v3049, %v3177
  %v3434 = vmax.f32 %v3050, %v3178
  %v3435 = vmax.f32 %v3051, %v3179
  %v3436 = vmax.f32 %v3052, %v3180
  %v3437 = vmax.f32 %v3053, %v3181
  %v3438 = vmax.f32 %v3054, %v3182
  %v3439 = vmax.f32 %v3055, %v3183
  %v3440 = vmax.f32 %v3056, %v3184
  %v3441 = vmax.f32 %v3057, %v3185
  %v3442 = vmax.f32 %v3058, %v3186
  %v3443 = vmax.f32 %v3059, %v3187
  %v3444 = vmax.f32 %v3060, %v3188
  %v3445 = vmax.f32 %v3061, %v3189
  %v3446 = vmax.f32 %v3062, %v3190
  %v3447 = vmax.f32 %v3063, %v3191
  %v3448 = vmax.f32 %v3064, %v3192
  %v3449 = vmax.f32 %v3065, %v3193
  %v3450 = vmax.f32 %v3066, %v3194
  %v3451 = vmax.f32 %v3067, %v3195
  %v3452 = vmax.f32 %v3068, %v3196
  %v3453 = vmax.f32 %v3069, %v3197
  %v3454 = vmax.f32 %v3070, %v3198
  %v3455 = vmax.f32 %v3071, %v3199
  %v3456 = vmax.f32 %v3072, %v3200
  %v3457 = vmax.f32 %v3073, %v3201
  %v3458 = vmax.f32 %v3074, %v3202
  %v3459 = vmax.f32 %v3075, %v3203
  %v3460 = vmax.f32 %v3076, %v3204
  %v3461 = vmax.f32 %v3077, %v3205
  %v3462 = vmax.f32 %v3078, %v3206
  %v3463 = vmax.f32 %v3079, %v3207
  %v3464 = vmax.f32 %v3080, %v3208
  %v3465 = vmax.f32 %v3081, %v3209
  %v3466 = vmax.f32 %v3082, %v3210
  %v3467 = vmax.f32 %v3339, %v3211
  %v3468 = vmax.f32 %v3340, %v3212
  %v3469 = vmax.f32 %v3341, %v3213
  %v3470 = vmax.f32 %v3342, %v3214
  %v3471 = vmax.f32 %v3343, %v3215
  %v3472 = vmax.f32 %v3344, %v3216
  %v3473 = vmax.f32 %v3345, %v3217
  %v3474 = vmax.f32 %v3346, %v3218
  %v3475 = vmax.f32 %v3347, %v3219
  %v3476 = vmax.f32 %v3348, %v3220
  %v3477 = vmax.f32 %v3349, %v3221
  %v3478 = vmax.f32 %v3350, %v3222
  %v3479 = vmax.f32 %v3351, %v3223
  %v3480 = vmax.f32 %v3352, %v3224
  %v3481 = vmax.f32 %v3353, %v3225
  %v3482 = vmax.f32 %v3354, %v3226
  %v3483 = vmax.f32 %v3355, %v3227
  %v3484 = vmax.f32 %v3356, %v3228
  %v3485 = vmax.f32 %v3357, %v3229
  %v3486 = vmax.f32 %v3358, %v3230
  %v3487 = vmax.f32 %v3359, %v3231
  %v3488 = vmax.f32 %v3360, %v3232
  %v3489 = vmax.f32 %v3361, %v3233
  %v3490 = vmax.f32 %v3362, %v3234
  %v3491 = vmax.f32 %v3363, %v3235
  %v3492 = vmax.f32 %v3364, %v3236
  %v3493 = vmax.f32 %v3365, %v3237
  %v3494 = vmax.f32 %v3366, %v3238
  %v3495 = vmax.f32 %v3367, %v3239
  %v3496 = vmax.f32 %v3368, %v3240
  %v3497 = vmax.f32 %v3369, %v3241
  %v3498 = vmax.f32 %v3370, %v3242
  %v3499 = vmax.f32 %v3371, %v3243
  %v3500 = vmax.f32 %v3372, %v3244
  %v3501 = vmax.f32 %v3373, %v3245
  %v3502 = vmax.f32 %v3374, %v3246
  %v3503 = vmax.f32 %v3375, %v3247
  %v3504 = vmax.f32 %v3376, %v3248
  %v3505 = vmax.f32 %v3377, %v3249
  %v3506 = vmax.f32 %v3378, %v3250
  %v3507 = vmax.f32 %v3379, %v3251
  %v3508 = vmax.f32 %v3380, %v3252
  %v3509 = vmax.f32 %v3381, %v3253
  %v3510 = vmax.f32 %v3382, %v3254
  %v3511 = vmax.f32 %v3383, %v3255
  %v3512 = vmax.f32 %v3384, %v3256
  %v3513 = vmax.f32 %v3385, %v3257
  %v3514 = vmax.f32 %v3386, %v3258
  %v3515 = vmax.f32 %v3387, %v3259
  %v3516 = vmax.f32 %v3388, %v3260
  %v3517 = vmax.f32 %v3389, %v3261
  %v3518 = vmax.f32 %v3390, %v3262
  %v3519 = vmax.f32 %v3391, %v3263
  %v3520 = vmax.f32 %v3392, %v3264
  %v3521 = vmax.f32 %v3393, %v3265
  %v3522 = vmax.f32 %v3394, %v3266
  %v3523 = vmax.f32 %v3395, %v3267
  %v3524 = vmax.f32 %v3396, %v3268
  %v3525 = vmax.f32 %v3397, %v3269
  %v3526 = vmax.f32 %v3398, %v3270
  %v3527 = vmax.f32 %v3399, %v3271
  %v3528 = vmax.f32 %v3400, %v3272
  %v3529 = vmax.f32 %v3401, %v3273
  %v3530 = vmax.f32 %v3402, %v3274
  %v3531 = vmax.f32 %v3403, %v3275
  %v3532 = vmax.f32 %v3404, %v3276
  %v3533 = vmax.f32 %v3405, %v3277
  %v3534 = vmax.f32 %v3406, %v3278
  %v3535 = vmax.f32 %v3407, %v3279
  %v3536 = vmax.f32 %v3408, %v3280
  %v3537 = vmax.f32 %v3409, %v3281
  %v3538 = vmax.f32 %v3410, %v3282
  %v3539 = vmax.f32 %v3411, %v3283
  %v3540 = vmax.f32 %v3412, %v3284
  %v3541 = vmax.f32 %v3413, %v3285
  %v3542 = vmax.f32 %v3414, %v3286
  %v3543 = vmax.f32 %v3415, %v3287
  %v3544 = vmax.f32 %v3416, %v3288
  %v3545 = vmax.f32 %v3417, %v3289
  %v3546 = vmax.f32 %v3418, %v3290
  %v3547 = vmax.f32 %v3419, %v3291
  %v3548 = vmax.f32 %v3420, %v3292
  %v3549 = vmax.f32 %v3421, %v3293
  %v3550 = vmax.f32 %v3422, %v3294
  %v3551 = vmax.f32 %v3423, %v3295
  %v3552 = vmax.f32 %v3424, %v3296
  %v3553 = vmax.f32 %v3425, %v3297
  %v3554 = vmax.f32 %v3426, %v3298
  %v3555 = vmax.f32 %v3427, %v3299
  %v3556 = vmax.f32 %v3428, %v3300
  %v3557 = vmax.f32 %v3429, %v3301
  %v3558 = vmax.f32 %v3430, %v3302
  %v3559 = vmax.f32 %v3431, %v3303
  %v3560 = vmax.f32 %v3432, %v3304
  %v3561 = vmax.f32 %v3433, %v3305
  %v3562 = vmax.f32 %v3434, %v3306
  %v3563 = vmax.f32 %v3435, %v3307
  %v3564 = vmax.f32 %v3436, %v3308
  %v3565 = vmax.f32 %v3437, %v3309
  %v3566 = vmax.f32 %v3438, %v3310
  %v3567 = vmax.f32 %v3439, %v3311
  %v3568 = vmax.f32 %v3440, %v3312
  %v3569 = vmax.f32 %v3441, %v3313
  %v3570 = vmax.f32 %v3442, %v3314
  %v3571 = vmax.f32 %v3443, %v3315
  %v3572 = vmax.f32 %v3444, %v3316
  %v3573 = vmax.f32 %v3445, %v3317
  %v3574 = vmax.f32 %v3446, %v3318
  %v3575 = vmax.f32 %v3447, %v3319
  %v3576 = vmax.f32 %v3448, %v3320
  %v3577 = vmax.f32 %v3449, %v3321
  %v3578 = vmax.f32 %v3450, %v3322
  %v3579 = vmax.f32 %v3451, %v3323
  %v3580 = vmax.f32 %v3452, %v3324
  %v3581 = vmax.f32 %v3453, %v3325
  %v3582 = vmax.f32 %v3454, %v3326
  %v3583 = vmax.f32 %v3455, %v3327
  %v3584 = vmax.f32 %v3456, %v3328
  %v3585 = vmax.f32 %v3457, %v3329
  %v3586 = vmax.f32 %v3458, %v3330
  %v3587 = vmax.f32 %v3459, %v3331
  %v3588 = vmax.f32 %v3460, %v3332
  %v3589 = vmax.f32 %v3461, %v3333
  %v3590 = vmax.f32 %v3462, %v3334
  %v3591 = vmax.f32 %v3463, %v3335
  %v3592 = vmax.f32 %v3464, %v3336
  %v3593 = vmax.f32 %v3465, %v3337
  %v3594 = vmax.f32 %v3466, %v3338
  %v3595 = vmax.f32 %v3467, %v3469
  %v3596 = vmax.f32 %v3468, %v3470
  %v3597 = vmax.f32 %v3471, %v3473
  %v3598 = vmax.f32 %v3472, %v3474
  %v3599 = vmax.f32 %v3475, %v3477
  %v3600 = vmax.f32 %v3476, %v3478
  %v3601 = vmax.f32 %v3479, %v3481
  %v3602 = vmax.f32 %v3480, %v3482
  %v3603 = vmax.f32 %v3483, %v3485
  %v3604 = vmax.f32 %v3484, %v3486
  %v3605 = vmax.f32 %v3487, %v3489
  %v3606 = vmax.f32 %v3488, %v3490
  %v3607 = vmax.f32 %v3491, %v3493
  %v3608 = vmax.f32 %v3492, %v3494
  %v3609 = vmax.f32 %v3495, %v3497
  %v3610 = vmax.f32 %v3496, %v3498
  %v3611 = vmax.f32 %v3499, %v3501
  %v3612 = vmax.f32 %v3500, %v3502
  %v3613 = vmax.f32 %v3503, %v3505
  %v3614 = vmax.f32 %v3504, %v3506
  %v3615 = vmax.f32 %v3507, %v3509
  %v3616 = vmax.f32 %v3508, %v3510
  %v3617 = vmax.f32 %v3511, %v3513
  %v3618 = vmax.f32 %v3512, %v3514
  %v3619 = vmax.f32 %v3515, %v3517
  %v3620 = vmax.f32 %v3516, %v3518
  %v3621 = vmax.f32 %v3519, %v3521
  %v3622 = vmax.f32 %v3520, %v3522
  %v3623 = vmax.f32 %v3523, %v3525
  %v3624 = vmax.f32 %v3524, %v3526
  %v3625 = vmax.f32 %v3527, %v3529
  %v3626 = vmax.f32 %v3528, %v3530
  %v3627 = vmax.f32 %v3531, %v3533
  %v3628 = vmax.f32 %v3532, %v3534
  %v3629 = vmax.f32 %v3535, %v3537
  %v3630 = vmax.f32 %v3536, %v3538
  %v3631 = vmax.f32 %v3539, %v3541
  %v3632 = vmax.f32 %v3540, %v3542
  %v3633 = vmax.f32 %v3543, %v3545
  %v3634 = vmax.f32 %v3544, %v3546
  %v3635 = vmax.f32 %v3547, %v3549
  %v3636 = vmax.f32 %v3548, %v3550
  %v3637 = vmax.f32 %v3551, %v3553
  %v3638 = vmax.f32 %v3552, %v3554
  %v3639 = vmax.f32 %v3555, %v3557
  %v3640 = vmax.f32 %v3556, %v3558
  %v3641 = vmax.f32 %v3559, %v3561
  %v3642 = vmax.f32 %v3560, %v3562
  %v3643 = vmax.f32 %v3563, %v3565
  %v3644 = vmax.f32 %v3564, %v3566
  %v3645 = vmax.f32 %v3567, %v3569
  %v3646 = vmax.f32 %v3568, %v3570
  %v3647 = vmax.f32 %v3571, %v3573
  %v3648 = vmax.f32 %v3572, %v3574
  %v3649 = vmax.f32 %v3575, %v3577
  %v3650 = vmax.f32 %v3576, %v3578
  %v3651 = vmax.f32 %v3579, %v3581
  %v3652 = vmax.f32 %v3580, %v3582
  %v3653 = vmax.f32 %v3583, %v3585
  %v3654 = vmax.f32 %v3584, %v3586
  %v3655 = vmax.f32 %v3587, %v3589
  %v3656 = vmax.f32 %v3588, %v3590
  %v3657 = vmax.f32 %v3591, %v3593
  %v3658 = vmax.f32 %v3592, %v3594
  %v3659 = vmax.f32 %v3595, %v3471
  %v3660 = vmax.f32 %v3596, %v3472
  %v3661 = vmax.f32 %v3597, %v3475
  %v3662 = vmax.f32 %v3598, %v3476
  %v3663 = vmax.f32 %v3599, %v3479
  %v3664 = vmax.f32 %v3600, %v3480
  %v3665 = vmax.f32 %v3601, %v3483
  %v3666 = vmax.f32 %v3602, %v3484
  %v3667 = vmax.f32 %v3603, %v3487
  %v3668 = vmax.f32 %v3604, %v3488
  %v3669 = vmax.f32 %v3605, %v3491
  %v3670 = vmax.f32 %v3606, %v3492
  %v3671 = vmax.f32 %v3607, %v3495
  %v3672 = vmax.f32 %v3608, %v3496
  %v3673 = vmax.f32 %v3609, %v3499
  %v3674 = vmax.f32 %v3610, %v3500
  %v3675 = vmax.f32 %v3611, %v3503
  %v3676 = vmax.f32 %v3612, %v3504
  %v3677 = vmax.f32 %v3613, %v3507
  %v3678 = vmax.f32 %v3614, %v3508
  %v3679 = vmax.f32 %v3615, %v3511
  %v3680 = vmax.f32 %v3616, %v3512
  %v3681 = vmax.f32 %v3617, %v3515
  %v3682 = vmax.f32 %v3618, %v3516
  %v3683 = vmax.f32 %v3619, %v3519
  %v3684 = vmax.f32 %v3620, %v3520
  %v3685 = vmax.f32 %v3621, %v3523
  %v3686 = vmax.f32 %v3622, %v3524
  %v3687 = vmax.f32 %v3623, %v3527
  %v3688 = vmax.f32 %v3624, %v3528
  %v3689 = vmax.f32 %v3625, %v3531
  %v3690 = vmax.f32 %v3626, %v3532
  %v3691 = vmax.f32 %v3627, %v3535
  %v3692 = vmax.f32 %v3628, %v3536
  %v3693 = vmax.f32 %v3629, %v3539
  %v3694 = vmax.f32 %v3630, %v3540
  %v3695 = vmax.f32 %v3631, %v3543
  %v3696 = vmax.f32 %v3632, %v3544
  %v3697 = vmax.f32 %v3633, %v3547
  %v3698 = vmax.f32 %v3634, %v3548
  %v3699 = vmax.f32 %v3635, %v3551
  %v3700 = vmax.f32 %v3636, %v3552
  %v3701 = vmax.f32 %v3637, %v3555
  %v3702 = vmax.f32 %v3638, %v3556
  %v3703 = vmax.f32 %v3639, %v3559
  %v3704 = vmax.f32 %v3640, %v3560
  %v3705 = vmax.f32 %v3641, %v3563
  %v3706 = vmax.f32 %v3642, %v3564
  %v3707 = vmax.f32 %v3643, %v3567
  %v3708 = vmax.f32 %v3644, %v3568
  %v3709 = vmax.f32 %v3645, %v3571
  %v3710 = vmax.f32 %v3646, %v3572
  %v3711 = vmax.f32 %v3647, %v3575
  %v3712 = vmax.f32 %v3648, %v3576
  %v3713 = vmax.f32 %v3649, %v3579
  %v3714 = vmax.f32 %v3650, %v3580
  %v3715 = vmax.f32 %v3651, %v3583
  %v3716 = vmax.f32 %v3652, %v3584
  %v3717 = vmax.f32 %v3653, %v3587
  %v3718 = vmax.f32 %v3654, %v3588
  %v3719 = vmax.f32 %v3655, %v3591
  %v3720 = vmax.f32 %v3656, %v3592
  %v3721 = vmax.f32 %v3657, %v3591
  %v3722 = vmax.f32 %v3658, %v3592
  %vm3723 = vcmask 523264
  %3724 = vst.msk [vmem:[%s3] sm:$0xff] %vm3723, %v3659
  %3725 = vst.msk [vmem:[%s3 + $0x8] sm:$0xff] %vm3723, %v3660
  %3726 = vst.msk [vmem:[%s3 + $0x10] sm:$0xff] %vm3723, %v3661
  %3727 = vst.msk [vmem:[%s3 + $0x18] sm:$0xff] %vm3723, %v3662
  %3728 = vst.msk [vmem:[%s3 + $0x20] sm:$0xff] %vm3723, %v3663
  %3729 = vst.msk [vmem:[%s3 + $0x28] sm:$0xff] %vm3723, %v3664
  %3730 = vst.msk [vmem:[%s3 + $0x30] sm:$0xff] %vm3723, %v3665
  %3731 = vst.msk [vmem:[%s3 + $0x38] sm:$0xff] %vm3723, %v3666
  %3732 = vst.msk [vmem:[%s3 + $0x40] sm:$0xff] %vm3723, %v3667
  %3733 = vst.msk [vmem:[%s3 + $0x48] sm:$0xff] %vm3723, %v3668
  %3734 = vst.msk [vmem:[%s3 + $0x50] sm:$0xff] %vm3723, %v3669
  %3735 = vst.msk [vmem:[%s3 + $0x58] sm:$0xff] %vm3723, %v3670
  %3736 = vst.msk [vmem:[%s3 + $0x60] sm:$0xff] %vm3723, %v3671
  %3737 = vst.msk [vmem:[%s3 + $0x68] sm:$0xff] %vm3723, %v3672
  %3738 = vst.msk [vmem:[%s3 + $0x70] sm:$0xff] %vm3723, %v3673
  %3739 = vst.msk [vmem:[%s3 + $0x78] sm:$0xff] %vm3723, %v3674
  %3740 = vst.msk [vmem:[%s3 + $0x80] sm:$0xff] %vm3723, %v3675
  %3741 = vst.msk [vmem:[%s3 + $0x88] sm:$0xff] %vm3723, %v3676
  %3742 = vst.msk [vmem:[%s3 + $0x90] sm:$0xff] %vm3723, %v3677
  %3743 = vst.msk [vmem:[%s3 + $0x98] sm:$0xff] %vm3723, %v3678
  %3744 = vst.msk [vmem:[%s3 + $0xa0] sm:$0xff] %vm3723, %v3679
  %3745 = vst.msk [vmem:[%s3 + $0xa8] sm:$0xff] %vm3723, %v3680
  %3746 = vst.msk [vmem:[%s3 + $0xb0] sm:$0xff] %vm3723, %v3681
  %3747 = vst.msk [vmem:[%s3 + $0xb8] sm:$0xff] %vm3723, %v3682
  %3748 = vst.msk [vmem:[%s3 + $0xc0] sm:$0xff] %vm3723, %v3683
  %3749 = vst.msk [vmem:[%s3 + $0xc8] sm:$0xff] %vm3723, %v3684
  %3750 = vst.msk [vmem:[%s3 + $0xd0] sm:$0xff] %vm3723, %v3685
  %3751 = vst.msk [vmem:[%s3 + $0xd8] sm:$0xff] %vm3723, %v3686
  %3752 = vst.msk [vmem:[%s3 + $0xe0] sm:$0xff] %vm3723, %v3687
  %3753 = vst.msk [vmem:[%s3 + $0xe8] sm:$0xff] %vm3723, %v3688
  %3754 = vst.msk [vmem:[%s3 + $0xf0] sm:$0xff] %vm3723, %v3689
  %3755 = vst.msk [vmem:[%s3 + $0xf8] sm:$0xff] %vm3723, %v3690
  %3756 = vst.msk [vmem:[%s3 + $0x100] sm:$0xff] %vm3723, %v3691
  %3757 = vst.msk [vmem:[%s3 + $0x108] sm:$0xff] %vm3723, %v3692
  %3758 = vst.msk [vmem:[%s3 + $0x110] sm:$0xff] %vm3723, %v3693
  %3759 = vst.msk [vmem:[%s3 + $0x118] sm:$0xff] %vm3723, %v3694
  %3760 = vst.msk [vmem:[%s3 + $0x120] sm:$0xff] %vm3723, %v3695
  %3761 = vst.msk [vmem:[%s3 + $0x128] sm:$0xff] %vm3723, %v3696
  %3762 = vst.msk [vmem:[%s3 + $0x130] sm:$0xff] %vm3723, %v3697
  %3763 = vst.msk [vmem:[%s3 + $0x138] sm:$0xff] %vm3723, %v3698
  %3764 = vst.msk [vmem:[%s3 + $0x140] sm:$0xff] %vm3723, %v3699
  %3765 = vst.msk [vmem:[%s3 + $0x148] sm:$0xff] %vm3723, %v3700
  %3766 = vst.msk [vmem:[%s3 + $0x150] sm:$0xff] %vm3723, %v3701
  %3767 = vst.msk [vmem:[%s3 + $0x158] sm:$0xff] %vm3723, %v3702
  %3768 = vst.msk [vmem:[%s3 + $0x160] sm:$0xff] %vm3723, %v3703
  %3769 = vst.msk [vmem:[%s3 + $0x168] sm:$0xff] %vm3723, %v3704
  %3770 = vst.msk [vmem:[%s3 + $0x170] sm:$0xff] %vm3723, %v3705
  %3771 = vst.msk [vmem:[%s3 + $0x178] sm:$0xff] %vm3723, %v3706
  %3772 = vst.msk [vmem:[%s3 + $0x180] sm:$0xff] %vm3723, %v3707
  %3773 = vst.msk [vmem:[%s3 + $0x188] sm:$0xff] %vm3723, %v3708
  %3774 = vst.msk [vmem:[%s3 + $0x190] sm:$0xff] %vm3723, %v3709
  %3775 = vst.msk [vmem:[%s3 + $0x198] sm:$0xff] %vm3723, %v3710
  %3776 = vst.msk [vmem:[%s3 + $0x1a0] sm:$0xff] %vm3723, %v3711
  %3777 = vst.msk [vmem:[%s3 + $0x1a8] sm:$0xff] %vm3723, %v3712
  %3778 = vst.msk [vmem:[%s3 + $0x1b0] sm:$0xff] %vm3723, %v3713
  %3779 = vst.msk [vmem:[%s3 + $0x1b8] sm:$0xff] %vm3723, %v3714
  %3780 = vst.msk [vmem:[%s3 + $0x1c0] sm:$0xff] %vm3723, %v3715
  %3781 = vst.msk [vmem:[%s3 + $0x1c8] sm:$0xff] %vm3723, %v3716
  %3782 = vst.msk [vmem:[%s3 + $0x1d0] sm:$0xff] %vm3723, %v3717
  %3783 = vst.msk [vmem:[%s3 + $0x1d8] sm:$0xff] %vm3723, %v3718
  %3784 = vst.msk [vmem:[%s3 + $0x1e0] sm:$0xff] %vm3723, %v3719
  %3785 = vst.msk [vmem:[%s3 + $0x1e8] sm:$0xff] %vm3723, %v3720
  %3786 = vst.msk [vmem:[%s3 + $0x1f0] sm:$0xff] %vm3723, %v3721
  %3787 = vst.msk [vmem:[%s3 + $0x1f8] sm:$0xff] %vm3723, %v3722
  // Predicated region
  $region14: #{small_forward.3} parent=0 // pred_check
    _
  $region15: #{small_forward.3} parent=0 // pred_check_branch
    %3789 = sbr.rel (0) target = $region17
  $region16: #{small_forward.3} parent=0 // pred_region
    _
  $region17: #{small_forward.3} parent=0 // pred_fallthru
    _
  // Predicated region
  $region18: #{small_forward.3} parent=0 // pred_check
    _
  $region19: #{small_forward.3} parent=0 // pred_check_branch
    %3791 = sbr.rel (0) target = $region21
  $region20: #{small_forward.3} parent=0 // pred_region
    _
  $region21: #{small_forward.3} parent=0 // pred_fallthru
    _

// kernel: small_forward.5
$region0: #{small_forward.5}
  #allocation0 [shape = 'u32[]', space=smem, size = 0x4, offset = 0x4, fixed_abs, tag = 'smem constant byte address 0x4 - core index']
  #allocation1 [shape = 'u32[72,128]{1,0:T(1,128)}', space=vmem, size = 0x9000, scoped, tag = 'internal scratch']
  %s0 = inlined_call_operand.vmem [shape: bf16[8,3136], index: 0, kind: input, shape index: {}]
  %s1 = inlined_call_operand.vmem [shape: bf16[3136,128], index: 1, kind: input, shape index: {}]
  %s2 = inlined_call_operand.vmem [shape: f32[1,128], index: 2, kind: input, shape index: {}]
  %s3 = inlined_call_operand.vmem [shape: bf16[128,50], index: 3, kind: input, shape index: {}]
  %s4 = inlined_call_operand.vmem [shape: f32[1,50], index: 4, kind: input, shape index: {}]
  %s5 = inlined_call_operand.vmem [shape: f32[8,50], index: 5, kind: output, shape index: {}]
  %s6 = sld [smem:[#allocation0]]
  $region30: #{small_forward.5} parent=0
    _
  %s8 = ssub.s32 1, %s6
  %s9 = scalar_select 0, %s8, %s6
  // Predicated region
  $region2: #{small_forward.5} parent=0 // pred_check
    _
  $region3: #{small_forward.5} parent=0 // pred_check_branch
    %11 = sbr.rel (0) target = $region5
  $region4: #{small_forward.5} parent=0 // pred_region
    _
  $region5: #{small_forward.5} parent=0 // pred_fallthru
    _
  // Predicated region
  $region6: #{small_forward.5} parent=0 // pred_check
    _
  $region7: #{small_forward.5} parent=0 // pred_check_branch
    %13 = sbr.rel (0) target = $region9
  $region8: #{small_forward.5} parent=0 // pred_region
    _
  $region9: #{small_forward.5} parent=0 // pred_fallthru
    _
  // Predicated region
  $region10: #{small_forward.5} parent=0 // pred_check
    _
  $region11: #{small_forward.5} parent=0 // pred_check_branch
    %15 = sbr.rel (0) target = $region13
  $region12: #{small_forward.5} parent=0 // pred_region
    _
  $region13: #{small_forward.5} parent=0 // pred_fallthru
    _
  // Predicated region
  $region14: #{small_forward.5} parent=0 // pred_check
    _
  $region15: #{small_forward.5} parent=0 // pred_check_branch
    %17 = sbr.rel (0) target = $region17
  $region16: #{small_forward.5} parent=0 // pred_region
    _
  $region17: #{small_forward.5} parent=0 // pred_fallthru
    _
  // Predicated region
  $region18: #{small_forward.5} parent=0 // pred_check
    _
  $region19: #{small_forward.5} parent=0 // pred_check_branch
    %19 = sbr.rel (0) target = $region21
  $region20: #{small_forward.5} parent=0 // pred_region
    _
  $region21: #{small_forward.5} parent=0 // pred_fallthru
    _
  %v21 = vld [vmem:[%s0] sm:$0xff]
  %v22 = vld [vmem:[%s0 + $0x8] sm:$0xff]
  %v23 = vld [vmem:[%s0 + $0x10] sm:$0xff]
  %v24 = vld [vmem:[%s0 + $0x18] sm:$0xff]
  %v25 = vld [vmem:[%s0 + $0x20] sm:$0xff]
  %v26 = vld [vmem:[%s0 + $0x28] sm:$0xff]
  %v27 = vld [vmem:[%s0 + $0x30] sm:$0xff]
  %v28 = vld [vmem:[%s0 + $0x38] sm:$0xff]
  %v29 = vld [vmem:[%s0 + $0x40] sm:$0xff]
  %v30 = vld [vmem:[%s0 + $0x48] sm:$0xff]
  %v31 = vld [vmem:[%s0 + $0x50] sm:$0xff]
  %v32 = vld [vmem:[%s0 + $0x58] sm:$0xff]
  %v33 = vld [vmem:[%s0 + $0x60] sm:$0xf]
  %v34 = vld [vmem:[%s1] sm:$0xf]
  %v35 = vld [vmem:[%s1 + $0x4] sm:$0xf]
  %v36 = vld [vmem:[%s1 + $0x8] sm:$0xf]
  %v37 = vld [vmem:[%s1 + $0xc] sm:$0xf]
  %v38 = vld [vmem:[%s1 + $0x10] sm:$0xf]
  %v39 = vld [vmem:[%s1 + $0x14] sm:$0xf]
  %v40 = vld [vmem:[%s1 + $0x18] sm:$0xf]
  %v41 = vld [vmem:[%s1 + $0x1c] sm:$0xf]
  %v42 = vld [vmem:[%s1 + $0x20] sm:$0xf]
  %v43 = vld [vmem:[%s1 + $0x24] sm:$0xf]
  %v44 = vld [vmem:[%s1 + $0x28] sm:$0xf]
  %v45 = vld [vmem:[%s1 + $0x2c] sm:$0xf]
  %v46 = vld [vmem:[%s1 + $0x30] sm:$0xf]
  %v47 = vld [vmem:[%s1 + $0x34] sm:$0xf]
  %v48 = vld [vmem:[%s1 + $0x38] sm:$0xf]
  %v49 = vld [vmem:[%s1 + $0x3c] sm:$0xf]
  %v50 = vld [vmem:[%s1 + $0x40] sm:$0xf]
  %v51 = vld [vmem:[%s1 + $0x44] sm:$0xf]
  %v52 = vld [vmem:[%s1 + $0x48] sm:$0xf]
  %v53 = vld [vmem:[%s1 + $0x4c] sm:$0xf]
  %v54 = vld [vmem:[%s1 + $0x50] sm:$0xf]
  %v55 = vld [vmem:[%s1 + $0x54] sm:$0xf]
  %v56 = vld [vmem:[%s1 + $0x58] sm:$0xf]
  %v57 = vld [vmem:[%s1 + $0x5c] sm:$0xf]
  %v58 = vld [vmem:[%s1 + $0x60] sm:$0xf]
  %v59 = vld [vmem:[%s1 + $0x64] sm:$0xf]
  %v60 = vld [vmem:[%s1 + $0x68] sm:$0xf]
  %v61 = vld [vmem:[%s1 + $0x6c] sm:$0xf]
  %v62 = vld [vmem:[%s1 + $0x70] sm:$0xf]
  %v63 = vld [vmem:[%s1 + $0x74] sm:$0xf]
  %v64 = vld [vmem:[%s1 + $0x78] sm:$0xf]
  %v65 = vld [vmem:[%s1 + $0x7c] sm:$0xf]
  %v66 = vld [vmem:[%s1 + $0x80] sm:$0xf]
  %v67 = vld [vmem:[%s1 + $0x84] sm:$0xf]
  %v68 = vld [vmem:[%s1 + $0x88] sm:$0xf]
  %v69 = vld [vmem:[%s1 + $0x8c] sm:$0xf]
  %v70 = vld [vmem:[%s1 + $0x90] sm:$0xf]
  %v71 = vld [vmem:[%s1 + $0x94] sm:$0xf]
  %v72 = vld [vmem:[%s1 + $0x98] sm:$0xf]
  %v73 = vld [vmem:[%s1 + $0x9c] sm:$0xf]
  %v74 = vld [vmem:[%s1 + $0xa0] sm:$0xf]
  %v75 = vld [vmem:[%s1 + $0xa4] sm:$0xf]
  %v76 = vld [vmem:[%s1 + $0xa8] sm:$0xf]
  %v77 = vld [vmem:[%s1 + $0xac] sm:$0xf]
  %v78 = vld [vmem:[%s1 + $0xb0] sm:$0xf]
  %v79 = vld [vmem:[%s1 + $0xb4] sm:$0xf]
  %v80 = vld [vmem:[%s1 + $0xb8] sm:$0xf]
  %v81 = vld [vmem:[%s1 + $0xbc] sm:$0xf]
  %v82 = vld [vmem:[%s1 + $0xc0] sm:$0xf]
  %v83 = vld [vmem:[%s1 + $0xc4] sm:$0xf]
  %v84 = vld [vmem:[%s1 + $0xc8] sm:$0xf]
  %v85 = vld [vmem:[%s1 + $0xcc] sm:$0xf]
  %v86 = vld [vmem:[%s1 + $0xd0] sm:$0xf]
  %v87 = vld [vmem:[%s1 + $0xd4] sm:$0xf]
  %v88 = vld [vmem:[%s1 + $0xd8] sm:$0xf]
  %v89 = vld [vmem:[%s1 + $0xdc] sm:$0xf]
  %v90 = vld [vmem:[%s1 + $0xe0] sm:$0xf]
  %v91 = vld [vmem:[%s1 + $0xe4] sm:$0xf]
  %v92 = vld [vmem:[%s1 + $0xe8] sm:$0xf]
  %v93 = vld [vmem:[%s1 + $0xec] sm:$0xf]
  %v94 = vld [vmem:[%s1 + $0xf0] sm:$0xf]
  %v95 = vld [vmem:[%s1 + $0xf4] sm:$0xf]
  %v96 = vld [vmem:[%s1 + $0xf8] sm:$0xf]
  %v97 = vld [vmem:[%s1 + $0xfc] sm:$0xf]
  %v98 = vld [vmem:[%s1 + $0x100] sm:$0xf]
  %v99 = vld [vmem:[%s1 + $0x104] sm:$0xf]
  %v100 = vld [vmem:[%s1 + $0x108] sm:$0xf]
  %v101 = vld [vmem:[%s1 + $0x10c] sm:$0xf]
  %v102 = vld [vmem:[%s1 + $0x110] sm:$0xf]
  %v103 = vld [vmem:[%s1 + $0x114] sm:$0xf]
  %v104 = vld [vmem:[%s1 + $0x118] sm:$0xf]
  %v105 = vld [vmem:[%s1 + $0x11c] sm:$0xf]
  %v106 = vld [vmem:[%s1 + $0x120] sm:$0xf]
  %v107 = vld [vmem:[%s1 + $0x124] sm:$0xf]
  %v108 = vld [vmem:[%s1 + $0x128] sm:$0xf]
  %v109 = vld [vmem:[%s1 + $0x12c] sm:$0xf]
  %v110 = vld [vmem:[%s1 + $0x130] sm:$0xf]
  %v111 = vld [vmem:[%s1 + $0x134] sm:$0xf]
  %v112 = vld [vmem:[%s1 + $0x138] sm:$0xf]
  %v113 = vld [vmem:[%s1 + $0x13c] sm:$0xf]
  %v114 = vld [vmem:[%s1 + $0x140] sm:$0xf]
  %v115 = vld [vmem:[%s1 + $0x144] sm:$0xf]
  %v116 = vld [vmem:[%s1 + $0x148] sm:$0xf]
  %v117 = vld [vmem:[%s1 + $0x14c] sm:$0xf]
  %v118 = vld [vmem:[%s1 + $0x150] sm:$0xf]
  %v119 = vld [vmem:[%s1 + $0x154] sm:$0xf]
  %v120 = vld [vmem:[%s1 + $0x158] sm:$0xf]
  %v121 = vld [vmem:[%s1 + $0x15c] sm:$0xf]
  %v122 = vld [vmem:[%s1 + $0x160] sm:$0xf]
  %v123 = vld [vmem:[%s1 + $0x164] sm:$0xf]
  %v124 = vld [vmem:[%s1 + $0x168] sm:$0xf]
  %v125 = vld [vmem:[%s1 + $0x16c] sm:$0xf]
  %v126 = vld [vmem:[%s1 + $0x170] sm:$0xf]
  %v127 = vld [vmem:[%s1 + $0x174] sm:$0xf]
  %v128 = vld [vmem:[%s1 + $0x178] sm:$0xf]
  %v129 = vld [vmem:[%s1 + $0x17c] sm:$0xf]
  %v130 = vld [vmem:[%s1 + $0x180] sm:$0xf]
  %v131 = vld [vmem:[%s1 + $0x184] sm:$0xf]
  %v132 = vld [vmem:[%s1 + $0x188] sm:$0xf]
  %v133 = vld [vmem:[%s1 + $0x18c] sm:$0xf]
  %v134 = vld [vmem:[%s1 + $0x190] sm:$0xf]
  %v135 = vld [vmem:[%s1 + $0x194] sm:$0xf]
  %v136 = vld [vmem:[%s1 + $0x198] sm:$0xf]
  %v137 = vld [vmem:[%s1 + $0x19c] sm:$0xf]
  %v138 = vld [vmem:[%s1 + $0x1a0] sm:$0xf]
  %v139 = vld [vmem:[%s1 + $0x1a4] sm:$0xf]
  %v140 = vld [vmem:[%s1 + $0x1a8] sm:$0xf]
  %v141 = vld [vmem:[%s1 + $0x1ac] sm:$0xf]
  %v142 = vld [vmem:[%s1 + $0x1b0] sm:$0xf]
  %v143 = vld [vmem:[%s1 + $0x1b4] sm:$0xf]
  %v144 = vld [vmem:[%s1 + $0x1b8] sm:$0xf]
  %v145 = vld [vmem:[%s1 + $0x1bc] sm:$0xf]
  %v146 = vld [vmem:[%s1 + $0x1c0] sm:$0xf]
  %v147 = vld [vmem:[%s1 + $0x1c4] sm:$0xf]
  %v148 = vld [vmem:[%s1 + $0x1c8] sm:$0xf]
  %v149 = vld [vmem:[%s1 + $0x1cc] sm:$0xf]
  %v150 = vld [vmem:[%s1 + $0x1d0] sm:$0xf]
  %v151 = vld [vmem:[%s1 + $0x1d4] sm:$0xf]
  %v152 = vld [vmem:[%s1 + $0x1d8] sm:$0xf]
  %v153 = vld [vmem:[%s1 + $0x1dc] sm:$0xf]
  %v154 = vld [vmem:[%s1 + $0x1e0] sm:$0xf]
  %v155 = vld [vmem:[%s1 + $0x1e4] sm:$0xf]
  %v156 = vld [vmem:[%s1 + $0x1e8] sm:$0xf]
  %v157 = vld [vmem:[%s1 + $0x1ec] sm:$0xf]
  %v158 = vld [vmem:[%s1 + $0x1f0] sm:$0xf]
  %v159 = vld [vmem:[%s1 + $0x1f4] sm:$0xf]
  %v160 = vld [vmem:[%s1 + $0x1f8] sm:$0xf]
  %v161 = vld [vmem:[%s1 + $0x1fc] sm:$0xf]
  %v162 = vld [vmem:[%s1 + $0x200] sm:$0xf]
  %v163 = vld [vmem:[%s1 + $0x204] sm:$0xf]
  %v164 = vld [vmem:[%s1 + $0x208] sm:$0xf]
  %v165 = vld [vmem:[%s1 + $0x20c] sm:$0xf]
  %v166 = vld [vmem:[%s1 + $0x210] sm:$0xf]
  %v167 = vld [vmem:[%s1 + $0x214] sm:$0xf]
  %v168 = vld [vmem:[%s1 + $0x218] sm:$0xf]
  %v169 = vld [vmem:[%s1 + $0x21c] sm:$0xf]
  %v170 = vld [vmem:[%s1 + $0x220] sm:$0xf]
  %v171 = vld [vmem:[%s1 + $0x224] sm:$0xf]
  %v172 = vld [vmem:[%s1 + $0x228] sm:$0xf]
  %v173 = vld [vmem:[%s1 + $0x22c] sm:$0xf]
  %v174 = vld [vmem:[%s1 + $0x230] sm:$0xf]
  %v175 = vld [vmem:[%s1 + $0x234] sm:$0xf]
  %v176 = vld [vmem:[%s1 + $0x238] sm:$0xf]
  %v177 = vld [vmem:[%s1 + $0x23c] sm:$0xf]
  %v178 = vld [vmem:[%s1 + $0x240] sm:$0xf]
  %v179 = vld [vmem:[%s1 + $0x244] sm:$0xf]
  %v180 = vld [vmem:[%s1 + $0x248] sm:$0xf]
  %v181 = vld [vmem:[%s1 + $0x24c] sm:$0xf]
  %v182 = vld [vmem:[%s1 + $0x250] sm:$0xf]
  %v183 = vld [vmem:[%s1 + $0x254] sm:$0xf]
  %v184 = vld [vmem:[%s1 + $0x258] sm:$0xf]
  %v185 = vld [vmem:[%s1 + $0x25c] sm:$0xf]
  %v186 = vld [vmem:[%s1 + $0x260] sm:$0xf]
  %v187 = vld [vmem:[%s1 + $0x264] sm:$0xf]
  %v188 = vld [vmem:[%s1 + $0x268] sm:$0xf]
  %v189 = vld [vmem:[%s1 + $0x26c] sm:$0xf]
  %v190 = vld [vmem:[%s1 + $0x270] sm:$0xf]
  %v191 = vld [vmem:[%s1 + $0x274] sm:$0xf]
  %v192 = vld [vmem:[%s1 + $0x278] sm:$0xf]
  %v193 = vld [vmem:[%s1 + $0x27c] sm:$0xf]
  %v194 = vld [vmem:[%s1 + $0x280] sm:$0xf]
  %v195 = vld [vmem:[%s1 + $0x284] sm:$0xf]
  %v196 = vld [vmem:[%s1 + $0x288] sm:$0xf]
  %v197 = vld [vmem:[%s1 + $0x28c] sm:$0xf]
  %v198 = vld [vmem:[%s1 + $0x290] sm:$0xf]
  %v199 = vld [vmem:[%s1 + $0x294] sm:$0xf]
  %v200 = vld [vmem:[%s1 + $0x298] sm:$0xf]
  %v201 = vld [vmem:[%s1 + $0x29c] sm:$0xf]
  %v202 = vld [vmem:[%s1 + $0x2a0] sm:$0xf]
  %v203 = vld [vmem:[%s1 + $0x2a4] sm:$0xf]
  %v204 = vld [vmem:[%s1 + $0x2a8] sm:$0xf]
  %v205 = vld [vmem:[%s1 + $0x2ac] sm:$0xf]
  %v206 = vld [vmem:[%s1 + $0x2b0] sm:$0xf]
  %v207 = vld [vmem:[%s1 + $0x2b4] sm:$0xf]
  %v208 = vld [vmem:[%s1 + $0x2b8] sm:$0xf]
  %v209 = vld [vmem:[%s1 + $0x2bc] sm:$0xf]
  %v210 = vld [vmem:[%s1 + $0x2c0] sm:$0xf]
  %v211 = vld [vmem:[%s1 + $0x2c4] sm:$0xf]
  %v212 = vld [vmem:[%s1 + $0x2c8] sm:$0xf]
  %v213 = vld [vmem:[%s1 + $0x2cc] sm:$0xf]
  %v214 = vld [vmem:[%s1 + $0x2d0] sm:$0xf]
  %v215 = vld [vmem:[%s1 + $0x2d4] sm:$0xf]
  %v216 = vld [vmem:[%s1 + $0x2d8] sm:$0xf]
  %v217 = vld [vmem:[%s1 + $0x2dc] sm:$0xf]
  %v218 = vld [vmem:[%s1 + $0x2e0] sm:$0xf]
  %v219 = vld [vmem:[%s1 + $0x2e4] sm:$0xf]
  %v220 = vld [vmem:[%s1 + $0x2e8] sm:$0xf]
  %v221 = vld [vmem:[%s1 + $0x2ec] sm:$0xf]
  %v222 = vld [vmem:[%s1 + $0x2f0] sm:$0xf]
  %v223 = vld [vmem:[%s1 + $0x2f4] sm:$0xf]
  %v224 = vld [vmem:[%s1 + $0x2f8] sm:$0xf]
  %v225 = vld [vmem:[%s1 + $0x2fc] sm:$0xf]
  %v226 = vld [vmem:[%s1 + $0x300] sm:$0xf]
  %v227 = vld [vmem:[%s1 + $0x304] sm:$0xf]
  %v228 = vld [vmem:[%s1 + $0x308] sm:$0xf]
  %v229 = vld [vmem:[%s1 + $0x30c] sm:$0xf]
  %v230 = vld [vmem:[%s1 + $0x310] sm:$0xf]
  %v231 = vld [vmem:[%s1 + $0x314] sm:$0xf]
  %v232 = vld [vmem:[%s1 + $0x318] sm:$0xf]
  %v233 = vld [vmem:[%s1 + $0x31c] sm:$0xf]
  %v234 = vld [vmem:[%s1 + $0x320] sm:$0xf]
  %v235 = vld [vmem:[%s1 + $0x324] sm:$0xf]
  %v236 = vld [vmem:[%s1 + $0x328] sm:$0xf]
  %v237 = vld [vmem:[%s1 + $0x32c] sm:$0xf]
  %v238 = vld [vmem:[%s1 + $0x330] sm:$0xf]
  %v239 = vld [vmem:[%s1 + $0x334] sm:$0xf]
  %v240 = vld [vmem:[%s1 + $0x338] sm:$0xf]
  %v241 = vld [vmem:[%s1 + $0x33c] sm:$0xf]
  %v242 = vld [vmem:[%s1 + $0x340] sm:$0xf]
  %v243 = vld [vmem:[%s1 + $0x344] sm:$0xf]
  %v244 = vld [vmem:[%s1 + $0x348] sm:$0xf]
  %v245 = vld [vmem:[%s1 + $0x34c] sm:$0xf]
  %v246 = vld [vmem:[%s1 + $0x350] sm:$0xf]
  %v247 = vld [vmem:[%s1 + $0x354] sm:$0xf]
  %v248 = vld [vmem:[%s1 + $0x358] sm:$0xf]
  %v249 = vld [vmem:[%s1 + $0x35c] sm:$0xf]
  %v250 = vld [vmem:[%s1 + $0x360] sm:$0xf]
  %v251 = vld [vmem:[%s1 + $0x364] sm:$0xf]
  %v252 = vld [vmem:[%s1 + $0x368] sm:$0xf]
  %v253 = vld [vmem:[%s1 + $0x36c] sm:$0xf]
  %v254 = vld [vmem:[%s1 + $0x370] sm:$0xf]
  %v255 = vld [vmem:[%s1 + $0x374] sm:$0xf]
  %v256 = vld [vmem:[%s1 + $0x378] sm:$0xf]
  %v257 = vld [vmem:[%s1 + $0x37c] sm:$0xf]
  %v258 = vld [vmem:[%s1 + $0x380] sm:$0xf]
  %v259 = vld [vmem:[%s1 + $0x384] sm:$0xf]
  %v260 = vld [vmem:[%s1 + $0x388] sm:$0xf]
  %v261 = vld [vmem:[%s1 + $0x38c] sm:$0xf]
  %v262 = vld [vmem:[%s1 + $0x390] sm:$0xf]
  %v263 = vld [vmem:[%s1 + $0x394] sm:$0xf]
  %v264 = vld [vmem:[%s1 + $0x398] sm:$0xf]
  %v265 = vld [vmem:[%s1 + $0x39c] sm:$0xf]
  %v266 = vld [vmem:[%s1 + $0x3a0] sm:$0xf]
  %v267 = vld [vmem:[%s1 + $0x3a4] sm:$0xf]
  %v268 = vld [vmem:[%s1 + $0x3a8] sm:$0xf]
  %v269 = vld [vmem:[%s1 + $0x3ac] sm:$0xf]
  %v270 = vld [vmem:[%s1 + $0x3b0] sm:$0xf]
  %v271 = vld [vmem:[%s1 + $0x3b4] sm:$0xf]
  %v272 = vld [vmem:[%s1 + $0x3b8] sm:$0xf]
  %v273 = vld [vmem:[%s1 + $0x3bc] sm:$0xf]
  %v274 = vld [vmem:[%s1 + $0x3c0] sm:$0xf]
  %v275 = vld [vmem:[%s1 + $0x3c4] sm:$0xf]
  %v276 = vld [vmem:[%s1 + $0x3c8] sm:$0xf]
  %v277 = vld [vmem:[%s1 + $0x3cc] sm:$0xf]
  %v278 = vld [vmem:[%s1 + $0x3d0] sm:$0xf]
  %v279 = vld [vmem:[%s1 + $0x3d4] sm:$0xf]
  %v280 = vld [vmem:[%s1 + $0x3d8] sm:$0xf]
  %v281 = vld [vmem:[%s1 + $0x3dc] sm:$0xf]
  %v282 = vld [vmem:[%s1 + $0x3e0] sm:$0xf]
  %v283 = vld [vmem:[%s1 + $0x3e4] sm:$0xf]
  %v284 = vld [vmem:[%s1 + $0x3e8] sm:$0xf]
  %v285 = vld [vmem:[%s1 + $0x3ec] sm:$0xf]
  %v286 = vld [vmem:[%s1 + $0x3f0] sm:$0xf]
  %v287 = vld [vmem:[%s1 + $0x3f4] sm:$0xf]
  %v288 = vld [vmem:[%s1 + $0x3f8] sm:$0xf]
  %v289 = vld [vmem:[%s1 + $0x3fc] sm:$0xf]
  %v290 = vld [vmem:[%s1 + $0x400] sm:$0xf]
  %v291 = vld [vmem:[%s1 + $0x404] sm:$0xf]
  %v292 = vld [vmem:[%s1 + $0x408] sm:$0xf]
  %v293 = vld [vmem:[%s1 + $0x40c] sm:$0xf]
  %v294 = vld [vmem:[%s1 + $0x410] sm:$0xf]
  %v295 = vld [vmem:[%s1 + $0x414] sm:$0xf]
  %v296 = vld [vmem:[%s1 + $0x418] sm:$0xf]
  %v297 = vld [vmem:[%s1 + $0x41c] sm:$0xf]
  %v298 = vld [vmem:[%s1 + $0x420] sm:$0xf]
  %v299 = vld [vmem:[%s1 + $0x424] sm:$0xf]
  %v300 = vld [vmem:[%s1 + $0x428] sm:$0xf]
  %v301 = vld [vmem:[%s1 + $0x42c] sm:$0xf]
  %v302 = vld [vmem:[%s1 + $0x430] sm:$0xf]
  %v303 = vld [vmem:[%s1 + $0x434] sm:$0xf]
  %v304 = vld [vmem:[%s1 + $0x438] sm:$0xf]
  %v305 = vld [vmem:[%s1 + $0x43c] sm:$0xf]
  %v306 = vld [vmem:[%s1 + $0x440] sm:$0xf]
  %v307 = vld [vmem:[%s1 + $0x444] sm:$0xf]
  %v308 = vld [vmem:[%s1 + $0x448] sm:$0xf]
  %v309 = vld [vmem:[%s1 + $0x44c] sm:$0xf]
  %v310 = vld [vmem:[%s1 + $0x450] sm:$0xf]
  %v311 = vld [vmem:[%s1 + $0x454] sm:$0xf]
  %v312 = vld [vmem:[%s1 + $0x458] sm:$0xf]
  %v313 = vld [vmem:[%s1 + $0x45c] sm:$0xf]
  %v314 = vld [vmem:[%s1 + $0x460] sm:$0xf]
  %v315 = vld [vmem:[%s1 + $0x464] sm:$0xf]
  %v316 = vld [vmem:[%s1 + $0x468] sm:$0xf]
  %v317 = vld [vmem:[%s1 + $0x46c] sm:$0xf]
  %v318 = vld [vmem:[%s1 + $0x470] sm:$0xf]
  %v319 = vld [vmem:[%s1 + $0x474] sm:$0xf]
  %v320 = vld [vmem:[%s1 + $0x478] sm:$0xf]
  %v321 = vld [vmem:[%s1 + $0x47c] sm:$0xf]
  %v322 = vld [vmem:[%s1 + $0x480] sm:$0xf]
  %v323 = vld [vmem:[%s1 + $0x484] sm:$0xf]
  %v324 = vld [vmem:[%s1 + $0x488] sm:$0xf]
  %v325 = vld [vmem:[%s1 + $0x48c] sm:$0xf]
  %v326 = vld [vmem:[%s1 + $0x490] sm:$0xf]
  %v327 = vld [vmem:[%s1 + $0x494] sm:$0xf]
  %v328 = vld [vmem:[%s1 + $0x498] sm:$0xf]
  %v329 = vld [vmem:[%s1 + $0x49c] sm:$0xf]
  %v330 = vld [vmem:[%s1 + $0x4a0] sm:$0xf]
  %v331 = vld [vmem:[%s1 + $0x4a4] sm:$0xf]
  %v332 = vld [vmem:[%s1 + $0x4a8] sm:$0xf]
  %v333 = vld [vmem:[%s1 + $0x4ac] sm:$0xf]
  %v334 = vld [vmem:[%s1 + $0x4b0] sm:$0xf]
  %v335 = vld [vmem:[%s1 + $0x4b4] sm:$0xf]
  %v336 = vld [vmem:[%s1 + $0x4b8] sm:$0xf]
  %v337 = vld [vmem:[%s1 + $0x4bc] sm:$0xf]
  %v338 = vld [vmem:[%s1 + $0x4c0] sm:$0xf]
  %v339 = vld [vmem:[%s1 + $0x4c4] sm:$0xf]
  %v340 = vld [vmem:[%s1 + $0x4c8] sm:$0xf]
  %v341 = vld [vmem:[%s1 + $0x4cc] sm:$0xf]
  %v342 = vld [vmem:[%s1 + $0x4d0] sm:$0xf]
  %v343 = vld [vmem:[%s1 + $0x4d4] sm:$0xf]
  %v344 = vld [vmem:[%s1 + $0x4d8] sm:$0xf]
  %v345 = vld [vmem:[%s1 + $0x4dc] sm:$0xf]
  %v346 = vld [vmem:[%s1 + $0x4e0] sm:$0xf]
  %v347 = vld [vmem:[%s1 + $0x4e4] sm:$0xf]
  %v348 = vld [vmem:[%s1 + $0x4e8] sm:$0xf]
  %v349 = vld [vmem:[%s1 + $0x4ec] sm:$0xf]
  %v350 = vld [vmem:[%s1 + $0x4f0] sm:$0xf]
  %v351 = vld [vmem:[%s1 + $0x4f4] sm:$0xf]
  %v352 = vld [vmem:[%s1 + $0x4f8] sm:$0xf]
  %v353 = vld [vmem:[%s1 + $0x4fc] sm:$0xf]
  %v354 = vld [vmem:[%s1 + $0x500] sm:$0xf]
  %v355 = vld [vmem:[%s1 + $0x504] sm:$0xf]
  %v356 = vld [vmem:[%s1 + $0x508] sm:$0xf]
  %v357 = vld [vmem:[%s1 + $0x50c] sm:$0xf]
  %v358 = vld [vmem:[%s1 + $0x510] sm:$0xf]
  %v359 = vld [vmem:[%s1 + $0x514] sm:$0xf]
  %v360 = vld [vmem:[%s1 + $0x518] sm:$0xf]
  %v361 = vld [vmem:[%s1 + $0x51c] sm:$0xf]
  %v362 = vld [vmem:[%s1 + $0x520] sm:$0xf]
  %v363 = vld [vmem:[%s1 + $0x524] sm:$0xf]
  %v364 = vld [vmem:[%s1 + $0x528] sm:$0xf]
  %v365 = vld [vmem:[%s1 + $0x52c] sm:$0xf]
  %v366 = vld [vmem:[%s1 + $0x530] sm:$0xf]
  %v367 = vld [vmem:[%s1 + $0x534] sm:$0xf]
  %v368 = vld [vmem:[%s1 + $0x538] sm:$0xf]
  %v369 = vld [vmem:[%s1 + $0x53c] sm:$0xf]
  %v370 = vld [vmem:[%s1 + $0x540] sm:$0xf]
  %v371 = vld [vmem:[%s1 + $0x544] sm:$0xf]
  %v372 = vld [vmem:[%s1 + $0x548] sm:$0xf]
  %v373 = vld [vmem:[%s1 + $0x54c] sm:$0xf]
  %v374 = vld [vmem:[%s1 + $0x550] sm:$0xf]
  %v375 = vld [vmem:[%s1 + $0x554] sm:$0xf]
  %v376 = vld [vmem:[%s1 + $0x558] sm:$0xf]
  %v377 = vld [vmem:[%s1 + $0x55c] sm:$0xf]
  %v378 = vld [vmem:[%s1 + $0x560] sm:$0xf]
  %v379 = vld [vmem:[%s1 + $0x564] sm:$0xf]
  %v380 = vld [vmem:[%s1 + $0x568] sm:$0xf]
  %v381 = vld [vmem:[%s1 + $0x56c] sm:$0xf]
  %v382 = vld [vmem:[%s1 + $0x570] sm:$0xf]
  %v383 = vld [vmem:[%s1 + $0x574] sm:$0xf]
  %v384 = vld [vmem:[%s1 + $0x578] sm:$0xf]
  %v385 = vld [vmem:[%s1 + $0x57c] sm:$0xf]
  %v386 = vld [vmem:[%s1 + $0x580] sm:$0xf]
  %v387 = vld [vmem:[%s1 + $0x584] sm:$0xf]
  %v388 = vld [vmem:[%s1 + $0x588] sm:$0xf]
  %v389 = vld [vmem:[%s1 + $0x58c] sm:$0xf]
  %v390 = vld [vmem:[%s1 + $0x590] sm:$0xf]
  %v391 = vld [vmem:[%s1 + $0x594] sm:$0xf]
  %v392 = vld [vmem:[%s1 + $0x598] sm:$0xf]
  %v393 = vld [vmem:[%s1 + $0x59c] sm:$0xf]
  %v394 = vld [vmem:[%s1 + $0x5a0] sm:$0xf]
  %v395 = vld [vmem:[%s1 + $0x5a4] sm:$0xf]
  %v396 = vld [vmem:[%s1 + $0x5a8] sm:$0xf]
  %v397 = vld [vmem:[%s1 + $0x5ac] sm:$0xf]
  %v398 = vld [vmem:[%s1 + $0x5b0] sm:$0xf]
  %v399 = vld [vmem:[%s1 + $0x5b4] sm:$0xf]
  %v400 = vld [vmem:[%s1 + $0x5b8] sm:$0xf]
  %v401 = vld [vmem:[%s1 + $0x5bc] sm:$0xf]
  %v402 = vld [vmem:[%s1 + $0x5c0] sm:$0xf]
  %v403 = vld [vmem:[%s1 + $0x5c4] sm:$0xf]
  %v404 = vld [vmem:[%s1 + $0x5c8] sm:$0xf]
  %v405 = vld [vmem:[%s1 + $0x5cc] sm:$0xf]
  %v406 = vld [vmem:[%s1 + $0x5d0] sm:$0xf]
  %v407 = vld [vmem:[%s1 + $0x5d4] sm:$0xf]
  %v408 = vld [vmem:[%s1 + $0x5d8] sm:$0xf]
  %v409 = vld [vmem:[%s1 + $0x5dc] sm:$0xf]
  %v410 = vld [vmem:[%s1 + $0x5e0] sm:$0xf]
  %v411 = vld [vmem:[%s1 + $0x5e4] sm:$0xf]
  %v412 = vld [vmem:[%s1 + $0x5e8] sm:$0xf]
  %v413 = vld [vmem:[%s1 + $0x5ec] sm:$0xf]
  %v414 = vld [vmem:[%s1 + $0x5f0] sm:$0xf]
  %v415 = vld [vmem:[%s1 + $0x5f4] sm:$0xf]
  %v416 = vld [vmem:[%s1 + $0x5f8] sm:$0xf]
  %v417 = vld [vmem:[%s1 + $0x5fc] sm:$0xf]
  %v418 = vld [vmem:[%s1 + $0x600] sm:$0xf]
  %v419 = vld [vmem:[%s1 + $0x604] sm:$0xf]
  %v420 = vld [vmem:[%s1 + $0x608] sm:$0xf]
  %v421 = vld [vmem:[%s1 + $0x60c] sm:$0xf]
  %v422 = vld [vmem:[%s1 + $0x610] sm:$0xf]
  %v423 = vld [vmem:[%s1 + $0x614] sm:$0xf]
  %v424 = vld [vmem:[%s1 + $0x618] sm:$0xf]
  %v425 = vld [vmem:[%s1 + $0x61c] sm:$0xf]
  %v426 = vld [vmem:[%s2] sm:$0x1]
  %v428 = vperm.slane %v426, 0
  %v443 = vunpack.c.l.b16 %v21
  %v444 = vunpack.c.h.b16 %v21
  %v445 = vunpack.c.l.b16 %v22
  %v446 = vunpack.c.h.b16 %v22
  %v447 = vunpack.c.l.b16 %v23
  %v448 = vunpack.c.h.b16 %v23
  %v449 = vunpack.c.l.b16 %v24
  %v450 = vunpack.c.h.b16 %v24
  %v451 = vunpack.c.l.b16 %v25
  %v452 = vunpack.c.h.b16 %v25
  %v453 = vunpack.c.l.b16 %v26
  %v454 = vunpack.c.h.b16 %v26
  %v455 = vunpack.c.l.b16 %v27
  %v456 = vunpack.c.h.b16 %v27
  %v457 = vunpack.c.l.b16 %v28
  %v458 = vunpack.c.h.b16 %v28
  %v459 = vunpack.c.l.b16 %v29
  %v460 = vunpack.c.h.b16 %v29
  %v461 = vunpack.c.l.b16 %v30
  %v462 = vunpack.c.h.b16 %v30
  %v463 = vunpack.c.l.b16 %v31
  %v464 = vunpack.c.h.b16 %v31
  %v465 = vunpack.c.l.b16 %v32
  %v466 = vunpack.c.h.b16 %v32
  %v467 = vunpack.c.l.b16 %v33
  %v468 = vpack.c.b16 %v443, %v443
  %v469 = vpack.c.b16 %v444, %v444
  %v470 = vpack.c.b16 %v445, %v445
  %v471 = vpack.c.b16 %v446, %v446
  %v472 = vpack.c.b16 %v447, %v447
  %v473 = vpack.c.b16 %v448, %v448
  %v474 = vpack.c.b16 %v449, %v449
  %v475 = vpack.c.b16 %v450, %v450
  %v476 = vpack.c.b16 %v451, %v451
  %v477 = vpack.c.b16 %v452, %v452
  %v478 = vpack.c.b16 %v453, %v453
  %v479 = vpack.c.b16 %v454, %v454
  %v480 = vpack.c.b16 %v455, %v455
  %v481 = vpack.c.b16 %v456, %v456
  %v482 = vpack.c.b16 %v457, %v457
  %v483 = vpack.c.b16 %v458, %v458
  %v484 = vpack.c.b16 %v459, %v459
  %v485 = vpack.c.b16 %v460, %v460
  %v486 = vpack.c.b16 %v461, %v461
  %v487 = vpack.c.b16 %v462, %v462
  %v488 = vpack.c.b16 %v463, %v463
  %v489 = vpack.c.b16 %v464, %v464
  %v490 = vpack.c.b16 %v465, %v465
  %v491 = vpack.c.b16 %v466, %v466
  %v492 = vpack.c.b16 %v467, %v467
  %v909 = vunpack.c.l.b16 %v34
  %v910 = vunpack.c.l.b16 %v35
  %v911 = vunpack.c.l.b16 %v36
  %v912 = vunpack.c.l.b16 %v37
  %v913 = vunpack.c.l.b16 %v38
  %v914 = vunpack.c.l.b16 %v39
  %v915 = vunpack.c.l.b16 %v40
  %v916 = vunpack.c.l.b16 %v41
  %v917 = vunpack.c.l.b16 %v42
  %v918 = vunpack.c.l.b16 %v43
  %v919 = vunpack.c.l.b16 %v44
  %v920 = vunpack.c.l.b16 %v45
  %v921 = vunpack.c.l.b16 %v46
  %v922 = vunpack.c.l.b16 %v47
  %v923 = vunpack.c.l.b16 %v48
  %v924 = vunpack.c.l.b16 %v49
  %v925 = vunpack.c.l.b16 %v50
  %v926 = vunpack.c.l.b16 %v51
  %v927 = vunpack.c.l.b16 %v52
  %v928 = vunpack.c.l.b16 %v53
  %v929 = vunpack.c.l.b16 %v54
  %v930 = vunpack.c.l.b16 %v55
  %v931 = vunpack.c.l.b16 %v56
  %v932 = vunpack.c.l.b16 %v57
  %v933 = vunpack.c.l.b16 %v58
  %v934 = vunpack.c.l.b16 %v59
  %v935 = vunpack.c.l.b16 %v60
  %v936 = vunpack.c.l.b16 %v61
  %v937 = vunpack.c.l.b16 %v62
  %v938 = vunpack.c.l.b16 %v63
  %v939 = vunpack.c.l.b16 %v64
  %v940 = vunpack.c.l.b16 %v65
  %v941 = vunpack.c.l.b16 %v66
  %v942 = vunpack.c.l.b16 %v67
  %v943 = vunpack.c.l.b16 %v68
  %v944 = vunpack.c.l.b16 %v69
  %v945 = vunpack.c.l.b16 %v70
  %v946 = vunpack.c.l.b16 %v71
  %v947 = vunpack.c.l.b16 %v72
  %v948 = vunpack.c.l.b16 %v73
  %v949 = vunpack.c.l.b16 %v74
  %v950 = vunpack.c.l.b16 %v75
  %v951 = vunpack.c.l.b16 %v76
  %v952 = vunpack.c.l.b16 %v77
  %v953 = vunpack.c.l.b16 %v78
  %v954 = vunpack.c.l.b16 %v79
  %v955 = vunpack.c.l.b16 %v80
  %v956 = vunpack.c.l.b16 %v81
  %v957 = vunpack.c.l.b16 %v82
  %v958 = vunpack.c.l.b16 %v83
  %v959 = vunpack.c.l.b16 %v84
  %v960 = vunpack.c.l.b16 %v85
  %v961 = vunpack.c.l.b16 %v86
  %v962 = vunpack.c.l.b16 %v87
  %v963 = vunpack.c.l.b16 %v88
  %v964 = vunpack.c.l.b16 %v89
  %v965 = vunpack.c.l.b16 %v90
  %v966 = vunpack.c.l.b16 %v91
  %v967 = vunpack.c.l.b16 %v92
  %v968 = vunpack.c.l.b16 %v93
  %v969 = vunpack.c.l.b16 %v94
  %v970 = vunpack.c.l.b16 %v95
  %v971 = vunpack.c.l.b16 %v96
  %v972 = vunpack.c.l.b16 %v97
  %v973 = vunpack.c.l.b16 %v98
  %v974 = vunpack.c.l.b16 %v99
  %v975 = vunpack.c.l.b16 %v100
  %v976 = vunpack.c.l.b16 %v101
  %v977 = vunpack.c.l.b16 %v102
  %v978 = vunpack.c.l.b16 %v103
  %v979 = vunpack.c.l.b16 %v104
  %v980 = vunpack.c.l.b16 %v105
  %v981 = vunpack.c.l.b16 %v106
  %v982 = vunpack.c.l.b16 %v107
  %v983 = vunpack.c.l.b16 %v108
  %v984 = vunpack.c.l.b16 %v109
  %v985 = vunpack.c.l.b16 %v110
  %v986 = vunpack.c.l.b16 %v111
  %v987 = vunpack.c.l.b16 %v112
  %v988 = vunpack.c.l.b16 %v113
  %v989 = vunpack.c.l.b16 %v114
  %v990 = vunpack.c.l.b16 %v115
  %v991 = vunpack.c.l.b16 %v116
  %v992 = vunpack.c.l.b16 %v117
  %v993 = vunpack.c.l.b16 %v118
  %v994 = vunpack.c.l.b16 %v119
  %v995 = vunpack.c.l.b16 %v120
  %v996 = vunpack.c.l.b16 %v121
  %v997 = vunpack.c.l.b16 %v122
  %v998 = vunpack.c.l.b16 %v123
  %v999 = vunpack.c.l.b16 %v124
  %v1000 = vunpack.c.l.b16 %v125
  %v1001 = vunpack.c.l.b16 %v126
  %v1002 = vunpack.c.l.b16 %v127
  %v1003 = vunpack.c.l.b16 %v128
  %v1004 = vunpack.c.l.b16 %v129
  %v1005 = vunpack.c.l.b16 %v130
  %v1006 = vunpack.c.l.b16 %v131
  %v1007 = vunpack.c.l.b16 %v132
  %v1008 = vunpack.c.l.b16 %v133
  %v1009 = vunpack.c.l.b16 %v134
  %v1010 = vunpack.c.l.b16 %v135
  %v1011 = vunpack.c.l.b16 %v136
  %v1012 = vunpack.c.l.b16 %v137
  %v1013 = vunpack.c.l.b16 %v138
  %v1014 = vunpack.c.l.b16 %v139
  %v1015 = vunpack.c.l.b16 %v140
  %v1016 = vunpack.c.l.b16 %v141
  %v1017 = vunpack.c.l.b16 %v142
  %v1018 = vunpack.c.l.b16 %v143
  %v1019 = vunpack.c.l.b16 %v144
  %v1020 = vunpack.c.l.b16 %v145
  %v1021 = vunpack.c.l.b16 %v146
  %v1022 = vunpack.c.l.b16 %v147
  %v1023 = vunpack.c.l.b16 %v148
  %v1024 = vunpack.c.l.b16 %v149
  %v1025 = vunpack.c.l.b16 %v150
  %v1026 = vunpack.c.l.b16 %v151
  %v1027 = vunpack.c.l.b16 %v152
  %v1028 = vunpack.c.l.b16 %v153
  %v1029 = vunpack.c.l.b16 %v154
  %v1030 = vunpack.c.l.b16 %v155
  %v1031 = vunpack.c.l.b16 %v156
  %v1032 = vunpack.c.l.b16 %v157
  %v1033 = vunpack.c.l.b16 %v158
  %v1034 = vunpack.c.l.b16 %v159
  %v1035 = vunpack.c.l.b16 %v160
  %v1036 = vunpack.c.l.b16 %v161
  %v1037 = vunpack.c.l.b16 %v162
  %v1038 = vunpack.c.l.b16 %v163
  %v1039 = vunpack.c.l.b16 %v164
  %v1040 = vunpack.c.l.b16 %v165
  %v1041 = vunpack.c.l.b16 %v166
  %v1042 = vunpack.c.l.b16 %v167
  %v1043 = vunpack.c.l.b16 %v168
  %v1044 = vunpack.c.l.b16 %v169
  %v1045 = vunpack.c.l.b16 %v170
  %v1046 = vunpack.c.l.b16 %v171
  %v1047 = vunpack.c.l.b16 %v172
  %v1048 = vunpack.c.l.b16 %v173
  %v1049 = vunpack.c.l.b16 %v174
  %v1050 = vunpack.c.l.b16 %v175
  %v1051 = vunpack.c.l.b16 %v176
  %v1052 = vunpack.c.l.b16 %v177
  %v1053 = vunpack.c.l.b16 %v178
  %v1054 = vunpack.c.l.b16 %v179
  %v1055 = vunpack.c.l.b16 %v180
  %v1056 = vunpack.c.l.b16 %v181
  %v1057 = vunpack.c.l.b16 %v182
  %v1058 = vunpack.c.l.b16 %v183
  %v1059 = vunpack.c.l.b16 %v184
  %v1060 = vunpack.c.l.b16 %v185
  %v1061 = vunpack.c.l.b16 %v186
  %v1062 = vunpack.c.l.b16 %v187
  %v1063 = vunpack.c.l.b16 %v188
  %v1064 = vunpack.c.l.b16 %v189
  %v1065 = vunpack.c.l.b16 %v190
  %v1066 = vunpack.c.l.b16 %v191
  %v1067 = vunpack.c.l.b16 %v192
  %v1068 = vunpack.c.l.b16 %v193
  %v1069 = vunpack.c.l.b16 %v194
  %v1070 = vunpack.c.l.b16 %v195
  %v1071 = vunpack.c.l.b16 %v196
  %v1072 = vunpack.c.l.b16 %v197
  %v1073 = vunpack.c.l.b16 %v198
  %v1074 = vunpack.c.l.b16 %v199
  %v1075 = vunpack.c.l.b16 %v200
  %v1076 = vunpack.c.l.b16 %v201
  %v1077 = vunpack.c.l.b16 %v202
  %v1078 = vunpack.c.l.b16 %v203
  %v1079 = vunpack.c.l.b16 %v204
  %v1080 = vunpack.c.l.b16 %v205
  %v1081 = vunpack.c.l.b16 %v206
  %v1082 = vunpack.c.l.b16 %v207
  %v1083 = vunpack.c.l.b16 %v208
  %v1084 = vunpack.c.l.b16 %v209
  %v1085 = vunpack.c.l.b16 %v210
  %v1086 = vunpack.c.l.b16 %v211
  %v1087 = vunpack.c.l.b16 %v212
  %v1088 = vunpack.c.l.b16 %v213
  %v1089 = vunpack.c.l.b16 %v214
  %v1090 = vunpack.c.l.b16 %v215
  %v1091 = vunpack.c.l.b16 %v216
  %v1092 = vunpack.c.l.b16 %v217
  %v1093 = vunpack.c.l.b16 %v218
  %v1094 = vunpack.c.l.b16 %v219
  %v1095 = vunpack.c.l.b16 %v220
  %v1096 = vunpack.c.l.b16 %v221
  %v1097 = vunpack.c.l.b16 %v222
  %v1098 = vunpack.c.l.b16 %v223
  %v1099 = vunpack.c.l.b16 %v224
  %v1100 = vunpack.c.l.b16 %v225
  %v1101 = vunpack.c.l.b16 %v226
  %v1102 = vunpack.c.l.b16 %v227
  %v1103 = vunpack.c.l.b16 %v228
  %v1104 = vunpack.c.l.b16 %v229
  %v1105 = vunpack.c.l.b16 %v230
  %v1106 = vunpack.c.l.b16 %v231
  %v1107 = vunpack.c.l.b16 %v232
  %v1108 = vunpack.c.l.b16 %v233
  %v1109 = vunpack.c.l.b16 %v234
  %v1110 = vunpack.c.l.b16 %v235
  %v1111 = vunpack.c.l.b16 %v236
  %v1112 = vunpack.c.l.b16 %v237
  %v1113 = vunpack.c.l.b16 %v238
  %v1114 = vunpack.c.l.b16 %v239
  %v1115 = vunpack.c.l.b16 %v240
  %v1116 = vunpack.c.l.b16 %v241
  %v1117 = vunpack.c.l.b16 %v242
  %v1118 = vunpack.c.l.b16 %v243
  %v1119 = vunpack.c.l.b16 %v244
  %v1120 = vunpack.c.l.b16 %v245
  %v1121 = vunpack.c.l.b16 %v246
  %v1122 = vunpack.c.l.b16 %v247
  %v1123 = vunpack.c.l.b16 %v248
  %v1124 = vunpack.c.l.b16 %v249
  %v1125 = vunpack.c.l.b16 %v250
  %v1126 = vunpack.c.l.b16 %v251
  %v1127 = vunpack.c.l.b16 %v252
  %v1128 = vunpack.c.l.b16 %v253
  %v1129 = vunpack.c.l.b16 %v254
  %v1130 = vunpack.c.l.b16 %v255
  %v1131 = vunpack.c.l.b16 %v256
  %v1132 = vunpack.c.l.b16 %v257
  %v1133 = vunpack.c.l.b16 %v258
  %v1134 = vunpack.c.l.b16 %v259
  %v1135 = vunpack.c.l.b16 %v260
  %v1136 = vunpack.c.l.b16 %v261
  %v1137 = vunpack.c.l.b16 %v262
  %v1138 = vunpack.c.l.b16 %v263
  %v1139 = vunpack.c.l.b16 %v264
  %v1140 = vunpack.c.l.b16 %v265
  %v1141 = vunpack.c.l.b16 %v266
  %v1142 = vunpack.c.l.b16 %v267
  %v1143 = vunpack.c.l.b16 %v268
  %v1144 = vunpack.c.l.b16 %v269
  %v1145 = vunpack.c.l.b16 %v270
  %v1146 = vunpack.c.l.b16 %v271
  %v1147 = vunpack.c.l.b16 %v272
  %v1148 = vunpack.c.l.b16 %v273
  %v1149 = vunpack.c.l.b16 %v274
  %v1150 = vunpack.c.l.b16 %v275
  %v1151 = vunpack.c.l.b16 %v276
  %v1152 = vunpack.c.l.b16 %v277
  %v1153 = vunpack.c.l.b16 %v278
  %v1154 = vunpack.c.l.b16 %v279
  %v1155 = vunpack.c.l.b16 %v280
  %v1156 = vunpack.c.l.b16 %v281
  %v1157 = vunpack.c.l.b16 %v282
  %v1158 = vunpack.c.l.b16 %v283
  %v1159 = vunpack.c.l.b16 %v284
  %v1160 = vunpack.c.l.b16 %v285
  %v1161 = vunpack.c.l.b16 %v286
  %v1162 = vunpack.c.l.b16 %v287
  %v1163 = vunpack.c.l.b16 %v288
  %v1164 = vunpack.c.l.b16 %v289
  %v1165 = vunpack.c.l.b16 %v290
  %v1166 = vunpack.c.l.b16 %v291
  %v1167 = vunpack.c.l.b16 %v292
  %v1168 = vunpack.c.l.b16 %v293
  %v1169 = vunpack.c.l.b16 %v294
  %v1170 = vunpack.c.l.b16 %v295
  %v1171 = vunpack.c.l.b16 %v296
  %v1172 = vunpack.c.l.b16 %v297
  %v1173 = vunpack.c.l.b16 %v298
  %v1174 = vunpack.c.l.b16 %v299
  %v1175 = vunpack.c.l.b16 %v300
  %v1176 = vunpack.c.l.b16 %v301
  %v1177 = vunpack.c.l.b16 %v302
  %v1178 = vunpack.c.l.b16 %v303
  %v1179 = vunpack.c.l.b16 %v304
  %v1180 = vunpack.c.l.b16 %v305
  %v1181 = vunpack.c.l.b16 %v306
  %v1182 = vunpack.c.l.b16 %v307
  %v1183 = vunpack.c.l.b16 %v308
  %v1184 = vunpack.c.l.b16 %v309
  %v1185 = vunpack.c.l.b16 %v310
  %v1186 = vunpack.c.l.b16 %v311
  %v1187 = vunpack.c.l.b16 %v312
  %v1188 = vunpack.c.l.b16 %v313
  %v1189 = vunpack.c.l.b16 %v314
  %v1190 = vunpack.c.l.b16 %v315
  %v1191 = vunpack.c.l.b16 %v316
  %v1192 = vunpack.c.l.b16 %v317
  %v1193 = vunpack.c.l.b16 %v318
  %v1194 = vunpack.c.l.b16 %v319
  %v1195 = vunpack.c.l.b16 %v320
  %v1196 = vunpack.c.l.b16 %v321
  %v1197 = vunpack.c.l.b16 %v322
  %v1198 = vunpack.c.l.b16 %v323
  %v1199 = vunpack.c.l.b16 %v324
  %v1200 = vunpack.c.l.b16 %v325
  %v1201 = vunpack.c.l.b16 %v326
  %v1202 = vunpack.c.l.b16 %v327
  %v1203 = vunpack.c.l.b16 %v328
  %v1204 = vunpack.c.l.b16 %v329
  %v1205 = vunpack.c.l.b16 %v330
  %v1206 = vunpack.c.l.b16 %v331
  %v1207 = vunpack.c.l.b16 %v332
  %v1208 = vunpack.c.l.b16 %v333
  %v1209 = vunpack.c.l.b16 %v334
  %v1210 = vunpack.c.l.b16 %v335
  %v1211 = vunpack.c.l.b16 %v336
  %v1212 = vunpack.c.l.b16 %v337
  %v1213 = vunpack.c.l.b16 %v338
  %v1214 = vunpack.c.l.b16 %v339
  %v1215 = vunpack.c.l.b16 %v340
  %v1216 = vunpack.c.l.b16 %v341
  %v1217 = vunpack.c.l.b16 %v342
  %v1218 = vunpack.c.l.b16 %v343
  %v1219 = vunpack.c.l.b16 %v344
  %v1220 = vunpack.c.l.b16 %v345
  %v1221 = vunpack.c.l.b16 %v346
  %v1222 = vunpack.c.l.b16 %v347
  %v1223 = vunpack.c.l.b16 %v348
  %v1224 = vunpack.c.l.b16 %v349
  %v1225 = vunpack.c.l.b16 %v350
  %v1226 = vunpack.c.l.b16 %v351
  %v1227 = vunpack.c.l.b16 %v352
  %v1228 = vunpack.c.l.b16 %v353
  %v1229 = vunpack.c.l.b16 %v354
  %v1230 = vunpack.c.l.b16 %v355
  %v1231 = vunpack.c.l.b16 %v356
  %v1232 = vunpack.c.l.b16 %v357
  %v1233 = vunpack.c.l.b16 %v358
  %v1234 = vunpack.c.l.b16 %v359
  %v1235 = vunpack.c.l.b16 %v360
  %v1236 = vunpack.c.l.b16 %v361
  %v1237 = vunpack.c.l.b16 %v362
  %v1238 = vunpack.c.l.b16 %v363
  %v1239 = vunpack.c.l.b16 %v364
  %v1240 = vunpack.c.l.b16 %v365
  %v1241 = vunpack.c.l.b16 %v366
  %v1242 = vunpack.c.l.b16 %v367
  %v1243 = vunpack.c.l.b16 %v368
  %v1244 = vunpack.c.l.b16 %v369
  %v1245 = vunpack.c.l.b16 %v370
  %v1246 = vunpack.c.l.b16 %v371
  %v1247 = vunpack.c.l.b16 %v372
  %v1248 = vunpack.c.l.b16 %v373
  %v1249 = vunpack.c.l.b16 %v374
  %v1250 = vunpack.c.l.b16 %v375
  %v1251 = vunpack.c.l.b16 %v376
  %v1252 = vunpack.c.l.b16 %v377
  %v1253 = vunpack.c.l.b16 %v378
  %v1254 = vunpack.c.l.b16 %v379
  %v1255 = vunpack.c.l.b16 %v380
  %v1256 = vunpack.c.l.b16 %v381
  %v1257 = vunpack.c.l.b16 %v382
  %v1258 = vunpack.c.l.b16 %v383
  %v1259 = vunpack.c.l.b16 %v384
  %v1260 = vunpack.c.l.b16 %v385
  %v1261 = vunpack.c.l.b16 %v386
  %v1262 = vunpack.c.l.b16 %v387
  %v1263 = vunpack.c.l.b16 %v388
  %v1264 = vunpack.c.l.b16 %v389
  %v1265 = vunpack.c.l.b16 %v390
  %v1266 = vunpack.c.l.b16 %v391
  %v1267 = vunpack.c.l.b16 %v392
  %v1268 = vunpack.c.l.b16 %v393
  %v1269 = vunpack.c.l.b16 %v394
  %v1270 = vunpack.c.l.b16 %v395
  %v1271 = vunpack.c.l.b16 %v396
  %v1272 = vunpack.c.l.b16 %v397
  %v1273 = vunpack.c.l.b16 %v398
  %v1274 = vunpack.c.l.b16 %v399
  %v1275 = vunpack.c.l.b16 %v400
  %v1276 = vunpack.c.l.b16 %v401
  %v1277 = vunpack.c.l.b16 %v402
  %v1278 = vunpack.c.l.b16 %v403
  %v1279 = vunpack.c.l.b16 %v404
  %v1280 = vunpack.c.l.b16 %v405
  %v1281 = vunpack.c.l.b16 %v406
  %v1282 = vunpack.c.l.b16 %v407
  %v1283 = vunpack.c.l.b16 %v408
  %v1284 = vunpack.c.l.b16 %v409
  %v1285 = vunpack.c.l.b16 %v410
  %v1286 = vunpack.c.l.b16 %v411
  %v1287 = vunpack.c.l.b16 %v412
  %v1288 = vunpack.c.l.b16 %v413
  %v1289 = vunpack.c.l.b16 %v414
  %v1290 = vunpack.c.l.b16 %v415
  %v1291 = vunpack.c.l.b16 %v416
  %v1292 = vunpack.c.l.b16 %v417
  %v1293 = vunpack.c.l.b16 %v418
  %v1294 = vunpack.c.l.b16 %v419
  %v1295 = vunpack.c.l.b16 %v420
  %v1296 = vunpack.c.l.b16 %v421
  %v1297 = vunpack.c.l.b16 %v422
  %v1298 = vunpack.c.l.b16 %v423
  %v1299 = vunpack.c.l.b16 %v424
  %v1300 = vunpack.c.l.b16 %v425
  %v1301 = vpack.c.b16 %v910, %v909
  %v1302 = vpack.c.b16 %v912, %v911
  %v1303 = vpack.c.b16 %v914, %v913
  %v1304 = vpack.c.b16 %v916, %v915
  %v1305 = vpack.c.b16 %v918, %v917
  %v1306 = vpack.c.b16 %v920, %v919
  %v1307 = vpack.c.b16 %v922, %v921
  %v1308 = vpack.c.b16 %v924, %v923
  %v1309 = vpack.c.b16 %v926, %v925
  %v1310 = vpack.c.b16 %v928, %v927
  %v1311 = vpack.c.b16 %v930, %v929
  %v1312 = vpack.c.b16 %v932, %v931
  %v1313 = vpack.c.b16 %v934, %v933
  %v1314 = vpack.c.b16 %v936, %v935
  %v1315 = vpack.c.b16 %v938, %v937
  %v1316 = vpack.c.b16 %v940, %v939
  %v1317 = vpack.c.b16 %v942, %v941
  %v1318 = vpack.c.b16 %v944, %v943
  %v1319 = vpack.c.b16 %v946, %v945
  %v1320 = vpack.c.b16 %v948, %v947
  %v1321 = vpack.c.b16 %v950, %v949
  %v1322 = vpack.c.b16 %v952, %v951
  %v1323 = vpack.c.b16 %v954, %v953
  %v1324 = vpack.c.b16 %v956, %v955
  %v1325 = vpack.c.b16 %v958, %v957
  %v1326 = vpack.c.b16 %v960, %v959
  %v1327 = vpack.c.b16 %v962, %v961
  %v1328 = vpack.c.b16 %v964, %v963
  %v1329 = vpack.c.b16 %v966, %v965
  %v1330 = vpack.c.b16 %v968, %v967
  %v1331 = vpack.c.b16 %v970, %v969
  %v1332 = vpack.c.b16 %v972, %v971
  %v1333 = vpack.c.b16 %v974, %v973
  %v1334 = vpack.c.b16 %v976, %v975
  %v1335 = vpack.c.b16 %v978, %v977
  %v1336 = vpack.c.b16 %v980, %v979
  %v1337 = vpack.c.b16 %v982, %v981
  %v1338 = vpack.c.b16 %v984, %v983
  %v1339 = vpack.c.b16 %v986, %v985
  %v1340 = vpack.c.b16 %v988, %v987
  %v1341 = vpack.c.b16 %v990, %v989
  %v1342 = vpack.c.b16 %v992, %v991
  %v1343 = vpack.c.b16 %v994, %v993
  %v1344 = vpack.c.b16 %v996, %v995
  %v1345 = vpack.c.b16 %v998, %v997
  %v1346 = vpack.c.b16 %v1000, %v999
  %v1347 = vpack.c.b16 %v1002, %v1001
  %v1348 = vpack.c.b16 %v1004, %v1003
  %v1349 = vpack.c.b16 %v1006, %v1005
  %v1350 = vpack.c.b16 %v1008, %v1007
  %v1351 = vpack.c.b16 %v1010, %v1009
  %v1352 = vpack.c.b16 %v1012, %v1011
  %v1353 = vpack.c.b16 %v1014, %v1013
  %v1354 = vpack.c.b16 %v1016, %v1015
  %v1355 = vpack.c.b16 %v1018, %v1017
  %v1356 = vpack.c.b16 %v1020, %v1019
  %v1357 = vpack.c.b16 %v1022, %v1021
  %v1358 = vpack.c.b16 %v1024, %v1023
  %v1359 = vpack.c.b16 %v1026, %v1025
  %v1360 = vpack.c.b16 %v1028, %v1027
  %v1361 = vpack.c.b16 %v1030, %v1029
  %v1362 = vpack.c.b16 %v1032, %v1031
  %v1363 = vpack.c.b16 %v1034, %v1033
  %v1364 = vpack.c.b16 %v1036, %v1035
  %v1365 = vpack.c.b16 %v1038, %v1037
  %v1366 = vpack.c.b16 %v1040, %v1039
  %v1367 = vpack.c.b16 %v1042, %v1041
  %v1368 = vpack.c.b16 %v1044, %v1043
  %v1369 = vpack.c.b16 %v1046, %v1045
  %v1370 = vpack.c.b16 %v1048, %v1047
  %v1371 = vpack.c.b16 %v1050, %v1049
  %v1372 = vpack.c.b16 %v1052, %v1051
  %v1373 = vpack.c.b16 %v1054, %v1053
  %v1374 = vpack.c.b16 %v1056, %v1055
  %v1375 = vpack.c.b16 %v1058, %v1057
  %v1376 = vpack.c.b16 %v1060, %v1059
  %v1377 = vpack.c.b16 %v1062, %v1061
  %v1378 = vpack.c.b16 %v1064, %v1063
  %v1379 = vpack.c.b16 %v1066, %v1065
  %v1380 = vpack.c.b16 %v1068, %v1067
  %v1381 = vpack.c.b16 %v1070, %v1069
  %v1382 = vpack.c.b16 %v1072, %v1071
  %v1383 = vpack.c.b16 %v1074, %v1073
  %v1384 = vpack.c.b16 %v1076, %v1075
  %v1385 = vpack.c.b16 %v1078, %v1077
  %v1386 = vpack.c.b16 %v1080, %v1079
  %v1387 = vpack.c.b16 %v1082, %v1081
  %v1388 = vpack.c.b16 %v1084, %v1083
  %v1389 = vpack.c.b16 %v1086, %v1085
  %v1390 = vpack.c.b16 %v1088, %v1087
  %v1391 = vpack.c.b16 %v1090, %v1089
  %v1392 = vpack.c.b16 %v1092, %v1091
  %v1393 = vpack.c.b16 %v1094, %v1093
  %v1394 = vpack.c.b16 %v1096, %v1095
  %v1395 = vpack.c.b16 %v1098, %v1097
  %v1396 = vpack.c.b16 %v1100, %v1099
  %v1397 = vpack.c.b16 %v1102, %v1101
  %v1398 = vpack.c.b16 %v1104, %v1103
  %v1399 = vpack.c.b16 %v1106, %v1105
  %v1400 = vpack.c.b16 %v1108, %v1107
  %v1401 = vpack.c.b16 %v1110, %v1109
  %v1402 = vpack.c.b16 %v1112, %v1111
  %v1403 = vpack.c.b16 %v1114, %v1113
  %v1404 = vpack.c.b16 %v1116, %v1115
  %v1405 = vpack.c.b16 %v1118, %v1117
  %v1406 = vpack.c.b16 %v1120, %v1119
  %v1407 = vpack.c.b16 %v1122, %v1121
  %v1408 = vpack.c.b16 %v1124, %v1123
  %v1409 = vpack.c.b16 %v1126, %v1125
  %v1410 = vpack.c.b16 %v1128, %v1127
  %v1411 = vpack.c.b16 %v1130, %v1129
  %v1412 = vpack.c.b16 %v1132, %v1131
  %v1413 = vpack.c.b16 %v1134, %v1133
  %v1414 = vpack.c.b16 %v1136, %v1135
  %v1415 = vpack.c.b16 %v1138, %v1137
  %v1416 = vpack.c.b16 %v1140, %v1139
  %v1417 = vpack.c.b16 %v1142, %v1141
  %v1418 = vpack.c.b16 %v1144, %v1143
  %v1419 = vpack.c.b16 %v1146, %v1145
  %v1420 = vpack.c.b16 %v1148, %v1147
  %v1421 = vpack.c.b16 %v1150, %v1149
  %v1422 = vpack.c.b16 %v1152, %v1151
  %v1423 = vpack.c.b16 %v1154, %v1153
  %v1424 = vpack.c.b16 %v1156, %v1155
  %v1425 = vpack.c.b16 %v1158, %v1157
  %v1426 = vpack.c.b16 %v1160, %v1159
  %v1427 = vpack.c.b16 %v1162, %v1161
  %v1428 = vpack.c.b16 %v1164, %v1163
  %v1429 = vpack.c.b16 %v1166, %v1165
  %v1430 = vpack.c.b16 %v1168, %v1167
  %v1431 = vpack.c.b16 %v1170, %v1169
  %v1432 = vpack.c.b16 %v1172, %v1171
  %v1433 = vpack.c.b16 %v1174, %v1173
  %v1434 = vpack.c.b16 %v1176, %v1175
  %v1435 = vpack.c.b16 %v1178, %v1177
  %v1436 = vpack.c.b16 %v1180, %v1179
  %v1437 = vpack.c.b16 %v1182, %v1181
  %v1438 = vpack.c.b16 %v1184, %v1183
  %v1439 = vpack.c.b16 %v1186, %v1185
  %v1440 = vpack.c.b16 %v1188, %v1187
  %v1441 = vpack.c.b16 %v1190, %v1189
  %v1442 = vpack.c.b16 %v1192, %v1191
  %v1443 = vpack.c.b16 %v1194, %v1193
  %v1444 = vpack.c.b16 %v1196, %v1195
  %v1445 = vpack.c.b16 %v1198, %v1197
  %v1446 = vpack.c.b16 %v1200, %v1199
  %v1447 = vpack.c.b16 %v1202, %v1201
  %v1448 = vpack.c.b16 %v1204, %v1203
  %v1449 = vpack.c.b16 %v1206, %v1205
  %v1450 = vpack.c.b16 %v1208, %v1207
  %v1451 = vpack.c.b16 %v1210, %v1209
  %v1452 = vpack.c.b16 %v1212, %v1211
  %v1453 = vpack.c.b16 %v1214, %v1213
  %v1454 = vpack.c.b16 %v1216, %v1215
  %v1455 = vpack.c.b16 %v1218, %v1217
  %v1456 = vpack.c.b16 %v1220, %v1219
  %v1457 = vpack.c.b16 %v1222, %v1221
  %v1458 = vpack.c.b16 %v1224, %v1223
  %v1459 = vpack.c.b16 %v1226, %v1225
  %v1460 = vpack.c.b16 %v1228, %v1227
  %v1461 = vpack.c.b16 %v1230, %v1229
  %v1462 = vpack.c.b16 %v1232, %v1231
  %v1463 = vpack.c.b16 %v1234, %v1233
  %v1464 = vpack.c.b16 %v1236, %v1235
  %v1465 = vpack.c.b16 %v1238, %v1237
  %v1466 = vpack.c.b16 %v1240, %v1239
  %v1467 = vpack.c.b16 %v1242, %v1241
  %v1468 = vpack.c.b16 %v1244, %v1243
  %v1469 = vpack.c.b16 %v1246, %v1245
  %v1470 = vpack.c.b16 %v1248, %v1247
  %v1471 = vpack.c.b16 %v1250, %v1249
  %v1472 = vpack.c.b16 %v1252, %v1251
  %v1473 = vpack.c.b16 %v1254, %v1253
  %v1474 = vpack.c.b16 %v1256, %v1255
  %v1475 = vpack.c.b16 %v1258, %v1257
  %v1476 = vpack.c.b16 %v1260, %v1259
  %v1477 = vpack.c.b16 %v1262, %v1261
  %v1478 = vpack.c.b16 %v1264, %v1263
  %v1479 = vpack.c.b16 %v1266, %v1265
  %v1480 = vpack.c.b16 %v1268, %v1267
  %v1481 = vpack.c.b16 %v1270, %v1269
  %v1482 = vpack.c.b16 %v1272, %v1271
  %v1483 = vpack.c.b16 %v1274, %v1273
  %v1484 = vpack.c.b16 %v1276, %v1275
  %v1485 = vpack.c.b16 %v1278, %v1277
  %v1486 = vpack.c.b16 %v1280, %v1279
  %v1487 = vpack.c.b16 %v1282, %v1281
  %v1488 = vpack.c.b16 %v1284, %v1283
  %v1489 = vpack.c.b16 %v1286, %v1285
  %v1490 = vpack.c.b16 %v1288, %v1287
  %v1491 = vpack.c.b16 %v1290, %v1289
  %v1492 = vpack.c.b16 %v1292, %v1291
  %v1493 = vpack.c.b16 %v1294, %v1293
  %v1494 = vpack.c.b16 %v1296, %v1295
  %v1495 = vpack.c.b16 %v1298, %v1297
  %v1496 = vpack.c.b16 %v1300, %v1299
  %vm1693 = vcmask 523264
  %v1695 = vsel %vm1693, %v492, 0
  %1697 = vmatpush.bf16.msra.mxu0 %v1308
  %1698 = vmatpush.bf16.msra.mxu0 %v1307
  %1699 = vmatpush.bf16.msra.mxu0 %v1306
  %1700 = vmatpush.bf16.msra.mxu0 %v1305
  %1701 = vmatpush.bf16.msra.mxu0 %v1304
  %1702 = vmatpush.bf16.msra.mxu0 %v1303
  %1703 = vmatpush.bf16.msra.mxu0 %v1302
  %1704 = vmatpush.bf16.msra.mxu0 %v1301
  %1705 = vmatmul.bf16.gmra.mxu0 %v468
  %v1706 = vpop.f32.mrf.mxu0
  %v1707 = vadd.f32 %v428, %v1706
  %v1708 = vpop.f32.mrf.mxu0
  %1709 = vdwg.mxu0
  %1710 = vmatpush.bf16.msra.mxu0 %v1316
  %1711 = vmatpush.bf16.msra.mxu0 %v1315
  %1712 = vmatpush.bf16.msra.mxu0 %v1314
  %1713 = vmatpush.bf16.msra.mxu0 %v1313
  %1714 = vmatpush.bf16.msra.mxu0 %v1312
  %1715 = vmatpush.bf16.msra.mxu0 %v1311
  %1716 = vmatpush.bf16.msra.mxu0 %v1310
  %1717 = vmatpush.bf16.msra.mxu0 %v1309
  %1718 = vmatmul.bf16.gmra.mxu0 %v469
  %v1719 = vpop.f32.mrf.mxu0
  %v1720 = vadd.f32 %v1707, %v1719
  %v1721 = vpop.f32.mrf.mxu0
  %1722 = vdwg.mxu0
  %1723 = vmatpush.bf16.msra.mxu0 %v1324
  %1724 = vmatpush.bf16.msra.mxu0 %v1323
  %1725 = vmatpush.bf16.msra.mxu0 %v1322
  %1726 = vmatpush.bf16.msra.mxu0 %v1321
  %1727 = vmatpush.bf16.msra.mxu0 %v1320
  %1728 = vmatpush.bf16.msra.mxu0 %v1319
  %1729 = vmatpush.bf16.msra.mxu0 %v1318
  %1730 = vmatpush.bf16.msra.mxu0 %v1317
  %1731 = vmatmul.bf16.gmra.mxu0 %v470
  %v1732 = vpop.f32.mrf.mxu0
  %v1733 = vadd.f32 %v1720, %v1732
  %v1734 = vpop.f32.mrf.mxu0
  %1735 = vdwg.mxu0
  %1736 = vmatpush.bf16.msra.mxu0 %v1332
  %1737 = vmatpush.bf16.msra.mxu0 %v1331
  %1738 = vmatpush.bf16.msra.mxu0 %v1330
  %1739 = vmatpush.bf16.msra.mxu0 %v1329
  %1740 = vmatpush.bf16.msra.mxu0 %v1328
  %1741 = vmatpush.bf16.msra.mxu0 %v1327
  %1742 = vmatpush.bf16.msra.mxu0 %v1326
  %1743 = vmatpush.bf16.msra.mxu0 %v1325
  %1744 = vmatmul.bf16.gmra.mxu0 %v471
  %v1745 = vpop.f32.mrf.mxu0
  %v1746 = vadd.f32 %v1733, %v1745
  %v1747 = vpop.f32.mrf.mxu0
  %1748 = vdwg.mxu0
  %1749 = vmatpush.bf16.msra.mxu0 %v1340
  %1750 = vmatpush.bf16.msra.mxu0 %v1339
  %1751 = vmatpush.bf16.msra.mxu0 %v1338
  %1752 = vmatpush.bf16.msra.mxu0 %v1337
  %1753 = vmatpush.bf16.msra.mxu0 %v1336
  %1754 = vmatpush.bf16.msra.mxu0 %v1335
  %1755 = vmatpush.bf16.msra.mxu0 %v1334
  %1756 = vmatpush.bf16.msra.mxu0 %v1333
  %1757 = vmatmul.bf16.gmra.mxu0 %v472
  %v1758 = vpop.f32.mrf.mxu0
  %v1759 = vadd.f32 %v1746, %v1758
  %v1760 = vpop.f32.mrf.mxu0
  %1761 = vdwg.mxu0
  %1762 = vmatpush.bf16.msra.mxu0 %v1348
  %1763 = vmatpush.bf16.msra.mxu0 %v1347
  %1764 = vmatpush.bf16.msra.mxu0 %v1346
  %1765 = vmatpush.bf16.msra.mxu0 %v1345
  %1766 = vmatpush.bf16.msra.mxu0 %v1344
  %1767 = vmatpush.bf16.msra.mxu0 %v1343
  %1768 = vmatpush.bf16.msra.mxu0 %v1342
  %1769 = vmatpush.bf16.msra.mxu0 %v1341
  %1770 = vmatmul.bf16.gmra.mxu0 %v473
  %v1771 = vpop.f32.mrf.mxu0
  %v1772 = vadd.f32 %v1759, %v1771
  %v1773 = vpop.f32.mrf.mxu0
  %1774 = vdwg.mxu0
  %1775 = vmatpush.bf16.msra.mxu0 %v1356
  %1776 = vmatpush.bf16.msra.mxu0 %v1355
  %1777 = vmatpush.bf16.msra.mxu0 %v1354
  %1778 = vmatpush.bf16.msra.mxu0 %v1353
  %1779 = vmatpush.bf16.msra.mxu0 %v1352
  %1780 = vmatpush.bf16.msra.mxu0 %v1351
  %1781 = vmatpush.bf16.msra.mxu0 %v1350
  %1782 = vmatpush.bf16.msra.mxu0 %v1349
  %1783 = vmatmul.bf16.gmra.mxu0 %v474
  %v1784 = vpop.f32.mrf.mxu0
  %v1785 = vadd.f32 %v1772, %v1784
  %v1786 = vpop.f32.mrf.mxu0
  %1787 = vdwg.mxu0
  %1788 = vmatpush.bf16.msra.mxu0 %v1364
  %1789 = vmatpush.bf16.msra.mxu0 %v1363
  %1790 = vmatpush.bf16.msra.mxu0 %v1362
  %1791 = vmatpush.bf16.msra.mxu0 %v1361
  %1792 = vmatpush.bf16.msra.mxu0 %v1360
  %1793 = vmatpush.bf16.msra.mxu0 %v1359
  %1794 = vmatpush.bf16.msra.mxu0 %v1358
  %1795 = vmatpush.bf16.msra.mxu0 %v1357
  %1796 = vmatmul.bf16.gmra.mxu0 %v475
  %v1797 = vpop.f32.mrf.mxu0
  %v1798 = vadd.f32 %v1785, %v1797
  %v1799 = vpop.f32.mrf.mxu0
  %1800 = vdwg.mxu0
  %1801 = vmatpush.bf16.msra.mxu0 %v1372
  %1802 = vmatpush.bf16.msra.mxu0 %v1371
  %1803 = vmatpush.bf16.msra.mxu0 %v1370
  %1804 = vmatpush.bf16.msra.mxu0 %v1369
  %1805 = vmatpush.bf16.msra.mxu0 %v1368
  %1806 = vmatpush.bf16.msra.mxu0 %v1367
  %1807 = vmatpush.bf16.msra.mxu0 %v1366
  %1808 = vmatpush.bf16.msra.mxu0 %v1365
  %1809 = vmatmul.bf16.gmra.mxu0 %v476
  %v1810 = vpop.f32.mrf.mxu0
  %v1811 = vadd.f32 %v1798, %v1810
  %v1812 = vpop.f32.mrf.mxu0
  %1813 = vdwg.mxu0
  %1814 = vmatpush.bf16.msra.mxu0 %v1380
  %1815 = vmatpush.bf16.msra.mxu0 %v1379
  %1816 = vmatpush.bf16.msra.mxu0 %v1378
  %1817 = vmatpush.bf16.msra.mxu0 %v1377
  %1818 = vmatpush.bf16.msra.mxu0 %v1376
  %1819 = vmatpush.bf16.msra.mxu0 %v1375
  %1820 = vmatpush.bf16.msra.mxu0 %v1374
  %1821 = vmatpush.bf16.msra.mxu0 %v1373
  %1822 = vmatmul.bf16.gmra.mxu0 %v477
  %v1823 = vpop.f32.mrf.mxu0
  %v1824 = vadd.f32 %v1811, %v1823
  %v1825 = vpop.f32.mrf.mxu0
  %1826 = vdwg.mxu0
  %1827 = vmatpush.bf16.msra.mxu0 %v1388
  %1828 = vmatpush.bf16.msra.mxu0 %v1387
  %1829 = vmatpush.bf16.msra.mxu0 %v1386
  %1830 = vmatpush.bf16.msra.mxu0 %v1385
  %1831 = vmatpush.bf16.msra.mxu0 %v1384
  %1832 = vmatpush.bf16.msra.mxu0 %v1383
  %1833 = vmatpush.bf16.msra.mxu0 %v1382
  %1834 = vmatpush.bf16.msra.mxu0 %v1381
  %1835 = vmatmul.bf16.gmra.mxu0 %v478
  %v1836 = vpop.f32.mrf.mxu0
  %v1837 = vadd.f32 %v1824, %v1836
  %v1838 = vpop.f32.mrf.mxu0
  %1839 = vdwg.mxu0
  %1840 = vmatpush.bf16.msra.mxu0 %v1396
  %1841 = vmatpush.bf16.msra.mxu0 %v1395
  %1842 = vmatpush.bf16.msra.mxu0 %v1394
  %1843 = vmatpush.bf16.msra.mxu0 %v1393
  %1844 = vmatpush.bf16.msra.mxu0 %v1392
  %1845 = vmatpush.bf16.msra.mxu0 %v1391
  %1846 = vmatpush.bf16.msra.mxu0 %v1390
  %1847 = vmatpush.bf16.msra.mxu0 %v1389
  %1848 = vmatmul.bf16.gmra.mxu0 %v479
  %v1849 = vpop.f32.mrf.mxu0
  %v1850 = vadd.f32 %v1837, %v1849
  %v1851 = vpop.f32.mrf.mxu0
  %1852 = vdwg.mxu0
  %1853 = vmatpush.bf16.msra.mxu0 %v1404
  %1854 = vmatpush.bf16.msra.mxu0 %v1403
  %1855 = vmatpush.bf16.msra.mxu0 %v1402
  %1856 = vmatpush.bf16.msra.mxu0 %v1401
  %1857 = vmatpush.bf16.msra.mxu0 %v1400
  %1858 = vmatpush.bf16.msra.mxu0 %v1399
  %1859 = vmatpush.bf16.msra.mxu0 %v1398
  %1860 = vmatpush.bf16.msra.mxu0 %v1397
  %1861 = vmatmul.bf16.gmra.mxu0 %v480
  %v1862 = vpop.f32.mrf.mxu0
  %v1863 = vadd.f32 %v1850, %v1862
  %v1864 = vpop.f32.mrf.mxu0
  %1865 = vdwg.mxu0
  %1866 = vmatpush.bf16.msra.mxu0 %v1412
  %1867 = vmatpush.bf16.msra.mxu0 %v1411
  %1868 = vmatpush.bf16.msra.mxu0 %v1410
  %1869 = vmatpush.bf16.msra.mxu0 %v1409
  %1870 = vmatpush.bf16.msra.mxu0 %v1408
  %1871 = vmatpush.bf16.msra.mxu0 %v1407
  %1872 = vmatpush.bf16.msra.mxu0 %v1406
  %1873 = vmatpush.bf16.msra.mxu0 %v1405
  %1874 = vmatmul.bf16.gmra.mxu0 %v481
  %v1875 = vpop.f32.mrf.mxu0
  %v1876 = vadd.f32 %v1863, %v1875
  %v1877 = vpop.f32.mrf.mxu0
  %1878 = vdwg.mxu0
  %1879 = vmatpush.bf16.msra.mxu0 %v1420
  %1880 = vmatpush.bf16.msra.mxu0 %v1419
  %1881 = vmatpush.bf16.msra.mxu0 %v1418
  %1882 = vmatpush.bf16.msra.mxu0 %v1417
  %1883 = vmatpush.bf16.msra.mxu0 %v1416
  %1884 = vmatpush.bf16.msra.mxu0 %v1415
  %1885 = vmatpush.bf16.msra.mxu0 %v1414
  %1886 = vmatpush.bf16.msra.mxu0 %v1413
  %1887 = vmatmul.bf16.gmra.mxu0 %v482
  %v1888 = vpop.f32.mrf.mxu0
  %v1889 = vadd.f32 %v1876, %v1888
  %v1890 = vpop.f32.mrf.mxu0
  %1891 = vdwg.mxu0
  %1892 = vmatpush.bf16.msra.mxu0 %v1428
  %1893 = vmatpush.bf16.msra.mxu0 %v1427
  %1894 = vmatpush.bf16.msra.mxu0 %v1426
  %1895 = vmatpush.bf16.msra.mxu0 %v1425
  %1896 = vmatpush.bf16.msra.mxu0 %v1424
  %1897 = vmatpush.bf16.msra.mxu0 %v1423
  %1898 = vmatpush.bf16.msra.mxu0 %v1422
  %1899 = vmatpush.bf16.msra.mxu0 %v1421
  %1900 = vmatmul.bf16.gmra.mxu0 %v483
  %v1901 = vpop.f32.mrf.mxu0
  %v1902 = vadd.f32 %v1889, %v1901
  %v1903 = vpop.f32.mrf.mxu0
  %1904 = vdwg.mxu0
  %1905 = vmatpush.bf16.msra.mxu0 %v1436
  %1906 = vmatpush.bf16.msra.mxu0 %v1435
  %1907 = vmatpush.bf16.msra.mxu0 %v1434
  %1908 = vmatpush.bf16.msra.mxu0 %v1433
  %1909 = vmatpush.bf16.msra.mxu0 %v1432
  %1910 = vmatpush.bf16.msra.mxu0 %v1431
  %1911 = vmatpush.bf16.msra.mxu0 %v1430
  %1912 = vmatpush.bf16.msra.mxu0 %v1429
  %1913 = vmatmul.bf16.gmra.mxu0 %v484
  %v1914 = vpop.f32.mrf.mxu0
  %v1915 = vadd.f32 %v1902, %v1914
  %v1916 = vpop.f32.mrf.mxu0
  %1917 = vdwg.mxu0
  %1918 = vmatpush.bf16.msra.mxu0 %v1444
  %1919 = vmatpush.bf16.msra.mxu0 %v1443
  %1920 = vmatpush.bf16.msra.mxu0 %v1442
  %1921 = vmatpush.bf16.msra.mxu0 %v1441
  %1922 = vmatpush.bf16.msra.mxu0 %v1440
  %1923 = vmatpush.bf16.msra.mxu0 %v1439
  %1924 = vmatpush.bf16.msra.mxu0 %v1438
  %1925 = vmatpush.bf16.msra.mxu0 %v1437
  %1926 = vmatmul.bf16.gmra.mxu0 %v485
  %v1927 = vpop.f32.mrf.mxu0
  %v1928 = vadd.f32 %v1915, %v1927
  %v1929 = vpop.f32.mrf.mxu0
  %1930 = vdwg.mxu0
  %1931 = vmatpush.bf16.msra.mxu0 %v1452
  %1932 = vmatpush.bf16.msra.mxu0 %v1451
  %1933 = vmatpush.bf16.msra.mxu0 %v1450
  %1934 = vmatpush.bf16.msra.mxu0 %v1449
  %1935 = vmatpush.bf16.msra.mxu0 %v1448
  %1936 = vmatpush.bf16.msra.mxu0 %v1447
  %1937 = vmatpush.bf16.msra.mxu0 %v1446
  %1938 = vmatpush.bf16.msra.mxu0 %v1445
  %1939 = vmatmul.bf16.gmra.mxu0 %v486
  %v1940 = vpop.f32.mrf.mxu0
  %v1941 = vadd.f32 %v1928, %v1940
  %v1942 = vpop.f32.mrf.mxu0
  %1943 = vdwg.mxu0
  %1944 = vmatpush.bf16.msra.mxu0 %v1460
  %1945 = vmatpush.bf16.msra.mxu0 %v1459
  %1946 = vmatpush.bf16.msra.mxu0 %v1458
  %1947 = vmatpush.bf16.msra.mxu0 %v1457
  %1948 = vmatpush.bf16.msra.mxu0 %v1456
  %1949 = vmatpush.bf16.msra.mxu0 %v1455
  %1950 = vmatpush.bf16.msra.mxu0 %v1454
  %1951 = vmatpush.bf16.msra.mxu0 %v1453
  %1952 = vmatmul.bf16.gmra.mxu0 %v487
  %v1953 = vpop.f32.mrf.mxu0
  %v1954 = vadd.f32 %v1941, %v1953
  %v1955 = vpop.f32.mrf.mxu0
  %1956 = vdwg.mxu0
  %1957 = vmatpush.bf16.msra.mxu0 %v1468
  %1958 = vmatpush.bf16.msra.mxu0 %v1467
  %1959 = vmatpush.bf16.msra.mxu0 %v1466
  %1960 = vmatpush.bf16.msra.mxu0 %v1465
  %1961 = vmatpush.bf16.msra.mxu0 %v1464
  %1962 = vmatpush.bf16.msra.mxu0 %v1463
  %1963 = vmatpush.bf16.msra.mxu0 %v1462
  %1964 = vmatpush.bf16.msra.mxu0 %v1461
  %1965 = vmatmul.bf16.gmra.mxu0 %v488
  %v1966 = vpop.f32.mrf.mxu0
  %v1967 = vadd.f32 %v1954, %v1966
  %v1968 = vpop.f32.mrf.mxu0
  %1969 = vdwg.mxu0
  %1970 = vmatpush.bf16.msra.mxu0 %v1476
  %1971 = vmatpush.bf16.msra.mxu0 %v1475
  %1972 = vmatpush.bf16.msra.mxu0 %v1474
  %1973 = vmatpush.bf16.msra.mxu0 %v1473
  %1974 = vmatpush.bf16.msra.mxu0 %v1472
  %1975 = vmatpush.bf16.msra.mxu0 %v1471
  %1976 = vmatpush.bf16.msra.mxu0 %v1470
  %1977 = vmatpush.bf16.msra.mxu0 %v1469
  %1978 = vmatmul.bf16.gmra.mxu0 %v489
  %v1979 = vpop.f32.mrf.mxu0
  %v1980 = vadd.f32 %v1967, %v1979
  %v1981 = vpop.f32.mrf.mxu0
  %1982 = vdwg.mxu0
  %1983 = vmatpush.bf16.msra.mxu0 %v1484
  %1984 = vmatpush.bf16.msra.mxu0 %v1483
  %1985 = vmatpush.bf16.msra.mxu0 %v1482
  %1986 = vmatpush.bf16.msra.mxu0 %v1481
  %1987 = vmatpush.bf16.msra.mxu0 %v1480
  %1988 = vmatpush.bf16.msra.mxu0 %v1479
  %1989 = vmatpush.bf16.msra.mxu0 %v1478
  %1990 = vmatpush.bf16.msra.mxu0 %v1477
  %1991 = vmatmul.bf16.gmra.mxu0 %v490
  %v1992 = vpop.f32.mrf.mxu0
  %v1993 = vadd.f32 %v1980, %v1992
  %v1994 = vpop.f32.mrf.mxu0
  %1995 = vdwg.mxu0
  %1996 = vmatpush.bf16.msra.mxu0 %v1492
  %1997 = vmatpush.bf16.msra.mxu0 %v1491
  %1998 = vmatpush.bf16.msra.mxu0 %v1490
  %1999 = vmatpush.bf16.msra.mxu0 %v1489
  %2000 = vmatpush.bf16.msra.mxu0 %v1488
  %2001 = vmatpush.bf16.msra.mxu0 %v1487
  %2002 = vmatpush.bf16.msra.mxu0 %v1486
  %2003 = vmatpush.bf16.msra.mxu0 %v1485
  %2004 = vmatmul.bf16.gmra.mxu0 %v491
  %v2005 = vpop.f32.mrf.mxu0
  %v2006 = vadd.f32 %v1993, %v2005
  %v2007 = vpop.f32.mrf.mxu0
  %2008 = vdwg.mxu0
  %2009 = vmatpush.bf16.msra.mxu0 0
  %2010 = vmatpush.bf16.msra.mxu0 0
  %2011 = vmatpush.bf16.msra.mxu0 0
  %2012 = vmatpush.bf16.msra.mxu0 0
  %2013 = vmatpush.bf16.msra.mxu0 %v1496
  %2014 = vmatpush.bf16.msra.mxu0 %v1495
  %2015 = vmatpush.bf16.msra.mxu0 %v1494
  %2016 = vmatpush.bf16.msra.mxu0 %v1493
  %2017 = vmatmul.bf16.gmra.mxu0 %v1695
  %v2018 = vpop.f32.mrf.mxu0
  %v2019 = vadd.f32 %v2006, %v2018
  %v2020 = vpop.f32.mrf.mxu0
  %2021 = vdwg.mxu0
  %v2022 = vpack.c.bf16 %v2019, %v2019
  %v2023 = vld [vmem:[%s3] sm:$0xf]
  %v2024 = vld [vmem:[%s3 + $0x4] sm:$0xf]
  %v2025 = vld [vmem:[%s3 + $0x8] sm:$0xf]
  %v2026 = vld [vmem:[%s3 + $0xc] sm:$0xf]
  %v2027 = vld [vmem:[%s3 + $0x10] sm:$0xf]
  %v2028 = vld [vmem:[%s3 + $0x14] sm:$0xf]
  %v2029 = vld [vmem:[%s3 + $0x18] sm:$0xf]
  %v2030 = vld [vmem:[%s3 + $0x1c] sm:$0xf]
  %v2031 = vld [vmem:[%s3 + $0x20] sm:$0xf]
  %v2032 = vld [vmem:[%s3 + $0x24] sm:$0xf]
  %v2033 = vld [vmem:[%s3 + $0x28] sm:$0xf]
  %v2034 = vld [vmem:[%s3 + $0x2c] sm:$0xf]
  %v2035 = vld [vmem:[%s3 + $0x30] sm:$0xf]
  %v2036 = vld [vmem:[%s3 + $0x34] sm:$0xf]
  %v2037 = vld [vmem:[%s3 + $0x38] sm:$0xf]
  %v2038 = vld [vmem:[%s3 + $0x3c] sm:$0xf]
  %v2039 = vld [vmem:[%s4] sm:$0x1]
  %v2041 = vperm.slane %v2039, 0
  %v2059 = vunpack.c.l.b16 %v2023
  %v2060 = vunpack.c.l.b16 %v2024
  %v2061 = vunpack.c.l.b16 %v2025
  %v2062 = vunpack.c.l.b16 %v2026
  %v2063 = vunpack.c.l.b16 %v2027
  %v2064 = vunpack.c.l.b16 %v2028
  %v2065 = vunpack.c.l.b16 %v2029
  %v2066 = vunpack.c.l.b16 %v2030
  %v2067 = vunpack.c.l.b16 %v2031
  %v2068 = vunpack.c.l.b16 %v2032
  %v2069 = vunpack.c.l.b16 %v2033
  %v2070 = vunpack.c.l.b16 %v2034
  %v2071 = vunpack.c.l.b16 %v2035
  %v2072 = vunpack.c.l.b16 %v2036
  %v2073 = vunpack.c.l.b16 %v2037
  %v2074 = vunpack.c.l.b16 %v2038
  %v2075 = vpack.c.b16 %v2060, %v2059
  %v2076 = vpack.c.b16 %v2062, %v2061
  %v2077 = vpack.c.b16 %v2064, %v2063
  %v2078 = vpack.c.b16 %v2066, %v2065
  %v2079 = vpack.c.b16 %v2068, %v2067
  %v2080 = vpack.c.b16 %v2070, %v2069
  %v2081 = vpack.c.b16 %v2072, %v2071
  %v2082 = vpack.c.b16 %v2074, %v2073
  %2091 = vmatpush.bf16.msra.mxu0 %v2082
  %2092 = vmatpush.bf16.msra.mxu0 %v2081
  %2093 = vmatpush.bf16.msra.mxu0 %v2080
  %2094 = vmatpush.bf16.msra.mxu0 %v2079
  %2095 = vmatpush.bf16.msra.mxu0 %v2078
  %2096 = vmatpush.bf16.msra.mxu0 %v2077
  %2097 = vmatpush.bf16.msra.mxu0 %v2076
  %2098 = vmatpush.bf16.msra.mxu0 %v2075
  %2099 = vmatmul.bf16.gmra.mxu0 %v2022
  %v2100 = vpop.f32.mrf.mxu0
  %v2101 = vadd.f32 %v2041, %v2100
  %v2102 = vpop.f32.mrf.mxu0
  %2103 = vdwg.mxu0
  %vm2104 = vcmask 408576
  %2105 = vst.msk [vmem:[%s5] sm:$0xff] %vm2104, %v2101
  // Predicated region
  $region22: #{small_forward.5} parent=0 // pred_check
    _
  $region23: #{small_forward.5} parent=0 // pred_check_branch
    %2107 = sbr.rel (0) target = $region25
  $region24: #{small_forward.5} parent=0 // pred_region
    _
  $region25: #{small_forward.5} parent=0 // pred_fallthru
    _
  // Predicated region
  $region26: #{small_forward.5} parent=0 // pred_check
    _
  $region27: #{small_forward.5} parent=0 // pred_check_branch
    %2109 = sbr.rel (0) target = $region29
  $region28: #{small_forward.5} parent=0 // pred_region
    _
  $region29: #{small_forward.5} parent=0 // pred_fallthru
    _

// kernel: small_forward.4
$region0: #{small_forward.4}
  #allocation0 [shape = 'u32[]', space=smem, size = 0x4, offset = 0x4, fixed_abs, tag = 'smem constant byte address 0x4 - core index']
  #allocation1 [shape = 'u32[72,128]{1,0:T(1,128)}', space=vmem, size = 0x9000, scoped, tag = 'internal scratch']
  %s0 = inlined_call_operand.vmem [shape: bf16[3,2,128,1600], index: 0, kind: input, shape index: {}]
  %s1 = inlined_call_operand.vmem [shape: bf16[1600,64], index: 1, kind: input, shape index: {}]
  %s2 = inlined_call_operand.vmem [shape: f32[1,64], index: 2, kind: input, shape index: {}]
  %s3 = inlined_call_operand.vmem [shape: f32[2,8,8,64], index: 3, kind: output, shape index: {}]
  %s4 = sld [smem:[#allocation0]]
  $region22: #{small_forward.4} parent=0
    _
  %s6 = ssub.s32 1, %s4
  %s7 = scalar_select 0, %s6, %s4
  // Predicated region
  $region2: #{small_forward.4} parent=0 // pred_check
    _
  $region3: #{small_forward.4} parent=0 // pred_check_branch
    %9 = sbr.rel (0) target = $region5
  $region4: #{small_forward.4} parent=0 // pred_region
    _
  $region5: #{small_forward.4} parent=0 // pred_fallthru
    _
  // Predicated region
  $region6: #{small_forward.4} parent=0 // pred_check
    _
  $region7: #{small_forward.4} parent=0 // pred_check_branch
    %11 = sbr.rel (0) target = $region9
  $region8: #{small_forward.4} parent=0 // pred_region
    _
  $region9: #{small_forward.4} parent=0 // pred_fallthru
    _
  // Predicated region
  $region10: #{small_forward.4} parent=0 // pred_check
    _
  $region11: #{small_forward.4} parent=0 // pred_check_branch
    %13 = sbr.rel (0) target = $region13
  $region12: #{small_forward.4} parent=0 // pred_region
    _
  $region13: #{small_forward.4} parent=0 // pred_fallthru
    _
  %v15 = vld [vmem:[%s0] sm:$0xff]
  %v16 = vld [vmem:[%s0 + $0x8] sm:$0xff]
  %v17 = vld [vmem:[%s0 + $0x10] sm:$0xff]
  %v18 = vld [vmem:[%s0 + $0x18] sm:$0xff]
  %v19 = vld [vmem:[%s0 + $0x20] sm:$0xff]
  %v20 = vld [vmem:[%s0 + $0x28] sm:$0xff]
  %v21 = vld [vmem:[%s0 + $0x30] sm:$0xf]
  %v22 = vld [vmem:[%s0 + $0x34] sm:$0xff]
  %v23 = vld [vmem:[%s0 + $0x3c] sm:$0xff]
  %v24 = vld [vmem:[%s0 + $0x44] sm:$0xff]
  %v25 = vld [vmem:[%s0 + $0x4c] sm:$0xff]
  %v26 = vld [vmem:[%s0 + $0x54] sm:$0xff]
  %v27 = vld [vmem:[%s0 + $0x5c] sm:$0xff]
  %v28 = vld [vmem:[%s0 + $0x64] sm:$0xf]
  %v29 = vld [vmem:[%s0 + $0x68] sm:$0xff]
  %v30 = vld [vmem:[%s0 + $0x70] sm:$0xff]
  %v31 = vld [vmem:[%s0 + $0x78] sm:$0xff]
  %v32 = vld [vmem:[%s0 + $0x80] sm:$0xff]
  %v33 = vld [vmem:[%s0 + $0x88] sm:$0xff]
  %v34 = vld [vmem:[%s0 + $0x90] sm:$0xff]
  %v35 = vld [vmem:[%s0 + $0x98] sm:$0xf]
  %v36 = vld [vmem:[%s0 + $0x9c] sm:$0xff]
  %v37 = vld [vmem:[%s0 + $0xa4] sm:$0xff]
  %v38 = vld [vmem:[%s0 + $0xac] sm:$0xff]
  %v39 = vld [vmem:[%s0 + $0xb4] sm:$0xff]
  %v40 = vld [vmem:[%s0 + $0xbc] sm:$0xff]
  %v41 = vld [vmem:[%s0 + $0xc4] sm:$0xff]
  %v42 = vld [vmem:[%s0 + $0xcc] sm:$0xf]
  %v43 = vld [vmem:[%s0 + $0xd0] sm:$0xff]
  %v44 = vld [vmem:[%s0 + $0xd8] sm:$0xff]
  %v45 = vld [vmem:[%s0 + $0xe0] sm:$0xff]
  %v46 = vld [vmem:[%s0 + $0xe8] sm:$0xff]
  %v47 = vld [vmem:[%s0 + $0xf0] sm:$0xff]
  %v48 = vld [vmem:[%s0 + $0xf8] sm:$0xff]
  %v49 = vld [vmem:[%s0 + $0x100] sm:$0xf]
  %v50 = vld [vmem:[%s0 + $0x104] sm:$0xff]
  %v51 = vld [vmem:[%s0 + $0x10c] sm:$0xff]
  %v52 = vld [vmem:[%s0 + $0x114] sm:$0xff]
  %v53 = vld [vmem:[%s0 + $0x11c] sm:$0xff]
  %v54 = vld [vmem:[%s0 + $0x124] sm:$0xff]
  %v55 = vld [vmem:[%s0 + $0x12c] sm:$0xff]
  %v56 = vld [vmem:[%s0 + $0x134] sm:$0xf]
  %v57 = vld [vmem:[%s0 + $0x138] sm:$0xff]
  %v58 = vld [vmem:[%s0 + $0x140] sm:$0xff]
  %v59 = vld [vmem:[%s0 + $0x148] sm:$0xff]
  %v60 = vld [vmem:[%s0 + $0x150] sm:$0xff]
  %v61 = vld [vmem:[%s0 + $0x158] sm:$0xff]
  %v62 = vld [vmem:[%s0 + $0x160] sm:$0xff]
  %v63 = vld [vmem:[%s0 + $0x168] sm:$0xf]
  %v64 = vld [vmem:[%s0 + $0x16c] sm:$0xff]
  %v65 = vld [vmem:[%s0 + $0x174] sm:$0xff]
  %v66 = vld [vmem:[%s0 + $0x17c] sm:$0xff]
  %v67 = vld [vmem:[%s0 + $0x184] sm:$0xff]
  %v68 = vld [vmem:[%s0 + $0x18c] sm:$0xff]
  %v69 = vld [vmem:[%s0 + $0x194] sm:$0xff]
  %v70 = vld [vmem:[%s0 + $0x19c] sm:$0xf]
  %v71 = vld [vmem:[%s0 + $0x1a0] sm:$0xff]
  %v72 = vld [vmem:[%s0 + $0x1a8] sm:$0xff]
  %v73 = vld [vmem:[%s0 + $0x1b0] sm:$0xff]
  %v74 = vld [vmem:[%s0 + $0x1b8] sm:$0xff]
  %v75 = vld [vmem:[%s0 + $0x1c0] sm:$0xff]
  %v76 = vld [vmem:[%s0 + $0x1c8] sm:$0xff]
  %v77 = vld [vmem:[%s0 + $0x1d0] sm:$0xf]
  %v78 = vld [vmem:[%s0 + $0x1d4] sm:$0xff]
  %v79 = vld [vmem:[%s0 + $0x1dc] sm:$0xff]
  %v80 = vld [vmem:[%s0 + $0x1e4] sm:$0xff]
  %v81 = vld [vmem:[%s0 + $0x1ec] sm:$0xff]
  %v82 = vld [vmem:[%s0 + $0x1f4] sm:$0xff]
  %v83 = vld [vmem:[%s0 + $0x1fc] sm:$0xff]
  %v84 = vld [vmem:[%s0 + $0x204] sm:$0xf]
  %v85 = vld [vmem:[%s0 + $0x208] sm:$0xff]
  %v86 = vld [vmem:[%s0 + $0x210] sm:$0xff]
  %v87 = vld [vmem:[%s0 + $0x218] sm:$0xff]
  %v88 = vld [vmem:[%s0 + $0x220] sm:$0xff]
  %v89 = vld [vmem:[%s0 + $0x228] sm:$0xff]
  %v90 = vld [vmem:[%s0 + $0x230] sm:$0xff]
  %v91 = vld [vmem:[%s0 + $0x238] sm:$0xf]
  %v92 = vld [vmem:[%s0 + $0x23c] sm:$0xff]
  %v93 = vld [vmem:[%s0 + $0x244] sm:$0xff]
  %v94 = vld [vmem:[%s0 + $0x24c] sm:$0xff]
  %v95 = vld [vmem:[%s0 + $0x254] sm:$0xff]
  %v96 = vld [vmem:[%s0 + $0x25c] sm:$0xff]
  %v97 = vld [vmem:[%s0 + $0x264] sm:$0xff]
  %v98 = vld [vmem:[%s0 + $0x26c] sm:$0xf]
  %v99 = vld [vmem:[%s0 + $0x270] sm:$0xff]
  %v100 = vld [vmem:[%s0 + $0x278] sm:$0xff]
  %v101 = vld [vmem:[%s0 + $0x280] sm:$0xff]
  %v102 = vld [vmem:[%s0 + $0x288] sm:$0xff]
  %v103 = vld [vmem:[%s0 + $0x290] sm:$0xff]
  %v104 = vld [vmem:[%s0 + $0x298] sm:$0xff]
  %v105 = vld [vmem:[%s0 + $0x2a0] sm:$0xf]
  %v106 = vld [vmem:[%s0 + $0x2a4] sm:$0xff]
  %v107 = vld [vmem:[%s0 + $0x2ac] sm:$0xff]
  %v108 = vld [vmem:[%s0 + $0x2b4] sm:$0xff]
  %v109 = vld [vmem:[%s0 + $0x2bc] sm:$0xff]
  %v110 = vld [vmem:[%s0 + $0x2c4] sm:$0xff]
  %v111 = vld [vmem:[%s0 + $0x2cc] sm:$0xff]
  %v112 = vld [vmem:[%s0 + $0x2d4] sm:$0xf]
  %v113 = vld [vmem:[%s0 + $0x2d8] sm:$0xff]
  %v114 = vld [vmem:[%s0 + $0x2e0] sm:$0xff]
  %v115 = vld [vmem:[%s0 + $0x2e8] sm:$0xff]
  %v116 = vld [vmem:[%s0 + $0x2f0] sm:$0xff]
  %v117 = vld [vmem:[%s0 + $0x2f8] sm:$0xff]
  %v118 = vld [vmem:[%s0 + $0x300] sm:$0xff]
  %v119 = vld [vmem:[%s0 + $0x308] sm:$0xf]
  %v120 = vld [vmem:[%s0 + $0x30c] sm:$0xff]
  %v121 = vld [vmem:[%s0 + $0x314] sm:$0xff]
  %v122 = vld [vmem:[%s0 + $0x31c] sm:$0xff]
  %v123 = vld [vmem:[%s0 + $0x324] sm:$0xff]
  %v124 = vld [vmem:[%s0 + $0x32c] sm:$0xff]
  %v125 = vld [vmem:[%s0 + $0x334] sm:$0xff]
  %v126 = vld [vmem:[%s0 + $0x33c] sm:$0xf]
  %v127 = vld [vmem:[%s0 + $0x340] sm:$0xff]
  %v128 = vld [vmem:[%s0 + $0x348] sm:$0xff]
  %v129 = vld [vmem:[%s0 + $0x350] sm:$0xff]
  %v130 = vld [vmem:[%s0 + $0x358] sm:$0xff]
  %v131 = vld [vmem:[%s0 + $0x360] sm:$0xff]
  %v132 = vld [vmem:[%s0 + $0x368] sm:$0xff]
  %v133 = vld [vmem:[%s0 + $0x370] sm:$0xf]
  %v134 = vld [vmem:[%s0 + $0x374] sm:$0xff]
  %v135 = vld [vmem:[%s0 + $0x37c] sm:$0xff]
  %v136 = vld [vmem:[%s0 + $0x384] sm:$0xff]
  %v137 = vld [vmem:[%s0 + $0x38c] sm:$0xff]
  %v138 = vld [vmem:[%s0 + $0x394] sm:$0xff]
  %v139 = vld [vmem:[%s0 + $0x39c] sm:$0xff]
  %v140 = vld [vmem:[%s0 + $0x3a4] sm:$0xf]
  %v141 = vld [vmem:[%s0 + $0x3a8] sm:$0xff]
  %v142 = vld [vmem:[%s0 + $0x3b0] sm:$0xff]
  %v143 = vld [vmem:[%s0 + $0x3b8] sm:$0xff]
  %v144 = vld [vmem:[%s0 + $0x3c0] sm:$0xff]
  %v145 = vld [vmem:[%s0 + $0x3c8] sm:$0xff]
  %v146 = vld [vmem:[%s0 + $0x3d0] sm:$0xff]
  %v147 = vld [vmem:[%s0 + $0x3d8] sm:$0xf]
  %v148 = vld [vmem:[%s0 + $0x3dc] sm:$0xff]
  %v149 = vld [vmem:[%s0 + $0x3e4] sm:$0xff]
  %v150 = vld [vmem:[%s0 + $0x3ec] sm:$0xff]
  %v151 = vld [vmem:[%s0 + $0x3f4] sm:$0xff]
  %v152 = vld [vmem:[%s0 + $0x3fc] sm:$0xff]
  %v153 = vld [vmem:[%s0 + $0x404] sm:$0xff]
  %v154 = vld [vmem:[%s0 + $0x40c] sm:$0xf]
  %v155 = vld [vmem:[%s0 + $0x410] sm:$0xff]
  %v156 = vld [vmem:[%s0 + $0x418] sm:$0xff]
  %v157 = vld [vmem:[%s0 + $0x420] sm:$0xff]
  %v158 = vld [vmem:[%s0 + $0x428] sm:$0xff]
  %v159 = vld [vmem:[%s0 + $0x430] sm:$0xff]
  %v160 = vld [vmem:[%s0 + $0x438] sm:$0xff]
  %v161 = vld [vmem:[%s0 + $0x440] sm:$0xf]
  %v162 = vld [vmem:[%s0 + $0x444] sm:$0xff]
  %v163 = vld [vmem:[%s0 + $0x44c] sm:$0xff]
  %v164 = vld [vmem:[%s0 + $0x454] sm:$0xff]
  %v165 = vld [vmem:[%s0 + $0x45c] sm:$0xff]
  %v166 = vld [vmem:[%s0 + $0x464] sm:$0xff]
  %v167 = vld [vmem:[%s0 + $0x46c] sm:$0xff]
  %v168 = vld [vmem:[%s0 + $0x474] sm:$0xf]
  %v169 = vld [vmem:[%s0 + $0x478] sm:$0xff]
  %v170 = vld [vmem:[%s0 + $0x480] sm:$0xff]
  %v171 = vld [vmem:[%s0 + $0x488] sm:$0xff]
  %v172 = vld [vmem:[%s0 + $0x490] sm:$0xff]
  %v173 = vld [vmem:[%s0 + $0x498] sm:$0xff]
  %v174 = vld [vmem:[%s0 + $0x4a0] sm:$0xff]
  %v175 = vld [vmem:[%s0 + $0x4a8] sm:$0xf]
  %v176 = vld [vmem:[%s0 + $0x4ac] sm:$0xff]
  %v177 = vld [vmem:[%s0 + $0x4b4] sm:$0xff]
  %v178 = vld [vmem:[%s0 + $0x4bc] sm:$0xff]
  %v179 = vld [vmem:[%s0 + $0x4c4] sm:$0xff]
  %v180 = vld [vmem:[%s0 + $0x4cc] sm:$0xff]
  %v181 = vld [vmem:[%s0 + $0x4d4] sm:$0xff]
  %v182 = vld [vmem:[%s0 + $0x4dc] sm:$0xf]
  %v183 = vld [vmem:[%s0 + $0x4e0] sm:$0xff]
  %v184 = vld [vmem:[%s0 + $0x4e8] sm:$0xff]
  %v185 = vld [vmem:[%s0 + $0x4f0] sm:$0xff]
  %v186 = vld [vmem:[%s0 + $0x4f8] sm:$0xff]
  %v187 = vld [vmem:[%s0 + $0x500] sm:$0xff]
  %v188 = vld [vmem:[%s0 + $0x508] sm:$0xff]
  %v189 = vld [vmem:[%s0 + $0x510] sm:$0xf]
  %v190 = vld [vmem:[%s0 + $0x514] sm:$0xff]
  %v191 = vld [vmem:[%s0 + $0x51c] sm:$0xff]
  %v192 = vld [vmem:[%s0 + $0x524] sm:$0xff]
  %v193 = vld [vmem:[%s0 + $0x52c] sm:$0xff]
  %v194 = vld [vmem:[%s0 + $0x534] sm:$0xff]
  %v195 = vld [vmem:[%s0 + $0x53c] sm:$0xff]
  %v196 = vld [vmem:[%s0 + $0x544] sm:$0xf]
  %v197 = vld [vmem:[%s0 + $0x548] sm:$0xff]
  %v198 = vld [vmem:[%s0 + $0x550] sm:$0xff]
  %v199 = vld [vmem:[%s0 + $0x558] sm:$0xff]
  %v200 = vld [vmem:[%s0 + $0x560] sm:$0xff]
  %v201 = vld [vmem:[%s0 + $0x568] sm:$0xff]
  %v202 = vld [vmem:[%s0 + $0x570] sm:$0xff]
  %v203 = vld [vmem:[%s0 + $0x578] sm:$0xf]
  %v204 = vld [vmem:[%s0 + $0x57c] sm:$0xff]
  %v205 = vld [vmem:[%s0 + $0x584] sm:$0xff]
  %v206 = vld [vmem:[%s0 + $0x58c] sm:$0xff]
  %v207 = vld [vmem:[%s0 + $0x594] sm:$0xff]
  %v208 = vld [vmem:[%s0 + $0x59c] sm:$0xff]
  %v209 = vld [vmem:[%s0 + $0x5a4] sm:$0xff]
  %v210 = vld [vmem:[%s0 + $0x5ac] sm:$0xf]
  %v211 = vld [vmem:[%s0 + $0x5b0] sm:$0xff]
  %v212 = vld [vmem:[%s0 + $0x5b8] sm:$0xff]
  %v213 = vld [vmem:[%s0 + $0x5c0] sm:$0xff]
  %v214 = vld [vmem:[%s0 + $0x5c8] sm:$0xff]
  %v215 = vld [vmem:[%s0 + $0x5d0] sm:$0xff]
  %v216 = vld [vmem:[%s0 + $0x5d8] sm:$0xff]
  %v217 = vld [vmem:[%s0 + $0x5e0] sm:$0xf]
  %v218 = vld [vmem:[%s0 + $0x5e4] sm:$0xff]
  %v219 = vld [vmem:[%s0 + $0x5ec] sm:$0xff]
  %v220 = vld [vmem:[%s0 + $0x5f4] sm:$0xff]
  %v221 = vld [vmem:[%s0 + $0x5fc] sm:$0xff]
  %v222 = vld [vmem:[%s0 + $0x604] sm:$0xff]
  %v223 = vld [vmem:[%s0 + $0x60c] sm:$0xff]
  %v224 = vld [vmem:[%s0 + $0x614] sm:$0xf]
  %v225 = vld [vmem:[%s0 + $0x618] sm:$0xff]
  %v226 = vld [vmem:[%s0 + $0x620] sm:$0xff]
  %v227 = vld [vmem:[%s0 + $0x628] sm:$0xff]
  %v228 = vld [vmem:[%s0 + $0x630] sm:$0xff]
  %v229 = vld [vmem:[%s0 + $0x638] sm:$0xff]
  %v230 = vld [vmem:[%s0 + $0x640] sm:$0xff]
  %v231 = vld [vmem:[%s0 + $0x648] sm:$0xf]
  %v232 = vld [vmem:[%s0 + $0x64c] sm:$0xff]
  %v233 = vld [vmem:[%s0 + $0x654] sm:$0xff]
  %v234 = vld [vmem:[%s0 + $0x65c] sm:$0xff]
  %v235 = vld [vmem:[%s0 + $0x664] sm:$0xff]
  %v236 = vld [vmem:[%s0 + $0x66c] sm:$0xff]
  %v237 = vld [vmem:[%s0 + $0x674] sm:$0xff]
  %v238 = vld [vmem:[%s0 + $0x67c] sm:$0xf]
  %v239 = vld [vmem:[%s0 + $0x680] sm:$0xff]
  %v240 = vld [vmem:[%s0 + $0x688] sm:$0xff]
  %v241 = vld [vmem:[%s0 + $0x690] sm:$0xff]
  %v242 = vld [vmem:[%s0 + $0x698] sm:$0xff]
  %v243 = vld [vmem:[%s0 + $0x6a0] sm:$0xff]
  %v244 = vld [vmem:[%s0 + $0x6a8] sm:$0xff]
  %v245 = vld [vmem:[%s0 + $0x6b0] sm:$0xf]
  %v246 = vld [vmem:[%s0 + $0x6b4] sm:$0xff]
  %v247 = vld [vmem:[%s0 + $0x6bc] sm:$0xff]
  %v248 = vld [vmem:[%s0 + $0x6c4] sm:$0xff]
  %v249 = vld [vmem:[%s0 + $0x6cc] sm:$0xff]
  %v250 = vld [vmem:[%s0 + $0x6d4] sm:$0xff]
  %v251 = vld [vmem:[%s0 + $0x6dc] sm:$0xff]
  %v252 = vld [vmem:[%s0 + $0x6e4] sm:$0xf]
  %v253 = vld [vmem:[%s0 + $0x6e8] sm:$0xff]
  %v254 = vld [vmem:[%s0 + $0x6f0] sm:$0xff]
  %v255 = vld [vmem:[%s0 + $0x6f8] sm:$0xff]
  %v256 = vld [vmem:[%s0 + $0x700] sm:$0xff]
  %v257 = vld [vmem:[%s0 + $0x708] sm:$0xff]
  %v258 = vld [vmem:[%s0 + $0x710] sm:$0xff]
  %v259 = vld [vmem:[%s0 + $0x718] sm:$0xf]
  %v260 = vld [vmem:[%s0 + $0x71c] sm:$0xff]
  %v261 = vld [vmem:[%s0 + $0x724] sm:$0xff]
  %v262 = vld [vmem:[%s0 + $0x72c] sm:$0xff]
  %v263 = vld [vmem:[%s0 + $0x734] sm:$0xff]
  %v264 = vld [vmem:[%s0 + $0x73c] sm:$0xff]
  %v265 = vld [vmem:[%s0 + $0x744] sm:$0xff]
  %v266 = vld [vmem:[%s0 + $0x74c] sm:$0xf]
  %v267 = vld [vmem:[%s0 + $0x750] sm:$0xff]
  %v268 = vld [vmem:[%s0 + $0x758] sm:$0xff]
  %v269 = vld [vmem:[%s0 + $0x760] sm:$0xff]
  %v270 = vld [vmem:[%s0 + $0x768] sm:$0xff]
  %v271 = vld [vmem:[%s0 + $0x770] sm:$0xff]
  %v272 = vld [vmem:[%s0 + $0x778] sm:$0xff]
  %v273 = vld [vmem:[%s0 + $0x780] sm:$0xf]
  %v274 = vld [vmem:[%s0 + $0x784] sm:$0xff]
  %v275 = vld [vmem:[%s0 + $0x78c] sm:$0xff]
  %v276 = vld [vmem:[%s0 + $0x794] sm:$0xff]
  %v277 = vld [vmem:[%s0 + $0x79c] sm:$0xff]
  %v278 = vld [vmem:[%s0 + $0x7a4] sm:$0xff]
  %v279 = vld [vmem:[%s0 + $0x7ac] sm:$0xff]
  %v280 = vld [vmem:[%s0 + $0x7b4] sm:$0xf]
  %v281 = vld [vmem:[%s0 + $0x7b8] sm:$0xff]
  %v282 = vld [vmem:[%s0 + $0x7c0] sm:$0xff]
  %v283 = vld [vmem:[%s0 + $0x7c8] sm:$0xff]
  %v284 = vld [vmem:[%s0 + $0x7d0] sm:$0xff]
  %v285 = vld [vmem:[%s0 + $0x7d8] sm:$0xff]
  %v286 = vld [vmem:[%s0 + $0x7e0] sm:$0xff]
  %v287 = vld [vmem:[%s0 + $0x7e8] sm:$0xf]
  %v288 = vld [vmem:[%s0 + $0x7ec] sm:$0xff]
  %v289 = vld [vmem:[%s0 + $0x7f4] sm:$0xff]
  %v290 = vld [vmem:[%s0 + $0x7fc] sm:$0xff]
  %v291 = vld [vmem:[%s0 + $0x804] sm:$0xff]
  %v292 = vld [vmem:[%s0 + $0x80c] sm:$0xff]
  %v293 = vld [vmem:[%s0 + $0x814] sm:$0xff]
  %v294 = vld [vmem:[%s0 + $0x81c] sm:$0xf]
  %v295 = vld [vmem:[%s0 + $0x820] sm:$0xff]
  %v296 = vld [vmem:[%s0 + $0x828] sm:$0xff]
  %v297 = vld [vmem:[%s0 + $0x830] sm:$0xff]
  %v298 = vld [vmem:[%s0 + $0x838] sm:$0xff]
  %v299 = vld [vmem:[%s0 + $0x840] sm:$0xff]
  %v300 = vld [vmem:[%s0 + $0x848] sm:$0xff]
  %v301 = vld [vmem:[%s0 + $0x850] sm:$0xf]
  %v302 = vld [vmem:[%s0 + $0x854] sm:$0xff]
  %v303 = vld [vmem:[%s0 + $0x85c] sm:$0xff]
  %v304 = vld [vmem:[%s0 + $0x864] sm:$0xff]
  %v305 = vld [vmem:[%s0 + $0x86c] sm:$0xff]
  %v306 = vld [vmem:[%s0 + $0x874] sm:$0xff]
  %v307 = vld [vmem:[%s0 + $0x87c] sm:$0xff]
  %v308 = vld [vmem:[%s0 + $0x884] sm:$0xf]
  %v309 = vld [vmem:[%s0 + $0x888] sm:$0xff]
  %v310 = vld [vmem:[%s0 + $0x890] sm:$0xff]
  %v311 = vld [vmem:[%s0 + $0x898] sm:$0xff]
  %v312 = vld [vmem:[%s0 + $0x8a0] sm:$0xff]
  %v313 = vld [vmem:[%s0 + $0x8a8] sm:$0xff]
  %v314 = vld [vmem:[%s0 + $0x8b0] sm:$0xff]
  %v315 = vld [vmem:[%s0 + $0x8b8] sm:$0xf]
  %v316 = vld [vmem:[%s0 + $0x8bc] sm:$0xff]
  %v317 = vld [vmem:[%s0 + $0x8c4] sm:$0xff]
  %v318 = vld [vmem:[%s0 + $0x8cc] sm:$0xff]
  %v319 = vld [vmem:[%s0 + $0x8d4] sm:$0xff]
  %v320 = vld [vmem:[%s0 + $0x8dc] sm:$0xff]
  %v321 = vld [vmem:[%s0 + $0x8e4] sm:$0xff]
  %v322 = vld [vmem:[%s0 + $0x8ec] sm:$0xf]
  %v323 = vld [vmem:[%s0 + $0x8f0] sm:$0xff]
  %v324 = vld [vmem:[%s0 + $0x8f8] sm:$0xff]
  %v325 = vld [vmem:[%s0 + $0x900] sm:$0xff]
  %v326 = vld [vmem:[%s0 + $0x908] sm:$0xff]
  %v327 = vld [vmem:[%s0 + $0x910] sm:$0xff]
  %v328 = vld [vmem:[%s0 + $0x918] sm:$0xff]
  %v329 = vld [vmem:[%s0 + $0x920] sm:$0xf]
  %v330 = vld [vmem:[%s0 + $0x924] sm:$0xff]
  %v331 = vld [vmem:[%s0 + $0x92c] sm:$0xff]
  %v332 = vld [vmem:[%s0 + $0x934] sm:$0xff]
  %v333 = vld [vmem:[%s0 + $0x93c] sm:$0xff]
  %v334 = vld [vmem:[%s0 + $0x944] sm:$0xff]
  %v335 = vld [vmem:[%s0 + $0x94c] sm:$0xff]
  %v336 = vld [vmem:[%s0 + $0x954] sm:$0xf]
  %v337 = vld [vmem:[%s0 + $0x958] sm:$0xff]
  %v338 = vld [vmem:[%s0 + $0x960] sm:$0xff]
  %v339 = vld [vmem:[%s0 + $0x968] sm:$0xff]
  %v340 = vld [vmem:[%s0 + $0x970] sm:$0xff]
  %v341 = vld [vmem:[%s0 + $0x978] sm:$0xff]
  %v342 = vld [vmem:[%s0 + $0x980] sm:$0xff]
  %v343 = vld [vmem:[%s0 + $0x988] sm:$0xf]
  %v344 = vld [vmem:[%s0 + $0x98c] sm:$0xff]
  %v345 = vld [vmem:[%s0 + $0x994] sm:$0xff]
  %v346 = vld [vmem:[%s0 + $0x99c] sm:$0xff]
  %v347 = vld [vmem:[%s0 + $0x9a4] sm:$0xff]
  %v348 = vld [vmem:[%s0 + $0x9ac] sm:$0xff]
  %v349 = vld [vmem:[%s0 + $0x9b4] sm:$0xff]
  %v350 = vld [vmem:[%s0 + $0x9bc] sm:$0xf]
  %v351 = vld [vmem:[%s0 + $0x9c0] sm:$0xff]
  %v352 = vld [vmem:[%s0 + $0x9c8] sm:$0xff]
  %v353 = vld [vmem:[%s0 + $0x9d0] sm:$0xff]
  %v354 = vld [vmem:[%s0 + $0x9d8] sm:$0xff]
  %v355 = vld [vmem:[%s0 + $0x9e0] sm:$0xff]
  %v356 = vld [vmem:[%s0 + $0x9e8] sm:$0xff]
  %v357 = vld [vmem:[%s0 + $0x9f0] sm:$0xf]
  %v358 = vld [vmem:[%s0 + $0x9f4] sm:$0xff]
  %v359 = vld [vmem:[%s0 + $0x9fc] sm:$0xff]
  %v360 = vld [vmem:[%s0 + $0xa04] sm:$0xff]
  %v361 = vld [vmem:[%s0 + $0xa0c] sm:$0xff]
  %v362 = vld [vmem:[%s0 + $0xa14] sm:$0xff]
  %v363 = vld [vmem:[%s0 + $0xa1c] sm:$0xff]
  %v364 = vld [vmem:[%s0 + $0xa24] sm:$0xf]
  %v365 = vld [vmem:[%s0 + $0xa28] sm:$0xff]
  %v366 = vld [vmem:[%s0 + $0xa30] sm:$0xff]
  %v367 = vld [vmem:[%s0 + $0xa38] sm:$0xff]
  %v368 = vld [vmem:[%s0 + $0xa40] sm:$0xff]
  %v369 = vld [vmem:[%s0 + $0xa48] sm:$0xff]
  %v370 = vld [vmem:[%s0 + $0xa50] sm:$0xff]
  %v371 = vld [vmem:[%s0 + $0xa58] sm:$0xf]
  %v372 = vld [vmem:[%s0 + $0xa5c] sm:$0xff]
  %v373 = vld [vmem:[%s0 + $0xa64] sm:$0xff]
  %v374 = vld [vmem:[%s0 + $0xa6c] sm:$0xff]
  %v375 = vld [vmem:[%s0 + $0xa74] sm:$0xff]
  %v376 = vld [vmem:[%s0 + $0xa7c] sm:$0xff]
  %v377 = vld [vmem:[%s0 + $0xa84] sm:$0xff]
  %v378 = vld [vmem:[%s0 + $0xa8c] sm:$0xf]
  %v379 = vld [vmem:[%s0 + $0xa90] sm:$0xff]
  %v380 = vld [vmem:[%s0 + $0xa98] sm:$0xff]
  %v381 = vld [vmem:[%s0 + $0xaa0] sm:$0xff]
  %v382 = vld [vmem:[%s0 + $0xaa8] sm:$0xff]
  %v383 = vld [vmem:[%s0 + $0xab0] sm:$0xff]
  %v384 = vld [vmem:[%s0 + $0xab8] sm:$0xff]
  %v385 = vld [vmem:[%s0 + $0xac0] sm:$0xf]
  %v386 = vld [vmem:[%s0 + $0xac4] sm:$0xff]
  %v387 = vld [vmem:[%s0 + $0xacc] sm:$0xff]
  %v388 = vld [vmem:[%s0 + $0xad4] sm:$0xff]
  %v389 = vld [vmem:[%s0 + $0xadc] sm:$0xff]
  %v390 = vld [vmem:[%s0 + $0xae4] sm:$0xff]
  %v391 = vld [vmem:[%s0 + $0xaec] sm:$0xff]
  %v392 = vld [vmem:[%s0 + $0xaf4] sm:$0xf]
  %v393 = vld [vmem:[%s0 + $0xaf8] sm:$0xff]
  %v394 = vld [vmem:[%s0 + $0xb00] sm:$0xff]
  %v395 = vld [vmem:[%s0 + $0xb08] sm:$0xff]
  %v396 = vld [vmem:[%s0 + $0xb10] sm:$0xff]
  %v397 = vld [vmem:[%s0 + $0xb18] sm:$0xff]
  %v398 = vld [vmem:[%s0 + $0xb20] sm:$0xff]
  %v399 = vld [vmem:[%s0 + $0xb28] sm:$0xf]
  %v400 = vld [vmem:[%s0 + $0xb2c] sm:$0xff]
  %v401 = vld [vmem:[%s0 + $0xb34] sm:$0xff]
  %v402 = vld [vmem:[%s0 + $0xb3c] sm:$0xff]
  %v403 = vld [vmem:[%s0 + $0xb44] sm:$0xff]
  %v404 = vld [vmem:[%s0 + $0xb4c] sm:$0xff]
  %v405 = vld [vmem:[%s0 + $0xb54] sm:$0xff]
  %v406 = vld [vmem:[%s0 + $0xb5c] sm:$0xf]
  %v407 = vld [vmem:[%s0 + $0xb60] sm:$0xff]
  %v408 = vld [vmem:[%s0 + $0xb68] sm:$0xff]
  %v409 = vld [vmem:[%s0 + $0xb70] sm:$0xff]
  %v410 = vld [vmem:[%s0 + $0xb78] sm:$0xff]
  %v411 = vld [vmem:[%s0 + $0xb80] sm:$0xff]
  %v412 = vld [vmem:[%s0 + $0xb88] sm:$0xff]
  %v413 = vld [vmem:[%s0 + $0xb90] sm:$0xf]
  %v414 = vld [vmem:[%s0 + $0xb94] sm:$0xff]
  %v415 = vld [vmem:[%s0 + $0xb9c] sm:$0xff]
  %v416 = vld [vmem:[%s0 + $0xba4] sm:$0xff]
  %v417 = vld [vmem:[%s0 + $0xbac] sm:$0xff]
  %v418 = vld [vmem:[%s0 + $0xbb4] sm:$0xff]
  %v419 = vld [vmem:[%s0 + $0xbbc] sm:$0xff]
  %v420 = vld [vmem:[%s0 + $0xbc4] sm:$0xf]
  %v421 = vld [vmem:[%s0 + $0xbc8] sm:$0xff]
  %v422 = vld [vmem:[%s0 + $0xbd0] sm:$0xff]
  %v423 = vld [vmem:[%s0 + $0xbd8] sm:$0xff]
  %v424 = vld [vmem:[%s0 + $0xbe0] sm:$0xff]
  %v425 = vld [vmem:[%s0 + $0xbe8] sm:$0xff]
  %v426 = vld [vmem:[%s0 + $0xbf0] sm:$0xff]
  %v427 = vld [vmem:[%s0 + $0xbf8] sm:$0xf]
  %v428 = vld [vmem:[%s0 + $0xbfc] sm:$0xff]
  %v429 = vld [vmem:[%s0 + $0xc04] sm:$0xff]
  %v430 = vld [vmem:[%s0 + $0xc0c] sm:$0xff]
  %v431 = vld [vmem:[%s0 + $0xc14] sm:$0xff]
  %v432 = vld [vmem:[%s0 + $0xc1c] sm:$0xff]
  %v433 = vld [vmem:[%s0 + $0xc24] sm:$0xff]
  %v434 = vld [vmem:[%s0 + $0xc2c] sm:$0xf]
  %v435 = vld [vmem:[%s0 + $0xc30] sm:$0xff]
  %v436 = vld [vmem:[%s0 + $0xc38] sm:$0xff]
  %v437 = vld [vmem:[%s0 + $0xc40] sm:$0xff]
  %v438 = vld [vmem:[%s0 + $0xc48] sm:$0xff]
  %v439 = vld [vmem:[%s0 + $0xc50] sm:$0xff]
  %v440 = vld [vmem:[%s0 + $0xc58] sm:$0xff]
  %v441 = vld [vmem:[%s0 + $0xc60] sm:$0xf]
  %v442 = vld [vmem:[%s0 + $0xc64] sm:$0xff]
  %v443 = vld [vmem:[%s0 + $0xc6c] sm:$0xff]
  %v444 = vld [vmem:[%s0 + $0xc74] sm:$0xff]
  %v445 = vld [vmem:[%s0 + $0xc7c] sm:$0xff]
  %v446 = vld [vmem:[%s0 + $0xc84] sm:$0xff]
  %v447 = vld [vmem:[%s0 + $0xc8c] sm:$0xff]
  %v448 = vld [vmem:[%s0 + $0xc94] sm:$0xf]
  %v449 = vld [vmem:[%s0 + $0xc98] sm:$0xff]
  %v450 = vld [vmem:[%s0 + $0xca0] sm:$0xff]
  %v451 = vld [vmem:[%s0 + $0xca8] sm:$0xff]
  %v452 = vld [vmem:[%s0 + $0xcb0] sm:$0xff]
  %v453 = vld [vmem:[%s0 + $0xcb8] sm:$0xff]
  %v454 = vld [vmem:[%s0 + $0xcc0] sm:$0xff]
  %v455 = vld [vmem:[%s0 + $0xcc8] sm:$0xf]
  %v456 = vld [vmem:[%s0 + $0xccc] sm:$0xff]
  %v457 = vld [vmem:[%s0 + $0xcd4] sm:$0xff]
  %v458 = vld [vmem:[%s0 + $0xcdc] sm:$0xff]
  %v459 = vld [vmem:[%s0 + $0xce4] sm:$0xff]
  %v460 = vld [vmem:[%s0 + $0xcec] sm:$0xff]
  %v461 = vld [vmem:[%s0 + $0xcf4] sm:$0xff]
  %v462 = vld [vmem:[%s0 + $0xcfc] sm:$0xf]
  %v463 = vld [vmem:[%s0 + $0xd00] sm:$0xff]
  %v464 = vld [vmem:[%s0 + $0xd08] sm:$0xff]
  %v465 = vld [vmem:[%s0 + $0xd10] sm:$0xff]
  %v466 = vld [vmem:[%s0 + $0xd18] sm:$0xff]
  %v467 = vld [vmem:[%s0 + $0xd20] sm:$0xff]
  %v468 = vld [vmem:[%s0 + $0xd28] sm:$0xff]
  %v469 = vld [vmem:[%s0 + $0xd30] sm:$0xf]
  %v470 = vld [vmem:[%s0 + $0xd34] sm:$0xff]
  %v471 = vld [vmem:[%s0 + $0xd3c] sm:$0xff]
  %v472 = vld [vmem:[%s0 + $0xd44] sm:$0xff]
  %v473 = vld [vmem:[%s0 + $0xd4c] sm:$0xff]
  %v474 = vld [vmem:[%s0 + $0xd54] sm:$0xff]
  %v475 = vld [vmem:[%s0 + $0xd5c] sm:$0xff]
  %v476 = vld [vmem:[%s0 + $0xd64] sm:$0xf]
  %v477 = vld [vmem:[%s0 + $0xd68] sm:$0xff]
  %v478 = vld [vmem:[%s0 + $0xd70] sm:$0xff]
  %v479 = vld [vmem:[%s0 + $0xd78] sm:$0xff]
  %v480 = vld [vmem:[%s0 + $0xd80] sm:$0xff]
  %v481 = vld [vmem:[%s0 + $0xd88] sm:$0xff]
  %v482 = vld [vmem:[%s0 + $0xd90] sm:$0xff]
  %v483 = vld [vmem:[%s0 + $0xd98] sm:$0xf]
  %v484 = vld [vmem:[%s0 + $0xd9c] sm:$0xff]
  %v485 = vld [vmem:[%s0 + $0xda4] sm:$0xff]
  %v486 = vld [vmem:[%s0 + $0xdac] sm:$0xff]
  %v487 = vld [vmem:[%s0 + $0xdb4] sm:$0xff]
  %v488 = vld [vmem:[%s0 + $0xdbc] sm:$0xff]
  %v489 = vld [vmem:[%s0 + $0xdc4] sm:$0xff]
  %v490 = vld [vmem:[%s0 + $0xdcc] sm:$0xf]
  %v491 = vld [vmem:[%s0 + $0xdd0] sm:$0xff]
  %v492 = vld [vmem:[%s0 + $0xdd8] sm:$0xff]
  %v493 = vld [vmem:[%s0 + $0xde0] sm:$0xff]
  %v494 = vld [vmem:[%s0 + $0xde8] sm:$0xff]
  %v495 = vld [vmem:[%s0 + $0xdf0] sm:$0xff]
  %v496 = vld [vmem:[%s0 + $0xdf8] sm:$0xff]
  %v497 = vld [vmem:[%s0 + $0xe00] sm:$0xf]
  %v498 = vld [vmem:[%s0 + $0xe04] sm:$0xff]
  %v499 = vld [vmem:[%s0 + $0xe0c] sm:$0xff]
  %v500 = vld [vmem:[%s0 + $0xe14] sm:$0xff]
  %v501 = vld [vmem:[%s0 + $0xe1c] sm:$0xff]
  %v502 = vld [vmem:[%s0 + $0xe24] sm:$0xff]
  %v503 = vld [vmem:[%s0 + $0xe2c] sm:$0xff]
  %v504 = vld [vmem:[%s0 + $0xe34] sm:$0xf]
  %v505 = vld [vmem:[%s0 + $0xe38] sm:$0xff]
  %v506 = vld [vmem:[%s0 + $0xe40] sm:$0xff]
  %v507 = vld [vmem:[%s0 + $0xe48] sm:$0xff]
  %v508 = vld [vmem:[%s0 + $0xe50] sm:$0xff]
  %v509 = vld [vmem:[%s0 + $0xe58] sm:$0xff]
  %v510 = vld [vmem:[%s0 + $0xe60] sm:$0xff]
  %v511 = vld [vmem:[%s0 + $0xe68] sm:$0xf]
  %v512 = vld [vmem:[%s0 + $0xe6c] sm:$0xff]
  %v513 = vld [vmem:[%s0 + $0xe74] sm:$0xff]
  %v514 = vld [vmem:[%s0 + $0xe7c] sm:$0xff]
  %v515 = vld [vmem:[%s0 + $0xe84] sm:$0xff]
  %v516 = vld [vmem:[%s0 + $0xe8c] sm:$0xff]
  %v517 = vld [vmem:[%s0 + $0xe94] sm:$0xff]
  %v518 = vld [vmem:[%s0 + $0xe9c] sm:$0xf]
  %v519 = vld [vmem:[%s0 + $0xea0] sm:$0xff]
  %v520 = vld [vmem:[%s0 + $0xea8] sm:$0xff]
  %v521 = vld [vmem:[%s0 + $0xeb0] sm:$0xff]
  %v522 = vld [vmem:[%s0 + $0xeb8] sm:$0xff]
  %v523 = vld [vmem:[%s0 + $0xec0] sm:$0xff]
  %v524 = vld [vmem:[%s0 + $0xec8] sm:$0xff]
  %v525 = vld [vmem:[%s0 + $0xed0] sm:$0xf]
  %v526 = vld [vmem:[%s0 + $0xed4] sm:$0xff]
  %v527 = vld [vmem:[%s0 + $0xedc] sm:$0xff]
  %v528 = vld [vmem:[%s0 + $0xee4] sm:$0xff]
  %v529 = vld [vmem:[%s0 + $0xeec] sm:$0xff]
  %v530 = vld [vmem:[%s0 + $0xef4] sm:$0xff]
  %v531 = vld [vmem:[%s0 + $0xefc] sm:$0xff]
  %v532 = vld [vmem:[%s0 + $0xf04] sm:$0xf]
  %v533 = vld [vmem:[%s0 + $0xf08] sm:$0xff]
  %v534 = vld [vmem:[%s0 + $0xf10] sm:$0xff]
  %v535 = vld [vmem:[%s0 + $0xf18] sm:$0xff]
  %v536 = vld [vmem:[%s0 + $0xf20] sm:$0xff]
  %v537 = vld [vmem:[%s0 + $0xf28] sm:$0xff]
  %v538 = vld [vmem:[%s0 + $0xf30] sm:$0xff]
  %v539 = vld [vmem:[%s0 + $0xf38] sm:$0xf]
  %v540 = vld [vmem:[%s0 + $0xf3c] sm:$0xff]
  %v541 = vld [vmem:[%s0 + $0xf44] sm:$0xff]
  %v542 = vld [vmem:[%s0 + $0xf4c] sm:$0xff]
  %v543 = vld [vmem:[%s0 + $0xf54] sm:$0xff]
  %v544 = vld [vmem:[%s0 + $0xf5c] sm:$0xff]
  %v545 = vld [vmem:[%s0 + $0xf64] sm:$0xff]
  %v546 = vld [vmem:[%s0 + $0xf6c] sm:$0xf]
  %v547 = vld [vmem:[%s0 + $0xf70] sm:$0xff]
  %v548 = vld [vmem:[%s0 + $0xf78] sm:$0xff]
  %v549 = vld [vmem:[%s0 + $0xf80] sm:$0xff]
  %v550 = vld [vmem:[%s0 + $0xf88] sm:$0xff]
  %v551 = vld [vmem:[%s0 + $0xf90] sm:$0xff]
  %v552 = vld [vmem:[%s0 + $0xf98] sm:$0xff]
  %v553 = vld [vmem:[%s0 + $0xfa0] sm:$0xf]
  %v554 = vld [vmem:[%s0 + $0xfa4] sm:$0xff]
  %v555 = vld [vmem:[%s0 + $0xfac] sm:$0xff]
  %v556 = vld [vmem:[%s0 + $0xfb4] sm:$0xff]
  %v557 = vld [vmem:[%s0 + $0xfbc] sm:$0xff]
  %v558 = vld [vmem:[%s0 + $0xfc4] sm:$0xff]
  %v559 = vld [vmem:[%s0 + $0xfcc] sm:$0xff]
  %v560 = vld [vmem:[%s0 + $0xfd4] sm:$0xf]
  %v561 = vld [vmem:[%s0 + $0xfd8] sm:$0xff]
  %v562 = vld [vmem:[%s0 + $0xfe0] sm:$0xff]
  %v563 = vld [vmem:[%s0 + $0xfe8] sm:$0xff]
  %v564 = vld [vmem:[%s0 + $0xff0] sm:$0xff]
  %v565 = vld [vmem:[%s0 + $0xff8] sm:$0xff]
  %v566 = vld [vmem:[%s0 + $0x1000] sm:$0xff]
  %v567 = vld [vmem:[%s0 + $0x1008] sm:$0xf]
  %v568 = vld [vmem:[%s0 + $0x100c] sm:$0xff]
  %v569 = vld [vmem:[%s0 + $0x1014] sm:$0xff]
  %v570 = vld [vmem:[%s0 + $0x101c] sm:$0xff]
  %v571 = vld [vmem:[%s0 + $0x1024] sm:$0xff]
  %v572 = vld [vmem:[%s0 + $0x102c] sm:$0xff]
  %v573 = vld [vmem:[%s0 + $0x1034] sm:$0xff]
  %v574 = vld [vmem:[%s0 + $0x103c] sm:$0xf]
  %v575 = vld [vmem:[%s0 + $0x1040] sm:$0xff]
  %v576 = vld [vmem:[%s0 + $0x1048] sm:$0xff]
  %v577 = vld [vmem:[%s0 + $0x1050] sm:$0xff]
  %v578 = vld [vmem:[%s0 + $0x1058] sm:$0xff]
  %v579 = vld [vmem:[%s0 + $0x1060] sm:$0xff]
  %v580 = vld [vmem:[%s0 + $0x1068] sm:$0xff]
  %v581 = vld [vmem:[%s0 + $0x1070] sm:$0xf]
  %v582 = vld [vmem:[%s0 + $0x1074] sm:$0xff]
  %v583 = vld [vmem:[%s0 + $0x107c] sm:$0xff]
  %v584 = vld [vmem:[%s0 + $0x1084] sm:$0xff]
  %v585 = vld [vmem:[%s0 + $0x108c] sm:$0xff]
  %v586 = vld [vmem:[%s0 + $0x1094] sm:$0xff]
  %v587 = vld [vmem:[%s0 + $0x109c] sm:$0xff]
  %v588 = vld [vmem:[%s0 + $0x10a4] sm:$0xf]
  %v589 = vld [vmem:[%s0 + $0x10a8] sm:$0xff]
  %v590 = vld [vmem:[%s0 + $0x10b0] sm:$0xff]
  %v591 = vld [vmem:[%s0 + $0x10b8] sm:$0xff]
  %v592 = vld [vmem:[%s0 + $0x10c0] sm:$0xff]
  %v593 = vld [vmem:[%s0 + $0x10c8] sm:$0xff]
  %v594 = vld [vmem:[%s0 + $0x10d0] sm:$0xff]
  %v595 = vld [vmem:[%s0 + $0x10d8] sm:$0xf]
  %v596 = vld [vmem:[%s0 + $0x10dc] sm:$0xff]
  %v597 = vld [vmem:[%s0 + $0x10e4] sm:$0xff]
  %v598 = vld [vmem:[%s0 + $0x10ec] sm:$0xff]
  %v599 = vld [vmem:[%s0 + $0x10f4] sm:$0xff]
  %v600 = vld [vmem:[%s0 + $0x10fc] sm:$0xff]
  %v601 = vld [vmem:[%s0 + $0x1104] sm:$0xff]
  %v602 = vld [vmem:[%s0 + $0x110c] sm:$0xf]
  %v603 = vld [vmem:[%s0 + $0x1110] sm:$0xff]
  %v604 = vld [vmem:[%s0 + $0x1118] sm:$0xff]
  %v605 = vld [vmem:[%s0 + $0x1120] sm:$0xff]
  %v606 = vld [vmem:[%s0 + $0x1128] sm:$0xff]
  %v607 = vld [vmem:[%s0 + $0x1130] sm:$0xff]
  %v608 = vld [vmem:[%s0 + $0x1138] sm:$0xff]
  %v609 = vld [vmem:[%s0 + $0x1140] sm:$0xf]
  %v610 = vld [vmem:[%s0 + $0x1144] sm:$0xff]
  %v611 = vld [vmem:[%s0 + $0x114c] sm:$0xff]
  %v612 = vld [vmem:[%s0 + $0x1154] sm:$0xff]
  %v613 = vld [vmem:[%s0 + $0x115c] sm:$0xff]
  %v614 = vld [vmem:[%s0 + $0x1164] sm:$0xff]
  %v615 = vld [vmem:[%s0 + $0x116c] sm:$0xff]
  %v616 = vld [vmem:[%s0 + $0x1174] sm:$0xf]
  %v617 = vld [vmem:[%s0 + $0x1178] sm:$0xff]
  %v618 = vld [vmem:[%s0 + $0x1180] sm:$0xff]
  %v619 = vld [vmem:[%s0 + $0x1188] sm:$0xff]
  %v620 = vld [vmem:[%s0 + $0x1190] sm:$0xff]
  %v621 = vld [vmem:[%s0 + $0x1198] sm:$0xff]
  %v622 = vld [vmem:[%s0 + $0x11a0] sm:$0xff]
  %v623 = vld [vmem:[%s0 + $0x11a8] sm:$0xf]
  %v624 = vld [vmem:[%s0 + $0x11ac] sm:$0xff]
  %v625 = vld [vmem:[%s0 + $0x11b4] sm:$0xff]
  %v626 = vld [vmem:[%s0 + $0x11bc] sm:$0xff]
  %v627 = vld [vmem:[%s0 + $0x11c4] sm:$0xff]
  %v628 = vld [vmem:[%s0 + $0x11cc] sm:$0xff]
  %v629 = vld [vmem:[%s0 + $0x11d4] sm:$0xff]
  %v630 = vld [vmem:[%s0 + $0x11dc] sm:$0xf]
  %v631 = vld [vmem:[%s0 + $0x11e0] sm:$0xff]
  %v632 = vld [vmem:[%s0 + $0x11e8] sm:$0xff]
  %v633 = vld [vmem:[%s0 + $0x11f0] sm:$0xff]
  %v634 = vld [vmem:[%s0 + $0x11f8] sm:$0xff]
  %v635 = vld [vmem:[%s0 + $0x1200] sm:$0xff]
  %v636 = vld [vmem:[%s0 + $0x1208] sm:$0xff]
  %v637 = vld [vmem:[%s0 + $0x1210] sm:$0xf]
  %v638 = vld [vmem:[%s0 + $0x1214] sm:$0xff]
  %v639 = vld [vmem:[%s0 + $0x121c] sm:$0xff]
  %v640 = vld [vmem:[%s0 + $0x1224] sm:$0xff]
  %v641 = vld [vmem:[%s0 + $0x122c] sm:$0xff]
  %v642 = vld [vmem:[%s0 + $0x1234] sm:$0xff]
  %v643 = vld [vmem:[%s0 + $0x123c] sm:$0xff]
  %v644 = vld [vmem:[%s0 + $0x1244] sm:$0xf]
  %v645 = vld [vmem:[%s0 + $0x1248] sm:$0xff]
  %v646 = vld [vmem:[%s0 + $0x1250] sm:$0xff]
  %v647 = vld [vmem:[%s0 + $0x1258] sm:$0xff]
  %v648 = vld [vmem:[%s0 + $0x1260] sm:$0xff]
  %v649 = vld [vmem:[%s0 + $0x1268] sm:$0xff]
  %v650 = vld [vmem:[%s0 + $0x1270] sm:$0xff]
  %v651 = vld [vmem:[%s0 + $0x1278] sm:$0xf]
  %v652 = vld [vmem:[%s0 + $0x127c] sm:$0xff]
  %v653 = vld [vmem:[%s0 + $0x1284] sm:$0xff]
  %v654 = vld [vmem:[%s0 + $0x128c] sm:$0xff]
  %v655 = vld [vmem:[%s0 + $0x1294] sm:$0xff]
  %v656 = vld [vmem:[%s0 + $0x129c] sm:$0xff]
  %v657 = vld [vmem:[%s0 + $0x12a4] sm:$0xff]
  %v658 = vld [vmem:[%s0 + $0x12ac] sm:$0xf]
  %v659 = vld [vmem:[%s0 + $0x12b0] sm:$0xff]
  %v660 = vld [vmem:[%s0 + $0x12b8] sm:$0xff]
  %v661 = vld [vmem:[%s0 + $0x12c0] sm:$0xff]
  %v662 = vld [vmem:[%s0 + $0x12c8] sm:$0xff]
  %v663 = vld [vmem:[%s0 + $0x12d0] sm:$0xff]
  %v664 = vld [vmem:[%s0 + $0x12d8] sm:$0xff]
  %v665 = vld [vmem:[%s0 + $0x12e0] sm:$0xf]
  %v666 = vld [vmem:[%s0 + $0x12e4] sm:$0xff]
  %v667 = vld [vmem:[%s0 + $0x12ec] sm:$0xff]
  %v668 = vld [vmem:[%s0 + $0x12f4] sm:$0xff]
  %v669 = vld [vmem:[%s0 + $0x12fc] sm:$0xff]
  %v670 = vld [vmem:[%s0 + $0x1304] sm:$0xff]
  %v671 = vld [vmem:[%s0 + $0x130c] sm:$0xff]
  %v672 = vld [vmem:[%s0 + $0x1314] sm:$0xf]
  %v673 = vld [vmem:[%s0 + $0x1318] sm:$0xff]
  %v674 = vld [vmem:[%s0 + $0x1320] sm:$0xff]
  %v675 = vld [vmem:[%s0 + $0x1328] sm:$0xff]
  %v676 = vld [vmem:[%s0 + $0x1330] sm:$0xff]
  %v677 = vld [vmem:[%s0 + $0x1338] sm:$0xff]
  %v678 = vld [vmem:[%s0 + $0x1340] sm:$0xff]
  %v679 = vld [vmem:[%s0 + $0x1348] sm:$0xf]
  %v680 = vld [vmem:[%s0 + $0x134c] sm:$0xff]
  %v681 = vld [vmem:[%s0 + $0x1354] sm:$0xff]
  %v682 = vld [vmem:[%s0 + $0x135c] sm:$0xff]
  %v683 = vld [vmem:[%s0 + $0x1364] sm:$0xff]
  %v684 = vld [vmem:[%s0 + $0x136c] sm:$0xff]
  %v685 = vld [vmem:[%s0 + $0x1374] sm:$0xff]
  %v686 = vld [vmem:[%s0 + $0x137c] sm:$0xf]
  %v687 = vld [vmem:[%s1] sm:$0xf]
  %v688 = vld [vmem:[%s1 + $0x4] sm:$0xf]
  %v689 = vld [vmem:[%s1 + $0x8] sm:$0xf]
  %v690 = vld [vmem:[%s1 + $0xc] sm:$0xf]
  %v691 = vld [vmem:[%s1 + $0x10] sm:$0xf]
  %v692 = vld [vmem:[%s1 + $0x14] sm:$0xf]
  %v693 = vld [vmem:[%s1 + $0x18] sm:$0xf]
  %v694 = vld [vmem:[%s1 + $0x1c] sm:$0xf]
  %v695 = vld [vmem:[%s1 + $0x20] sm:$0xf]
  %v696 = vld [vmem:[%s1 + $0x24] sm:$0xf]
  %v697 = vld [vmem:[%s1 + $0x28] sm:$0xf]
  %v698 = vld [vmem:[%s1 + $0x2c] sm:$0xf]
  %v699 = vld [vmem:[%s1 + $0x30] sm:$0xf]
  %v700 = vld [vmem:[%s1 + $0x34] sm:$0xf]
  %v701 = vld [vmem:[%s1 + $0x38] sm:$0xf]
  %v702 = vld [vmem:[%s1 + $0x3c] sm:$0xf]
  %v703 = vld [vmem:[%s1 + $0x40] sm:$0xf]
  %v704 = vld [vmem:[%s1 + $0x44] sm:$0xf]
  %v705 = vld [vmem:[%s1 + $0x48] sm:$0xf]
  %v706 = vld [vmem:[%s1 + $0x4c] sm:$0xf]
  %v707 = vld [vmem:[%s1 + $0x50] sm:$0xf]
  %v708 = vld [vmem:[%s1 + $0x54] sm:$0xf]
  %v709 = vld [vmem:[%s1 + $0x58] sm:$0xf]
  %v710 = vld [vmem:[%s1 + $0x5c] sm:$0xf]
  %v711 = vld [vmem:[%s1 + $0x60] sm:$0xf]
  %v712 = vld [vmem:[%s1 + $0x64] sm:$0xf]
  %v713 = vld [vmem:[%s1 + $0x68] sm:$0xf]
  %v714 = vld [vmem:[%s1 + $0x6c] sm:$0xf]
  %v715 = vld [vmem:[%s1 + $0x70] sm:$0xf]
  %v716 = vld [vmem:[%s1 + $0x74] sm:$0xf]
  %v717 = vld [vmem:[%s1 + $0x78] sm:$0xf]
  %v718 = vld [vmem:[%s1 + $0x7c] sm:$0xf]
  %v719 = vld [vmem:[%s1 + $0x80] sm:$0xf]
  %v720 = vld [vmem:[%s1 + $0x84] sm:$0xf]
  %v721 = vld [vmem:[%s1 + $0x88] sm:$0xf]
  %v722 = vld [vmem:[%s1 + $0x8c] sm:$0xf]
  %v723 = vld [vmem:[%s1 + $0x90] sm:$0xf]
  %v724 = vld [vmem:[%s1 + $0x94] sm:$0xf]
  %v725 = vld [vmem:[%s1 + $0x98] sm:$0xf]
  %v726 = vld [vmem:[%s1 + $0x9c] sm:$0xf]
  %v727 = vld [vmem:[%s1 + $0xa0] sm:$0xf]
  %v728 = vld [vmem:[%s1 + $0xa4] sm:$0xf]
  %v729 = vld [vmem:[%s1 + $0xa8] sm:$0xf]
  %v730 = vld [vmem:[%s1 + $0xac] sm:$0xf]
  %v731 = vld [vmem:[%s1 + $0xb0] sm:$0xf]
  %v732 = vld [vmem:[%s1 + $0xb4] sm:$0xf]
  %v733 = vld [vmem:[%s1 + $0xb8] sm:$0xf]
  %v734 = vld [vmem:[%s1 + $0xbc] sm:$0xf]
  %v735 = vld [vmem:[%s1 + $0xc0] sm:$0xf]
  %v736 = vld [vmem:[%s1 + $0xc4] sm:$0xf]
  %v737 = vld [vmem:[%s1 + $0xc8] sm:$0xf]
  %v738 = vld [vmem:[%s1 + $0xcc] sm:$0xf]
  %v739 = vld [vmem:[%s1 + $0xd0] sm:$0xf]
  %v740 = vld [vmem:[%s1 + $0xd4] sm:$0xf]
  %v741 = vld [vmem:[%s1 + $0xd8] sm:$0xf]
  %v742 = vld [vmem:[%s1 + $0xdc] sm:$0xf]
  %v743 = vld [vmem:[%s1 + $0xe0] sm:$0xf]
  %v744 = vld [vmem:[%s1 + $0xe4] sm:$0xf]
  %v745 = vld [vmem:[%s1 + $0xe8] sm:$0xf]
  %v746 = vld [vmem:[%s1 + $0xec] sm:$0xf]
  %v747 = vld [vmem:[%s1 + $0xf0] sm:$0xf]
  %v748 = vld [vmem:[%s1 + $0xf4] sm:$0xf]
  %v749 = vld [vmem:[%s1 + $0xf8] sm:$0xf]
  %v750 = vld [vmem:[%s1 + $0xfc] sm:$0xf]
  %v751 = vld [vmem:[%s1 + $0x100] sm:$0xf]
  %v752 = vld [vmem:[%s1 + $0x104] sm:$0xf]
  %v753 = vld [vmem:[%s1 + $0x108] sm:$0xf]
  %v754 = vld [vmem:[%s1 + $0x10c] sm:$0xf]
  %v755 = vld [vmem:[%s1 + $0x110] sm:$0xf]
  %v756 = vld [vmem:[%s1 + $0x114] sm:$0xf]
  %v757 = vld [vmem:[%s1 + $0x118] sm:$0xf]
  %v758 = vld [vmem:[%s1 + $0x11c] sm:$0xf]
  %v759 = vld [vmem:[%s1 + $0x120] sm:$0xf]
  %v760 = vld [vmem:[%s1 + $0x124] sm:$0xf]
  %v761 = vld [vmem:[%s1 + $0x128] sm:$0xf]
  %v762 = vld [vmem:[%s1 + $0x12c] sm:$0xf]
  %v763 = vld [vmem:[%s1 + $0x130] sm:$0xf]
  %v764 = vld [vmem:[%s1 + $0x134] sm:$0xf]
  %v765 = vld [vmem:[%s1 + $0x138] sm:$0xf]
  %v766 = vld [vmem:[%s1 + $0x13c] sm:$0xf]
  %v767 = vld [vmem:[%s1 + $0x140] sm:$0xf]
  %v768 = vld [vmem:[%s1 + $0x144] sm:$0xf]
  %v769 = vld [vmem:[%s1 + $0x148] sm:$0xf]
  %v770 = vld [vmem:[%s1 + $0x14c] sm:$0xf]
  %v771 = vld [vmem:[%s1 + $0x150] sm:$0xf]
  %v772 = vld [vmem:[%s1 + $0x154] sm:$0xf]
  %v773 = vld [vmem:[%s1 + $0x158] sm:$0xf]
  %v774 = vld [vmem:[%s1 + $0x15c] sm:$0xf]
  %v775 = vld [vmem:[%s1 + $0x160] sm:$0xf]
  %v776 = vld [vmem:[%s1 + $0x164] sm:$0xf]
  %v777 = vld [vmem:[%s1 + $0x168] sm:$0xf]
  %v778 = vld [vmem:[%s1 + $0x16c] sm:$0xf]
  %v779 = vld [vmem:[%s1 + $0x170] sm:$0xf]
  %v780 = vld [vmem:[%s1 + $0x174] sm:$0xf]
  %v781 = vld [vmem:[%s1 + $0x178] sm:$0xf]
  %v782 = vld [vmem:[%s1 + $0x17c] sm:$0xf]
  %v783 = vld [vmem:[%s1 + $0x180] sm:$0xf]
  %v784 = vld [vmem:[%s1 + $0x184] sm:$0xf]
  %v785 = vld [vmem:[%s1 + $0x188] sm:$0xf]
  %v786 = vld [vmem:[%s1 + $0x18c] sm:$0xf]
  %v787 = vld [vmem:[%s1 + $0x190] sm:$0xf]
  %v788 = vld [vmem:[%s1 + $0x194] sm:$0xf]
  %v789 = vld [vmem:[%s1 + $0x198] sm:$0xf]
  %v790 = vld [vmem:[%s1 + $0x19c] sm:$0xf]
  %v791 = vld [vmem:[%s1 + $0x1a0] sm:$0xf]
  %v792 = vld [vmem:[%s1 + $0x1a4] sm:$0xf]
  %v793 = vld [vmem:[%s1 + $0x1a8] sm:$0xf]
  %v794 = vld [vmem:[%s1 + $0x1ac] sm:$0xf]
  %v795 = vld [vmem:[%s1 + $0x1b0] sm:$0xf]
  %v796 = vld [vmem:[%s1 + $0x1b4] sm:$0xf]
  %v797 = vld [vmem:[%s1 + $0x1b8] sm:$0xf]
  %v798 = vld [vmem:[%s1 + $0x1bc] sm:$0xf]
  %v799 = vld [vmem:[%s1 + $0x1c0] sm:$0xf]
  %v800 = vld [vmem:[%s1 + $0x1c4] sm:$0xf]
  %v801 = vld [vmem:[%s1 + $0x1c8] sm:$0xf]
  %v802 = vld [vmem:[%s1 + $0x1cc] sm:$0xf]
  %v803 = vld [vmem:[%s1 + $0x1d0] sm:$0xf]
  %v804 = vld [vmem:[%s1 + $0x1d4] sm:$0xf]
  %v805 = vld [vmem:[%s1 + $0x1d8] sm:$0xf]
  %v806 = vld [vmem:[%s1 + $0x1dc] sm:$0xf]
  %v807 = vld [vmem:[%s1 + $0x1e0] sm:$0xf]
  %v808 = vld [vmem:[%s1 + $0x1e4] sm:$0xf]
  %v809 = vld [vmem:[%s1 + $0x1e8] sm:$0xf]
  %v810 = vld [vmem:[%s1 + $0x1ec] sm:$0xf]
  %v811 = vld [vmem:[%s1 + $0x1f0] sm:$0xf]
  %v812 = vld [vmem:[%s1 + $0x1f4] sm:$0xf]
  %v813 = vld [vmem:[%s1 + $0x1f8] sm:$0xf]
  %v814 = vld [vmem:[%s1 + $0x1fc] sm:$0xf]
  %v815 = vld [vmem:[%s1 + $0x200] sm:$0xf]
  %v816 = vld [vmem:[%s1 + $0x204] sm:$0xf]
  %v817 = vld [vmem:[%s1 + $0x208] sm:$0xf]
  %v818 = vld [vmem:[%s1 + $0x20c] sm:$0xf]
  %v819 = vld [vmem:[%s1 + $0x210] sm:$0xf]
  %v820 = vld [vmem:[%s1 + $0x214] sm:$0xf]
  %v821 = vld [vmem:[%s1 + $0x218] sm:$0xf]
  %v822 = vld [vmem:[%s1 + $0x21c] sm:$0xf]
  %v823 = vld [vmem:[%s1 + $0x220] sm:$0xf]
  %v824 = vld [vmem:[%s1 + $0x224] sm:$0xf]
  %v825 = vld [vmem:[%s1 + $0x228] sm:$0xf]
  %v826 = vld [vmem:[%s1 + $0x22c] sm:$0xf]
  %v827 = vld [vmem:[%s1 + $0x230] sm:$0xf]
  %v828 = vld [vmem:[%s1 + $0x234] sm:$0xf]
  %v829 = vld [vmem:[%s1 + $0x238] sm:$0xf]
  %v830 = vld [vmem:[%s1 + $0x23c] sm:$0xf]
  %v831 = vld [vmem:[%s1 + $0x240] sm:$0xf]
  %v832 = vld [vmem:[%s1 + $0x244] sm:$0xf]
  %v833 = vld [vmem:[%s1 + $0x248] sm:$0xf]
  %v834 = vld [vmem:[%s1 + $0x24c] sm:$0xf]
  %v835 = vld [vmem:[%s1 + $0x250] sm:$0xf]
  %v836 = vld [vmem:[%s1 + $0x254] sm:$0xf]
  %v837 = vld [vmem:[%s1 + $0x258] sm:$0xf]
  %v838 = vld [vmem:[%s1 + $0x25c] sm:$0xf]
  %v839 = vld [vmem:[%s1 + $0x260] sm:$0xf]
  %v840 = vld [vmem:[%s1 + $0x264] sm:$0xf]
  %v841 = vld [vmem:[%s1 + $0x268] sm:$0xf]
  %v842 = vld [vmem:[%s1 + $0x26c] sm:$0xf]
  %v843 = vld [vmem:[%s1 + $0x270] sm:$0xf]
  %v844 = vld [vmem:[%s1 + $0x274] sm:$0xf]
  %v845 = vld [vmem:[%s1 + $0x278] sm:$0xf]
  %v846 = vld [vmem:[%s1 + $0x27c] sm:$0xf]
  %v847 = vld [vmem:[%s1 + $0x280] sm:$0xf]
  %v848 = vld [vmem:[%s1 + $0x284] sm:$0xf]
  %v849 = vld [vmem:[%s1 + $0x288] sm:$0xf]
  %v850 = vld [vmem:[%s1 + $0x28c] sm:$0xf]
  %v851 = vld [vmem:[%s1 + $0x290] sm:$0xf]
  %v852 = vld [vmem:[%s1 + $0x294] sm:$0xf]
  %v853 = vld [vmem:[%s1 + $0x298] sm:$0xf]
  %v854 = vld [vmem:[%s1 + $0x29c] sm:$0xf]
  %v855 = vld [vmem:[%s1 + $0x2a0] sm:$0xf]
  %v856 = vld [vmem:[%s1 + $0x2a4] sm:$0xf]
  %v857 = vld [vmem:[%s1 + $0x2a8] sm:$0xf]
  %v858 = vld [vmem:[%s1 + $0x2ac] sm:$0xf]
  %v859 = vld [vmem:[%s1 + $0x2b0] sm:$0xf]
  %v860 = vld [vmem:[%s1 + $0x2b4] sm:$0xf]
  %v861 = vld [vmem:[%s1 + $0x2b8] sm:$0xf]
  %v862 = vld [vmem:[%s1 + $0x2bc] sm:$0xf]
  %v863 = vld [vmem:[%s1 + $0x2c0] sm:$0xf]
  %v864 = vld [vmem:[%s1 + $0x2c4] sm:$0xf]
  %v865 = vld [vmem:[%s1 + $0x2c8] sm:$0xf]
  %v866 = vld [vmem:[%s1 + $0x2cc] sm:$0xf]
  %v867 = vld [vmem:[%s1 + $0x2d0] sm:$0xf]
  %v868 = vld [vmem:[%s1 + $0x2d4] sm:$0xf]
  %v869 = vld [vmem:[%s1 + $0x2d8] sm:$0xf]
  %v870 = vld [vmem:[%s1 + $0x2dc] sm:$0xf]
  %v871 = vld [vmem:[%s1 + $0x2e0] sm:$0xf]
  %v872 = vld [vmem:[%s1 + $0x2e4] sm:$0xf]
  %v873 = vld [vmem:[%s1 + $0x2e8] sm:$0xf]
  %v874 = vld [vmem:[%s1 + $0x2ec] sm:$0xf]
  %v875 = vld [vmem:[%s1 + $0x2f0] sm:$0xf]
  %v876 = vld [vmem:[%s1 + $0x2f4] sm:$0xf]
  %v877 = vld [vmem:[%s1 + $0x2f8] sm:$0xf]
  %v878 = vld [vmem:[%s1 + $0x2fc] sm:$0xf]
  %v879 = vld [vmem:[%s1 + $0x300] sm:$0xf]
  %v880 = vld [vmem:[%s1 + $0x304] sm:$0xf]
  %v881 = vld [vmem:[%s1 + $0x308] sm:$0xf]
  %v882 = vld [vmem:[%s1 + $0x30c] sm:$0xf]
  %v883 = vld [vmem:[%s1 + $0x310] sm:$0xf]
  %v884 = vld [vmem:[%s1 + $0x314] sm:$0xf]
  %v885 = vld [vmem:[%s1 + $0x318] sm:$0xf]
  %v886 = vld [vmem:[%s1 + $0x31c] sm:$0xf]
  %v887 = vld [vmem:[%s2] sm:$0x1]
  %v889 = vperm.slane %v887, 0
  %v1563 = vunpack.c.l.b16 %v15
  %v1564 = vunpack.c.h.b16 %v15
  %v1565 = vunpack.c.l.b16 %v16
  %v1566 = vunpack.c.h.b16 %v16
  %v1567 = vunpack.c.l.b16 %v17
  %v1568 = vunpack.c.h.b16 %v17
  %v1569 = vunpack.c.l.b16 %v18
  %v1570 = vunpack.c.h.b16 %v18
  %v1571 = vunpack.c.l.b16 %v19
  %v1572 = vunpack.c.h.b16 %v19
  %v1573 = vunpack.c.l.b16 %v20
  %v1574 = vunpack.c.h.b16 %v20
  %v1575 = vunpack.c.l.b16 %v21
  %v1576 = vunpack.c.l.b16 %v22
  %v1577 = vunpack.c.h.b16 %v22
  %v1578 = vunpack.c.l.b16 %v23
  %v1579 = vunpack.c.h.b16 %v23
  %v1580 = vunpack.c.l.b16 %v24
  %v1581 = vunpack.c.h.b16 %v24
  %v1582 = vunpack.c.l.b16 %v25
  %v1583 = vunpack.c.h.b16 %v25
  %v1584 = vunpack.c.l.b16 %v26
  %v1585 = vunpack.c.h.b16 %v26
  %v1586 = vunpack.c.l.b16 %v27
  %v1587 = vunpack.c.h.b16 %v27
  %v1588 = vunpack.c.l.b16 %v28
  %v1589 = vunpack.c.l.b16 %v29
  %v1590 = vunpack.c.h.b16 %v29
  %v1591 = vunpack.c.l.b16 %v30
  %v1592 = vunpack.c.h.b16 %v30
  %v1593 = vunpack.c.l.b16 %v31
  %v1594 = vunpack.c.h.b16 %v31
  %v1595 = vunpack.c.l.b16 %v32
  %v1596 = vunpack.c.h.b16 %v32
  %v1597 = vunpack.c.l.b16 %v33
  %v1598 = vunpack.c.h.b16 %v33
  %v1599 = vunpack.c.l.b16 %v34
  %v1600 = vunpack.c.h.b16 %v34
  %v1601 = vunpack.c.l.b16 %v35
  %v1602 = vunpack.c.l.b16 %v36
  %v1603 = vunpack.c.h.b16 %v36
  %v1604 = vunpack.c.l.b16 %v37
  %v1605 = vunpack.c.h.b16 %v37
  %v1606 = vunpack.c.l.b16 %v38
  %v1607 = vunpack.c.h.b16 %v38
  %v1608 = vunpack.c.l.b16 %v39
  %v1609 = vunpack.c.h.b16 %v39
  %v1610 = vunpack.c.l.b16 %v40
  %v1611 = vunpack.c.h.b16 %v40
  %v1612 = vunpack.c.l.b16 %v41
  %v1613 = vunpack.c.h.b16 %v41
  %v1614 = vunpack.c.l.b16 %v42
  %v1615 = vunpack.c.l.b16 %v43
  %v1616 = vunpack.c.h.b16 %v43
  %v1617 = vunpack.c.l.b16 %v44
  %v1618 = vunpack.c.h.b16 %v44
  %v1619 = vunpack.c.l.b16 %v45
  %v1620 = vunpack.c.h.b16 %v45
  %v1621 = vunpack.c.l.b16 %v46
  %v1622 = vunpack.c.h.b16 %v46
  %v1623 = vunpack.c.l.b16 %v47
  %v1624 = vunpack.c.h.b16 %v47
  %v1625 = vunpack.c.l.b16 %v48
  %v1626 = vunpack.c.h.b16 %v48
  %v1627 = vunpack.c.l.b16 %v49
  %v1628 = vunpack.c.l.b16 %v50
  %v1629 = vunpack.c.h.b16 %v50
  %v1630 = vunpack.c.l.b16 %v51
  %v1631 = vunpack.c.h.b16 %v51
  %v1632 = vunpack.c.l.b16 %v52
  %v1633 = vunpack.c.h.b16 %v52
  %v1634 = vunpack.c.l.b16 %v53
  %v1635 = vunpack.c.h.b16 %v53
  %v1636 = vunpack.c.l.b16 %v54
  %v1637 = vunpack.c.h.b16 %v54
  %v1638 = vunpack.c.l.b16 %v55
  %v1639 = vunpack.c.h.b16 %v55
  %v1640 = vunpack.c.l.b16 %v56
  %v1641 = vunpack.c.l.b16 %v57
  %v1642 = vunpack.c.h.b16 %v57
  %v1643 = vunpack.c.l.b16 %v58
  %v1644 = vunpack.c.h.b16 %v58
  %v1645 = vunpack.c.l.b16 %v59
  %v1646 = vunpack.c.h.b16 %v59
  %v1647 = vunpack.c.l.b16 %v60
  %v1648 = vunpack.c.h.b16 %v60
  %v1649 = vunpack.c.l.b16 %v61
  %v1650 = vunpack.c.h.b16 %v61
  %v1651 = vunpack.c.l.b16 %v62
  %v1652 = vunpack.c.h.b16 %v62
  %v1653 = vunpack.c.l.b16 %v63
  %v1654 = vunpack.c.l.b16 %v64
  %v1655 = vunpack.c.h.b16 %v64
  %v1656 = vunpack.c.l.b16 %v65
  %v1657 = vunpack.c.h.b16 %v65
  %v1658 = vunpack.c.l.b16 %v66
  %v1659 = vunpack.c.h.b16 %v66
  %v1660 = vunpack.c.l.b16 %v67
  %v1661 = vunpack.c.h.b16 %v67
  %v1662 = vunpack.c.l.b16 %v68
  %v1663 = vunpack.c.h.b16 %v68
  %v1664 = vunpack.c.l.b16 %v69
  %v1665 = vunpack.c.h.b16 %v69
  %v1666 = vunpack.c.l.b16 %v70
  %v1667 = vunpack.c.l.b16 %v71
  %v1668 = vunpack.c.h.b16 %v71
  %v1669 = vunpack.c.l.b16 %v72
  %v1670 = vunpack.c.h.b16 %v72
  %v1671 = vunpack.c.l.b16 %v73
  %v1672 = vunpack.c.h.b16 %v73
  %v1673 = vunpack.c.l.b16 %v74
  %v1674 = vunpack.c.h.b16 %v74
  %v1675 = vunpack.c.l.b16 %v75
  %v1676 = vunpack.c.h.b16 %v75
  %v1677 = vunpack.c.l.b16 %v76
  %v1678 = vunpack.c.h.b16 %v76
  %v1679 = vunpack.c.l.b16 %v77
  %v1680 = vunpack.c.l.b16 %v78
  %v1681 = vunpack.c.h.b16 %v78
  %v1682 = vunpack.c.l.b16 %v79
  %v1683 = vunpack.c.h.b16 %v79
  %v1684 = vunpack.c.l.b16 %v80
  %v1685 = vunpack.c.h.b16 %v80
  %v1686 = vunpack.c.l.b16 %v81
  %v1687 = vunpack.c.h.b16 %v81
  %v1688 = vunpack.c.l.b16 %v82
  %v1689 = vunpack.c.h.b16 %v82
  %v1690 = vunpack.c.l.b16 %v83
  %v1691 = vunpack.c.h.b16 %v83
  %v1692 = vunpack.c.l.b16 %v84
  %v1693 = vunpack.c.l.b16 %v85
  %v1694 = vunpack.c.h.b16 %v85
  %v1695 = vunpack.c.l.b16 %v86
  %v1696 = vunpack.c.h.b16 %v86
  %v1697 = vunpack.c.l.b16 %v87
  %v1698 = vunpack.c.h.b16 %v87
  %v1699 = vunpack.c.l.b16 %v88
  %v1700 = vunpack.c.h.b16 %v88
  %v1701 = vunpack.c.l.b16 %v89
  %v1702 = vunpack.c.h.b16 %v89
  %v1703 = vunpack.c.l.b16 %v90
  %v1704 = vunpack.c.h.b16 %v90
  %v1705 = vunpack.c.l.b16 %v91
  %v1706 = vunpack.c.l.b16 %v92
  %v1707 = vunpack.c.h.b16 %v92
  %v1708 = vunpack.c.l.b16 %v93
  %v1709 = vunpack.c.h.b16 %v93
  %v1710 = vunpack.c.l.b16 %v94
  %v1711 = vunpack.c.h.b16 %v94
  %v1712 = vunpack.c.l.b16 %v95
  %v1713 = vunpack.c.h.b16 %v95
  %v1714 = vunpack.c.l.b16 %v96
  %v1715 = vunpack.c.h.b16 %v96
  %v1716 = vunpack.c.l.b16 %v97
  %v1717 = vunpack.c.h.b16 %v97
  %v1718 = vunpack.c.l.b16 %v98
  %v1719 = vunpack.c.l.b16 %v99
  %v1720 = vunpack.c.h.b16 %v99
  %v1721 = vunpack.c.l.b16 %v100
  %v1722 = vunpack.c.h.b16 %v100
  %v1723 = vunpack.c.l.b16 %v101
  %v1724 = vunpack.c.h.b16 %v101
  %v1725 = vunpack.c.l.b16 %v102
  %v1726 = vunpack.c.h.b16 %v102
  %v1727 = vunpack.c.l.b16 %v103
  %v1728 = vunpack.c.h.b16 %v103
  %v1729 = vunpack.c.l.b16 %v104
  %v1730 = vunpack.c.h.b16 %v104
  %v1731 = vunpack.c.l.b16 %v105
  %v1732 = vunpack.c.l.b16 %v106
  %v1733 = vunpack.c.h.b16 %v106
  %v1734 = vunpack.c.l.b16 %v107
  %v1735 = vunpack.c.h.b16 %v107
  %v1736 = vunpack.c.l.b16 %v108
  %v1737 = vunpack.c.h.b16 %v108
  %v1738 = vunpack.c.l.b16 %v109
  %v1739 = vunpack.c.h.b16 %v109
  %v1740 = vunpack.c.l.b16 %v110
  %v1741 = vunpack.c.h.b16 %v110
  %v1742 = vunpack.c.l.b16 %v111
  %v1743 = vunpack.c.h.b16 %v111
  %v1744 = vunpack.c.l.b16 %v112
  %v1745 = vunpack.c.l.b16 %v113
  %v1746 = vunpack.c.h.b16 %v113
  %v1747 = vunpack.c.l.b16 %v114
  %v1748 = vunpack.c.h.b16 %v114
  %v1749 = vunpack.c.l.b16 %v115
  %v1750 = vunpack.c.h.b16 %v115
  %v1751 = vunpack.c.l.b16 %v116
  %v1752 = vunpack.c.h.b16 %v116
  %v1753 = vunpack.c.l.b16 %v117
  %v1754 = vunpack.c.h.b16 %v117
  %v1755 = vunpack.c.l.b16 %v118
  %v1756 = vunpack.c.h.b16 %v118
  %v1757 = vunpack.c.l.b16 %v119
  %v1758 = vunpack.c.l.b16 %v120
  %v1759 = vunpack.c.h.b16 %v120
  %v1760 = vunpack.c.l.b16 %v121
  %v1761 = vunpack.c.h.b16 %v121
  %v1762 = vunpack.c.l.b16 %v122
  %v1763 = vunpack.c.h.b16 %v122
  %v1764 = vunpack.c.l.b16 %v123
  %v1765 = vunpack.c.h.b16 %v123
  %v1766 = vunpack.c.l.b16 %v124
  %v1767 = vunpack.c.h.b16 %v124
  %v1768 = vunpack.c.l.b16 %v125
  %v1769 = vunpack.c.h.b16 %v125
  %v1770 = vunpack.c.l.b16 %v126
  %v1771 = vunpack.c.l.b16 %v127
  %v1772 = vunpack.c.h.b16 %v127
  %v1773 = vunpack.c.l.b16 %v128
  %v1774 = vunpack.c.h.b16 %v128
  %v1775 = vunpack.c.l.b16 %v129
  %v1776 = vunpack.c.h.b16 %v129
  %v1777 = vunpack.c.l.b16 %v130
  %v1778 = vunpack.c.h.b16 %v130
  %v1779 = vunpack.c.l.b16 %v131
  %v1780 = vunpack.c.h.b16 %v131
  %v1781 = vunpack.c.l.b16 %v132
  %v1782 = vunpack.c.h.b16 %v132
  %v1783 = vunpack.c.l.b16 %v133
  %v1784 = vunpack.c.l.b16 %v134
  %v1785 = vunpack.c.h.b16 %v134
  %v1786 = vunpack.c.l.b16 %v135
  %v1787 = vunpack.c.h.b16 %v135
  %v1788 = vunpack.c.l.b16 %v136
  %v1789 = vunpack.c.h.b16 %v136
  %v1790 = vunpack.c.l.b16 %v137
  %v1791 = vunpack.c.h.b16 %v137
  %v1792 = vunpack.c.l.b16 %v138
  %v1793 = vunpack.c.h.b16 %v138
  %v1794 = vunpack.c.l.b16 %v139
  %v1795 = vunpack.c.h.b16 %v139
  %v1796 = vunpack.c.l.b16 %v140
  %v1797 = vunpack.c.l.b16 %v141
  %v1798 = vunpack.c.h.b16 %v141
  %v1799 = vunpack.c.l.b16 %v142
  %v1800 = vunpack.c.h.b16 %v142
  %v1801 = vunpack.c.l.b16 %v143
  %v1802 = vunpack.c.h.b16 %v143
  %v1803 = vunpack.c.l.b16 %v144
  %v1804 = vunpack.c.h.b16 %v144
  %v1805 = vunpack.c.l.b16 %v145
  %v1806 = vunpack.c.h.b16 %v145
  %v1807 = vunpack.c.l.b16 %v146
  %v1808 = vunpack.c.h.b16 %v146
  %v1809 = vunpack.c.l.b16 %v147
  %v1810 = vunpack.c.l.b16 %v148
  %v1811 = vunpack.c.h.b16 %v148
  %v1812 = vunpack.c.l.b16 %v149
  %v1813 = vunpack.c.h.b16 %v149
  %v1814 = vunpack.c.l.b16 %v150
  %v1815 = vunpack.c.h.b16 %v150
  %v1816 = vunpack.c.l.b16 %v151
  %v1817 = vunpack.c.h.b16 %v151
  %v1818 = vunpack.c.l.b16 %v152
  %v1819 = vunpack.c.h.b16 %v152
  %v1820 = vunpack.c.l.b16 %v153
  %v1821 = vunpack.c.h.b16 %v153
  %v1822 = vunpack.c.l.b16 %v154
  %v1823 = vunpack.c.l.b16 %v155
  %v1824 = vunpack.c.h.b16 %v155
  %v1825 = vunpack.c.l.b16 %v156
  %v1826 = vunpack.c.h.b16 %v156
  %v1827 = vunpack.c.l.b16 %v157
  %v1828 = vunpack.c.h.b16 %v157
  %v1829 = vunpack.c.l.b16 %v158
  %v1830 = vunpack.c.h.b16 %v158
  %v1831 = vunpack.c.l.b16 %v159
  %v1832 = vunpack.c.h.b16 %v159
  %v1833 = vunpack.c.l.b16 %v160
  %v1834 = vunpack.c.h.b16 %v160
  %v1835 = vunpack.c.l.b16 %v161
  %v1836 = vunpack.c.l.b16 %v162
  %v1837 = vunpack.c.h.b16 %v162
  %v1838 = vunpack.c.l.b16 %v163
  %v1839 = vunpack.c.h.b16 %v163
  %v1840 = vunpack.c.l.b16 %v164
  %v1841 = vunpack.c.h.b16 %v164
  %v1842 = vunpack.c.l.b16 %v165
  %v1843 = vunpack.c.h.b16 %v165
  %v1844 = vunpack.c.l.b16 %v166
  %v1845 = vunpack.c.h.b16 %v166
  %v1846 = vunpack.c.l.b16 %v167
  %v1847 = vunpack.c.h.b16 %v167
  %v1848 = vunpack.c.l.b16 %v168
  %v1849 = vunpack.c.l.b16 %v169
  %v1850 = vunpack.c.h.b16 %v169
  %v1851 = vunpack.c.l.b16 %v170
  %v1852 = vunpack.c.h.b16 %v170
  %v1853 = vunpack.c.l.b16 %v171
  %v1854 = vunpack.c.h.b16 %v171
  %v1855 = vunpack.c.l.b16 %v172
  %v1856 = vunpack.c.h.b16 %v172
  %v1857 = vunpack.c.l.b16 %v173
  %v1858 = vunpack.c.h.b16 %v173
  %v1859 = vunpack.c.l.b16 %v174
  %v1860 = vunpack.c.h.b16 %v174
  %v1861 = vunpack.c.l.b16 %v175
  %v1862 = vunpack.c.l.b16 %v176
  %v1863 = vunpack.c.h.b16 %v176
  %v1864 = vunpack.c.l.b16 %v177
  %v1865 = vunpack.c.h.b16 %v177
  %v1866 = vunpack.c.l.b16 %v178
  %v1867 = vunpack.c.h.b16 %v178
  %v1868 = vunpack.c.l.b16 %v179
  %v1869 = vunpack.c.h.b16 %v179
  %v1870 = vunpack.c.l.b16 %v180
  %v1871 = vunpack.c.h.b16 %v180
  %v1872 = vunpack.c.l.b16 %v181
  %v1873 = vunpack.c.h.b16 %v181
  %v1874 = vunpack.c.l.b16 %v182
  %v1875 = vunpack.c.l.b16 %v183
  %v1876 = vunpack.c.h.b16 %v183
  %v1877 = vunpack.c.l.b16 %v184
  %v1878 = vunpack.c.h.b16 %v184
  %v1879 = vunpack.c.l.b16 %v185
  %v1880 = vunpack.c.h.b16 %v185
  %v1881 = vunpack.c.l.b16 %v186
  %v1882 = vunpack.c.h.b16 %v186
  %v1883 = vunpack.c.l.b16 %v187
  %v1884 = vunpack.c.h.b16 %v187
  %v1885 = vunpack.c.l.b16 %v188
  %v1886 = vunpack.c.h.b16 %v188
  %v1887 = vunpack.c.l.b16 %v189
  %v1888 = vunpack.c.l.b16 %v190
  %v1889 = vunpack.c.h.b16 %v190
  %v1890 = vunpack.c.l.b16 %v191
  %v1891 = vunpack.c.h.b16 %v191
  %v1892 = vunpack.c.l.b16 %v192
  %v1893 = vunpack.c.h.b16 %v192
  %v1894 = vunpack.c.l.b16 %v193
  %v1895 = vunpack.c.h.b16 %v193
  %v1896 = vunpack.c.l.b16 %v194
  %v1897 = vunpack.c.h.b16 %v194
  %v1898 = vunpack.c.l.b16 %v195
  %v1899 = vunpack.c.h.b16 %v195
  %v1900 = vunpack.c.l.b16 %v196
  %v1901 = vunpack.c.l.b16 %v197
  %v1902 = vunpack.c.h.b16 %v197
  %v1903 = vunpack.c.l.b16 %v198
  %v1904 = vunpack.c.h.b16 %v198
  %v1905 = vunpack.c.l.b16 %v199
  %v1906 = vunpack.c.h.b16 %v199
  %v1907 = vunpack.c.l.b16 %v200
  %v1908 = vunpack.c.h.b16 %v200
  %v1909 = vunpack.c.l.b16 %v201
  %v1910 = vunpack.c.h.b16 %v201
  %v1911 = vunpack.c.l.b16 %v202
  %v1912 = vunpack.c.h.b16 %v202
  %v1913 = vunpack.c.l.b16 %v203
  %v1914 = vunpack.c.l.b16 %v204
  %v1915 = vunpack.c.h.b16 %v204
  %v1916 = vunpack.c.l.b16 %v205
  %v1917 = vunpack.c.h.b16 %v205
  %v1918 = vunpack.c.l.b16 %v206
  %v1919 = vunpack.c.h.b16 %v206
  %v1920 = vunpack.c.l.b16 %v207
  %v1921 = vunpack.c.h.b16 %v207
  %v1922 = vunpack.c.l.b16 %v208
  %v1923 = vunpack.c.h.b16 %v208
  %v1924 = vunpack.c.l.b16 %v209
  %v1925 = vunpack.c.h.b16 %v209
  %v1926 = vunpack.c.l.b16 %v210
  %v1927 = vunpack.c.l.b16 %v211
  %v1928 = vunpack.c.h.b16 %v211
  %v1929 = vunpack.c.l.b16 %v212
  %v1930 = vunpack.c.h.b16 %v212
  %v1931 = vunpack.c.l.b16 %v213
  %v1932 = vunpack.c.h.b16 %v213
  %v1933 = vunpack.c.l.b16 %v214
  %v1934 = vunpack.c.h.b16 %v214
  %v1935 = vunpack.c.l.b16 %v215
  %v1936 = vunpack.c.h.b16 %v215
  %v1937 = vunpack.c.l.b16 %v216
  %v1938 = vunpack.c.h.b16 %v216
  %v1939 = vunpack.c.l.b16 %v217
  %v1940 = vunpack.c.l.b16 %v218
  %v1941 = vunpack.c.h.b16 %v218
  %v1942 = vunpack.c.l.b16 %v219
  %v1943 = vunpack.c.h.b16 %v219
  %v1944 = vunpack.c.l.b16 %v220
  %v1945 = vunpack.c.h.b16 %v220
  %v1946 = vunpack.c.l.b16 %v221
  %v1947 = vunpack.c.h.b16 %v221
  %v1948 = vunpack.c.l.b16 %v222
  %v1949 = vunpack.c.h.b16 %v222
  %v1950 = vunpack.c.l.b16 %v223
  %v1951 = vunpack.c.h.b16 %v223
  %v1952 = vunpack.c.l.b16 %v224
  %v1953 = vunpack.c.l.b16 %v225
  %v1954 = vunpack.c.h.b16 %v225
  %v1955 = vunpack.c.l.b16 %v226
  %v1956 = vunpack.c.h.b16 %v226
  %v1957 = vunpack.c.l.b16 %v227
  %v1958 = vunpack.c.h.b16 %v227
  %v1959 = vunpack.c.l.b16 %v228
  %v1960 = vunpack.c.h.b16 %v228
  %v1961 = vunpack.c.l.b16 %v229
  %v1962 = vunpack.c.h.b16 %v229
  %v1963 = vunpack.c.l.b16 %v230
  %v1964 = vunpack.c.h.b16 %v230
  %v1965 = vunpack.c.l.b16 %v231
  %v1966 = vunpack.c.l.b16 %v232
  %v1967 = vunpack.c.h.b16 %v232
  %v1968 = vunpack.c.l.b16 %v233
  %v1969 = vunpack.c.h.b16 %v233
  %v1970 = vunpack.c.l.b16 %v234
  %v1971 = vunpack.c.h.b16 %v234
  %v1972 = vunpack.c.l.b16 %v235
  %v1973 = vunpack.c.h.b16 %v235
  %v1974 = vunpack.c.l.b16 %v236
  %v1975 = vunpack.c.h.b16 %v236
  %v1976 = vunpack.c.l.b16 %v237
  %v1977 = vunpack.c.h.b16 %v237
  %v1978 = vunpack.c.l.b16 %v238
  %v1979 = vunpack.c.l.b16 %v239
  %v1980 = vunpack.c.h.b16 %v239
  %v1981 = vunpack.c.l.b16 %v240
  %v1982 = vunpack.c.h.b16 %v240
  %v1983 = vunpack.c.l.b16 %v241
  %v1984 = vunpack.c.h.b16 %v241
  %v1985 = vunpack.c.l.b16 %v242
  %v1986 = vunpack.c.h.b16 %v242
  %v1987 = vunpack.c.l.b16 %v243
  %v1988 = vunpack.c.h.b16 %v243
  %v1989 = vunpack.c.l.b16 %v244
  %v1990 = vunpack.c.h.b16 %v244
  %v1991 = vunpack.c.l.b16 %v245
  %v1992 = vunpack.c.l.b16 %v246
  %v1993 = vunpack.c.h.b16 %v246
  %v1994 = vunpack.c.l.b16 %v247
  %v1995 = vunpack.c.h.b16 %v247
  %v1996 = vunpack.c.l.b16 %v248
  %v1997 = vunpack.c.h.b16 %v248
  %v1998 = vunpack.c.l.b16 %v249
  %v1999 = vunpack.c.h.b16 %v249
  %v2000 = vunpack.c.l.b16 %v250
  %v2001 = vunpack.c.h.b16 %v250
  %v2002 = vunpack.c.l.b16 %v251
  %v2003 = vunpack.c.h.b16 %v251
  %v2004 = vunpack.c.l.b16 %v252
  %v2005 = vunpack.c.l.b16 %v253
  %v2006 = vunpack.c.h.b16 %v253
  %v2007 = vunpack.c.l.b16 %v254
  %v2008 = vunpack.c.h.b16 %v254
  %v2009 = vunpack.c.l.b16 %v255
  %v2010 = vunpack.c.h.b16 %v255
  %v2011 = vunpack.c.l.b16 %v256
  %v2012 = vunpack.c.h.b16 %v256
  %v2013 = vunpack.c.l.b16 %v257
  %v2014 = vunpack.c.h.b16 %v257
  %v2015 = vunpack.c.l.b16 %v258
  %v2016 = vunpack.c.h.b16 %v258
  %v2017 = vunpack.c.l.b16 %v259
  %v2018 = vunpack.c.l.b16 %v260
  %v2019 = vunpack.c.h.b16 %v260
  %v2020 = vunpack.c.l.b16 %v261
  %v2021 = vunpack.c.h.b16 %v261
  %v2022 = vunpack.c.l.b16 %v262
  %v2023 = vunpack.c.h.b16 %v262
  %v2024 = vunpack.c.l.b16 %v263
  %v2025 = vunpack.c.h.b16 %v263
  %v2026 = vunpack.c.l.b16 %v264
  %v2027 = vunpack.c.h.b16 %v264
  %v2028 = vunpack.c.l.b16 %v265
  %v2029 = vunpack.c.h.b16 %v265
  %v2030 = vunpack.c.l.b16 %v266
  %v2031 = vunpack.c.l.b16 %v267
  %v2032 = vunpack.c.h.b16 %v267
  %v2033 = vunpack.c.l.b16 %v268
  %v2034 = vunpack.c.h.b16 %v268
  %v2035 = vunpack.c.l.b16 %v269
  %v2036 = vunpack.c.h.b16 %v269
  %v2037 = vunpack.c.l.b16 %v270
  %v2038 = vunpack.c.h.b16 %v270
  %v2039 = vunpack.c.l.b16 %v271
  %v2040 = vunpack.c.h.b16 %v271
  %v2041 = vunpack.c.l.b16 %v272
  %v2042 = vunpack.c.h.b16 %v272
  %v2043 = vunpack.c.l.b16 %v273
  %v2044 = vunpack.c.l.b16 %v274
  %v2045 = vunpack.c.h.b16 %v274
  %v2046 = vunpack.c.l.b16 %v275
  %v2047 = vunpack.c.h.b16 %v275
  %v2048 = vunpack.c.l.b16 %v276
  %v2049 = vunpack.c.h.b16 %v276
  %v2050 = vunpack.c.l.b16 %v277
  %v2051 = vunpack.c.h.b16 %v277
  %v2052 = vunpack.c.l.b16 %v278
  %v2053 = vunpack.c.h.b16 %v278
  %v2054 = vunpack.c.l.b16 %v279
  %v2055 = vunpack.c.h.b16 %v279
  %v2056 = vunpack.c.l.b16 %v280
  %v2057 = vunpack.c.l.b16 %v281
  %v2058 = vunpack.c.h.b16 %v281
  %v2059 = vunpack.c.l.b16 %v282
  %v2060 = vunpack.c.h.b16 %v282
  %v2061 = vunpack.c.l.b16 %v283
  %v2062 = vunpack.c.h.b16 %v283
  %v2063 = vunpack.c.l.b16 %v284
  %v2064 = vunpack.c.h.b16 %v284
  %v2065 = vunpack.c.l.b16 %v285
  %v2066 = vunpack.c.h.b16 %v285
  %v2067 = vunpack.c.l.b16 %v286
  %v2068 = vunpack.c.h.b16 %v286
  %v2069 = vunpack.c.l.b16 %v287
  %v2070 = vunpack.c.l.b16 %v288
  %v2071 = vunpack.c.h.b16 %v288
  %v2072 = vunpack.c.l.b16 %v289
  %v2073 = vunpack.c.h.b16 %v289
  %v2074 = vunpack.c.l.b16 %v290
  %v2075 = vunpack.c.h.b16 %v290
  %v2076 = vunpack.c.l.b16 %v291
  %v2077 = vunpack.c.h.b16 %v291
  %v2078 = vunpack.c.l.b16 %v292
  %v2079 = vunpack.c.h.b16 %v292
  %v2080 = vunpack.c.l.b16 %v293
  %v2081 = vunpack.c.h.b16 %v293
  %v2082 = vunpack.c.l.b16 %v294
  %v2083 = vunpack.c.l.b16 %v295
  %v2084 = vunpack.c.h.b16 %v295
  %v2085 = vunpack.c.l.b16 %v296
  %v2086 = vunpack.c.h.b16 %v296
  %v2087 = vunpack.c.l.b16 %v297
  %v2088 = vunpack.c.h.b16 %v297
  %v2089 = vunpack.c.l.b16 %v298
  %v2090 = vunpack.c.h.b16 %v298
  %v2091 = vunpack.c.l.b16 %v299
  %v2092 = vunpack.c.h.b16 %v299
  %v2093 = vunpack.c.l.b16 %v300
  %v2094 = vunpack.c.h.b16 %v300
  %v2095 = vunpack.c.l.b16 %v301
  %v2096 = vunpack.c.l.b16 %v302
  %v2097 = vunpack.c.h.b16 %v302
  %v2098 = vunpack.c.l.b16 %v303
  %v2099 = vunpack.c.h.b16 %v303
  %v2100 = vunpack.c.l.b16 %v304
  %v2101 = vunpack.c.h.b16 %v304
  %v2102 = vunpack.c.l.b16 %v305
  %v2103 = vunpack.c.h.b16 %v305
  %v2104 = vunpack.c.l.b16 %v306
  %v2105 = vunpack.c.h.b16 %v306
  %v2106 = vunpack.c.l.b16 %v307
  %v2107 = vunpack.c.h.b16 %v307
  %v2108 = vunpack.c.l.b16 %v308
  %v2109 = vunpack.c.l.b16 %v309
  %v2110 = vunpack.c.h.b16 %v309
  %v2111 = vunpack.c.l.b16 %v310
  %v2112 = vunpack.c.h.b16 %v310
  %v2113 = vunpack.c.l.b16 %v311
  %v2114 = vunpack.c.h.b16 %v311
  %v2115 = vunpack.c.l.b16 %v312
  %v2116 = vunpack.c.h.b16 %v312
  %v2117 = vunpack.c.l.b16 %v313
  %v2118 = vunpack.c.h.b16 %v313
  %v2119 = vunpack.c.l.b16 %v314
  %v2120 = vunpack.c.h.b16 %v314
  %v2121 = vunpack.c.l.b16 %v315
  %v2122 = vunpack.c.l.b16 %v316
  %v2123 = vunpack.c.h.b16 %v316
  %v2124 = vunpack.c.l.b16 %v317
  %v2125 = vunpack.c.h.b16 %v317
  %v2126 = vunpack.c.l.b16 %v318
  %v2127 = vunpack.c.h.b16 %v318
  %v2128 = vunpack.c.l.b16 %v319
  %v2129 = vunpack.c.h.b16 %v319
  %v2130 = vunpack.c.l.b16 %v320
  %v2131 = vunpack.c.h.b16 %v320
  %v2132 = vunpack.c.l.b16 %v321
  %v2133 = vunpack.c.h.b16 %v321
  %v2134 = vunpack.c.l.b16 %v322
  %v2135 = vunpack.c.l.b16 %v323
  %v2136 = vunpack.c.h.b16 %v323
  %v2137 = vunpack.c.l.b16 %v324
  %v2138 = vunpack.c.h.b16 %v324
  %v2139 = vunpack.c.l.b16 %v325
  %v2140 = vunpack.c.h.b16 %v325
  %v2141 = vunpack.c.l.b16 %v326
  %v2142 = vunpack.c.h.b16 %v326
  %v2143 = vunpack.c.l.b16 %v327
  %v2144 = vunpack.c.h.b16 %v327
  %v2145 = vunpack.c.l.b16 %v328
  %v2146 = vunpack.c.h.b16 %v328
  %v2147 = vunpack.c.l.b16 %v329
  %v2148 = vunpack.c.l.b16 %v330
  %v2149 = vunpack.c.h.b16 %v330
  %v2150 = vunpack.c.l.b16 %v331
  %v2151 = vunpack.c.h.b16 %v331
  %v2152 = vunpack.c.l.b16 %v332
  %v2153 = vunpack.c.h.b16 %v332
  %v2154 = vunpack.c.l.b16 %v333
  %v2155 = vunpack.c.h.b16 %v333
  %v2156 = vunpack.c.l.b16 %v334
  %v2157 = vunpack.c.h.b16 %v334
  %v2158 = vunpack.c.l.b16 %v335
  %v2159 = vunpack.c.h.b16 %v335
  %v2160 = vunpack.c.l.b16 %v336
  %v2161 = vunpack.c.l.b16 %v337
  %v2162 = vunpack.c.h.b16 %v337
  %v2163 = vunpack.c.l.b16 %v338
  %v2164 = vunpack.c.h.b16 %v338
  %v2165 = vunpack.c.l.b16 %v339
  %v2166 = vunpack.c.h.b16 %v339
  %v2167 = vunpack.c.l.b16 %v340
  %v2168 = vunpack.c.h.b16 %v340
  %v2169 = vunpack.c.l.b16 %v341
  %v2170 = vunpack.c.h.b16 %v341
  %v2171 = vunpack.c.l.b16 %v342
  %v2172 = vunpack.c.h.b16 %v342
  %v2173 = vunpack.c.l.b16 %v343
  %v2174 = vunpack.c.l.b16 %v344
  %v2175 = vunpack.c.h.b16 %v344
  %v2176 = vunpack.c.l.b16 %v345
  %v2177 = vunpack.c.h.b16 %v345
  %v2178 = vunpack.c.l.b16 %v346
  %v2179 = vunpack.c.h.b16 %v346
  %v2180 = vunpack.c.l.b16 %v347
  %v2181 = vunpack.c.h.b16 %v347
  %v2182 = vunpack.c.l.b16 %v348
  %v2183 = vunpack.c.h.b16 %v348
  %v2184 = vunpack.c.l.b16 %v349
  %v2185 = vunpack.c.h.b16 %v349
  %v2186 = vunpack.c.l.b16 %v350
  %v2187 = vunpack.c.l.b16 %v351
  %v2188 = vunpack.c.h.b16 %v351
  %v2189 = vunpack.c.l.b16 %v352
  %v2190 = vunpack.c.h.b16 %v352
  %v2191 = vunpack.c.l.b16 %v353
  %v2192 = vunpack.c.h.b16 %v353
  %v2193 = vunpack.c.l.b16 %v354
  %v2194 = vunpack.c.h.b16 %v354
  %v2195 = vunpack.c.l.b16 %v355
  %v2196 = vunpack.c.h.b16 %v355
  %v2197 = vunpack.c.l.b16 %v356
  %v2198 = vunpack.c.h.b16 %v356
  %v2199 = vunpack.c.l.b16 %v357
  %v2200 = vunpack.c.l.b16 %v358
  %v2201 = vunpack.c.h.b16 %v358
  %v2202 = vunpack.c.l.b16 %v359
  %v2203 = vunpack.c.h.b16 %v359
  %v2204 = vunpack.c.l.b16 %v360
  %v2205 = vunpack.c.h.b16 %v360
  %v2206 = vunpack.c.l.b16 %v361
  %v2207 = vunpack.c.h.b16 %v361
  %v2208 = vunpack.c.l.b16 %v362
  %v2209 = vunpack.c.h.b16 %v362
  %v2210 = vunpack.c.l.b16 %v363
  %v2211 = vunpack.c.h.b16 %v363
  %v2212 = vunpack.c.l.b16 %v364
  %v2213 = vunpack.c.l.b16 %v365
  %v2214 = vunpack.c.h.b16 %v365
  %v2215 = vunpack.c.l.b16 %v366
  %v2216 = vunpack.c.h.b16 %v366
  %v2217 = vunpack.c.l.b16 %v367
  %v2218 = vunpack.c.h.b16 %v367
  %v2219 = vunpack.c.l.b16 %v368
  %v2220 = vunpack.c.h.b16 %v368
  %v2221 = vunpack.c.l.b16 %v369
  %v2222 = vunpack.c.h.b16 %v369
  %v2223 = vunpack.c.l.b16 %v370
  %v2224 = vunpack.c.h.b16 %v370
  %v2225 = vunpack.c.l.b16 %v371
  %v2226 = vunpack.c.l.b16 %v372
  %v2227 = vunpack.c.h.b16 %v372
  %v2228 = vunpack.c.l.b16 %v373
  %v2229 = vunpack.c.h.b16 %v373
  %v2230 = vunpack.c.l.b16 %v374
  %v2231 = vunpack.c.h.b16 %v374
  %v2232 = vunpack.c.l.b16 %v375
  %v2233 = vunpack.c.h.b16 %v375
  %v2234 = vunpack.c.l.b16 %v376
  %v2235 = vunpack.c.h.b16 %v376
  %v2236 = vunpack.c.l.b16 %v377
  %v2237 = vunpack.c.h.b16 %v377
  %v2238 = vunpack.c.l.b16 %v378
  %v2239 = vunpack.c.l.b16 %v379
  %v2240 = vunpack.c.h.b16 %v379
  %v2241 = vunpack.c.l.b16 %v380
  %v2242 = vunpack.c.h.b16 %v380
  %v2243 = vunpack.c.l.b16 %v381
  %v2244 = vunpack.c.h.b16 %v381
  %v2245 = vunpack.c.l.b16 %v382
  %v2246 = vunpack.c.h.b16 %v382
  %v2247 = vunpack.c.l.b16 %v383
  %v2248 = vunpack.c.h.b16 %v383
  %v2249 = vunpack.c.l.b16 %v384
  %v2250 = vunpack.c.h.b16 %v384
  %v2251 = vunpack.c.l.b16 %v385
  %v2252 = vunpack.c.l.b16 %v386
  %v2253 = vunpack.c.h.b16 %v386
  %v2254 = vunpack.c.l.b16 %v387
  %v2255 = vunpack.c.h.b16 %v387
  %v2256 = vunpack.c.l.b16 %v388
  %v2257 = vunpack.c.h.b16 %v388
  %v2258 = vunpack.c.l.b16 %v389
  %v2259 = vunpack.c.h.b16 %v389
  %v2260 = vunpack.c.l.b16 %v390
  %v2261 = vunpack.c.h.b16 %v390
  %v2262 = vunpack.c.l.b16 %v391
  %v2263 = vunpack.c.h.b16 %v391
  %v2264 = vunpack.c.l.b16 %v392
  %v2265 = vunpack.c.l.b16 %v393
  %v2266 = vunpack.c.h.b16 %v393
  %v2267 = vunpack.c.l.b16 %v394
  %v2268 = vunpack.c.h.b16 %v394
  %v2269 = vunpack.c.l.b16 %v395
  %v2270 = vunpack.c.h.b16 %v395
  %v2271 = vunpack.c.l.b16 %v396
  %v2272 = vunpack.c.h.b16 %v396
  %v2273 = vunpack.c.l.b16 %v397
  %v2274 = vunpack.c.h.b16 %v397
  %v2275 = vunpack.c.l.b16 %v398
  %v2276 = vunpack.c.h.b16 %v398
  %v2277 = vunpack.c.l.b16 %v399
  %v2278 = vunpack.c.l.b16 %v400
  %v2279 = vunpack.c.h.b16 %v400
  %v2280 = vunpack.c.l.b16 %v401
  %v2281 = vunpack.c.h.b16 %v401
  %v2282 = vunpack.c.l.b16 %v402
  %v2283 = vunpack.c.h.b16 %v402
  %v2284 = vunpack.c.l.b16 %v403
  %v2285 = vunpack.c.h.b16 %v403
  %v2286 = vunpack.c.l.b16 %v404
  %v2287 = vunpack.c.h.b16 %v404
  %v2288 = vunpack.c.l.b16 %v405
  %v2289 = vunpack.c.h.b16 %v405
  %v2290 = vunpack.c.l.b16 %v406
  %v2291 = vunpack.c.l.b16 %v407
  %v2292 = vunpack.c.h.b16 %v407
  %v2293 = vunpack.c.l.b16 %v408
  %v2294 = vunpack.c.h.b16 %v408
  %v2295 = vunpack.c.l.b16 %v409
  %v2296 = vunpack.c.h.b16 %v409
  %v2297 = vunpack.c.l.b16 %v410
  %v2298 = vunpack.c.h.b16 %v410
  %v2299 = vunpack.c.l.b16 %v411
  %v2300 = vunpack.c.h.b16 %v411
  %v2301 = vunpack.c.l.b16 %v412
  %v2302 = vunpack.c.h.b16 %v412
  %v2303 = vunpack.c.l.b16 %v413
  %v2304 = vunpack.c.l.b16 %v414
  %v2305 = vunpack.c.h.b16 %v414
  %v2306 = vunpack.c.l.b16 %v415
  %v2307 = vunpack.c.h.b16 %v415
  %v2308 = vunpack.c.l.b16 %v416
  %v2309 = vunpack.c.h.b16 %v416
  %v2310 = vunpack.c.l.b16 %v417
  %v2311 = vunpack.c.h.b16 %v417
  %v2312 = vunpack.c.l.b16 %v418
  %v2313 = vunpack.c.h.b16 %v418
  %v2314 = vunpack.c.l.b16 %v419
  %v2315 = vunpack.c.h.b16 %v419
  %v2316 = vunpack.c.l.b16 %v420
  %v2317 = vunpack.c.l.b16 %v421
  %v2318 = vunpack.c.h.b16 %v421
  %v2319 = vunpack.c.l.b16 %v422
  %v2320 = vunpack.c.h.b16 %v422
  %v2321 = vunpack.c.l.b16 %v423
  %v2322 = vunpack.c.h.b16 %v423
  %v2323 = vunpack.c.l.b16 %v424
  %v2324 = vunpack.c.h.b16 %v424
  %v2325 = vunpack.c.l.b16 %v425
  %v2326 = vunpack.c.h.b16 %v425
  %v2327 = vunpack.c.l.b16 %v426
  %v2328 = vunpack.c.h.b16 %v426
  %v2329 = vunpack.c.l.b16 %v427
  %v2330 = vunpack.c.l.b16 %v428
  %v2331 = vunpack.c.h.b16 %v428
  %v2332 = vunpack.c.l.b16 %v429
  %v2333 = vunpack.c.h.b16 %v429
  %v2334 = vunpack.c.l.b16 %v430
  %v2335 = vunpack.c.h.b16 %v430
  %v2336 = vunpack.c.l.b16 %v431
  %v2337 = vunpack.c.h.b16 %v431
  %v2338 = vunpack.c.l.b16 %v432
  %v2339 = vunpack.c.h.b16 %v432
  %v2340 = vunpack.c.l.b16 %v433
  %v2341 = vunpack.c.h.b16 %v433
  %v2342 = vunpack.c.l.b16 %v434
  %v2343 = vunpack.c.l.b16 %v435
  %v2344 = vunpack.c.h.b16 %v435
  %v2345 = vunpack.c.l.b16 %v436
  %v2346 = vunpack.c.h.b16 %v436
  %v2347 = vunpack.c.l.b16 %v437
  %v2348 = vunpack.c.h.b16 %v437
  %v2349 = vunpack.c.l.b16 %v438
  %v2350 = vunpack.c.h.b16 %v438
  %v2351 = vunpack.c.l.b16 %v439
  %v2352 = vunpack.c.h.b16 %v439
  %v2353 = vunpack.c.l.b16 %v440
  %v2354 = vunpack.c.h.b16 %v440
  %v2355 = vunpack.c.l.b16 %v441
  %v2356 = vunpack.c.l.b16 %v442
  %v2357 = vunpack.c.h.b16 %v442
  %v2358 = vunpack.c.l.b16 %v443
  %v2359 = vunpack.c.h.b16 %v443
  %v2360 = vunpack.c.l.b16 %v444
  %v2361 = vunpack.c.h.b16 %v444
  %v2362 = vunpack.c.l.b16 %v445
  %v2363 = vunpack.c.h.b16 %v445
  %v2364 = vunpack.c.l.b16 %v446
  %v2365 = vunpack.c.h.b16 %v446
  %v2366 = vunpack.c.l.b16 %v447
  %v2367 = vunpack.c.h.b16 %v447
  %v2368 = vunpack.c.l.b16 %v448
  %v2369 = vunpack.c.l.b16 %v449
  %v2370 = vunpack.c.h.b16 %v449
  %v2371 = vunpack.c.l.b16 %v450
  %v2372 = vunpack.c.h.b16 %v450
  %v2373 = vunpack.c.l.b16 %v451
  %v2374 = vunpack.c.h.b16 %v451
  %v2375 = vunpack.c.l.b16 %v452
  %v2376 = vunpack.c.h.b16 %v452
  %v2377 = vunpack.c.l.b16 %v453
  %v2378 = vunpack.c.h.b16 %v453
  %v2379 = vunpack.c.l.b16 %v454
  %v2380 = vunpack.c.h.b16 %v454
  %v2381 = vunpack.c.l.b16 %v455
  %v2382 = vunpack.c.l.b16 %v456
  %v2383 = vunpack.c.h.b16 %v456
  %v2384 = vunpack.c.l.b16 %v457
  %v2385 = vunpack.c.h.b16 %v457
  %v2386 = vunpack.c.l.b16 %v458
  %v2387 = vunpack.c.h.b16 %v458
  %v2388 = vunpack.c.l.b16 %v459
  %v2389 = vunpack.c.h.b16 %v459
  %v2390 = vunpack.c.l.b16 %v460
  %v2391 = vunpack.c.h.b16 %v460
  %v2392 = vunpack.c.l.b16 %v461
  %v2393 = vunpack.c.h.b16 %v461
  %v2394 = vunpack.c.l.b16 %v462
  %v2395 = vunpack.c.l.b16 %v463
  %v2396 = vunpack.c.h.b16 %v463
  %v2397 = vunpack.c.l.b16 %v464
  %v2398 = vunpack.c.h.b16 %v464
  %v2399 = vunpack.c.l.b16 %v465
  %v2400 = vunpack.c.h.b16 %v465
  %v2401 = vunpack.c.l.b16 %v466
  %v2402 = vunpack.c.h.b16 %v466
  %v2403 = vunpack.c.l.b16 %v467
  %v2404 = vunpack.c.h.b16 %v467
  %v2405 = vunpack.c.l.b16 %v468
  %v2406 = vunpack.c.h.b16 %v468
  %v2407 = vunpack.c.l.b16 %v469
  %v2408 = vunpack.c.l.b16 %v470
  %v2409 = vunpack.c.h.b16 %v470
  %v2410 = vunpack.c.l.b16 %v471
  %v2411 = vunpack.c.h.b16 %v471
  %v2412 = vunpack.c.l.b16 %v472
  %v2413 = vunpack.c.h.b16 %v472
  %v2414 = vunpack.c.l.b16 %v473
  %v2415 = vunpack.c.h.b16 %v473
  %v2416 = vunpack.c.l.b16 %v474
  %v2417 = vunpack.c.h.b16 %v474
  %v2418 = vunpack.c.l.b16 %v475
  %v2419 = vunpack.c.h.b16 %v475
  %v2420 = vunpack.c.l.b16 %v476
  %v2421 = vunpack.c.l.b16 %v477
  %v2422 = vunpack.c.h.b16 %v477
  %v2423 = vunpack.c.l.b16 %v478
  %v2424 = vunpack.c.h.b16 %v478
  %v2425 = vunpack.c.l.b16 %v479
  %v2426 = vunpack.c.h.b16 %v479
  %v2427 = vunpack.c.l.b16 %v480
  %v2428 = vunpack.c.h.b16 %v480
  %v2429 = vunpack.c.l.b16 %v481
  %v2430 = vunpack.c.h.b16 %v481
  %v2431 = vunpack.c.l.b16 %v482
  %v2432 = vunpack.c.h.b16 %v482
  %v2433 = vunpack.c.l.b16 %v483
  %v2434 = vunpack.c.l.b16 %v484
  %v2435 = vunpack.c.h.b16 %v484
  %v2436 = vunpack.c.l.b16 %v485
  %v2437 = vunpack.c.h.b16 %v485
  %v2438 = vunpack.c.l.b16 %v486
  %v2439 = vunpack.c.h.b16 %v486
  %v2440 = vunpack.c.l.b16 %v487
  %v2441 = vunpack.c.h.b16 %v487
  %v2442 = vunpack.c.l.b16 %v488
  %v2443 = vunpack.c.h.b16 %v488
  %v2444 = vunpack.c.l.b16 %v489
  %v2445 = vunpack.c.h.b16 %v489
  %v2446 = vunpack.c.l.b16 %v490
  %v2447 = vunpack.c.l.b16 %v491
  %v2448 = vunpack.c.h.b16 %v491
  %v2449 = vunpack.c.l.b16 %v492
  %v2450 = vunpack.c.h.b16 %v492
  %v2451 = vunpack.c.l.b16 %v493
  %v2452 = vunpack.c.h.b16 %v493
  %v2453 = vunpack.c.l.b16 %v494
  %v2454 = vunpack.c.h.b16 %v494
  %v2455 = vunpack.c.l.b16 %v495
  %v2456 = vunpack.c.h.b16 %v495
  %v2457 = vunpack.c.l.b16 %v496
  %v2458 = vunpack.c.h.b16 %v496
  %v2459 = vunpack.c.l.b16 %v497
  %v2460 = vunpack.c.l.b16 %v498
  %v2461 = vunpack.c.h.b16 %v498
  %v2462 = vunpack.c.l.b16 %v499
  %v2463 = vunpack.c.h.b16 %v499
  %v2464 = vunpack.c.l.b16 %v500
  %v2465 = vunpack.c.h.b16 %v500
  %v2466 = vunpack.c.l.b16 %v501
  %v2467 = vunpack.c.h.b16 %v501
  %v2468 = vunpack.c.l.b16 %v502
  %v2469 = vunpack.c.h.b16 %v502
  %v2470 = vunpack.c.l.b16 %v503
  %v2471 = vunpack.c.h.b16 %v503
  %v2472 = vunpack.c.l.b16 %v504
  %v2473 = vunpack.c.l.b16 %v505
  %v2474 = vunpack.c.h.b16 %v505
  %v2475 = vunpack.c.l.b16 %v506
  %v2476 = vunpack.c.h.b16 %v506
  %v2477 = vunpack.c.l.b16 %v507
  %v2478 = vunpack.c.h.b16 %v507
  %v2479 = vunpack.c.l.b16 %v508
  %v2480 = vunpack.c.h.b16 %v508
  %v2481 = vunpack.c.l.b16 %v509
  %v2482 = vunpack.c.h.b16 %v509
  %v2483 = vunpack.c.l.b16 %v510
  %v2484 = vunpack.c.h.b16 %v510
  %v2485 = vunpack.c.l.b16 %v511
  %v2486 = vunpack.c.l.b16 %v512
  %v2487 = vunpack.c.h.b16 %v512
  %v2488 = vunpack.c.l.b16 %v513
  %v2489 = vunpack.c.h.b16 %v513
  %v2490 = vunpack.c.l.b16 %v514
  %v2491 = vunpack.c.h.b16 %v514
  %v2492 = vunpack.c.l.b16 %v515
  %v2493 = vunpack.c.h.b16 %v515
  %v2494 = vunpack.c.l.b16 %v516
  %v2495 = vunpack.c.h.b16 %v516
  %v2496 = vunpack.c.l.b16 %v517
  %v2497 = vunpack.c.h.b16 %v517
  %v2498 = vunpack.c.l.b16 %v518
  %v2499 = vunpack.c.l.b16 %v519
  %v2500 = vunpack.c.h.b16 %v519
  %v2501 = vunpack.c.l.b16 %v520
  %v2502 = vunpack.c.h.b16 %v520
  %v2503 = vunpack.c.l.b16 %v521
  %v2504 = vunpack.c.h.b16 %v521
  %v2505 = vunpack.c.l.b16 %v522
  %v2506 = vunpack.c.h.b16 %v522
  %v2507 = vunpack.c.l.b16 %v523
  %v2508 = vunpack.c.h.b16 %v523
  %v2509 = vunpack.c.l.b16 %v524
  %v2510 = vunpack.c.h.b16 %v524
  %v2511 = vunpack.c.l.b16 %v525
  %v2512 = vunpack.c.l.b16 %v526
  %v2513 = vunpack.c.h.b16 %v526
  %v2514 = vunpack.c.l.b16 %v527
  %v2515 = vunpack.c.h.b16 %v527
  %v2516 = vunpack.c.l.b16 %v528
  %v2517 = vunpack.c.h.b16 %v528
  %v2518 = vunpack.c.l.b16 %v529
  %v2519 = vunpack.c.h.b16 %v529
  %v2520 = vunpack.c.l.b16 %v530
  %v2521 = vunpack.c.h.b16 %v530
  %v2522 = vunpack.c.l.b16 %v531
  %v2523 = vunpack.c.h.b16 %v531
  %v2524 = vunpack.c.l.b16 %v532
  %v2525 = vunpack.c.l.b16 %v533
  %v2526 = vunpack.c.h.b16 %v533
  %v2527 = vunpack.c.l.b16 %v534
  %v2528 = vunpack.c.h.b16 %v534
  %v2529 = vunpack.c.l.b16 %v535
  %v2530 = vunpack.c.h.b16 %v535
  %v2531 = vunpack.c.l.b16 %v536
  %v2532 = vunpack.c.h.b16 %v536
  %v2533 = vunpack.c.l.b16 %v537
  %v2534 = vunpack.c.h.b16 %v537
  %v2535 = vunpack.c.l.b16 %v538
  %v2536 = vunpack.c.h.b16 %v538
  %v2537 = vunpack.c.l.b16 %v539
  %v2538 = vunpack.c.l.b16 %v540
  %v2539 = vunpack.c.h.b16 %v540
  %v2540 = vunpack.c.l.b16 %v541
  %v2541 = vunpack.c.h.b16 %v541
  %v2542 = vunpack.c.l.b16 %v542
  %v2543 = vunpack.c.h.b16 %v542
  %v2544 = vunpack.c.l.b16 %v543
  %v2545 = vunpack.c.h.b16 %v543
  %v2546 = vunpack.c.l.b16 %v544
  %v2547 = vunpack.c.h.b16 %v544
  %v2548 = vunpack.c.l.b16 %v545
  %v2549 = vunpack.c.h.b16 %v545
  %v2550 = vunpack.c.l.b16 %v546
  %v2551 = vunpack.c.l.b16 %v547
  %v2552 = vunpack.c.h.b16 %v547
  %v2553 = vunpack.c.l.b16 %v548
  %v2554 = vunpack.c.h.b16 %v548
  %v2555 = vunpack.c.l.b16 %v549
  %v2556 = vunpack.c.h.b16 %v549
  %v2557 = vunpack.c.l.b16 %v550
  %v2558 = vunpack.c.h.b16 %v550
  %v2559 = vunpack.c.l.b16 %v551
  %v2560 = vunpack.c.h.b16 %v551
  %v2561 = vunpack.c.l.b16 %v552
  %v2562 = vunpack.c.h.b16 %v552
  %v2563 = vunpack.c.l.b16 %v553
  %v2564 = vunpack.c.l.b16 %v554
  %v2565 = vunpack.c.h.b16 %v554
  %v2566 = vunpack.c.l.b16 %v555
  %v2567 = vunpack.c.h.b16 %v555
  %v2568 = vunpack.c.l.b16 %v556
  %v2569 = vunpack.c.h.b16 %v556
  %v2570 = vunpack.c.l.b16 %v557
  %v2571 = vunpack.c.h.b16 %v557
  %v2572 = vunpack.c.l.b16 %v558
  %v2573 = vunpack.c.h.b16 %v558
  %v2574 = vunpack.c.l.b16 %v559
  %v2575 = vunpack.c.h.b16 %v559
  %v2576 = vunpack.c.l.b16 %v560
  %v2577 = vunpack.c.l.b16 %v561
  %v2578 = vunpack.c.h.b16 %v561
  %v2579 = vunpack.c.l.b16 %v562
  %v2580 = vunpack.c.h.b16 %v562
  %v2581 = vunpack.c.l.b16 %v563
  %v2582 = vunpack.c.h.b16 %v563
  %v2583 = vunpack.c.l.b16 %v564
  %v2584 = vunpack.c.h.b16 %v564
  %v2585 = vunpack.c.l.b16 %v565
  %v2586 = vunpack.c.h.b16 %v565
  %v2587 = vunpack.c.l.b16 %v566
  %v2588 = vunpack.c.h.b16 %v566
  %v2589 = vunpack.c.l.b16 %v567
  %v2590 = vunpack.c.l.b16 %v568
  %v2591 = vunpack.c.h.b16 %v568
  %v2592 = vunpack.c.l.b16 %v569
  %v2593 = vunpack.c.h.b16 %v569
  %v2594 = vunpack.c.l.b16 %v570
  %v2595 = vunpack.c.h.b16 %v570
  %v2596 = vunpack.c.l.b16 %v571
  %v2597 = vunpack.c.h.b16 %v571
  %v2598 = vunpack.c.l.b16 %v572
  %v2599 = vunpack.c.h.b16 %v572
  %v2600 = vunpack.c.l.b16 %v573
  %v2601 = vunpack.c.h.b16 %v573
  %v2602 = vunpack.c.l.b16 %v574
  %v2603 = vunpack.c.l.b16 %v575
  %v2604 = vunpack.c.h.b16 %v575
  %v2605 = vunpack.c.l.b16 %v576
  %v2606 = vunpack.c.h.b16 %v576
  %v2607 = vunpack.c.l.b16 %v577
  %v2608 = vunpack.c.h.b16 %v577
  %v2609 = vunpack.c.l.b16 %v578
  %v2610 = vunpack.c.h.b16 %v578
  %v2611 = vunpack.c.l.b16 %v579
  %v2612 = vunpack.c.h.b16 %v579
  %v2613 = vunpack.c.l.b16 %v580
  %v2614 = vunpack.c.h.b16 %v580
  %v2615 = vunpack.c.l.b16 %v581
  %v2616 = vunpack.c.l.b16 %v582
  %v2617 = vunpack.c.h.b16 %v582
  %v2618 = vunpack.c.l.b16 %v583
  %v2619 = vunpack.c.h.b16 %v583
  %v2620 = vunpack.c.l.b16 %v584
  %v2621 = vunpack.c.h.b16 %v584
  %v2622 = vunpack.c.l.b16 %v585
  %v2623 = vunpack.c.h.b16 %v585
  %v2624 = vunpack.c.l.b16 %v586
  %v2625 = vunpack.c.h.b16 %v586
  %v2626 = vunpack.c.l.b16 %v587
  %v2627 = vunpack.c.h.b16 %v587
  %v2628 = vunpack.c.l.b16 %v588
  %v2629 = vunpack.c.l.b16 %v589
  %v2630 = vunpack.c.h.b16 %v589
  %v2631 = vunpack.c.l.b16 %v590
  %v2632 = vunpack.c.h.b16 %v590
  %v2633 = vunpack.c.l.b16 %v591
  %v2634 = vunpack.c.h.b16 %v591
  %v2635 = vunpack.c.l.b16 %v592
  %v2636 = vunpack.c.h.b16 %v592
  %v2637 = vunpack.c.l.b16 %v593
  %v2638 = vunpack.c.h.b16 %v593
  %v2639 = vunpack.c.l.b16 %v594
  %v2640 = vunpack.c.h.b16 %v594
  %v2641 = vunpack.c.l.b16 %v595
  %v2642 = vunpack.c.l.b16 %v596
  %v2643 = vunpack.c.h.b16 %v596
  %v2644 = vunpack.c.l.b16 %v597
  %v2645 = vunpack.c.h.b16 %v597
  %v2646 = vunpack.c.l.b16 %v598
  %v2647 = vunpack.c.h.b16 %v598
  %v2648 = vunpack.c.l.b16 %v599
  %v2649 = vunpack.c.h.b16 %v599
  %v2650 = vunpack.c.l.b16 %v600
  %v2651 = vunpack.c.h.b16 %v600
  %v2652 = vunpack.c.l.b16 %v601
  %v2653 = vunpack.c.h.b16 %v601
  %v2654 = vunpack.c.l.b16 %v602
  %v2655 = vunpack.c.l.b16 %v603
  %v2656 = vunpack.c.h.b16 %v603
  %v2657 = vunpack.c.l.b16 %v604
  %v2658 = vunpack.c.h.b16 %v604
  %v2659 = vunpack.c.l.b16 %v605
  %v2660 = vunpack.c.h.b16 %v605
  %v2661 = vunpack.c.l.b16 %v606
  %v2662 = vunpack.c.h.b16 %v606
  %v2663 = vunpack.c.l.b16 %v607
  %v2664 = vunpack.c.h.b16 %v607
  %v2665 = vunpack.c.l.b16 %v608
  %v2666 = vunpack.c.h.b16 %v608
  %v2667 = vunpack.c.l.b16 %v609
  %v2668 = vunpack.c.l.b16 %v610
  %v2669 = vunpack.c.h.b16 %v610
  %v2670 = vunpack.c.l.b16 %v611
  %v2671 = vunpack.c.h.b16 %v611
  %v2672 = vunpack.c.l.b16 %v612
  %v2673 = vunpack.c.h.b16 %v612
  %v2674 = vunpack.c.l.b16 %v613
  %v2675 = vunpack.c.h.b16 %v613
  %v2676 = vunpack.c.l.b16 %v614
  %v2677 = vunpack.c.h.b16 %v614
  %v2678 = vunpack.c.l.b16 %v615
  %v2679 = vunpack.c.h.b16 %v615
  %v2680 = vunpack.c.l.b16 %v616
  %v2681 = vunpack.c.l.b16 %v617
  %v2682 = vunpack.c.h.b16 %v617
  %v2683 = vunpack.c.l.b16 %v618
  %v2684 = vunpack.c.h.b16 %v618
  %v2685 = vunpack.c.l.b16 %v619
  %v2686 = vunpack.c.h.b16 %v619
  %v2687 = vunpack.c.l.b16 %v620
  %v2688 = vunpack.c.h.b16 %v620
  %v2689 = vunpack.c.l.b16 %v621
  %v2690 = vunpack.c.h.b16 %v621
  %v2691 = vunpack.c.l.b16 %v622
  %v2692 = vunpack.c.h.b16 %v622
  %v2693 = vunpack.c.l.b16 %v623
  %v2694 = vunpack.c.l.b16 %v624
  %v2695 = vunpack.c.h.b16 %v624
  %v2696 = vunpack.c.l.b16 %v625
  %v2697 = vunpack.c.h.b16 %v625
  %v2698 = vunpack.c.l.b16 %v626
  %v2699 = vunpack.c.h.b16 %v626
  %v2700 = vunpack.c.l.b16 %v627
  %v2701 = vunpack.c.h.b16 %v627
  %v2702 = vunpack.c.l.b16 %v628
  %v2703 = vunpack.c.h.b16 %v628
  %v2704 = vunpack.c.l.b16 %v629
  %v2705 = vunpack.c.h.b16 %v629
  %v2706 = vunpack.c.l.b16 %v630
  %v2707 = vunpack.c.l.b16 %v631
  %v2708 = vunpack.c.h.b16 %v631
  %v2709 = vunpack.c.l.b16 %v632
  %v2710 = vunpack.c.h.b16 %v632
  %v2711 = vunpack.c.l.b16 %v633
  %v2712 = vunpack.c.h.b16 %v633
  %v2713 = vunpack.c.l.b16 %v634
  %v2714 = vunpack.c.h.b16 %v634
  %v2715 = vunpack.c.l.b16 %v635
  %v2716 = vunpack.c.h.b16 %v635
  %v2717 = vunpack.c.l.b16 %v636
  %v2718 = vunpack.c.h.b16 %v636
  %v2719 = vunpack.c.l.b16 %v637
  %v2720 = vunpack.c.l.b16 %v638
  %v2721 = vunpack.c.h.b16 %v638
  %v2722 = vunpack.c.l.b16 %v639
  %v2723 = vunpack.c.h.b16 %v639
  %v2724 = vunpack.c.l.b16 %v640
  %v2725 = vunpack.c.h.b16 %v640
  %v2726 = vunpack.c.l.b16 %v641
  %v2727 = vunpack.c.h.b16 %v641
  %v2728 = vunpack.c.l.b16 %v642
  %v2729 = vunpack.c.h.b16 %v642
  %v2730 = vunpack.c.l.b16 %v643
  %v2731 = vunpack.c.h.b16 %v643
  %v2732 = vunpack.c.l.b16 %v644
  %v2733 = vunpack.c.l.b16 %v645
  %v2734 = vunpack.c.h.b16 %v645
  %v2735 = vunpack.c.l.b16 %v646
  %v2736 = vunpack.c.h.b16 %v646
  %v2737 = vunpack.c.l.b16 %v647
  %v2738 = vunpack.c.h.b16 %v647
  %v2739 = vunpack.c.l.b16 %v648
  %v2740 = vunpack.c.h.b16 %v648
  %v2741 = vunpack.c.l.b16 %v649
  %v2742 = vunpack.c.h.b16 %v649
  %v2743 = vunpack.c.l.b16 %v650
  %v2744 = vunpack.c.h.b16 %v650
  %v2745 = vunpack.c.l.b16 %v651
  %v2746 = vunpack.c.l.b16 %v652
  %v2747 = vunpack.c.h.b16 %v652
  %v2748 = vunpack.c.l.b16 %v653
  %v2749 = vunpack.c.h.b16 %v653
  %v2750 = vunpack.c.l.b16 %v654
  %v2751 = vunpack.c.h.b16 %v654
  %v2752 = vunpack.c.l.b16 %v655
  %v2753 = vunpack.c.h.b16 %v655
  %v2754 = vunpack.c.l.b16 %v656
  %v2755 = vunpack.c.h.b16 %v656
  %v2756 = vunpack.c.l.b16 %v657
  %v2757 = vunpack.c.h.b16 %v657
  %v2758 = vunpack.c.l.b16 %v658
  %v2759 = vunpack.c.l.b16 %v659
  %v2760 = vunpack.c.h.b16 %v659
  %v2761 = vunpack.c.l.b16 %v660
  %v2762 = vunpack.c.h.b16 %v660
  %v2763 = vunpack.c.l.b16 %v661
  %v2764 = vunpack.c.h.b16 %v661
  %v2765 = vunpack.c.l.b16 %v662
  %v2766 = vunpack.c.h.b16 %v662
  %v2767 = vunpack.c.l.b16 %v663
  %v2768 = vunpack.c.h.b16 %v663
  %v2769 = vunpack.c.l.b16 %v664
  %v2770 = vunpack.c.h.b16 %v664
  %v2771 = vunpack.c.l.b16 %v665
  %v2772 = vunpack.c.l.b16 %v666
  %v2773 = vunpack.c.h.b16 %v666
  %v2774 = vunpack.c.l.b16 %v667
  %v2775 = vunpack.c.h.b16 %v667
  %v2776 = vunpack.c.l.b16 %v668
  %v2777 = vunpack.c.h.b16 %v668
  %v2778 = vunpack.c.l.b16 %v669
  %v2779 = vunpack.c.h.b16 %v669
  %v2780 = vunpack.c.l.b16 %v670
  %v2781 = vunpack.c.h.b16 %v670
  %v2782 = vunpack.c.l.b16 %v671
  %v2783 = vunpack.c.h.b16 %v671
  %v2784 = vunpack.c.l.b16 %v672
  %v2785 = vunpack.c.l.b16 %v673
  %v2786 = vunpack.c.h.b16 %v673
  %v2787 = vunpack.c.l.b16 %v674
  %v2788 = vunpack.c.h.b16 %v674
  %v2789 = vunpack.c.l.b16 %v675
  %v2790 = vunpack.c.h.b16 %v675
  %v2791 = vunpack.c.l.b16 %v676
  %v2792 = vunpack.c.h.b16 %v676
  %v2793 = vunpack.c.l.b16 %v677
  %v2794 = vunpack.c.h.b16 %v677
  %v2795 = vunpack.c.l.b16 %v678
  %v2796 = vunpack.c.h.b16 %v678
  %v2797 = vunpack.c.l.b16 %v679
  %v2798 = vunpack.c.l.b16 %v680
  %v2799 = vunpack.c.h.b16 %v680
  %v2800 = vunpack.c.l.b16 %v681
  %v2801 = vunpack.c.h.b16 %v681
  %v2802 = vunpack.c.l.b16 %v682
  %v2803 = vunpack.c.h.b16 %v682
  %v2804 = vunpack.c.l.b16 %v683
  %v2805 = vunpack.c.h.b16 %v683
  %v2806 = vunpack.c.l.b16 %v684
  %v2807 = vunpack.c.h.b16 %v684
  %v2808 = vunpack.c.l.b16 %v685
  %v2809 = vunpack.c.h.b16 %v685
  %v2810 = vunpack.c.l.b16 %v686
  %v2811 = vpack.c.b16 %v1576, %v1563
  %v2812 = vpack.c.b16 %v1577, %v1564
  %v2813 = vpack.c.b16 %v1578, %v1565
  %v2814 = vpack.c.b16 %v1579, %v1566
  %v2815 = vpack.c.b16 %v1580, %v1567
  %v2816 = vpack.c.b16 %v1581, %v1568
  %v2817 = vpack.c.b16 %v1582, %v1569
  %v2818 = vpack.c.b16 %v1583, %v1570
  %v2819 = vpack.c.b16 %v1584, %v1571
  %v2820 = vpack.c.b16 %v1585, %v1572
  %v2821 = vpack.c.b16 %v1586, %v1573
  %v2822 = vpack.c.b16 %v1587, %v1574
  %v2823 = vpack.c.b16 %v1588, %v1575
  %v2824 = vpack.c.b16 %v1602, %v1589
  %v2825 = vpack.c.b16 %v1603, %v1590
  %v2826 = vpack.c.b16 %v1604, %v1591
  %v2827 = vpack.c.b16 %v1605, %v1592
  %v2828 = vpack.c.b16 %v1606, %v1593
  %v2829 = vpack.c.b16 %v1607, %v1594
  %v2830 = vpack.c.b16 %v1608, %v1595
  %v2831 = vpack.c.b16 %v1609, %v1596
  %v2832 = vpack.c.b16 %v1610, %v1597
  %v2833 = vpack.c.b16 %v1611, %v1598
  %v2834 = vpack.c.b16 %v1612, %v1599
  %v2835 = vpack.c.b16 %v1613, %v1600
  %v2836 = vpack.c.b16 %v1614, %v1601
  %v2837 = vpack.c.b16 %v1628, %v1615
  %v2838 = vpack.c.b16 %v1629, %v1616
  %v2839 = vpack.c.b16 %v1630, %v1617
  %v2840 = vpack.c.b16 %v1631, %v1618
  %v2841 = vpack.c.b16 %v1632, %v1619
  %v2842 = vpack.c.b16 %v1633, %v1620
  %v2843 = vpack.c.b16 %v1634, %v1621
  %v2844 = vpack.c.b16 %v1635, %v1622
  %v2845 = vpack.c.b16 %v1636, %v1623
  %v2846 = vpack.c.b16 %v1637, %v1624
  %v2847 = vpack.c.b16 %v1638, %v1625
  %v2848 = vpack.c.b16 %v1639, %v1626
  %v2849 = vpack.c.b16 %v1640, %v1627
  %v2850 = vpack.c.b16 %v1654, %v1641
  %v2851 = vpack.c.b16 %v1655, %v1642
  %v2852 = vpack.c.b16 %v1656, %v1643
  %v2853 = vpack.c.b16 %v1657, %v1644
  %v2854 = vpack.c.b16 %v1658, %v1645
  %v2855 = vpack.c.b16 %v1659, %v1646
  %v2856 = vpack.c.b16 %v1660, %v1647
  %v2857 = vpack.c.b16 %v1661, %v1648
  %v2858 = vpack.c.b16 %v1662, %v1649
  %v2859 = vpack.c.b16 %v1663, %v1650
  %v2860 = vpack.c.b16 %v1664, %v1651
  %v2861 = vpack.c.b16 %v1665, %v1652
  %v2862 = vpack.c.b16 %v1666, %v1653
  %v2863 = vpack.c.b16 %v1680, %v1667
  %v2864 = vpack.c.b16 %v1681, %v1668
  %v2865 = vpack.c.b16 %v1682, %v1669
  %v2866 = vpack.c.b16 %v1683, %v1670
  %v2867 = vpack.c.b16 %v1684, %v1671
  %v2868 = vpack.c.b16 %v1685, %v1672
  %v2869 = vpack.c.b16 %v1686, %v1673
  %v2870 = vpack.c.b16 %v1687, %v1674
  %v2871 = vpack.c.b16 %v1688, %v1675
  %v2872 = vpack.c.b16 %v1689, %v1676
  %v2873 = vpack.c.b16 %v1690, %v1677
  %v2874 = vpack.c.b16 %v1691, %v1678
  %v2875 = vpack.c.b16 %v1692, %v1679
  %v2876 = vpack.c.b16 %v1706, %v1693
  %v2877 = vpack.c.b16 %v1707, %v1694
  %v2878 = vpack.c.b16 %v1708, %v1695
  %v2879 = vpack.c.b16 %v1709, %v1696
  %v2880 = vpack.c.b16 %v1710, %v1697
  %v2881 = vpack.c.b16 %v1711, %v1698
  %v2882 = vpack.c.b16 %v1712, %v1699
  %v2883 = vpack.c.b16 %v1713, %v1700
  %v2884 = vpack.c.b16 %v1714, %v1701
  %v2885 = vpack.c.b16 %v1715, %v1702
  %v2886 = vpack.c.b16 %v1716, %v1703
  %v2887 = vpack.c.b16 %v1717, %v1704
  %v2888 = vpack.c.b16 %v1718, %v1705
  %v2889 = vpack.c.b16 %v1732, %v1719
  %v2890 = vpack.c.b16 %v1733, %v1720
  %v2891 = vpack.c.b16 %v1734, %v1721
  %v2892 = vpack.c.b16 %v1735, %v1722
  %v2893 = vpack.c.b16 %v1736, %v1723
  %v2894 = vpack.c.b16 %v1737, %v1724
  %v2895 = vpack.c.b16 %v1738, %v1725
  %v2896 = vpack.c.b16 %v1739, %v1726
  %v2897 = vpack.c.b16 %v1740, %v1727
  %v2898 = vpack.c.b16 %v1741, %v1728
  %v2899 = vpack.c.b16 %v1742, %v1729
  %v2900 = vpack.c.b16 %v1743, %v1730
  %v2901 = vpack.c.b16 %v1744, %v1731
  %v2902 = vpack.c.b16 %v1758, %v1745
  %v2903 = vpack.c.b16 %v1759, %v1746
  %v2904 = vpack.c.b16 %v1760, %v1747
  %v2905 = vpack.c.b16 %v1761, %v1748
  %v2906 = vpack.c.b16 %v1762, %v1749
  %v2907 = vpack.c.b16 %v1763, %v1750
  %v2908 = vpack.c.b16 %v1764, %v1751
  %v2909 = vpack.c.b16 %v1765, %v1752
  %v2910 = vpack.c.b16 %v1766, %v1753
  %v2911 = vpack.c.b16 %v1767, %v1754
  %v2912 = vpack.c.b16 %v1768, %v1755
  %v2913 = vpack.c.b16 %v1769, %v1756
  %v2914 = vpack.c.b16 %v1770, %v1757
  %v2915 = vpack.c.b16 %v1784, %v1771
  %v2916 = vpack.c.b16 %v1785, %v1772
  %v2917 = vpack.c.b16 %v1786, %v1773
  %v2918 = vpack.c.b16 %v1787, %v1774
  %v2919 = vpack.c.b16 %v1788, %v1775
  %v2920 = vpack.c.b16 %v1789, %v1776
  %v2921 = vpack.c.b16 %v1790, %v1777
  %v2922 = vpack.c.b16 %v1791, %v1778
  %v2923 = vpack.c.b16 %v1792, %v1779
  %v2924 = vpack.c.b16 %v1793, %v1780
  %v2925 = vpack.c.b16 %v1794, %v1781
  %v2926 = vpack.c.b16 %v1795, %v1782
  %v2927 = vpack.c.b16 %v1796, %v1783
  %v2928 = vpack.c.b16 %v1810, %v1797
  %v2929 = vpack.c.b16 %v1811, %v1798
  %v2930 = vpack.c.b16 %v1812, %v1799
  %v2931 = vpack.c.b16 %v1813, %v1800
  %v2932 = vpack.c.b16 %v1814, %v1801
  %v2933 = vpack.c.b16 %v1815, %v1802
  %v2934 = vpack.c.b16 %v1816, %v1803
  %v2935 = vpack.c.b16 %v1817, %v1804
  %v2936 = vpack.c.b16 %v1818, %v1805
  %v2937 = vpack.c.b16 %v1819, %v1806
  %v2938 = vpack.c.b16 %v1820, %v1807
  %v2939 = vpack.c.b16 %v1821, %v1808
  %v2940 = vpack.c.b16 %v1822, %v1809
  %v2941 = vpack.c.b16 %v1836, %v1823
  %v2942 = vpack.c.b16 %v1837, %v1824
  %v2943 = vpack.c.b16 %v1838, %v1825
  %v2944 = vpack.c.b16 %v1839, %v1826
  %v2945 = vpack.c.b16 %v1840, %v1827
  %v2946 = vpack.c.b16 %v1841, %v1828
  %v2947 = vpack.c.b16 %v1842, %v1829
  %v2948 = vpack.c.b16 %v1843, %v1830
  %v2949 = vpack.c.b16 %v1844, %v1831
  %v2950 = vpack.c.b16 %v1845, %v1832
  %v2951 = vpack.c.b16 %v1846, %v1833
  %v2952 = vpack.c.b16 %v1847, %v1834
  %v2953 = vpack.c.b16 %v1848, %v1835
  %v2954 = vpack.c.b16 %v1862, %v1849
  %v2955 = vpack.c.b16 %v1863, %v1850
  %v2956 = vpack.c.b16 %v1864, %v1851
  %v2957 = vpack.c.b16 %v1865, %v1852
  %v2958 = vpack.c.b16 %v1866, %v1853
  %v2959 = vpack.c.b16 %v1867, %v1854
  %v2960 = vpack.c.b16 %v1868, %v1855
  %v2961 = vpack.c.b16 %v1869, %v1856
  %v2962 = vpack.c.b16 %v1870, %v1857
  %v2963 = vpack.c.b16 %v1871, %v1858
  %v2964 = vpack.c.b16 %v1872, %v1859
  %v2965 = vpack.c.b16 %v1873, %v1860
  %v2966 = vpack.c.b16 %v1874, %v1861
  %v2967 = vpack.c.b16 %v1888, %v1875
  %v2968 = vpack.c.b16 %v1889, %v1876
  %v2969 = vpack.c.b16 %v1890, %v1877
  %v2970 = vpack.c.b16 %v1891, %v1878
  %v2971 = vpack.c.b16 %v1892, %v1879
  %v2972 = vpack.c.b16 %v1893, %v1880
  %v2973 = vpack.c.b16 %v1894, %v1881
  %v2974 = vpack.c.b16 %v1895, %v1882
  %v2975 = vpack.c.b16 %v1896, %v1883
  %v2976 = vpack.c.b16 %v1897, %v1884
  %v2977 = vpack.c.b16 %v1898, %v1885
  %v2978 = vpack.c.b16 %v1899, %v1886
  %v2979 = vpack.c.b16 %v1900, %v1887
  %v2980 = vpack.c.b16 %v1914, %v1901
  %v2981 = vpack.c.b16 %v1915, %v1902
  %v2982 = vpack.c.b16 %v1916, %v1903
  %v2983 = vpack.c.b16 %v1917, %v1904
  %v2984 = vpack.c.b16 %v1918, %v1905
  %v2985 = vpack.c.b16 %v1919, %v1906
  %v2986 = vpack.c.b16 %v1920, %v1907
  %v2987 = vpack.c.b16 %v1921, %v1908
  %v2988 = vpack.c.b16 %v1922, %v1909
  %v2989 = vpack.c.b16 %v1923, %v1910
  %v2990 = vpack.c.b16 %v1924, %v1911
  %v2991 = vpack.c.b16 %v1925, %v1912
  %v2992 = vpack.c.b16 %v1926, %v1913
  %v2993 = vpack.c.b16 %v1940, %v1927
  %v2994 = vpack.c.b16 %v1941, %v1928
  %v2995 = vpack.c.b16 %v1942, %v1929
  %v2996 = vpack.c.b16 %v1943, %v1930
  %v2997 = vpack.c.b16 %v1944, %v1931
  %v2998 = vpack.c.b16 %v1945, %v1932
  %v2999 = vpack.c.b16 %v1946, %v1933
  %v3000 = vpack.c.b16 %v1947, %v1934
  %v3001 = vpack.c.b16 %v1948, %v1935
  %v3002 = vpack.c.b16 %v1949, %v1936
  %v3003 = vpack.c.b16 %v1950, %v1937
  %v3004 = vpack.c.b16 %v1951, %v1938
  %v3005 = vpack.c.b16 %v1952, %v1939
  %v3006 = vpack.c.b16 %v1966, %v1953
  %v3007 = vpack.c.b16 %v1967, %v1954
  %v3008 = vpack.c.b16 %v1968, %v1955
  %v3009 = vpack.c.b16 %v1969, %v1956
  %v3010 = vpack.c.b16 %v1970, %v1957
  %v3011 = vpack.c.b16 %v1971, %v1958
  %v3012 = vpack.c.b16 %v1972, %v1959
  %v3013 = vpack.c.b16 %v1973, %v1960
  %v3014 = vpack.c.b16 %v1974, %v1961
  %v3015 = vpack.c.b16 %v1975, %v1962
  %v3016 = vpack.c.b16 %v1976, %v1963
  %v3017 = vpack.c.b16 %v1977, %v1964
  %v3018 = vpack.c.b16 %v1978, %v1965
  %v3019 = vpack.c.b16 %v1992, %v1979
  %v3020 = vpack.c.b16 %v1993, %v1980
  %v3021 = vpack.c.b16 %v1994, %v1981
  %v3022 = vpack.c.b16 %v1995, %v1982
  %v3023 = vpack.c.b16 %v1996, %v1983
  %v3024 = vpack.c.b16 %v1997, %v1984
  %v3025 = vpack.c.b16 %v1998, %v1985
  %v3026 = vpack.c.b16 %v1999, %v1986
  %v3027 = vpack.c.b16 %v2000, %v1987
  %v3028 = vpack.c.b16 %v2001, %v1988
  %v3029 = vpack.c.b16 %v2002, %v1989
  %v3030 = vpack.c.b16 %v2003, %v1990
  %v3031 = vpack.c.b16 %v2004, %v1991
  %v3032 = vpack.c.b16 %v2018, %v2005
  %v3033 = vpack.c.b16 %v2019, %v2006
  %v3034 = vpack.c.b16 %v2020, %v2007
  %v3035 = vpack.c.b16 %v2021, %v2008
  %v3036 = vpack.c.b16 %v2022, %v2009
  %v3037 = vpack.c.b16 %v2023, %v2010
  %v3038 = vpack.c.b16 %v2024, %v2011
  %v3039 = vpack.c.b16 %v2025, %v2012
  %v3040 = vpack.c.b16 %v2026, %v2013
  %v3041 = vpack.c.b16 %v2027, %v2014
  %v3042 = vpack.c.b16 %v2028, %v2015
  %v3043 = vpack.c.b16 %v2029, %v2016
  %v3044 = vpack.c.b16 %v2030, %v2017
  %v3045 = vpack.c.b16 %v2044, %v2031
  %v3046 = vpack.c.b16 %v2045, %v2032
  %v3047 = vpack.c.b16 %v2046, %v2033
  %v3048 = vpack.c.b16 %v2047, %v2034
  %v3049 = vpack.c.b16 %v2048, %v2035
  %v3050 = vpack.c.b16 %v2049, %v2036
  %v3051 = vpack.c.b16 %v2050, %v2037
  %v3052 = vpack.c.b16 %v2051, %v2038
  %v3053 = vpack.c.b16 %v2052, %v2039
  %v3054 = vpack.c.b16 %v2053, %v2040
  %v3055 = vpack.c.b16 %v2054, %v2041
  %v3056 = vpack.c.b16 %v2055, %v2042
  %v3057 = vpack.c.b16 %v2056, %v2043
  %v3058 = vpack.c.b16 %v2070, %v2057
  %v3059 = vpack.c.b16 %v2071, %v2058
  %v3060 = vpack.c.b16 %v2072, %v2059
  %v3061 = vpack.c.b16 %v2073, %v2060
  %v3062 = vpack.c.b16 %v2074, %v2061
  %v3063 = vpack.c.b16 %v2075, %v2062
  %v3064 = vpack.c.b16 %v2076, %v2063
  %v3065 = vpack.c.b16 %v2077, %v2064
  %v3066 = vpack.c.b16 %v2078, %v2065
  %v3067 = vpack.c.b16 %v2079, %v2066
  %v3068 = vpack.c.b16 %v2080, %v2067
  %v3069 = vpack.c.b16 %v2081, %v2068
  %v3070 = vpack.c.b16 %v2082, %v2069
  %v3071 = vpack.c.b16 %v2096, %v2083
  %v3072 = vpack.c.b16 %v2097, %v2084
  %v3073 = vpack.c.b16 %v2098, %v2085
  %v3074 = vpack.c.b16 %v2099, %v2086
  %v3075 = vpack.c.b16 %v2100, %v2087
  %v3076 = vpack.c.b16 %v2101, %v2088
  %v3077 = vpack.c.b16 %v2102, %v2089
  %v3078 = vpack.c.b16 %v2103, %v2090
  %v3079 = vpack.c.b16 %v2104, %v2091
  %v3080 = vpack.c.b16 %v2105, %v2092
  %v3081 = vpack.c.b16 %v2106, %v2093
  %v3082 = vpack.c.b16 %v2107, %v2094
  %v3083 = vpack.c.b16 %v2108, %v2095
  %v3084 = vpack.c.b16 %v2122, %v2109
  %v3085 = vpack.c.b16 %v2123, %v2110
  %v3086 = vpack.c.b16 %v2124, %v2111
  %v3087 = vpack.c.b16 %v2125, %v2112
  %v3088 = vpack.c.b16 %v2126, %v2113
  %v3089 = vpack.c.b16 %v2127, %v2114
  %v3090 = vpack.c.b16 %v2128, %v2115
  %v3091 = vpack.c.b16 %v2129, %v2116
  %v3092 = vpack.c.b16 %v2130, %v2117
  %v3093 = vpack.c.b16 %v2131, %v2118
  %v3094 = vpack.c.b16 %v2132, %v2119
  %v3095 = vpack.c.b16 %v2133, %v2120
  %v3096 = vpack.c.b16 %v2134, %v2121
  %v3097 = vpack.c.b16 %v2148, %v2135
  %v3098 = vpack.c.b16 %v2149, %v2136
  %v3099 = vpack.c.b16 %v2150, %v2137
  %v3100 = vpack.c.b16 %v2151, %v2138
  %v3101 = vpack.c.b16 %v2152, %v2139
  %v3102 = vpack.c.b16 %v2153, %v2140
  %v3103 = vpack.c.b16 %v2154, %v2141
  %v3104 = vpack.c.b16 %v2155, %v2142
  %v3105 = vpack.c.b16 %v2156, %v2143
  %v3106 = vpack.c.b16 %v2157, %v2144
  %v3107 = vpack.c.b16 %v2158, %v2145
  %v3108 = vpack.c.b16 %v2159, %v2146
  %v3109 = vpack.c.b16 %v2160, %v2147
  %v3110 = vpack.c.b16 %v2174, %v2161
  %v3111 = vpack.c.b16 %v2175, %v2162
  %v3112 = vpack.c.b16 %v2176, %v2163
  %v3113 = vpack.c.b16 %v2177, %v2164
  %v3114 = vpack.c.b16 %v2178, %v2165
  %v3115 = vpack.c.b16 %v2179, %v2166
  %v3116 = vpack.c.b16 %v2180, %v2167
  %v3117 = vpack.c.b16 %v2181, %v2168
  %v3118 = vpack.c.b16 %v2182, %v2169
  %v3119 = vpack.c.b16 %v2183, %v2170
  %v3120 = vpack.c.b16 %v2184, %v2171
  %v3121 = vpack.c.b16 %v2185, %v2172
  %v3122 = vpack.c.b16 %v2186, %v2173
  %v3123 = vpack.c.b16 %v2200, %v2187
  %v3124 = vpack.c.b16 %v2201, %v2188
  %v3125 = vpack.c.b16 %v2202, %v2189
  %v3126 = vpack.c.b16 %v2203, %v2190
  %v3127 = vpack.c.b16 %v2204, %v2191
  %v3128 = vpack.c.b16 %v2205, %v2192
  %v3129 = vpack.c.b16 %v2206, %v2193
  %v3130 = vpack.c.b16 %v2207, %v2194
  %v3131 = vpack.c.b16 %v2208, %v2195
  %v3132 = vpack.c.b16 %v2209, %v2196
  %v3133 = vpack.c.b16 %v2210, %v2197
  %v3134 = vpack.c.b16 %v2211, %v2198
  %v3135 = vpack.c.b16 %v2212, %v2199
  %v3136 = vpack.c.b16 %v2226, %v2213
  %v3137 = vpack.c.b16 %v2227, %v2214
  %v3138 = vpack.c.b16 %v2228, %v2215
  %v3139 = vpack.c.b16 %v2229, %v2216
  %v3140 = vpack.c.b16 %v2230, %v2217
  %v3141 = vpack.c.b16 %v2231, %v2218
  %v3142 = vpack.c.b16 %v2232, %v2219
  %v3143 = vpack.c.b16 %v2233, %v2220
  %v3144 = vpack.c.b16 %v2234, %v2221
  %v3145 = vpack.c.b16 %v2235, %v2222
  %v3146 = vpack.c.b16 %v2236, %v2223
  %v3147 = vpack.c.b16 %v2237, %v2224
  %v3148 = vpack.c.b16 %v2238, %v2225
  %v3149 = vpack.c.b16 %v2252, %v2239
  %v3150 = vpack.c.b16 %v2253, %v2240
  %v3151 = vpack.c.b16 %v2254, %v2241
  %v3152 = vpack.c.b16 %v2255, %v2242
  %v3153 = vpack.c.b16 %v2256, %v2243
  %v3154 = vpack.c.b16 %v2257, %v2244
  %v3155 = vpack.c.b16 %v2258, %v2245
  %v3156 = vpack.c.b16 %v2259, %v2246
  %v3157 = vpack.c.b16 %v2260, %v2247
  %v3158 = vpack.c.b16 %v2261, %v2248
  %v3159 = vpack.c.b16 %v2262, %v2249
  %v3160 = vpack.c.b16 %v2263, %v2250
  %v3161 = vpack.c.b16 %v2264, %v2251
  %v3162 = vpack.c.b16 %v2278, %v2265
  %v3163 = vpack.c.b16 %v2279, %v2266
  %v3164 = vpack.c.b16 %v2280, %v2267
  %v3165 = vpack.c.b16 %v2281, %v2268
  %v3166 = vpack.c.b16 %v2282, %v2269
  %v3167 = vpack.c.b16 %v2283, %v2270
  %v3168 = vpack.c.b16 %v2284, %v2271
  %v3169 = vpack.c.b16 %v2285, %v2272
  %v3170 = vpack.c.b16 %v2286, %v2273
  %v3171 = vpack.c.b16 %v2287, %v2274
  %v3172 = vpack.c.b16 %v2288, %v2275
  %v3173 = vpack.c.b16 %v2289, %v2276
  %v3174 = vpack.c.b16 %v2290, %v2277
  %v3175 = vpack.c.b16 %v2304, %v2291
  %v3176 = vpack.c.b16 %v2305, %v2292
  %v3177 = vpack.c.b16 %v2306, %v2293
  %v3178 = vpack.c.b16 %v2307, %v2294
  %v3179 = vpack.c.b16 %v2308, %v2295
  %v3180 = vpack.c.b16 %v2309, %v2296
  %v3181 = vpack.c.b16 %v2310, %v2297
  %v3182 = vpack.c.b16 %v2311, %v2298
  %v3183 = vpack.c.b16 %v2312, %v2299
  %v3184 = vpack.c.b16 %v2313, %v2300
  %v3185 = vpack.c.b16 %v2314, %v2301
  %v3186 = vpack.c.b16 %v2315, %v2302
  %v3187 = vpack.c.b16 %v2316, %v2303
  %v3188 = vpack.c.b16 %v2330, %v2317
  %v3189 = vpack.c.b16 %v2331, %v2318
  %v3190 = vpack.c.b16 %v2332, %v2319
  %v3191 = vpack.c.b16 %v2333, %v2320
  %v3192 = vpack.c.b16 %v2334, %v2321
  %v3193 = vpack.c.b16 %v2335, %v2322
  %v3194 = vpack.c.b16 %v2336, %v2323
  %v3195 = vpack.c.b16 %v2337, %v2324
  %v3196 = vpack.c.b16 %v2338, %v2325
  %v3197 = vpack.c.b16 %v2339, %v2326
  %v3198 = vpack.c.b16 %v2340, %v2327
  %v3199 = vpack.c.b16 %v2341, %v2328
  %v3200 = vpack.c.b16 %v2342, %v2329
  %v3201 = vpack.c.b16 %v2356, %v2343
  %v3202 = vpack.c.b16 %v2357, %v2344
  %v3203 = vpack.c.b16 %v2358, %v2345
  %v3204 = vpack.c.b16 %v2359, %v2346
  %v3205 = vpack.c.b16 %v2360, %v2347
  %v3206 = vpack.c.b16 %v2361, %v2348
  %v3207 = vpack.c.b16 %v2362, %v2349
  %v3208 = vpack.c.b16 %v2363, %v2350
  %v3209 = vpack.c.b16 %v2364, %v2351
  %v3210 = vpack.c.b16 %v2365, %v2352
  %v3211 = vpack.c.b16 %v2366, %v2353
  %v3212 = vpack.c.b16 %v2367, %v2354
  %v3213 = vpack.c.b16 %v2368, %v2355
  %v3214 = vpack.c.b16 %v2382, %v2369
  %v3215 = vpack.c.b16 %v2383, %v2370
  %v3216 = vpack.c.b16 %v2384, %v2371
  %v3217 = vpack.c.b16 %v2385, %v2372
  %v3218 = vpack.c.b16 %v2386, %v2373
  %v3219 = vpack.c.b16 %v2387, %v2374
  %v3220 = vpack.c.b16 %v2388, %v2375
  %v3221 = vpack.c.b16 %v2389, %v2376
  %v3222 = vpack.c.b16 %v2390, %v2377
  %v3223 = vpack.c.b16 %v2391, %v2378
  %v3224 = vpack.c.b16 %v2392, %v2379
  %v3225 = vpack.c.b16 %v2393, %v2380
  %v3226 = vpack.c.b16 %v2394, %v2381
  %v3227 = vpack.c.b16 %v2408, %v2395
  %v3228 = vpack.c.b16 %v2409, %v2396
  %v3229 = vpack.c.b16 %v2410, %v2397
  %v3230 = vpack.c.b16 %v2411, %v2398
  %v3231 = vpack.c.b16 %v2412, %v2399
  %v3232 = vpack.c.b16 %v2413, %v2400
  %v3233 = vpack.c.b16 %v2414, %v2401
  %v3234 = vpack.c.b16 %v2415, %v2402
  %v3235 = vpack.c.b16 %v2416, %v2403
  %v3236 = vpack.c.b16 %v2417, %v2404
  %v3237 = vpack.c.b16 %v2418, %v2405
  %v3238 = vpack.c.b16 %v2419, %v2406
  %v3239 = vpack.c.b16 %v2420, %v2407
  %v3240 = vpack.c.b16 %v2434, %v2421
  %v3241 = vpack.c.b16 %v2435, %v2422
  %v3242 = vpack.c.b16 %v2436, %v2423
  %v3243 = vpack.c.b16 %v2437, %v2424
  %v3244 = vpack.c.b16 %v2438, %v2425
  %v3245 = vpack.c.b16 %v2439, %v2426
  %v3246 = vpack.c.b16 %v2440, %v2427
  %v3247 = vpack.c.b16 %v2441, %v2428
  %v3248 = vpack.c.b16 %v2442, %v2429
  %v3249 = vpack.c.b16 %v2443, %v2430
  %v3250 = vpack.c.b16 %v2444, %v2431
  %v3251 = vpack.c.b16 %v2445, %v2432
  %v3252 = vpack.c.b16 %v2446, %v2433
  %v3253 = vpack.c.b16 %v2460, %v2447
  %v3254 = vpack.c.b16 %v2461, %v2448
  %v3255 = vpack.c.b16 %v2462, %v2449
  %v3256 = vpack.c.b16 %v2463, %v2450
  %v3257 = vpack.c.b16 %v2464, %v2451
  %v3258 = vpack.c.b16 %v2465, %v2452
  %v3259 = vpack.c.b16 %v2466, %v2453
  %v3260 = vpack.c.b16 %v2467, %v2454
  %v3261 = vpack.c.b16 %v2468, %v2455
  %v3262 = vpack.c.b16 %v2469, %v2456
  %v3263 = vpack.c.b16 %v2470, %v2457
  %v3264 = vpack.c.b16 %v2471, %v2458
  %v3265 = vpack.c.b16 %v2472, %v2459
  %v3266 = vpack.c.b16 %v2486, %v2473
  %v3267 = vpack.c.b16 %v2487, %v2474
  %v3268 = vpack.c.b16 %v2488, %v2475
  %v3269 = vpack.c.b16 %v2489, %v2476
  %v3270 = vpack.c.b16 %v2490, %v2477
  %v3271 = vpack.c.b16 %v2491, %v2478
  %v3272 = vpack.c.b16 %v2492, %v2479
  %v3273 = vpack.c.b16 %v2493, %v2480
  %v3274 = vpack.c.b16 %v2494, %v2481
  %v3275 = vpack.c.b16 %v2495, %v2482
  %v3276 = vpack.c.b16 %v2496, %v2483
  %v3277 = vpack.c.b16 %v2497, %v2484
  %v3278 = vpack.c.b16 %v2498, %v2485
  %v3279 = vpack.c.b16 %v2512, %v2499
  %v3280 = vpack.c.b16 %v2513, %v2500
  %v3281 = vpack.c.b16 %v2514, %v2501
  %v3282 = vpack.c.b16 %v2515, %v2502
  %v3283 = vpack.c.b16 %v2516, %v2503
  %v3284 = vpack.c.b16 %v2517, %v2504
  %v3285 = vpack.c.b16 %v2518, %v2505
  %v3286 = vpack.c.b16 %v2519, %v2506
  %v3287 = vpack.c.b16 %v2520, %v2507
  %v3288 = vpack.c.b16 %v2521, %v2508
  %v3289 = vpack.c.b16 %v2522, %v2509
  %v3290 = vpack.c.b16 %v2523, %v2510
  %v3291 = vpack.c.b16 %v2524, %v2511
  %v3292 = vpack.c.b16 %v2538, %v2525
  %v3293 = vpack.c.b16 %v2539, %v2526
  %v3294 = vpack.c.b16 %v2540, %v2527
  %v3295 = vpack.c.b16 %v2541, %v2528
  %v3296 = vpack.c.b16 %v2542, %v2529
  %v3297 = vpack.c.b16 %v2543, %v2530
  %v3298 = vpack.c.b16 %v2544, %v2531
  %v3299 = vpack.c.b16 %v2545, %v2532
  %v3300 = vpack.c.b16 %v2546, %v2533
  %v3301 = vpack.c.b16 %v2547, %v2534
  %v3302 = vpack.c.b16 %v2548, %v2535
  %v3303 = vpack.c.b16 %v2549, %v2536
  %v3304 = vpack.c.b16 %v2550, %v2537
  %v3305 = vpack.c.b16 %v2564, %v2551
  %v3306 = vpack.c.b16 %v2565, %v2552
  %v3307 = vpack.c.b16 %v2566, %v2553
  %v3308 = vpack.c.b16 %v2567, %v2554
  %v3309 = vpack.c.b16 %v2568, %v2555
  %v3310 = vpack.c.b16 %v2569, %v2556
  %v3311 = vpack.c.b16 %v2570, %v2557
  %v3312 = vpack.c.b16 %v2571, %v2558
  %v3313 = vpack.c.b16 %v2572, %v2559
  %v3314 = vpack.c.b16 %v2573, %v2560
  %v3315 = vpack.c.b16 %v2574, %v2561
  %v3316 = vpack.c.b16 %v2575, %v2562
  %v3317 = vpack.c.b16 %v2576, %v2563
  %v3318 = vpack.c.b16 %v2590, %v2577
  %v3319 = vpack.c.b16 %v2591, %v2578
  %v3320 = vpack.c.b16 %v2592, %v2579
  %v3321 = vpack.c.b16 %v2593, %v2580
  %v3322 = vpack.c.b16 %v2594, %v2581
  %v3323 = vpack.c.b16 %v2595, %v2582
  %v3324 = vpack.c.b16 %v2596, %v2583
  %v3325 = vpack.c.b16 %v2597, %v2584
  %v3326 = vpack.c.b16 %v2598, %v2585
  %v3327 = vpack.c.b16 %v2599, %v2586
  %v3328 = vpack.c.b16 %v2600, %v2587
  %v3329 = vpack.c.b16 %v2601, %v2588
  %v3330 = vpack.c.b16 %v2602, %v2589
  %v3331 = vpack.c.b16 %v2616, %v2603
  %v3332 = vpack.c.b16 %v2617, %v2604
  %v3333 = vpack.c.b16 %v2618, %v2605
  %v3334 = vpack.c.b16 %v2619, %v2606
  %v3335 = vpack.c.b16 %v2620, %v2607
  %v3336 = vpack.c.b16 %v2621, %v2608
  %v3337 = vpack.c.b16 %v2622, %v2609
  %v3338 = vpack.c.b16 %v2623, %v2610
  %v3339 = vpack.c.b16 %v2624, %v2611
  %v3340 = vpack.c.b16 %v2625, %v2612
  %v3341 = vpack.c.b16 %v2626, %v2613
  %v3342 = vpack.c.b16 %v2627, %v2614
  %v3343 = vpack.c.b16 %v2628, %v2615
  %v3344 = vpack.c.b16 %v2642, %v2629
  %v3345 = vpack.c.b16 %v2643, %v2630
  %v3346 = vpack.c.b16 %v2644, %v2631
  %v3347 = vpack.c.b16 %v2645, %v2632
  %v3348 = vpack.c.b16 %v2646, %v2633
  %v3349 = vpack.c.b16 %v2647, %v2634
  %v3350 = vpack.c.b16 %v2648, %v2635
  %v3351 = vpack.c.b16 %v2649, %v2636
  %v3352 = vpack.c.b16 %v2650, %v2637
  %v3353 = vpack.c.b16 %v2651, %v2638
  %v3354 = vpack.c.b16 %v2652, %v2639
  %v3355 = vpack.c.b16 %v2653, %v2640
  %v3356 = vpack.c.b16 %v2654, %v2641
  %v3357 = vpack.c.b16 %v2668, %v2655
  %v3358 = vpack.c.b16 %v2669, %v2656
  %v3359 = vpack.c.b16 %v2670, %v2657
  %v3360 = vpack.c.b16 %v2671, %v2658
  %v3361 = vpack.c.b16 %v2672, %v2659
  %v3362 = vpack.c.b16 %v2673, %v2660
  %v3363 = vpack.c.b16 %v2674, %v2661
  %v3364 = vpack.c.b16 %v2675, %v2662
  %v3365 = vpack.c.b16 %v2676, %v2663
  %v3366 = vpack.c.b16 %v2677, %v2664
  %v3367 = vpack.c.b16 %v2678, %v2665
  %v3368 = vpack.c.b16 %v2679, %v2666
  %v3369 = vpack.c.b16 %v2680, %v2667
  %v3370 = vpack.c.b16 %v2694, %v2681
  %v3371 = vpack.c.b16 %v2695, %v2682
  %v3372 = vpack.c.b16 %v2696, %v2683
  %v3373 = vpack.c.b16 %v2697, %v2684
  %v3374 = vpack.c.b16 %v2698, %v2685
  %v3375 = vpack.c.b16 %v2699, %v2686
  %v3376 = vpack.c.b16 %v2700, %v2687
  %v3377 = vpack.c.b16 %v2701, %v2688
  %v3378 = vpack.c.b16 %v2702, %v2689
  %v3379 = vpack.c.b16 %v2703, %v2690
  %v3380 = vpack.c.b16 %v2704, %v2691
  %v3381 = vpack.c.b16 %v2705, %v2692
  %v3382 = vpack.c.b16 %v2706, %v2693
  %v3383 = vpack.c.b16 %v2720, %v2707
  %v3384 = vpack.c.b16 %v2721, %v2708
  %v3385 = vpack.c.b16 %v2722, %v2709
  %v3386 = vpack.c.b16 %v2723, %v2710
  %v3387 = vpack.c.b16 %v2724, %v2711
  %v3388 = vpack.c.b16 %v2725, %v2712
  %v3389 = vpack.c.b16 %v2726, %v2713
  %v3390 = vpack.c.b16 %v2727, %v2714
  %v3391 = vpack.c.b16 %v2728, %v2715
  %v3392 = vpack.c.b16 %v2729, %v2716
  %v3393 = vpack.c.b16 %v2730, %v2717
  %v3394 = vpack.c.b16 %v2731, %v2718
  %v3395 = vpack.c.b16 %v2732, %v2719
  %v3396 = vpack.c.b16 %v2746, %v2733
  %v3397 = vpack.c.b16 %v2747, %v2734
  %v3398 = vpack.c.b16 %v2748, %v2735
  %v3399 = vpack.c.b16 %v2749, %v2736
  %v3400 = vpack.c.b16 %v2750, %v2737
  %v3401 = vpack.c.b16 %v2751, %v2738
  %v3402 = vpack.c.b16 %v2752, %v2739
  %v3403 = vpack.c.b16 %v2753, %v2740
  %v3404 = vpack.c.b16 %v2754, %v2741
  %v3405 = vpack.c.b16 %v2755, %v2742
  %v3406 = vpack.c.b16 %v2756, %v2743
  %v3407 = vpack.c.b16 %v2757, %v2744
  %v3408 = vpack.c.b16 %v2758, %v2745
  %v3409 = vpack.c.b16 %v2772, %v2759
  %v3410 = vpack.c.b16 %v2773, %v2760
  %v3411 = vpack.c.b16 %v2774, %v2761
  %v3412 = vpack.c.b16 %v2775, %v2762
  %v3413 = vpack.c.b16 %v2776, %v2763
  %v3414 = vpack.c.b16 %v2777, %v2764
  %v3415 = vpack.c.b16 %v2778, %v2765
  %v3416 = vpack.c.b16 %v2779, %v2766
  %v3417 = vpack.c.b16 %v2780, %v2767
  %v3418 = vpack.c.b16 %v2781, %v2768
  %v3419 = vpack.c.b16 %v2782, %v2769
  %v3420 = vpack.c.b16 %v2783, %v2770
  %v3421 = vpack.c.b16 %v2784, %v2771
  %v3422 = vpack.c.b16 %v2798, %v2785
  %v3423 = vpack.c.b16 %v2799, %v2786
  %v3424 = vpack.c.b16 %v2800, %v2787
  %v3425 = vpack.c.b16 %v2801, %v2788
  %v3426 = vpack.c.b16 %v2802, %v2789
  %v3427 = vpack.c.b16 %v2803, %v2790
  %v3428 = vpack.c.b16 %v2804, %v2791
  %v3429 = vpack.c.b16 %v2805, %v2792
  %v3430 = vpack.c.b16 %v2806, %v2793
  %v3431 = vpack.c.b16 %v2807, %v2794
  %v3432 = vpack.c.b16 %v2808, %v2795
  %v3433 = vpack.c.b16 %v2809, %v2796
  %v3434 = vpack.c.b16 %v2810, %v2797
  %v4211 = vunpack.c.l.b16 %v687
  %v4212 = vunpack.c.l.b16 %v688
  %v4213 = vunpack.c.l.b16 %v689
  %v4214 = vunpack.c.l.b16 %v690
  %v4215 = vunpack.c.l.b16 %v691
  %v4216 = vunpack.c.l.b16 %v692
  %v4217 = vunpack.c.l.b16 %v693
  %v4218 = vunpack.c.l.b16 %v694
  %v4219 = vunpack.c.l.b16 %v695
  %v4220 = vunpack.c.l.b16 %v696
  %v4221 = vunpack.c.l.b16 %v697
  %v4222 = vunpack.c.l.b16 %v698
  %v4223 = vunpack.c.l.b16 %v699
  %v4224 = vunpack.c.l.b16 %v700
  %v4225 = vunpack.c.l.b16 %v701
  %v4226 = vunpack.c.l.b16 %v702
  %v4227 = vunpack.c.l.b16 %v703
  %v4228 = vunpack.c.l.b16 %v704
  %v4229 = vunpack.c.l.b16 %v705
  %v4230 = vunpack.c.l.b16 %v706
  %v4231 = vunpack.c.l.b16 %v707
  %v4232 = vunpack.c.l.b16 %v708
  %v4233 = vunpack.c.l.b16 %v709
  %v4234 = vunpack.c.l.b16 %v710
  %v4235 = vunpack.c.l.b16 %v711
  %v4236 = vunpack.c.l.b16 %v712
  %v4237 = vunpack.c.l.b16 %v713
  %v4238 = vunpack.c.l.b16 %v714
  %v4239 = vunpack.c.l.b16 %v715
  %v4240 = vunpack.c.l.b16 %v716
  %v4241 = vunpack.c.l.b16 %v717
  %v4242 = vunpack.c.l.b16 %v718
  %v4243 = vunpack.c.l.b16 %v719
  %v4244 = vunpack.c.l.b16 %v720
  %v4245 = vunpack.c.l.b16 %v721
  %v4246 = vunpack.c.l.b16 %v722
  %v4247 = vunpack.c.l.b16 %v723
  %v4248 = vunpack.c.l.b16 %v724
  %v4249 = vunpack.c.l.b16 %v725
  %v4250 = vunpack.c.l.b16 %v726
  %v4251 = vunpack.c.l.b16 %v727
  %v4252 = vunpack.c.l.b16 %v728
  %v4253 = vunpack.c.l.b16 %v729
  %v4254 = vunpack.c.l.b16 %v730
  %v4255 = vunpack.c.l.b16 %v731
  %v4256 = vunpack.c.l.b16 %v732
  %v4257 = vunpack.c.l.b16 %v733
  %v4258 = vunpack.c.l.b16 %v734
  %v4259 = vunpack.c.l.b16 %v735
  %v4260 = vunpack.c.l.b16 %v736
  %v4261 = vunpack.c.l.b16 %v737
  %v4262 = vunpack.c.l.b16 %v738
  %v4263 = vunpack.c.l.b16 %v739
  %v4264 = vunpack.c.l.b16 %v740
  %v4265 = vunpack.c.l.b16 %v741
  %v4266 = vunpack.c.l.b16 %v742
  %v4267 = vunpack.c.l.b16 %v743
  %v4268 = vunpack.c.l.b16 %v744
  %v4269 = vunpack.c.l.b16 %v745
  %v4270 = vunpack.c.l.b16 %v746
  %v4271 = vunpack.c.l.b16 %v747
  %v4272 = vunpack.c.l.b16 %v748
  %v4273 = vunpack.c.l.b16 %v749
  %v4274 = vunpack.c.l.b16 %v750
  %v4275 = vunpack.c.l.b16 %v751
  %v4276 = vunpack.c.l.b16 %v752
  %v4277 = vunpack.c.l.b16 %v753
  %v4278 = vunpack.c.l.b16 %v754
  %v4279 = vunpack.c.l.b16 %v755
  %v4280 = vunpack.c.l.b16 %v756
  %v4281 = vunpack.c.l.b16 %v757
  %v4282 = vunpack.c.l.b16 %v758
  %v4283 = vunpack.c.l.b16 %v759
  %v4284 = vunpack.c.l.b16 %v760
  %v4285 = vunpack.c.l.b16 %v761
  %v4286 = vunpack.c.l.b16 %v762
  %v4287 = vunpack.c.l.b16 %v763
  %v4288 = vunpack.c.l.b16 %v764
  %v4289 = vunpack.c.l.b16 %v765
  %v4290 = vunpack.c.l.b16 %v766
  %v4291 = vunpack.c.l.b16 %v767
  %v4292 = vunpack.c.l.b16 %v768
  %v4293 = vunpack.c.l.b16 %v769
  %v4294 = vunpack.c.l.b16 %v770
  %v4295 = vunpack.c.l.b16 %v771
  %v4296 = vunpack.c.l.b16 %v772
  %v4297 = vunpack.c.l.b16 %v773
  %v4298 = vunpack.c.l.b16 %v774
  %v4299 = vunpack.c.l.b16 %v775
  %v4300 = vunpack.c.l.b16 %v776
  %v4301 = vunpack.c.l.b16 %v777
  %v4302 = vunpack.c.l.b16 %v778
  %v4303 = vunpack.c.l.b16 %v779
  %v4304 = vunpack.c.l.b16 %v780
  %v4305 = vunpack.c.l.b16 %v781
  %v4306 = vunpack.c.l.b16 %v782
  %v4307 = vunpack.c.l.b16 %v783
  %v4308 = vunpack.c.l.b16 %v784
  %v4309 = vunpack.c.l.b16 %v785
  %v4310 = vunpack.c.l.b16 %v786
  %v4311 = vunpack.c.l.b16 %v787
  %v4312 = vunpack.c.l.b16 %v788
  %v4313 = vunpack.c.l.b16 %v789
  %v4314 = vunpack.c.l.b16 %v790
  %v4315 = vunpack.c.l.b16 %v791
  %v4316 = vunpack.c.l.b16 %v792
  %v4317 = vunpack.c.l.b16 %v793
  %v4318 = vunpack.c.l.b16 %v794
  %v4319 = vunpack.c.l.b16 %v795
  %v4320 = vunpack.c.l.b16 %v796
  %v4321 = vunpack.c.l.b16 %v797
  %v4322 = vunpack.c.l.b16 %v798
  %v4323 = vunpack.c.l.b16 %v799
  %v4324 = vunpack.c.l.b16 %v800
  %v4325 = vunpack.c.l.b16 %v801
  %v4326 = vunpack.c.l.b16 %v802
  %v4327 = vunpack.c.l.b16 %v803
  %v4328 = vunpack.c.l.b16 %v804
  %v4329 = vunpack.c.l.b16 %v805
  %v4330 = vunpack.c.l.b16 %v806
  %v4331 = vunpack.c.l.b16 %v807
  %v4332 = vunpack.c.l.b16 %v808
  %v4333 = vunpack.c.l.b16 %v809
  %v4334 = vunpack.c.l.b16 %v810
  %v4335 = vunpack.c.l.b16 %v811
  %v4336 = vunpack.c.l.b16 %v812
  %v4337 = vunpack.c.l.b16 %v813
  %v4338 = vunpack.c.l.b16 %v814
  %v4339 = vunpack.c.l.b16 %v815
  %v4340 = vunpack.c.l.b16 %v816
  %v4341 = vunpack.c.l.b16 %v817
  %v4342 = vunpack.c.l.b16 %v818
  %v4343 = vunpack.c.l.b16 %v819
  %v4344 = vunpack.c.l.b16 %v820
  %v4345 = vunpack.c.l.b16 %v821
  %v4346 = vunpack.c.l.b16 %v822
  %v4347 = vunpack.c.l.b16 %v823
  %v4348 = vunpack.c.l.b16 %v824
  %v4349 = vunpack.c.l.b16 %v825
  %v4350 = vunpack.c.l.b16 %v826
  %v4351 = vunpack.c.l.b16 %v827
  %v4352 = vunpack.c.l.b16 %v828
  %v4353 = vunpack.c.l.b16 %v829
  %v4354 = vunpack.c.l.b16 %v830
  %v4355 = vunpack.c.l.b16 %v831
  %v4356 = vunpack.c.l.b16 %v832
  %v4357 = vunpack.c.l.b16 %v833
  %v4358 = vunpack.c.l.b16 %v834
  %v4359 = vunpack.c.l.b16 %v835
  %v4360 = vunpack.c.l.b16 %v836
  %v4361 = vunpack.c.l.b16 %v837
  %v4362 = vunpack.c.l.b16 %v838
  %v4363 = vunpack.c.l.b16 %v839
  %v4364 = vunpack.c.l.b16 %v840
  %v4365 = vunpack.c.l.b16 %v841
  %v4366 = vunpack.c.l.b16 %v842
  %v4367 = vunpack.c.l.b16 %v843
  %v4368 = vunpack.c.l.b16 %v844
  %v4369 = vunpack.c.l.b16 %v845
  %v4370 = vunpack.c.l.b16 %v846
  %v4371 = vunpack.c.l.b16 %v847
  %v4372 = vunpack.c.l.b16 %v848
  %v4373 = vunpack.c.l.b16 %v849
  %v4374 = vunpack.c.l.b16 %v850
  %v4375 = vunpack.c.l.b16 %v851
  %v4376 = vunpack.c.l.b16 %v852
  %v4377 = vunpack.c.l.b16 %v853
  %v4378 = vunpack.c.l.b16 %v854
  %v4379 = vunpack.c.l.b16 %v855
  %v4380 = vunpack.c.l.b16 %v856
  %v4381 = vunpack.c.l.b16 %v857
  %v4382 = vunpack.c.l.b16 %v858
  %v4383 = vunpack.c.l.b16 %v859
  %v4384 = vunpack.c.l.b16 %v860
  %v4385 = vunpack.c.l.b16 %v861
  %v4386 = vunpack.c.l.b16 %v862
  %v4387 = vunpack.c.l.b16 %v863
  %v4388 = vunpack.c.l.b16 %v864
  %v4389 = vunpack.c.l.b16 %v865
  %v4390 = vunpack.c.l.b16 %v866
  %v4391 = vunpack.c.l.b16 %v867
  %v4392 = vunpack.c.l.b16 %v868
  %v4393 = vunpack.c.l.b16 %v869
  %v4394 = vunpack.c.l.b16 %v870
  %v4395 = vunpack.c.l.b16 %v871
  %v4396 = vunpack.c.l.b16 %v872
  %v4397 = vunpack.c.l.b16 %v873
  %v4398 = vunpack.c.l.b16 %v874
  %v4399 = vunpack.c.l.b16 %v875
  %v4400 = vunpack.c.l.b16 %v876
  %v4401 = vunpack.c.l.b16 %v877
  %v4402 = vunpack.c.l.b16 %v878
  %v4403 = vunpack.c.l.b16 %v879
  %v4404 = vunpack.c.l.b16 %v880
  %v4405 = vunpack.c.l.b16 %v881
  %v4406 = vunpack.c.l.b16 %v882
  %v4407 = vunpack.c.l.b16 %v883
  %v4408 = vunpack.c.l.b16 %v884
  %v4409 = vunpack.c.l.b16 %v885
  %v4410 = vunpack.c.l.b16 %v886
  %v4411 = vpack.c.b16 %v4212, %v4211
  %v4412 = vpack.c.b16 %v4214, %v4213
  %v4413 = vpack.c.b16 %v4216, %v4215
  %v4414 = vpack.c.b16 %v4218, %v4217
  %v4415 = vpack.c.b16 %v4220, %v4219
  %v4416 = vpack.c.b16 %v4222, %v4221
  %v4417 = vpack.c.b16 %v4224, %v4223
  %v4418 = vpack.c.b16 %v4226, %v4225
  %v4419 = vpack.c.b16 %v4228, %v4227
  %v4420 = vpack.c.b16 %v4230, %v4229
  %v4421 = vpack.c.b16 %v4232, %v4231
  %v4422 = vpack.c.b16 %v4234, %v4233
  %v4423 = vpack.c.b16 %v4236, %v4235
  %v4424 = vpack.c.b16 %v4238, %v4237
  %v4425 = vpack.c.b16 %v4240, %v4239
  %v4426 = vpack.c.b16 %v4242, %v4241
  %v4427 = vpack.c.b16 %v4244, %v4243
  %v4428 = vpack.c.b16 %v4246, %v4245
  %v4429 = vpack.c.b16 %v4248, %v4247
  %v4430 = vpack.c.b16 %v4250, %v4249
  %v4431 = vpack.c.b16 %v4252, %v4251
  %v4432 = vpack.c.b16 %v4254, %v4253
  %v4433 = vpack.c.b16 %v4256, %v4255
  %v4434 = vpack.c.b16 %v4258, %v4257
  %v4435 = vpack.c.b16 %v4260, %v4259
  %v4436 = vpack.c.b16 %v4262, %v4261
  %v4437 = vpack.c.b16 %v4264, %v4263
  %v4438 = vpack.c.b16 %v4266, %v4265
  %v4439 = vpack.c.b16 %v4268, %v4267
  %v4440 = vpack.c.b16 %v4270, %v4269
  %v4441 = vpack.c.b16 %v4272, %v4271
  %v4442 = vpack.c.b16 %v4274, %v4273
  %v4443 = vpack.c.b16 %v4276, %v4275
  %v4444 = vpack.c.b16 %v4278, %v4277
  %v4445 = vpack.c.b16 %v4280, %v4279
  %v4446 = vpack.c.b16 %v4282, %v4281
  %v4447 = vpack.c.b16 %v4284, %v4283
  %v4448 = vpack.c.b16 %v4286, %v4285
  %v4449 = vpack.c.b16 %v4288, %v4287
  %v4450 = vpack.c.b16 %v4290, %v4289
  %v4451 = vpack.c.b16 %v4292, %v4291
  %v4452 = vpack.c.b16 %v4294, %v4293
  %v4453 = vpack.c.b16 %v4296, %v4295
  %v4454 = vpack.c.b16 %v4298, %v4297
  %v4455 = vpack.c.b16 %v4300, %v4299
  %v4456 = vpack.c.b16 %v4302, %v4301
  %v4457 = vpack.c.b16 %v4304, %v4303
  %v4458 = vpack.c.b16 %v4306, %v4305
  %v4459 = vpack.c.b16 %v4308, %v4307
  %v4460 = vpack.c.b16 %v4310, %v4309
  %v4461 = vpack.c.b16 %v4312, %v4311
  %v4462 = vpack.c.b16 %v4314, %v4313
  %v4463 = vpack.c.b16 %v4316, %v4315
  %v4464 = vpack.c.b16 %v4318, %v4317
  %v4465 = vpack.c.b16 %v4320, %v4319
  %v4466 = vpack.c.b16 %v4322, %v4321
  %v4467 = vpack.c.b16 %v4324, %v4323
  %v4468 = vpack.c.b16 %v4326, %v4325
  %v4469 = vpack.c.b16 %v4328, %v4327
  %v4470 = vpack.c.b16 %v4330, %v4329
  %v4471 = vpack.c.b16 %v4332, %v4331
  %v4472 = vpack.c.b16 %v4334, %v4333
  %v4473 = vpack.c.b16 %v4336, %v4335
  %v4474 = vpack.c.b16 %v4338, %v4337
  %v4475 = vpack.c.b16 %v4340, %v4339
  %v4476 = vpack.c.b16 %v4342, %v4341
  %v4477 = vpack.c.b16 %v4344, %v4343
  %v4478 = vpack.c.b16 %v4346, %v4345
  %v4479 = vpack.c.b16 %v4348, %v4347
  %v4480 = vpack.c.b16 %v4350, %v4349
  %v4481 = vpack.c.b16 %v4352, %v4351
  %v4482 = vpack.c.b16 %v4354, %v4353
  %v4483 = vpack.c.b16 %v4356, %v4355
  %v4484 = vpack.c.b16 %v4358, %v4357
  %v4485 = vpack.c.b16 %v4360, %v4359
  %v4486 = vpack.c.b16 %v4362, %v4361
  %v4487 = vpack.c.b16 %v4364, %v4363
  %v4488 = vpack.c.b16 %v4366, %v4365
  %v4489 = vpack.c.b16 %v4368, %v4367
  %v4490 = vpack.c.b16 %v4370, %v4369
  %v4491 = vpack.c.b16 %v4372, %v4371
  %v4492 = vpack.c.b16 %v4374, %v4373
  %v4493 = vpack.c.b16 %v4376, %v4375
  %v4494 = vpack.c.b16 %v4378, %v4377
  %v4495 = vpack.c.b16 %v4380, %v4379
  %v4496 = vpack.c.b16 %v4382, %v4381
  %v4497 = vpack.c.b16 %v4384, %v4383
  %v4498 = vpack.c.b16 %v4386, %v4385
  %v4499 = vpack.c.b16 %v4388, %v4387
  %v4500 = vpack.c.b16 %v4390, %v4389
  %v4501 = vpack.c.b16 %v4392, %v4391
  %v4502 = vpack.c.b16 %v4394, %v4393
  %v4503 = vpack.c.b16 %v4396, %v4395
  %v4504 = vpack.c.b16 %v4398, %v4397
  %v4505 = vpack.c.b16 %v4400, %v4399
  %v4506 = vpack.c.b16 %v4402, %v4401
  %v4507 = vpack.c.b16 %v4404, %v4403
  %v4508 = vpack.c.b16 %v4406, %v4405
  %v4509 = vpack.c.b16 %v4408, %v4407
  %v4510 = vpack.c.b16 %v4410, %v4409
  %vm4611 = vcmask 523264
  %v4613 = vsel %vm4611, %v2823, 0
  %v4616 = vsel %vm4611, %v2836, 0
  %v4619 = vsel %vm4611, %v2849, 0
  %v4622 = vsel %vm4611, %v2862, 0
  %v4625 = vsel %vm4611, %v2875, 0
  %v4628 = vsel %vm4611, %v2888, 0
  %v4631 = vsel %vm4611, %v2901, 0
  %v4634 = vsel %vm4611, %v2914, 0
  %v4637 = vsel %vm4611, %v2927, 0
  %v4640 = vsel %vm4611, %v2940, 0
  %v4643 = vsel %vm4611, %v2953, 0
  %v4646 = vsel %vm4611, %v2966, 0
  %v4649 = vsel %vm4611, %v2979, 0
  %v4652 = vsel %vm4611, %v2992, 0
  %v4655 = vsel %vm4611, %v3005, 0
  %v4658 = vsel %vm4611, %v3018, 0
  %v4661 = vsel %vm4611, %v3031, 0
  %v4664 = vsel %vm4611, %v3044, 0
  %v4667 = vsel %vm4611, %v3057, 0
  %v4670 = vsel %vm4611, %v3070, 0
  %v4673 = vsel %vm4611, %v3083, 0
  %v4676 = vsel %vm4611, %v3096, 0
  %v4679 = vsel %vm4611, %v3109, 0
  %v4682 = vsel %vm4611, %v3122, 0
  %v4685 = vsel %vm4611, %v3135, 0
  %v4688 = vsel %vm4611, %v3148, 0
  %v4691 = vsel %vm4611, %v3161, 0
  %v4694 = vsel %vm4611, %v3174, 0
  %v4697 = vsel %vm4611, %v3187, 0
  %v4700 = vsel %vm4611, %v3200, 0
  %v4703 = vsel %vm4611, %v3213, 0
  %v4706 = vsel %vm4611, %v3226, 0
  %v4709 = vsel %vm4611, %v3239, 0
  %v4712 = vsel %vm4611, %v3252, 0
  %v4715 = vsel %vm4611, %v3265, 0
  %v4718 = vsel %vm4611, %v3278, 0
  %v4721 = vsel %vm4611, %v3291, 0
  %v4724 = vsel %vm4611, %v3304, 0
  %v4727 = vsel %vm4611, %v3317, 0
  %v4730 = vsel %vm4611, %v3330, 0
  %v4733 = vsel %vm4611, %v3343, 0
  %v4736 = vsel %vm4611, %v3356, 0
  %v4739 = vsel %vm4611, %v3369, 0
  %v4742 = vsel %vm4611, %v3382, 0
  %v4745 = vsel %vm4611, %v3395, 0
  %v4748 = vsel %vm4611, %v3408, 0
  %v4751 = vsel %vm4611, %v3421, 0
  %v4754 = vsel %vm4611, %v3434, 0
  %4756 = vmatpush.bf16.msra.mxu0 %v4418
  %4757 = vmatpush.bf16.msra.mxu0 %v4417
  %4758 = vmatpush.bf16.msra.mxu0 %v4416
  %4759 = vmatpush.bf16.msra.mxu0 %v4415
  %4760 = vmatpush.bf16.msra.mxu0 %v4414
  %4761 = vmatpush.bf16.msra.mxu0 %v4413
  %4762 = vmatpush.bf16.msra.mxu0 %v4412
  %4763 = vmatpush.bf16.msra.mxu0 %v4411
  %4764 = vmatmul.bf16.gmra.mxu0 %v2811
  %v4765 = vpop.f32.mrf.mxu0
  %v4766 = vadd.f32 %v889, %v4765
  %v4767 = vpop.f32.mrf.mxu0
  %v4768 = vadd.f32 %v889, %v4767
  %4769 = vmatmul.bf16.gmra.mxu0 %v2824
  %v4770 = vpop.f32.mrf.mxu0
  %v4771 = vadd.f32 %v889, %v4770
  %v4772 = vpop.f32.mrf.mxu0
  %v4773 = vadd.f32 %v889, %v4772
  %4774 = vmatmul.bf16.gmra.mxu0 %v2837
  %v4775 = vpop.f32.mrf.mxu0
  %v4776 = vadd.f32 %v889, %v4775
  %v4777 = vpop.f32.mrf.mxu0
  %v4778 = vadd.f32 %v889, %v4777
  %4779 = vmatmul.bf16.gmra.mxu0 %v2850
  %v4780 = vpop.f32.mrf.mxu0
  %v4781 = vadd.f32 %v889, %v4780
  %v4782 = vpop.f32.mrf.mxu0
  %v4783 = vadd.f32 %v889, %v4782
  %4784 = vmatmul.bf16.gmra.mxu0 %v2863
  %v4785 = vpop.f32.mrf.mxu0
  %v4786 = vadd.f32 %v889, %v4785
  %v4787 = vpop.f32.mrf.mxu0
  %v4788 = vadd.f32 %v889, %v4787
  %4789 = vmatmul.bf16.gmra.mxu0 %v2876
  %v4790 = vpop.f32.mrf.mxu0
  %v4791 = vadd.f32 %v889, %v4790
  %v4792 = vpop.f32.mrf.mxu0
  %v4793 = vadd.f32 %v889, %v4792
  %4794 = vmatmul.bf16.gmra.mxu0 %v2889
  %v4795 = vpop.f32.mrf.mxu0
  %v4796 = vadd.f32 %v889, %v4795
  %v4797 = vpop.f32.mrf.mxu0
  %v4798 = vadd.f32 %v889, %v4797
  %4799 = vmatmul.bf16.gmra.mxu0 %v2902
  %v4800 = vpop.f32.mrf.mxu0
  %v4801 = vadd.f32 %v889, %v4800
  %v4802 = vpop.f32.mrf.mxu0
  %v4803 = vadd.f32 %v889, %v4802
  %4804 = vmatmul.bf16.gmra.mxu0 %v2915
  %v4805 = vpop.f32.mrf.mxu0
  %v4806 = vadd.f32 %v889, %v4805
  %v4807 = vpop.f32.mrf.mxu0
  %v4808 = vadd.f32 %v889, %v4807
  %4809 = vmatmul.bf16.gmra.mxu0 %v2928
  %v4810 = vpop.f32.mrf.mxu0
  %v4811 = vadd.f32 %v889, %v4810
  %v4812 = vpop.f32.mrf.mxu0
  %v4813 = vadd.f32 %v889, %v4812
  %4814 = vmatmul.bf16.gmra.mxu0 %v2941
  %v4815 = vpop.f32.mrf.mxu0
  %v4816 = vadd.f32 %v889, %v4815
  %v4817 = vpop.f32.mrf.mxu0
  %v4818 = vadd.f32 %v889, %v4817
  %4819 = vmatmul.bf16.gmra.mxu0 %v2954
  %v4820 = vpop.f32.mrf.mxu0
  %v4821 = vadd.f32 %v889, %v4820
  %v4822 = vpop.f32.mrf.mxu0
  %v4823 = vadd.f32 %v889, %v4822
  %4824 = vmatmul.bf16.gmra.mxu0 %v2967
  %v4825 = vpop.f32.mrf.mxu0
  %v4826 = vadd.f32 %v889, %v4825
  %v4827 = vpop.f32.mrf.mxu0
  %v4828 = vadd.f32 %v889, %v4827
  %4829 = vmatmul.bf16.gmra.mxu0 %v2980
  %v4830 = vpop.f32.mrf.mxu0
  %v4831 = vadd.f32 %v889, %v4830
  %v4832 = vpop.f32.mrf.mxu0
  %v4833 = vadd.f32 %v889, %v4832
  %4834 = vmatmul.bf16.gmra.mxu0 %v2993
  %v4835 = vpop.f32.mrf.mxu0
  %v4836 = vadd.f32 %v889, %v4835
  %v4837 = vpop.f32.mrf.mxu0
  %v4838 = vadd.f32 %v889, %v4837
  %4839 = vmatmul.bf16.gmra.mxu0 %v3006
  %v4840 = vpop.f32.mrf.mxu0
  %v4841 = vadd.f32 %v889, %v4840
  %v4842 = vpop.f32.mrf.mxu0
  %v4843 = vadd.f32 %v889, %v4842
  %4844 = vmatmul.bf16.gmra.mxu0 %v3019
  %v4845 = vpop.f32.mrf.mxu0
  %v4846 = vadd.f32 %v889, %v4845
  %v4847 = vpop.f32.mrf.mxu0
  %v4848 = vadd.f32 %v889, %v4847
  %4849 = vmatmul.bf16.gmra.mxu0 %v3032
  %v4850 = vpop.f32.mrf.mxu0
  %v4851 = vadd.f32 %v889, %v4850
  %v4852 = vpop.f32.mrf.mxu0
  %v4853 = vadd.f32 %v889, %v4852
  %4854 = vmatmul.bf16.gmra.mxu0 %v3045
  %v4855 = vpop.f32.mrf.mxu0
  %v4856 = vadd.f32 %v889, %v4855
  %v4857 = vpop.f32.mrf.mxu0
  %v4858 = vadd.f32 %v889, %v4857
  %4859 = vmatmul.bf16.gmra.mxu0 %v3058
  %v4860 = vpop.f32.mrf.mxu0
  %v4861 = vadd.f32 %v889, %v4860
  %v4862 = vpop.f32.mrf.mxu0
  %v4863 = vadd.f32 %v889, %v4862
  %4864 = vmatmul.bf16.gmra.mxu0 %v3071
  %v4865 = vpop.f32.mrf.mxu0
  %v4866 = vadd.f32 %v889, %v4865
  %v4867 = vpop.f32.mrf.mxu0
  %v4868 = vadd.f32 %v889, %v4867
  %4869 = vmatmul.bf16.gmra.mxu0 %v3084
  %v4870 = vpop.f32.mrf.mxu0
  %v4871 = vadd.f32 %v889, %v4870
  %v4872 = vpop.f32.mrf.mxu0
  %v4873 = vadd.f32 %v889, %v4872
  %4874 = vmatmul.bf16.gmra.mxu0 %v3097
  %v4875 = vpop.f32.mrf.mxu0
  %v4876 = vadd.f32 %v889, %v4875
  %v4877 = vpop.f32.mrf.mxu0
  %v4878 = vadd.f32 %v889, %v4877
  %4879 = vmatmul.bf16.gmra.mxu0 %v3110
  %v4880 = vpop.f32.mrf.mxu0
  %v4881 = vadd.f32 %v889, %v4880
  %v4882 = vpop.f32.mrf.mxu0
  %v4883 = vadd.f32 %v889, %v4882
  %4884 = vmatmul.bf16.gmra.mxu0 %v3123
  %v4885 = vpop.f32.mrf.mxu0
  %v4886 = vadd.f32 %v889, %v4885
  %v4887 = vpop.f32.mrf.mxu0
  %v4888 = vadd.f32 %v889, %v4887
  %4889 = vmatmul.bf16.gmra.mxu0 %v3136
  %v4890 = vpop.f32.mrf.mxu0
  %v4891 = vadd.f32 %v889, %v4890
  %v4892 = vpop.f32.mrf.mxu0
  %v4893 = vadd.f32 %v889, %v4892
  %4894 = vmatmul.bf16.gmra.mxu0 %v3149
  %v4895 = vpop.f32.mrf.mxu0
  %v4896 = vadd.f32 %v889, %v4895
  %v4897 = vpop.f32.mrf.mxu0
  %v4898 = vadd.f32 %v889, %v4897
  %4899 = vmatmul.bf16.gmra.mxu0 %v3162
  %v4900 = vpop.f32.mrf.mxu0
  %v4901 = vadd.f32 %v889, %v4900
  %v4902 = vpop.f32.mrf.mxu0
  %v4903 = vadd.f32 %v889, %v4902
  %4904 = vmatmul.bf16.gmra.mxu0 %v3175
  %v4905 = vpop.f32.mrf.mxu0
  %v4906 = vadd.f32 %v889, %v4905
  %v4907 = vpop.f32.mrf.mxu0
  %v4908 = vadd.f32 %v889, %v4907
  %4909 = vmatmul.bf16.gmra.mxu0 %v3188
  %v4910 = vpop.f32.mrf.mxu0
  %v4911 = vadd.f32 %v889, %v4910
  %v4912 = vpop.f32.mrf.mxu0
  %v4913 = vadd.f32 %v889, %v4912
  %4914 = vmatmul.bf16.gmra.mxu0 %v3201
  %v4915 = vpop.f32.mrf.mxu0
  %v4916 = vadd.f32 %v889, %v4915
  %v4917 = vpop.f32.mrf.mxu0
  %v4918 = vadd.f32 %v889, %v4917
  %4919 = vmatmul.bf16.gmra.mxu0 %v3214
  %v4920 = vpop.f32.mrf.mxu0
  %v4921 = vadd.f32 %v889, %v4920
  %v4922 = vpop.f32.mrf.mxu0
  %v4923 = vadd.f32 %v889, %v4922
  %4924 = vmatmul.bf16.gmra.mxu0 %v3227
  %v4925 = vpop.f32.mrf.mxu0
  %v4926 = vadd.f32 %v889, %v4925
  %v4927 = vpop.f32.mrf.mxu0
  %v4928 = vadd.f32 %v889, %v4927
  %4929 = vmatmul.bf16.gmra.mxu0 %v3240
  %v4930 = vpop.f32.mrf.mxu0
  %v4931 = vadd.f32 %v889, %v4930
  %v4932 = vpop.f32.mrf.mxu0
  %v4933 = vadd.f32 %v889, %v4932
  %4934 = vmatmul.bf16.gmra.mxu0 %v3253
  %v4935 = vpop.f32.mrf.mxu0
  %v4936 = vadd.f32 %v889, %v4935
  %v4937 = vpop.f32.mrf.mxu0
  %v4938 = vadd.f32 %v889, %v4937
  %4939 = vmatmul.bf16.gmra.mxu0 %v3266
  %v4940 = vpop.f32.mrf.mxu0
  %v4941 = vadd.f32 %v889, %v4940
  %v4942 = vpop.f32.mrf.mxu0
  %v4943 = vadd.f32 %v889, %v4942
  %4944 = vmatmul.bf16.gmra.mxu0 %v3279
  %v4945 = vpop.f32.mrf.mxu0
  %v4946 = vadd.f32 %v889, %v4945
  %v4947 = vpop.f32.mrf.mxu0
  %v4948 = vadd.f32 %v889, %v4947
  %4949 = vmatmul.bf16.gmra.mxu0 %v3292
  %v4950 = vpop.f32.mrf.mxu0
  %v4951 = vadd.f32 %v889, %v4950
  %v4952 = vpop.f32.mrf.mxu0
  %v4953 = vadd.f32 %v889, %v4952
  %4954 = vmatmul.bf16.gmra.mxu0 %v3305
  %v4955 = vpop.f32.mrf.mxu0
  %v4956 = vadd.f32 %v889, %v4955
  %v4957 = vpop.f32.mrf.mxu0
  %v4958 = vadd.f32 %v889, %v4957
  %4959 = vmatmul.bf16.gmra.mxu0 %v3318
  %v4960 = vpop.f32.mrf.mxu0
  %v4961 = vadd.f32 %v889, %v4960
  %v4962 = vpop.f32.mrf.mxu0
  %v4963 = vadd.f32 %v889, %v4962
  %4964 = vmatmul.bf16.gmra.mxu0 %v3331
  %v4965 = vpop.f32.mrf.mxu0
  %v4966 = vadd.f32 %v889, %v4965
  %v4967 = vpop.f32.mrf.mxu0
  %v4968 = vadd.f32 %v889, %v4967
  %4969 = vmatmul.bf16.gmra.mxu0 %v3344
  %v4970 = vpop.f32.mrf.mxu0
  %v4971 = vadd.f32 %v889, %v4970
  %v4972 = vpop.f32.mrf.mxu0
  %v4973 = vadd.f32 %v889, %v4972
  %4974 = vmatmul.bf16.gmra.mxu0 %v3357
  %v4975 = vpop.f32.mrf.mxu0
  %v4976 = vadd.f32 %v889, %v4975
  %v4977 = vpop.f32.mrf.mxu0
  %v4978 = vadd.f32 %v889, %v4977
  %4979 = vmatmul.bf16.gmra.mxu0 %v3370
  %v4980 = vpop.f32.mrf.mxu0
  %v4981 = vadd.f32 %v889, %v4980
  %v4982 = vpop.f32.mrf.mxu0
  %v4983 = vadd.f32 %v889, %v4982
  %4984 = vmatmul.bf16.gmra.mxu0 %v3383
  %v4985 = vpop.f32.mrf.mxu0
  %v4986 = vadd.f32 %v889, %v4985
  %v4987 = vpop.f32.mrf.mxu0
  %v4988 = vadd.f32 %v889, %v4987
  %4989 = vmatmul.bf16.gmra.mxu0 %v3396
  %v4990 = vpop.f32.mrf.mxu0
  %v4991 = vadd.f32 %v889, %v4990
  %v4992 = vpop.f32.mrf.mxu0
  %v4993 = vadd.f32 %v889, %v4992
  %4994 = vmatmul.bf16.gmra.mxu0 %v3409
  %v4995 = vpop.f32.mrf.mxu0
  %v4996 = vadd.f32 %v889, %v4995
  %v4997 = vpop.f32.mrf.mxu0
  %v4998 = vadd.f32 %v889, %v4997
  %4999 = vmatmul.bf16.gmra.mxu0 %v3422
  %v5000 = vpop.f32.mrf.mxu0
  %v5001 = vadd.f32 %v889, %v5000
  %v5002 = vpop.f32.mrf.mxu0
  %v5003 = vadd.f32 %v889, %v5002
  %5004 = vdwg.mxu0
  %5005 = vmatpush.bf16.msra.mxu0 %v4426
  %5006 = vmatpush.bf16.msra.mxu0 %v4425
  %5007 = vmatpush.bf16.msra.mxu0 %v4424
  %5008 = vmatpush.bf16.msra.mxu0 %v4423
  %5009 = vmatpush.bf16.msra.mxu0 %v4422
  %5010 = vmatpush.bf16.msra.mxu0 %v4421
  %5011 = vmatpush.bf16.msra.mxu0 %v4420
  %5012 = vmatpush.bf16.msra.mxu0 %v4419
  %5013 = vmatmul.bf16.gmra.mxu0 %v2812
  %v5014 = vpop.f32.mrf.mxu0
  %v5015 = vadd.f32 %v4766, %v5014
  %v5016 = vpop.f32.mrf.mxu0
  %v5017 = vadd.f32 %v4768, %v5016
  %5018 = vmatmul.bf16.gmra.mxu0 %v2825
  %v5019 = vpop.f32.mrf.mxu0
  %v5020 = vadd.f32 %v4771, %v5019
  %v5021 = vpop.f32.mrf.mxu0
  %v5022 = vadd.f32 %v4773, %v5021
  %5023 = vmatmul.bf16.gmra.mxu0 %v2838
  %v5024 = vpop.f32.mrf.mxu0
  %v5025 = vadd.f32 %v4776, %v5024
  %v5026 = vpop.f32.mrf.mxu0
  %v5027 = vadd.f32 %v4778, %v5026
  %5028 = vmatmul.bf16.gmra.mxu0 %v2851
  %v5029 = vpop.f32.mrf.mxu0
  %v5030 = vadd.f32 %v4781, %v5029
  %v5031 = vpop.f32.mrf.mxu0
  %v5032 = vadd.f32 %v4783, %v5031
  %5033 = vmatmul.bf16.gmra.mxu0 %v2864
  %v5034 = vpop.f32.mrf.mxu0
  %v5035 = vadd.f32 %v4786, %v5034
  %v5036 = vpop.f32.mrf.mxu0
  %v5037 = vadd.f32 %v4788, %v5036
  %5038 = vmatmul.bf16.gmra.mxu0 %v2877
  %v5039 = vpop.f32.mrf.mxu0
  %v5040 = vadd.f32 %v4791, %v5039
  %v5041 = vpop.f32.mrf.mxu0
  %v5042 = vadd.f32 %v4793, %v5041
  %5043 = vmatmul.bf16.gmra.mxu0 %v2890
  %v5044 = vpop.f32.mrf.mxu0
  %v5045 = vadd.f32 %v4796, %v5044
  %v5046 = vpop.f32.mrf.mxu0
  %v5047 = vadd.f32 %v4798, %v5046
  %5048 = vmatmul.bf16.gmra.mxu0 %v2903
  %v5049 = vpop.f32.mrf.mxu0
  %v5050 = vadd.f32 %v4801, %v5049
  %v5051 = vpop.f32.mrf.mxu0
  %v5052 = vadd.f32 %v4803, %v5051
  %5053 = vmatmul.bf16.gmra.mxu0 %v2916
  %v5054 = vpop.f32.mrf.mxu0
  %v5055 = vadd.f32 %v4806, %v5054
  %v5056 = vpop.f32.mrf.mxu0
  %v5057 = vadd.f32 %v4808, %v5056
  %5058 = vmatmul.bf16.gmra.mxu0 %v2929
  %v5059 = vpop.f32.mrf.mxu0
  %v5060 = vadd.f32 %v4811, %v5059
  %v5061 = vpop.f32.mrf.mxu0
  %v5062 = vadd.f32 %v4813, %v5061
  %5063 = vmatmul.bf16.gmra.mxu0 %v2942
  %v5064 = vpop.f32.mrf.mxu0
  %v5065 = vadd.f32 %v4816, %v5064
  %v5066 = vpop.f32.mrf.mxu0
  %v5067 = vadd.f32 %v4818, %v5066
  %5068 = vmatmul.bf16.gmra.mxu0 %v2955
  %v5069 = vpop.f32.mrf.mxu0
  %v5070 = vadd.f32 %v4821, %v5069
  %v5071 = vpop.f32.mrf.mxu0
  %v5072 = vadd.f32 %v4823, %v5071
  %5073 = vmatmul.bf16.gmra.mxu0 %v2968
  %v5074 = vpop.f32.mrf.mxu0
  %v5075 = vadd.f32 %v4826, %v5074
  %v5076 = vpop.f32.mrf.mxu0
  %v5077 = vadd.f32 %v4828, %v5076
  %5078 = vmatmul.bf16.gmra.mxu0 %v2981
  %v5079 = vpop.f32.mrf.mxu0
  %v5080 = vadd.f32 %v4831, %v5079
  %v5081 = vpop.f32.mrf.mxu0
  %v5082 = vadd.f32 %v4833, %v5081
  %5083 = vmatmul.bf16.gmra.mxu0 %v2994
  %v5084 = vpop.f32.mrf.mxu0
  %v5085 = vadd.f32 %v4836, %v5084
  %v5086 = vpop.f32.mrf.mxu0
  %v5087 = vadd.f32 %v4838, %v5086
  %5088 = vmatmul.bf16.gmra.mxu0 %v3007
  %v5089 = vpop.f32.mrf.mxu0
  %v5090 = vadd.f32 %v4841, %v5089
  %v5091 = vpop.f32.mrf.mxu0
  %v5092 = vadd.f32 %v4843, %v5091
  %5093 = vmatmul.bf16.gmra.mxu0 %v3020
  %v5094 = vpop.f32.mrf.mxu0
  %v5095 = vadd.f32 %v4846, %v5094
  %v5096 = vpop.f32.mrf.mxu0
  %v5097 = vadd.f32 %v4848, %v5096
  %5098 = vmatmul.bf16.gmra.mxu0 %v3033
  %v5099 = vpop.f32.mrf.mxu0
  %v5100 = vadd.f32 %v4851, %v5099
  %v5101 = vpop.f32.mrf.mxu0
  %v5102 = vadd.f32 %v4853, %v5101
  %5103 = vmatmul.bf16.gmra.mxu0 %v3046
  %v5104 = vpop.f32.mrf.mxu0
  %v5105 = vadd.f32 %v4856, %v5104
  %v5106 = vpop.f32.mrf.mxu0
  %v5107 = vadd.f32 %v4858, %v5106
  %5108 = vmatmul.bf16.gmra.mxu0 %v3059
  %v5109 = vpop.f32.mrf.mxu0
  %v5110 = vadd.f32 %v4861, %v5109
  %v5111 = vpop.f32.mrf.mxu0
  %v5112 = vadd.f32 %v4863, %v5111
  %5113 = vmatmul.bf16.gmra.mxu0 %v3072
  %v5114 = vpop.f32.mrf.mxu0
  %v5115 = vadd.f32 %v4866, %v5114
  %v5116 = vpop.f32.mrf.mxu0
  %v5117 = vadd.f32 %v4868, %v5116
  %5118 = vmatmul.bf16.gmra.mxu0 %v3085
  %v5119 = vpop.f32.mrf.mxu0
  %v5120 = vadd.f32 %v4871, %v5119
  %v5121 = vpop.f32.mrf.mxu0
  %v5122 = vadd.f32 %v4873, %v5121
  %5123 = vmatmul.bf16.gmra.mxu0 %v3098
  %v5124 = vpop.f32.mrf.mxu0
  %v5125 = vadd.f32 %v4876, %v5124
  %v5126 = vpop.f32.mrf.mxu0
  %v5127 = vadd.f32 %v4878, %v5126
  %5128 = vmatmul.bf16.gmra.mxu0 %v3111
  %v5129 = vpop.f32.mrf.mxu0
  %v5130 = vadd.f32 %v4881, %v5129
  %v5131 = vpop.f32.mrf.mxu0
  %v5132 = vadd.f32 %v4883, %v5131
  %5133 = vmatmul.bf16.gmra.mxu0 %v3124
  %v5134 = vpop.f32.mrf.mxu0
  %v5135 = vadd.f32 %v4886, %v5134
  %v5136 = vpop.f32.mrf.mxu0
  %v5137 = vadd.f32 %v4888, %v5136
  %5138 = vmatmul.bf16.gmra.mxu0 %v3137
  %v5139 = vpop.f32.mrf.mxu0
  %v5140 = vadd.f32 %v4891, %v5139
  %v5141 = vpop.f32.mrf.mxu0
  %v5142 = vadd.f32 %v4893, %v5141
  %5143 = vmatmul.bf16.gmra.mxu0 %v3150
  %v5144 = vpop.f32.mrf.mxu0
  %v5145 = vadd.f32 %v4896, %v5144
  %v5146 = vpop.f32.mrf.mxu0
  %v5147 = vadd.f32 %v4898, %v5146
  %5148 = vmatmul.bf16.gmra.mxu0 %v3163
  %v5149 = vpop.f32.mrf.mxu0
  %v5150 = vadd.f32 %v4901, %v5149
  %v5151 = vpop.f32.mrf.mxu0
  %v5152 = vadd.f32 %v4903, %v5151
  %5153 = vmatmul.bf16.gmra.mxu0 %v3176
  %v5154 = vpop.f32.mrf.mxu0
  %v5155 = vadd.f32 %v4906, %v5154
  %v5156 = vpop.f32.mrf.mxu0
  %v5157 = vadd.f32 %v4908, %v5156
  %5158 = vmatmul.bf16.gmra.mxu0 %v3189
  %v5159 = vpop.f32.mrf.mxu0
  %v5160 = vadd.f32 %v4911, %v5159
  %v5161 = vpop.f32.mrf.mxu0
  %v5162 = vadd.f32 %v4913, %v5161
  %5163 = vmatmul.bf16.gmra.mxu0 %v3202
  %v5164 = vpop.f32.mrf.mxu0
  %v5165 = vadd.f32 %v4916, %v5164
  %v5166 = vpop.f32.mrf.mxu0
  %v5167 = vadd.f32 %v4918, %v5166
  %5168 = vmatmul.bf16.gmra.mxu0 %v3215
  %v5169 = vpop.f32.mrf.mxu0
  %v5170 = vadd.f32 %v4921, %v5169
  %v5171 = vpop.f32.mrf.mxu0
  %v5172 = vadd.f32 %v4923, %v5171
  %5173 = vmatmul.bf16.gmra.mxu0 %v3228
  %v5174 = vpop.f32.mrf.mxu0
  %v5175 = vadd.f32 %v4926, %v5174
  %v5176 = vpop.f32.mrf.mxu0
  %v5177 = vadd.f32 %v4928, %v5176
  %5178 = vmatmul.bf16.gmra.mxu0 %v3241
  %v5179 = vpop.f32.mrf.mxu0
  %v5180 = vadd.f32 %v4931, %v5179
  %v5181 = vpop.f32.mrf.mxu0
  %v5182 = vadd.f32 %v4933, %v5181
  %5183 = vmatmul.bf16.gmra.mxu0 %v3254
  %v5184 = vpop.f32.mrf.mxu0
  %v5185 = vadd.f32 %v4936, %v5184
  %v5186 = vpop.f32.mrf.mxu0
  %v5187 = vadd.f32 %v4938, %v5186
  %5188 = vmatmul.bf16.gmra.mxu0 %v3267
  %v5189 = vpop.f32.mrf.mxu0
  %v5190 = vadd.f32 %v4941, %v5189
  %v5191 = vpop.f32.mrf.mxu0
  %v5192 = vadd.f32 %v4943, %v5191
  %5193 = vmatmul.bf16.gmra.mxu0 %v3280
  %v5194 = vpop.f32.mrf.mxu0
  %v5195 = vadd.f32 %v4946, %v5194
  %v5196 = vpop.f32.mrf.mxu0
  %v5197 = vadd.f32 %v4948, %v5196
  %5198 = vmatmul.bf16.gmra.mxu0 %v3293
  %v5199 = vpop.f32.mrf.mxu0
  %v5200 = vadd.f32 %v4951, %v5199
  %v5201 = vpop.f32.mrf.mxu0
  %v5202 = vadd.f32 %v4953, %v5201
  %5203 = vmatmul.bf16.gmra.mxu0 %v3306
  %v5204 = vpop.f32.mrf.mxu0
  %v5205 = vadd.f32 %v4956, %v5204
  %v5206 = vpop.f32.mrf.mxu0
  %v5207 = vadd.f32 %v4958, %v5206
  %5208 = vmatmul.bf16.gmra.mxu0 %v3319
  %v5209 = vpop.f32.mrf.mxu0
  %v5210 = vadd.f32 %v4961, %v5209
  %v5211 = vpop.f32.mrf.mxu0
  %v5212 = vadd.f32 %v4963, %v5211
  %5213 = vmatmul.bf16.gmra.mxu0 %v3332
  %v5214 = vpop.f32.mrf.mxu0
  %v5215 = vadd.f32 %v4966, %v5214
  %v5216 = vpop.f32.mrf.mxu0
  %v5217 = vadd.f32 %v4968, %v5216
  %5218 = vmatmul.bf16.gmra.mxu0 %v3345
  %v5219 = vpop.f32.mrf.mxu0
  %v5220 = vadd.f32 %v4971, %v5219
  %v5221 = vpop.f32.mrf.mxu0
  %v5222 = vadd.f32 %v4973, %v5221
  %5223 = vmatmul.bf16.gmra.mxu0 %v3358
  %v5224 = vpop.f32.mrf.mxu0
  %v5225 = vadd.f32 %v4976, %v5224
  %v5226 = vpop.f32.mrf.mxu0
  %v5227 = vadd.f32 %v4978, %v5226
  %5228 = vmatmul.bf16.gmra.mxu0 %v3371
  %v5229 = vpop.f32.mrf.mxu0
  %v5230 = vadd.f32 %v4981, %v5229
  %v5231 = vpop.f32.mrf.mxu0
  %v5232 = vadd.f32 %v4983, %v5231
  %5233 = vmatmul.bf16.gmra.mxu0 %v3384
  %v5234 = vpop.f32.mrf.mxu0
  %v5235 = vadd.f32 %v4986, %v5234
  %v5236 = vpop.f32.mrf.mxu0
  %v5237 = vadd.f32 %v4988, %v5236
  %5238 = vmatmul.bf16.gmra.mxu0 %v3397
  %v5239 = vpop.f32.mrf.mxu0
  %v5240 = vadd.f32 %v4991, %v5239
  %v5241 = vpop.f32.mrf.mxu0
  %v5242 = vadd.f32 %v4993, %v5241
  %5243 = vmatmul.bf16.gmra.mxu0 %v3410
  %v5244 = vpop.f32.mrf.mxu0
  %v5245 = vadd.f32 %v4996, %v5244
  %v5246 = vpop.f32.mrf.mxu0
  %v5247 = vadd.f32 %v4998, %v5246
  %5248 = vmatmul.bf16.gmra.mxu0 %v3423
  %v5249 = vpop.f32.mrf.mxu0
  %v5250 = vadd.f32 %v5001, %v5249
  %v5251 = vpop.f32.mrf.mxu0
  %v5252 = vadd.f32 %v5003, %v5251
  %5253 = vdwg.mxu0
  %5254 = vmatpush.bf16.msra.mxu0 %v4434
  %5255 = vmatpush.bf16.msra.mxu0 %v4433
  %5256 = vmatpush.bf16.msra.mxu0 %v4432
  %5257 = vmatpush.bf16.msra.mxu0 %v4431
  %5258 = vmatpush.bf16.msra.mxu0 %v4430
  %5259 = vmatpush.bf16.msra.mxu0 %v4429
  %5260 = vmatpush.bf16.msra.mxu0 %v4428
  %5261 = vmatpush.bf16.msra.mxu0 %v4427
  %5262 = vmatmul.bf16.gmra.mxu0 %v2813
  %v5263 = vpop.f32.mrf.mxu0
  %v5264 = vadd.f32 %v5015, %v5263
  %v5265 = vpop.f32.mrf.mxu0
  %v5266 = vadd.f32 %v5017, %v5265
  %5267 = vmatmul.bf16.gmra.mxu0 %v2826
  %v5268 = vpop.f32.mrf.mxu0
  %v5269 = vadd.f32 %v5020, %v5268
  %v5270 = vpop.f32.mrf.mxu0
  %v5271 = vadd.f32 %v5022, %v5270
  %5272 = vmatmul.bf16.gmra.mxu0 %v2839
  %v5273 = vpop.f32.mrf.mxu0
  %v5274 = vadd.f32 %v5025, %v5273
  %v5275 = vpop.f32.mrf.mxu0
  %v5276 = vadd.f32 %v5027, %v5275
  %5277 = vmatmul.bf16.gmra.mxu0 %v2852
  %v5278 = vpop.f32.mrf.mxu0
  %v5279 = vadd.f32 %v5030, %v5278
  %v5280 = vpop.f32.mrf.mxu0
  %v5281 = vadd.f32 %v5032, %v5280
  %5282 = vmatmul.bf16.gmra.mxu0 %v2865
  %v5283 = vpop.f32.mrf.mxu0
  %v5284 = vadd.f32 %v5035, %v5283
  %v5285 = vpop.f32.mrf.mxu0
  %v5286 = vadd.f32 %v5037, %v5285
  %5287 = vmatmul.bf16.gmra.mxu0 %v2878
  %v5288 = vpop.f32.mrf.mxu0
  %v5289 = vadd.f32 %v5040, %v5288
  %v5290 = vpop.f32.mrf.mxu0
  %v5291 = vadd.f32 %v5042, %v5290
  %5292 = vmatmul.bf16.gmra.mxu0 %v2891
  %v5293 = vpop.f32.mrf.mxu0
  %v5294 = vadd.f32 %v5045, %v5293
  %v5295 = vpop.f32.mrf.mxu0
  %v5296 = vadd.f32 %v5047, %v5295
  %5297 = vmatmul.bf16.gmra.mxu0 %v2904
  %v5298 = vpop.f32.mrf.mxu0
  %v5299 = vadd.f32 %v5050, %v5298
  %v5300 = vpop.f32.mrf.mxu0
  %v5301 = vadd.f32 %v5052, %v5300
  %5302 = vmatmul.bf16.gmra.mxu0 %v2917
  %v5303 = vpop.f32.mrf.mxu0
  %v5304 = vadd.f32 %v5055, %v5303
  %v5305 = vpop.f32.mrf.mxu0
  %v5306 = vadd.f32 %v5057, %v5305
  %5307 = vmatmul.bf16.gmra.mxu0 %v2930
  %v5308 = vpop.f32.mrf.mxu0
  %v5309 = vadd.f32 %v5060, %v5308
  %v5310 = vpop.f32.mrf.mxu0
  %v5311 = vadd.f32 %v5062, %v5310
  %5312 = vmatmul.bf16.gmra.mxu0 %v2943
  %v5313 = vpop.f32.mrf.mxu0
  %v5314 = vadd.f32 %v5065, %v5313
  %v5315 = vpop.f32.mrf.mxu0
  %v5316 = vadd.f32 %v5067, %v5315
  %5317 = vmatmul.bf16.gmra.mxu0 %v2956
  %v5318 = vpop.f32.mrf.mxu0
  %v5319 = vadd.f32 %v5070, %v5318
  %v5320 = vpop.f32.mrf.mxu0
  %v5321 = vadd.f32 %v5072, %v5320
  %5322 = vmatmul.bf16.gmra.mxu0 %v2969
  %v5323 = vpop.f32.mrf.mxu0
  %v5324 = vadd.f32 %v5075, %v5323
  %v5325 = vpop.f32.mrf.mxu0
  %v5326 = vadd.f32 %v5077, %v5325
  %5327 = vmatmul.bf16.gmra.mxu0 %v2982
  %v5328 = vpop.f32.mrf.mxu0
  %v5329 = vadd.f32 %v5080, %v5328
  %v5330 = vpop.f32.mrf.mxu0
  %v5331 = vadd.f32 %v5082, %v5330
  %5332 = vmatmul.bf16.gmra.mxu0 %v2995
  %v5333 = vpop.f32.mrf.mxu0
  %v5334 = vadd.f32 %v5085, %v5333
  %v5335 = vpop.f32.mrf.mxu0
  %v5336 = vadd.f32 %v5087, %v5335
  %5337 = vmatmul.bf16.gmra.mxu0 %v3008
  %v5338 = vpop.f32.mrf.mxu0
  %v5339 = vadd.f32 %v5090, %v5338
  %v5340 = vpop.f32.mrf.mxu0
  %v5341 = vadd.f32 %v5092, %v5340
  %5342 = vmatmul.bf16.gmra.mxu0 %v3021
  %v5343 = vpop.f32.mrf.mxu0
  %v5344 = vadd.f32 %v5095, %v5343
  %v5345 = vpop.f32.mrf.mxu0
  %v5346 = vadd.f32 %v5097, %v5345
  %5347 = vmatmul.bf16.gmra.mxu0 %v3034
  %v5348 = vpop.f32.mrf.mxu0
  %v5349 = vadd.f32 %v5100, %v5348
  %v5350 = vpop.f32.mrf.mxu0
  %v5351 = vadd.f32 %v5102, %v5350
  %5352 = vmatmul.bf16.gmra.mxu0 %v3047
  %v5353 = vpop.f32.mrf.mxu0
  %v5354 = vadd.f32 %v5105, %v5353
  %v5355 = vpop.f32.mrf.mxu0
  %v5356 = vadd.f32 %v5107, %v5355
  %5357 = vmatmul.bf16.gmra.mxu0 %v3060
  %v5358 = vpop.f32.mrf.mxu0
  %v5359 = vadd.f32 %v5110, %v5358
  %v5360 = vpop.f32.mrf.mxu0
  %v5361 = vadd.f32 %v5112, %v5360
  %5362 = vmatmul.bf16.gmra.mxu0 %v3073
  %v5363 = vpop.f32.mrf.mxu0
  %v5364 = vadd.f32 %v5115, %v5363
  %v5365 = vpop.f32.mrf.mxu0
  %v5366 = vadd.f32 %v5117, %v5365
  %5367 = vmatmul.bf16.gmra.mxu0 %v3086
  %v5368 = vpop.f32.mrf.mxu0
  %v5369 = vadd.f32 %v5120, %v5368
  %v5370 = vpop.f32.mrf.mxu0
  %v5371 = vadd.f32 %v5122, %v5370
  %5372 = vmatmul.bf16.gmra.mxu0 %v3099
  %v5373 = vpop.f32.mrf.mxu0
  %v5374 = vadd.f32 %v5125, %v5373
  %v5375 = vpop.f32.mrf.mxu0
  %v5376 = vadd.f32 %v5127, %v5375
  %5377 = vmatmul.bf16.gmra.mxu0 %v3112
  %v5378 = vpop.f32.mrf.mxu0
  %v5379 = vadd.f32 %v5130, %v5378
  %v5380 = vpop.f32.mrf.mxu0
  %v5381 = vadd.f32 %v5132, %v5380
  %5382 = vmatmul.bf16.gmra.mxu0 %v3125
  %v5383 = vpop.f32.mrf.mxu0
  %v5384 = vadd.f32 %v5135, %v5383
  %v5385 = vpop.f32.mrf.mxu0
  %v5386 = vadd.f32 %v5137, %v5385
  %5387 = vmatmul.bf16.gmra.mxu0 %v3138
  %v5388 = vpop.f32.mrf.mxu0
  %v5389 = vadd.f32 %v5140, %v5388
  %v5390 = vpop.f32.mrf.mxu0
  %v5391 = vadd.f32 %v5142, %v5390
  %5392 = vmatmul.bf16.gmra.mxu0 %v3151
  %v5393 = vpop.f32.mrf.mxu0
  %v5394 = vadd.f32 %v5145, %v5393
  %v5395 = vpop.f32.mrf.mxu0
  %v5396 = vadd.f32 %v5147, %v5395
  %5397 = vmatmul.bf16.gmra.mxu0 %v3164
  %v5398 = vpop.f32.mrf.mxu0
  %v5399 = vadd.f32 %v5150, %v5398
  %v5400 = vpop.f32.mrf.mxu0
  %v5401 = vadd.f32 %v5152, %v5400
  %5402 = vmatmul.bf16.gmra.mxu0 %v3177
  %v5403 = vpop.f32.mrf.mxu0
  %v5404 = vadd.f32 %v5155, %v5403
  %v5405 = vpop.f32.mrf.mxu0
  %v5406 = vadd.f32 %v5157, %v5405
  %5407 = vmatmul.bf16.gmra.mxu0 %v3190
  %v5408 = vpop.f32.mrf.mxu0
  %v5409 = vadd.f32 %v5160, %v5408
  %v5410 = vpop.f32.mrf.mxu0
  %v5411 = vadd.f32 %v5162, %v5410
  %5412 = vmatmul.bf16.gmra.mxu0 %v3203
  %v5413 = vpop.f32.mrf.mxu0
  %v5414 = vadd.f32 %v5165, %v5413
  %v5415 = vpop.f32.mrf.mxu0
  %v5416 = vadd.f32 %v5167, %v5415
  %5417 = vmatmul.bf16.gmra.mxu0 %v3216
  %v5418 = vpop.f32.mrf.mxu0
  %v5419 = vadd.f32 %v5170, %v5418
  %v5420 = vpop.f32.mrf.mxu0
  %v5421 = vadd.f32 %v5172, %v5420
  %5422 = vmatmul.bf16.gmra.mxu0 %v3229
  %v5423 = vpop.f32.mrf.mxu0
  %v5424 = vadd.f32 %v5175, %v5423
  %v5425 = vpop.f32.mrf.mxu0
  %v5426 = vadd.f32 %v5177, %v5425
  %5427 = vmatmul.bf16.gmra.mxu0 %v3242
  %v5428 = vpop.f32.mrf.mxu0
  %v5429 = vadd.f32 %v5180, %v5428
  %v5430 = vpop.f32.mrf.mxu0
  %v5431 = vadd.f32 %v5182, %v5430
  %5432 = vmatmul.bf16.gmra.mxu0 %v3255
  %v5433 = vpop.f32.mrf.mxu0
  %v5434 = vadd.f32 %v5185, %v5433
  %v5435 = vpop.f32.mrf.mxu0
  %v5436 = vadd.f32 %v5187, %v5435
  %5437 = vmatmul.bf16.gmra.mxu0 %v3268
  %v5438 = vpop.f32.mrf.mxu0
  %v5439 = vadd.f32 %v5190, %v5438
  %v5440 = vpop.f32.mrf.mxu0
  %v5441 = vadd.f32 %v5192, %v5440
  %5442 = vmatmul.bf16.gmra.mxu0 %v3281
  %v5443 = vpop.f32.mrf.mxu0
  %v5444 = vadd.f32 %v5195, %v5443
  %v5445 = vpop.f32.mrf.mxu0
  %v5446 = vadd.f32 %v5197, %v5445
  %5447 = vmatmul.bf16.gmra.mxu0 %v3294
  %v5448 = vpop.f32.mrf.mxu0
  %v5449 = vadd.f32 %v5200, %v5448
  %v5450 = vpop.f32.mrf.mxu0
  %v5451 = vadd.f32 %v5202, %v5450
  %5452 = vmatmul.bf16.gmra.mxu0 %v3307
  %v5453 = vpop.f32.mrf.mxu0
  %v5454 = vadd.f32 %v5205, %v5453
  %v5455 = vpop.f32.mrf.mxu0
  %v5456 = vadd.f32 %v5207, %v5455
  %5457 = vmatmul.bf16.gmra.mxu0 %v3320
  %v5458 = vpop.f32.mrf.mxu0
  %v5459 = vadd.f32 %v5210, %v5458
  %v5460 = vpop.f32.mrf.mxu0
  %v5461 = vadd.f32 %v5212, %v5460
  %5462 = vmatmul.bf16.gmra.mxu0 %v3333
  %v5463 = vpop.f32.mrf.mxu0
  %v5464 = vadd.f32 %v5215, %v5463
  %v5465 = vpop.f32.mrf.mxu0
  %v5466 = vadd.f32 %v5217, %v5465
  %5467 = vmatmul.bf16.gmra.mxu0 %v3346
  %v5468 = vpop.f32.mrf.mxu0
  %v5469 = vadd.f32 %v5220, %v5468
  %v5470 = vpop.f32.mrf.mxu0
  %v5471 = vadd.f32 %v5222, %v5470
  %5472 = vmatmul.bf16.gmra.mxu0 %v3359
  %v5473 = vpop.f32.mrf.mxu0
  %v5474 = vadd.f32 %v5225, %v5473
  %v5475 = vpop.f32.mrf.mxu0
  %v5476 = vadd.f32 %v5227, %v5475
  %5477 = vmatmul.bf16.gmra.mxu0 %v3372
  %v5478 = vpop.f32.mrf.mxu0
  %v5479 = vadd.f32 %v5230, %v5478
  %v5480 = vpop.f32.mrf.mxu0
  %v5481 = vadd.f32 %v5232, %v5480
  %5482 = vmatmul.bf16.gmra.mxu0 %v3385
  %v5483 = vpop.f32.mrf.mxu0
  %v5484 = vadd.f32 %v5235, %v5483
  %v5485 = vpop.f32.mrf.mxu0
  %v5486 = vadd.f32 %v5237, %v5485
  %5487 = vmatmul.bf16.gmra.mxu0 %v3398
  %v5488 = vpop.f32.mrf.mxu0
  %v5489 = vadd.f32 %v5240, %v5488
  %v5490 = vpop.f32.mrf.mxu0
  %v5491 = vadd.f32 %v5242, %v5490
  %5492 = vmatmul.bf16.gmra.mxu0 %v3411
  %v5493 = vpop.f32.mrf.mxu0
  %v5494 = vadd.f32 %v5245, %v5493
  %v5495 = vpop.f32.mrf.mxu0
  %v5496 = vadd.f32 %v5247, %v5495
  %5497 = vmatmul.bf16.gmra.mxu0 %v3424
  %v5498 = vpop.f32.mrf.mxu0
  %v5499 = vadd.f32 %v5250, %v5498
  %v5500 = vpop.f32.mrf.mxu0
  %v5501 = vadd.f32 %v5252, %v5500
  %5502 = vdwg.mxu0
  %5503 = vmatpush.bf16.msra.mxu0 %v4442
  %5504 = vmatpush.bf16.msra.mxu0 %v4441
  %5505 = vmatpush.bf16.msra.mxu0 %v4440
  %5506 = vmatpush.bf16.msra.mxu0 %v4439
  %5507 = vmatpush.bf16.msra.mxu0 %v4438
  %5508 = vmatpush.bf16.msra.mxu0 %v4437
  %5509 = vmatpush.bf16.msra.mxu0 %v4436
  %5510 = vmatpush.bf16.msra.mxu0 %v4435
  %5511 = vmatmul.bf16.gmra.mxu0 %v2814
  %v5512 = vpop.f32.mrf.mxu0
  %v5513 = vadd.f32 %v5264, %v5512
  %v5514 = vpop.f32.mrf.mxu0
  %v5515 = vadd.f32 %v5266, %v5514
  %5516 = vmatmul.bf16.gmra.mxu0 %v2827
  %v5517 = vpop.f32.mrf.mxu0
  %v5518 = vadd.f32 %v5269, %v5517
  %v5519 = vpop.f32.mrf.mxu0
  %v5520 = vadd.f32 %v5271, %v5519
  %5521 = vmatmul.bf16.gmra.mxu0 %v2840
  %v5522 = vpop.f32.mrf.mxu0
  %v5523 = vadd.f32 %v5274, %v5522
  %v5524 = vpop.f32.mrf.mxu0
  %v5525 = vadd.f32 %v5276, %v5524
  %5526 = vmatmul.bf16.gmra.mxu0 %v2853
  %v5527 = vpop.f32.mrf.mxu0
  %v5528 = vadd.f32 %v5279, %v5527
  %v5529 = vpop.f32.mrf.mxu0
  %v5530 = vadd.f32 %v5281, %v5529
  %5531 = vmatmul.bf16.gmra.mxu0 %v2866
  %v5532 = vpop.f32.mrf.mxu0
  %v5533 = vadd.f32 %v5284, %v5532
  %v5534 = vpop.f32.mrf.mxu0
  %v5535 = vadd.f32 %v5286, %v5534
  %5536 = vmatmul.bf16.gmra.mxu0 %v2879
  %v5537 = vpop.f32.mrf.mxu0
  %v5538 = vadd.f32 %v5289, %v5537
  %v5539 = vpop.f32.mrf.mxu0
  %v5540 = vadd.f32 %v5291, %v5539
  %5541 = vmatmul.bf16.gmra.mxu0 %v2892
  %v5542 = vpop.f32.mrf.mxu0
  %v5543 = vadd.f32 %v5294, %v5542
  %v5544 = vpop.f32.mrf.mxu0
  %v5545 = vadd.f32 %v5296, %v5544
  %5546 = vmatmul.bf16.gmra.mxu0 %v2905
  %v5547 = vpop.f32.mrf.mxu0
  %v5548 = vadd.f32 %v5299, %v5547
  %v5549 = vpop.f32.mrf.mxu0
  %v5550 = vadd.f32 %v5301, %v5549
  %5551 = vmatmul.bf16.gmra.mxu0 %v2918
  %v5552 = vpop.f32.mrf.mxu0
  %v5553 = vadd.f32 %v5304, %v5552
  %v5554 = vpop.f32.mrf.mxu0
  %v5555 = vadd.f32 %v5306, %v5554
  %5556 = vmatmul.bf16.gmra.mxu0 %v2931
  %v5557 = vpop.f32.mrf.mxu0
  %v5558 = vadd.f32 %v5309, %v5557
  %v5559 = vpop.f32.mrf.mxu0
  %v5560 = vadd.f32 %v5311, %v5559
  %5561 = vmatmul.bf16.gmra.mxu0 %v2944
  %v5562 = vpop.f32.mrf.mxu0
  %v5563 = vadd.f32 %v5314, %v5562
  %v5564 = vpop.f32.mrf.mxu0
  %v5565 = vadd.f32 %v5316, %v5564
  %5566 = vmatmul.bf16.gmra.mxu0 %v2957
  %v5567 = vpop.f32.mrf.mxu0
  %v5568 = vadd.f32 %v5319, %v5567
  %v5569 = vpop.f32.mrf.mxu0
  %v5570 = vadd.f32 %v5321, %v5569
  %5571 = vmatmul.bf16.gmra.mxu0 %v2970
  %v5572 = vpop.f32.mrf.mxu0
  %v5573 = vadd.f32 %v5324, %v5572
  %v5574 = vpop.f32.mrf.mxu0
  %v5575 = vadd.f32 %v5326, %v5574
  %5576 = vmatmul.bf16.gmra.mxu0 %v2983
  %v5577 = vpop.f32.mrf.mxu0
  %v5578 = vadd.f32 %v5329, %v5577
  %v5579 = vpop.f32.mrf.mxu0
  %v5580 = vadd.f32 %v5331, %v5579
  %5581 = vmatmul.bf16.gmra.mxu0 %v2996
  %v5582 = vpop.f32.mrf.mxu0
  %v5583 = vadd.f32 %v5334, %v5582
  %v5584 = vpop.f32.mrf.mxu0
  %v5585 = vadd.f32 %v5336, %v5584
  %5586 = vmatmul.bf16.gmra.mxu0 %v3009
  %v5587 = vpop.f32.mrf.mxu0
  %v5588 = vadd.f32 %v5339, %v5587
  %v5589 = vpop.f32.mrf.mxu0
  %v5590 = vadd.f32 %v5341, %v5589
  %5591 = vmatmul.bf16.gmra.mxu0 %v3022
  %v5592 = vpop.f32.mrf.mxu0
  %v5593 = vadd.f32 %v5344, %v5592
  %v5594 = vpop.f32.mrf.mxu0
  %v5595 = vadd.f32 %v5346, %v5594
  %5596 = vmatmul.bf16.gmra.mxu0 %v3035
  %v5597 = vpop.f32.mrf.mxu0
  %v5598 = vadd.f32 %v5349, %v5597
  %v5599 = vpop.f32.mrf.mxu0
  %v5600 = vadd.f32 %v5351, %v5599
  %5601 = vmatmul.bf16.gmra.mxu0 %v3048
  %v5602 = vpop.f32.mrf.mxu0
  %v5603 = vadd.f32 %v5354, %v5602
  %v5604 = vpop.f32.mrf.mxu0
  %v5605 = vadd.f32 %v5356, %v5604
  %5606 = vmatmul.bf16.gmra.mxu0 %v3061
  %v5607 = vpop.f32.mrf.mxu0
  %v5608 = vadd.f32 %v5359, %v5607
  %v5609 = vpop.f32.mrf.mxu0
  %v5610 = vadd.f32 %v5361, %v5609
  %5611 = vmatmul.bf16.gmra.mxu0 %v3074
  %v5612 = vpop.f32.mrf.mxu0
  %v5613 = vadd.f32 %v5364, %v5612
  %v5614 = vpop.f32.mrf.mxu0
  %v5615 = vadd.f32 %v5366, %v5614
  %5616 = vmatmul.bf16.gmra.mxu0 %v3087
  %v5617 = vpop.f32.mrf.mxu0
  %v5618 = vadd.f32 %v5369, %v5617
  %v5619 = vpop.f32.mrf.mxu0
  %v5620 = vadd.f32 %v5371, %v5619
  %5621 = vmatmul.bf16.gmra.mxu0 %v3100
  %v5622 = vpop.f32.mrf.mxu0
  %v5623 = vadd.f32 %v5374, %v5622
  %v5624 = vpop.f32.mrf.mxu0
  %v5625 = vadd.f32 %v5376, %v5624
  %5626 = vmatmul.bf16.gmra.mxu0 %v3113
  %v5627 = vpop.f32.mrf.mxu0
  %v5628 = vadd.f32 %v5379, %v5627
  %v5629 = vpop.f32.mrf.mxu0
  %v5630 = vadd.f32 %v5381, %v5629
  %5631 = vmatmul.bf16.gmra.mxu0 %v3126
  %v5632 = vpop.f32.mrf.mxu0
  %v5633 = vadd.f32 %v5384, %v5632
  %v5634 = vpop.f32.mrf.mxu0
  %v5635 = vadd.f32 %v5386, %v5634
  %5636 = vmatmul.bf16.gmra.mxu0 %v3139
  %v5637 = vpop.f32.mrf.mxu0
  %v5638 = vadd.f32 %v5389, %v5637
  %v5639 = vpop.f32.mrf.mxu0
  %v5640 = vadd.f32 %v5391, %v5639
  %5641 = vmatmul.bf16.gmra.mxu0 %v3152
  %v5642 = vpop.f32.mrf.mxu0
  %v5643 = vadd.f32 %v5394, %v5642
  %v5644 = vpop.f32.mrf.mxu0
  %v5645 = vadd.f32 %v5396, %v5644
  %5646 = vmatmul.bf16.gmra.mxu0 %v3165
  %v5647 = vpop.f32.mrf.mxu0
  %v5648 = vadd.f32 %v5399, %v5647
  %v5649 = vpop.f32.mrf.mxu0
  %v5650 = vadd.f32 %v5401, %v5649
  %5651 = vmatmul.bf16.gmra.mxu0 %v3178
  %v5652 = vpop.f32.mrf.mxu0
  %v5653 = vadd.f32 %v5404, %v5652
  %v5654 = vpop.f32.mrf.mxu0
  %v5655 = vadd.f32 %v5406, %v5654
  %5656 = vmatmul.bf16.gmra.mxu0 %v3191
  %v5657 = vpop.f32.mrf.mxu0
  %v5658 = vadd.f32 %v5409, %v5657
  %v5659 = vpop.f32.mrf.mxu0
  %v5660 = vadd.f32 %v5411, %v5659
  %5661 = vmatmul.bf16.gmra.mxu0 %v3204
  %v5662 = vpop.f32.mrf.mxu0
  %v5663 = vadd.f32 %v5414, %v5662
  %v5664 = vpop.f32.mrf.mxu0
  %v5665 = vadd.f32 %v5416, %v5664
  %5666 = vmatmul.bf16.gmra.mxu0 %v3217
  %v5667 = vpop.f32.mrf.mxu0
  %v5668 = vadd.f32 %v5419, %v5667
  %v5669 = vpop.f32.mrf.mxu0
  %v5670 = vadd.f32 %v5421, %v5669
  %5671 = vmatmul.bf16.gmra.mxu0 %v3230
  %v5672 = vpop.f32.mrf.mxu0
  %v5673 = vadd.f32 %v5424, %v5672
  %v5674 = vpop.f32.mrf.mxu0
  %v5675 = vadd.f32 %v5426, %v5674
  %5676 = vmatmul.bf16.gmra.mxu0 %v3243
  %v5677 = vpop.f32.mrf.mxu0
  %v5678 = vadd.f32 %v5429, %v5677
  %v5679 = vpop.f32.mrf.mxu0
  %v5680 = vadd.f32 %v5431, %v5679
  %5681 = vmatmul.bf16.gmra.mxu0 %v3256
  %v5682 = vpop.f32.mrf.mxu0
  %v5683 = vadd.f32 %v5434, %v5682
  %v5684 = vpop.f32.mrf.mxu0
  %v5685 = vadd.f32 %v5436, %v5684
  %5686 = vmatmul.bf16.gmra.mxu0 %v3269
  %v5687 = vpop.f32.mrf.mxu0
  %v5688 = vadd.f32 %v5439, %v5687
  %v5689 = vpop.f32.mrf.mxu0
  %v5690 = vadd.f32 %v5441, %v5689
  %5691 = vmatmul.bf16.gmra.mxu0 %v3282
  %v5692 = vpop.f32.mrf.mxu0
  %v5693 = vadd.f32 %v5444, %v5692
  %v5694 = vpop.f32.mrf.mxu0
  %v5695 = vadd.f32 %v5446, %v5694
  %5696 = vmatmul.bf16.gmra.mxu0 %v3295
  %v5697 = vpop.f32.mrf.mxu0
  %v5698 = vadd.f32 %v5449, %v5697
  %v5699 = vpop.f32.mrf.mxu0
  %v5700 = vadd.f32 %v5451, %v5699
  %5701 = vmatmul.bf16.gmra.mxu0 %v3308
  %v5702 = vpop.f32.mrf.mxu0
  %v5703 = vadd.f32 %v5454, %v5702
  %v5704 = vpop.f32.mrf.mxu0
  %v5705 = vadd.f32 %v5456, %v5704
  %5706 = vmatmul.bf16.gmra.mxu0 %v3321
  %v5707 = vpop.f32.mrf.mxu0
  %v5708 = vadd.f32 %v5459, %v5707
  %v5709 = vpop.f32.mrf.mxu0
  %v5710 = vadd.f32 %v5461, %v5709
  %5711 = vmatmul.bf16.gmra.mxu0 %v3334
  %v5712 = vpop.f32.mrf.mxu0
  %v5713 = vadd.f32 %v5464, %v5712
  %v5714 = vpop.f32.mrf.mxu0
  %v5715 = vadd.f32 %v5466, %v5714
  %5716 = vmatmul.bf16.gmra.mxu0 %v3347
  %v5717 = vpop.f32.mrf.mxu0
  %v5718 = vadd.f32 %v5469, %v5717
  %v5719 = vpop.f32.mrf.mxu0
  %v5720 = vadd.f32 %v5471, %v5719
  %5721 = vmatmul.bf16.gmra.mxu0 %v3360
  %v5722 = vpop.f32.mrf.mxu0
  %v5723 = vadd.f32 %v5474, %v5722
  %v5724 = vpop.f32.mrf.mxu0
  %v5725 = vadd.f32 %v5476, %v5724
  %5726 = vmatmul.bf16.gmra.mxu0 %v3373
  %v5727 = vpop.f32.mrf.mxu0
  %v5728 = vadd.f32 %v5479, %v5727
  %v5729 = vpop.f32.mrf.mxu0
  %v5730 = vadd.f32 %v5481, %v5729
  %5731 = vmatmul.bf16.gmra.mxu0 %v3386
  %v5732 = vpop.f32.mrf.mxu0
  %v5733 = vadd.f32 %v5484, %v5732
  %v5734 = vpop.f32.mrf.mxu0
  %v5735 = vadd.f32 %v5486, %v5734
  %5736 = vmatmul.bf16.gmra.mxu0 %v3399
  %v5737 = vpop.f32.mrf.mxu0
  %v5738 = vadd.f32 %v5489, %v5737
  %v5739 = vpop.f32.mrf.mxu0
  %v5740 = vadd.f32 %v5491, %v5739
  %5741 = vmatmul.bf16.gmra.mxu0 %v3412
  %v5742 = vpop.f32.mrf.mxu0
  %v5743 = vadd.f32 %v5494, %v5742
  %v5744 = vpop.f32.mrf.mxu0
  %v5745 = vadd.f32 %v5496, %v5744
  %5746 = vmatmul.bf16.gmra.mxu0 %v3425
  %v5747 = vpop.f32.mrf.mxu0
  %v5748 = vadd.f32 %v5499, %v5747
  %v5749 = vpop.f32.mrf.mxu0
  %v5750 = vadd.f32 %v5501, %v5749
  %5751 = vdwg.mxu0
  %5752 = vmatpush.bf16.msra.mxu0 %v4450
  %5753 = vmatpush.bf16.msra.mxu0 %v4449
  %5754 = vmatpush.bf16.msra.mxu0 %v4448
  %5755 = vmatpush.bf16.msra.mxu0 %v4447
  %5756 = vmatpush.bf16.msra.mxu0 %v4446
  %5757 = vmatpush.bf16.msra.mxu0 %v4445
  %5758 = vmatpush.bf16.msra.mxu0 %v4444
  %5759 = vmatpush.bf16.msra.mxu0 %v4443
  %5760 = vmatmul.bf16.gmra.mxu0 %v2815
  %v5761 = vpop.f32.mrf.mxu0
  %v5762 = vadd.f32 %v5513, %v5761
  %v5763 = vpop.f32.mrf.mxu0
  %v5764 = vadd.f32 %v5515, %v5763
  %5765 = vmatmul.bf16.gmra.mxu0 %v2828
  %v5766 = vpop.f32.mrf.mxu0
  %v5767 = vadd.f32 %v5518, %v5766
  %v5768 = vpop.f32.mrf.mxu0
  %v5769 = vadd.f32 %v5520, %v5768
  %5770 = vmatmul.bf16.gmra.mxu0 %v2841
  %v5771 = vpop.f32.mrf.mxu0
  %v5772 = vadd.f32 %v5523, %v5771
  %v5773 = vpop.f32.mrf.mxu0
  %v5774 = vadd.f32 %v5525, %v5773
  %5775 = vmatmul.bf16.gmra.mxu0 %v2854
  %v5776 = vpop.f32.mrf.mxu0
  %v5777 = vadd.f32 %v5528, %v5776
  %v5778 = vpop.f32.mrf.mxu0
  %v5779 = vadd.f32 %v5530, %v5778
  %5780 = vmatmul.bf16.gmra.mxu0 %v2867
  %v5781 = vpop.f32.mrf.mxu0
  %v5782 = vadd.f32 %v5533, %v5781
  %v5783 = vpop.f32.mrf.mxu0
  %v5784 = vadd.f32 %v5535, %v5783
  %5785 = vmatmul.bf16.gmra.mxu0 %v2880
  %v5786 = vpop.f32.mrf.mxu0
  %v5787 = vadd.f32 %v5538, %v5786
  %v5788 = vpop.f32.mrf.mxu0
  %v5789 = vadd.f32 %v5540, %v5788
  %5790 = vmatmul.bf16.gmra.mxu0 %v2893
  %v5791 = vpop.f32.mrf.mxu0
  %v5792 = vadd.f32 %v5543, %v5791
  %v5793 = vpop.f32.mrf.mxu0
  %v5794 = vadd.f32 %v5545, %v5793
  %5795 = vmatmul.bf16.gmra.mxu0 %v2906
  %v5796 = vpop.f32.mrf.mxu0
  %v5797 = vadd.f32 %v5548, %v5796
  %v5798 = vpop.f32.mrf.mxu0
  %v5799 = vadd.f32 %v5550, %v5798
  %5800 = vmatmul.bf16.gmra.mxu0 %v2919
  %v5801 = vpop.f32.mrf.mxu0
  %v5802 = vadd.f32 %v5553, %v5801
  %v5803 = vpop.f32.mrf.mxu0
  %v5804 = vadd.f32 %v5555, %v5803
  %5805 = vmatmul.bf16.gmra.mxu0 %v2932
  %v5806 = vpop.f32.mrf.mxu0
  %v5807 = vadd.f32 %v5558, %v5806
  %v5808 = vpop.f32.mrf.mxu0
  %v5809 = vadd.f32 %v5560, %v5808
  %5810 = vmatmul.bf16.gmra.mxu0 %v2945
  %v5811 = vpop.f32.mrf.mxu0
  %v5812 = vadd.f32 %v5563, %v5811
  %v5813 = vpop.f32.mrf.mxu0
  %v5814 = vadd.f32 %v5565, %v5813
  %5815 = vmatmul.bf16.gmra.mxu0 %v2958
  %v5816 = vpop.f32.mrf.mxu0
  %v5817 = vadd.f32 %v5568, %v5816
  %v5818 = vpop.f32.mrf.mxu0
  %v5819 = vadd.f32 %v5570, %v5818
  %5820 = vmatmul.bf16.gmra.mxu0 %v2971
  %v5821 = vpop.f32.mrf.mxu0
  %v5822 = vadd.f32 %v5573, %v5821
  %v5823 = vpop.f32.mrf.mxu0
  %v5824 = vadd.f32 %v5575, %v5823
  %5825 = vmatmul.bf16.gmra.mxu0 %v2984
  %v5826 = vpop.f32.mrf.mxu0
  %v5827 = vadd.f32 %v5578, %v5826
  %v5828 = vpop.f32.mrf.mxu0
  %v5829 = vadd.f32 %v5580, %v5828
  %5830 = vmatmul.bf16.gmra.mxu0 %v2997
  %v5831 = vpop.f32.mrf.mxu0
  %v5832 = vadd.f32 %v5583, %v5831
  %v5833 = vpop.f32.mrf.mxu0
  %v5834 = vadd.f32 %v5585, %v5833
  %5835 = vmatmul.bf16.gmra.mxu0 %v3010
  %v5836 = vpop.f32.mrf.mxu0
  %v5837 = vadd.f32 %v5588, %v5836
  %v5838 = vpop.f32.mrf.mxu0
  %v5839 = vadd.f32 %v5590, %v5838
  %5840 = vmatmul.bf16.gmra.mxu0 %v3023
  %v5841 = vpop.f32.mrf.mxu0
  %v5842 = vadd.f32 %v5593, %v5841
  %v5843 = vpop.f32.mrf.mxu0
  %v5844 = vadd.f32 %v5595, %v5843
  %5845 = vmatmul.bf16.gmra.mxu0 %v3036
  %v5846 = vpop.f32.mrf.mxu0
  %v5847 = vadd.f32 %v5598, %v5846
  %v5848 = vpop.f32.mrf.mxu0
  %v5849 = vadd.f32 %v5600, %v5848
  %5850 = vmatmul.bf16.gmra.mxu0 %v3049
  %v5851 = vpop.f32.mrf.mxu0
  %v5852 = vadd.f32 %v5603, %v5851
  %v5853 = vpop.f32.mrf.mxu0
  %v5854 = vadd.f32 %v5605, %v5853
  %5855 = vmatmul.bf16.gmra.mxu0 %v3062
  %v5856 = vpop.f32.mrf.mxu0
  %v5857 = vadd.f32 %v5608, %v5856
  %v5858 = vpop.f32.mrf.mxu0
  %v5859 = vadd.f32 %v5610, %v5858
  %5860 = vmatmul.bf16.gmra.mxu0 %v3075
  %v5861 = vpop.f32.mrf.mxu0
  %v5862 = vadd.f32 %v5613, %v5861
  %v5863 = vpop.f32.mrf.mxu0
  %v5864 = vadd.f32 %v5615, %v5863
  %5865 = vmatmul.bf16.gmra.mxu0 %v3088
  %v5866 = vpop.f32.mrf.mxu0
  %v5867 = vadd.f32 %v5618, %v5866
  %v5868 = vpop.f32.mrf.mxu0
  %v5869 = vadd.f32 %v5620, %v5868
  %5870 = vmatmul.bf16.gmra.mxu0 %v3101
  %v5871 = vpop.f32.mrf.mxu0
  %v5872 = vadd.f32 %v5623, %v5871
  %v5873 = vpop.f32.mrf.mxu0
  %v5874 = vadd.f32 %v5625, %v5873
  %5875 = vmatmul.bf16.gmra.mxu0 %v3114
  %v5876 = vpop.f32.mrf.mxu0
  %v5877 = vadd.f32 %v5628, %v5876
  %v5878 = vpop.f32.mrf.mxu0
  %v5879 = vadd.f32 %v5630, %v5878
  %5880 = vmatmul.bf16.gmra.mxu0 %v3127
  %v5881 = vpop.f32.mrf.mxu0
  %v5882 = vadd.f32 %v5633, %v5881
  %v5883 = vpop.f32.mrf.mxu0
  %v5884 = vadd.f32 %v5635, %v5883
  %5885 = vmatmul.bf16.gmra.mxu0 %v3140
  %v5886 = vpop.f32.mrf.mxu0
  %v5887 = vadd.f32 %v5638, %v5886
  %v5888 = vpop.f32.mrf.mxu0
  %v5889 = vadd.f32 %v5640, %v5888
  %5890 = vmatmul.bf16.gmra.mxu0 %v3153
  %v5891 = vpop.f32.mrf.mxu0
  %v5892 = vadd.f32 %v5643, %v5891
  %v5893 = vpop.f32.mrf.mxu0
  %v5894 = vadd.f32 %v5645, %v5893
  %5895 = vmatmul.bf16.gmra.mxu0 %v3166
  %v5896 = vpop.f32.mrf.mxu0
  %v5897 = vadd.f32 %v5648, %v5896
  %v5898 = vpop.f32.mrf.mxu0
  %v5899 = vadd.f32 %v5650, %v5898
  %5900 = vmatmul.bf16.gmra.mxu0 %v3179
  %v5901 = vpop.f32.mrf.mxu0
  %v5902 = vadd.f32 %v5653, %v5901
  %v5903 = vpop.f32.mrf.mxu0
  %v5904 = vadd.f32 %v5655, %v5903
  %5905 = vmatmul.bf16.gmra.mxu0 %v3192
  %v5906 = vpop.f32.mrf.mxu0
  %v5907 = vadd.f32 %v5658, %v5906
  %v5908 = vpop.f32.mrf.mxu0
  %v5909 = vadd.f32 %v5660, %v5908
  %5910 = vmatmul.bf16.gmra.mxu0 %v3205
  %v5911 = vpop.f32.mrf.mxu0
  %v5912 = vadd.f32 %v5663, %v5911
  %v5913 = vpop.f32.mrf.mxu0
  %v5914 = vadd.f32 %v5665, %v5913
  %5915 = vmatmul.bf16.gmra.mxu0 %v3218
  %v5916 = vpop.f32.mrf.mxu0
  %v5917 = vadd.f32 %v5668, %v5916
  %v5918 = vpop.f32.mrf.mxu0
  %v5919 = vadd.f32 %v5670, %v5918
  %5920 = vmatmul.bf16.gmra.mxu0 %v3231
  %v5921 = vpop.f32.mrf.mxu0
  %v5922 = vadd.f32 %v5673, %v5921
  %v5923 = vpop.f32.mrf.mxu0
  %v5924 = vadd.f32 %v5675, %v5923
  %5925 = vmatmul.bf16.gmra.mxu0 %v3244
  %v5926 = vpop.f32.mrf.mxu0
  %v5927 = vadd.f32 %v5678, %v5926
  %v5928 = vpop.f32.mrf.mxu0
  %v5929 = vadd.f32 %v5680, %v5928
  %5930 = vmatmul.bf16.gmra.mxu0 %v3257
  %v5931 = vpop.f32.mrf.mxu0
  %v5932 = vadd.f32 %v5683, %v5931
  %v5933 = vpop.f32.mrf.mxu0
  %v5934 = vadd.f32 %v5685, %v5933
  %5935 = vmatmul.bf16.gmra.mxu0 %v3270
  %v5936 = vpop.f32.mrf.mxu0
  %v5937 = vadd.f32 %v5688, %v5936
  %v5938 = vpop.f32.mrf.mxu0
  %v5939 = vadd.f32 %v5690, %v5938
  %5940 = vmatmul.bf16.gmra.mxu0 %v3283
  %v5941 = vpop.f32.mrf.mxu0
  %v5942 = vadd.f32 %v5693, %v5941
  %v5943 = vpop.f32.mrf.mxu0
  %v5944 = vadd.f32 %v5695, %v5943
  %5945 = vmatmul.bf16.gmra.mxu0 %v3296
  %v5946 = vpop.f32.mrf.mxu0
  %v5947 = vadd.f32 %v5698, %v5946
  %v5948 = vpop.f32.mrf.mxu0
  %v5949 = vadd.f32 %v5700, %v5948
  %5950 = vmatmul.bf16.gmra.mxu0 %v3309
  %v5951 = vpop.f32.mrf.mxu0
  %v5952 = vadd.f32 %v5703, %v5951
  %v5953 = vpop.f32.mrf.mxu0
  %v5954 = vadd.f32 %v5705, %v5953
  %5955 = vmatmul.bf16.gmra.mxu0 %v3322
  %v5956 = vpop.f32.mrf.mxu0
  %v5957 = vadd.f32 %v5708, %v5956
  %v5958 = vpop.f32.mrf.mxu0
  %v5959 = vadd.f32 %v5710, %v5958
  %5960 = vmatmul.bf16.gmra.mxu0 %v3335
  %v5961 = vpop.f32.mrf.mxu0
  %v5962 = vadd.f32 %v5713, %v5961
  %v5963 = vpop.f32.mrf.mxu0
  %v5964 = vadd.f32 %v5715, %v5963
  %5965 = vmatmul.bf16.gmra.mxu0 %v3348
  %v5966 = vpop.f32.mrf.mxu0
  %v5967 = vadd.f32 %v5718, %v5966
  %v5968 = vpop.f32.mrf.mxu0
  %v5969 = vadd.f32 %v5720, %v5968
  %5970 = vmatmul.bf16.gmra.mxu0 %v3361
  %v5971 = vpop.f32.mrf.mxu0
  %v5972 = vadd.f32 %v5723, %v5971
  %v5973 = vpop.f32.mrf.mxu0
  %v5974 = vadd.f32 %v5725, %v5973
  %5975 = vmatmul.bf16.gmra.mxu0 %v3374
  %v5976 = vpop.f32.mrf.mxu0
  %v5977 = vadd.f32 %v5728, %v5976
  %v5978 = vpop.f32.mrf.mxu0
  %v5979 = vadd.f32 %v5730, %v5978
  %5980 = vmatmul.bf16.gmra.mxu0 %v3387
  %v5981 = vpop.f32.mrf.mxu0
  %v5982 = vadd.f32 %v5733, %v5981
  %v5983 = vpop.f32.mrf.mxu0
  %v5984 = vadd.f32 %v5735, %v5983
  %5985 = vmatmul.bf16.gmra.mxu0 %v3400
  %v5986 = vpop.f32.mrf.mxu0
  %v5987 = vadd.f32 %v5738, %v5986
  %v5988 = vpop.f32.mrf.mxu0
  %v5989 = vadd.f32 %v5740, %v5988
  %5990 = vmatmul.bf16.gmra.mxu0 %v3413
  %v5991 = vpop.f32.mrf.mxu0
  %v5992 = vadd.f32 %v5743, %v5991
  %v5993 = vpop.f32.mrf.mxu0
  %v5994 = vadd.f32 %v5745, %v5993
  %5995 = vmatmul.bf16.gmra.mxu0 %v3426
  %v5996 = vpop.f32.mrf.mxu0
  %v5997 = vadd.f32 %v5748, %v5996
  %v5998 = vpop.f32.mrf.mxu0
  %v5999 = vadd.f32 %v5750, %v5998
  %6000 = vdwg.mxu0
  %6001 = vmatpush.bf16.msra.mxu0 %v4458
  %6002 = vmatpush.bf16.msra.mxu0 %v4457
  %6003 = vmatpush.bf16.msra.mxu0 %v4456
  %6004 = vmatpush.bf16.msra.mxu0 %v4455
  %6005 = vmatpush.bf16.msra.mxu0 %v4454
  %6006 = vmatpush.bf16.msra.mxu0 %v4453
  %6007 = vmatpush.bf16.msra.mxu0 %v4452
  %6008 = vmatpush.bf16.msra.mxu0 %v4451
  %6009 = vmatmul.bf16.gmra.mxu0 %v2816
  %v6010 = vpop.f32.mrf.mxu0
  %v6011 = vadd.f32 %v5762, %v6010
  %v6012 = vpop.f32.mrf.mxu0
  %v6013 = vadd.f32 %v5764, %v6012
  %6014 = vmatmul.bf16.gmra.mxu0 %v2829
  %v6015 = vpop.f32.mrf.mxu0
  %v6016 = vadd.f32 %v5767, %v6015
  %v6017 = vpop.f32.mrf.mxu0
  %v6018 = vadd.f32 %v5769, %v6017
  %6019 = vmatmul.bf16.gmra.mxu0 %v2842
  %v6020 = vpop.f32.mrf.mxu0
  %v6021 = vadd.f32 %v5772, %v6020
  %v6022 = vpop.f32.mrf.mxu0
  %v6023 = vadd.f32 %v5774, %v6022
  %6024 = vmatmul.bf16.gmra.mxu0 %v2855
  %v6025 = vpop.f32.mrf.mxu0
  %v6026 = vadd.f32 %v5777, %v6025
  %v6027 = vpop.f32.mrf.mxu0
  %v6028 = vadd.f32 %v5779, %v6027
  %6029 = vmatmul.bf16.gmra.mxu0 %v2868
  %v6030 = vpop.f32.mrf.mxu0
  %v6031 = vadd.f32 %v5782, %v6030
  %v6032 = vpop.f32.mrf.mxu0
  %v6033 = vadd.f32 %v5784, %v6032
  %6034 = vmatmul.bf16.gmra.mxu0 %v2881
  %v6035 = vpop.f32.mrf.mxu0
  %v6036 = vadd.f32 %v5787, %v6035
  %v6037 = vpop.f32.mrf.mxu0
  %v6038 = vadd.f32 %v5789, %v6037
  %6039 = vmatmul.bf16.gmra.mxu0 %v2894
  %v6040 = vpop.f32.mrf.mxu0
  %v6041 = vadd.f32 %v5792, %v6040
  %v6042 = vpop.f32.mrf.mxu0
  %v6043 = vadd.f32 %v5794, %v6042
  %6044 = vmatmul.bf16.gmra.mxu0 %v2907
  %v6045 = vpop.f32.mrf.mxu0
  %v6046 = vadd.f32 %v5797, %v6045
  %v6047 = vpop.f32.mrf.mxu0
  %v6048 = vadd.f32 %v5799, %v6047
  %6049 = vmatmul.bf16.gmra.mxu0 %v2920
  %v6050 = vpop.f32.mrf.mxu0
  %v6051 = vadd.f32 %v5802, %v6050
  %v6052 = vpop.f32.mrf.mxu0
  %v6053 = vadd.f32 %v5804, %v6052
  %6054 = vmatmul.bf16.gmra.mxu0 %v2933
  %v6055 = vpop.f32.mrf.mxu0
  %v6056 = vadd.f32 %v5807, %v6055
  %v6057 = vpop.f32.mrf.mxu0
  %v6058 = vadd.f32 %v5809, %v6057
  %6059 = vmatmul.bf16.gmra.mxu0 %v2946
  %v6060 = vpop.f32.mrf.mxu0
  %v6061 = vadd.f32 %v5812, %v6060
  %v6062 = vpop.f32.mrf.mxu0
  %v6063 = vadd.f32 %v5814, %v6062
  %6064 = vmatmul.bf16.gmra.mxu0 %v2959
  %v6065 = vpop.f32.mrf.mxu0
  %v6066 = vadd.f32 %v5817, %v6065
  %v6067 = vpop.f32.mrf.mxu0
  %v6068 = vadd.f32 %v5819, %v6067
  %6069 = vmatmul.bf16.gmra.mxu0 %v2972
  %v6070 = vpop.f32.mrf.mxu0
  %v6071 = vadd.f32 %v5822, %v6070
  %v6072 = vpop.f32.mrf.mxu0
  %v6073 = vadd.f32 %v5824, %v6072
  %6074 = vmatmul.bf16.gmra.mxu0 %v2985
  %v6075 = vpop.f32.mrf.mxu0
  %v6076 = vadd.f32 %v5827, %v6075
  %v6077 = vpop.f32.mrf.mxu0
  %v6078 = vadd.f32 %v5829, %v6077
  %6079 = vmatmul.bf16.gmra.mxu0 %v2998
  %v6080 = vpop.f32.mrf.mxu0
  %v6081 = vadd.f32 %v5832, %v6080
  %v6082 = vpop.f32.mrf.mxu0
  %v6083 = vadd.f32 %v5834, %v6082
  %6084 = vmatmul.bf16.gmra.mxu0 %v3011
  %v6085 = vpop.f32.mrf.mxu0
  %v6086 = vadd.f32 %v5837, %v6085
  %v6087 = vpop.f32.mrf.mxu0
  %v6088 = vadd.f32 %v5839, %v6087
  %6089 = vmatmul.bf16.gmra.mxu0 %v3024
  %v6090 = vpop.f32.mrf.mxu0
  %v6091 = vadd.f32 %v5842, %v6090
  %v6092 = vpop.f32.mrf.mxu0
  %v6093 = vadd.f32 %v5844, %v6092
  %6094 = vmatmul.bf16.gmra.mxu0 %v3037
  %v6095 = vpop.f32.mrf.mxu0
  %v6096 = vadd.f32 %v5847, %v6095
  %v6097 = vpop.f32.mrf.mxu0
  %v6098 = vadd.f32 %v5849, %v6097
  %6099 = vmatmul.bf16.gmra.mxu0 %v3050
  %v6100 = vpop.f32.mrf.mxu0
  %v6101 = vadd.f32 %v5852, %v6100
  %v6102 = vpop.f32.mrf.mxu0
  %v6103 = vadd.f32 %v5854, %v6102
  %6104 = vmatmul.bf16.gmra.mxu0 %v3063
  %v6105 = vpop.f32.mrf.mxu0
  %v6106 = vadd.f32 %v5857, %v6105
  %v6107 = vpop.f32.mrf.mxu0
  %v6108 = vadd.f32 %v5859, %v6107
  %6109 = vmatmul.bf16.gmra.mxu0 %v3076
  %v6110 = vpop.f32.mrf.mxu0
  %v6111 = vadd.f32 %v5862, %v6110
  %v6112 = vpop.f32.mrf.mxu0
  %v6113 = vadd.f32 %v5864, %v6112
  %6114 = vmatmul.bf16.gmra.mxu0 %v3089
  %v6115 = vpop.f32.mrf.mxu0
  %v6116 = vadd.f32 %v5867, %v6115
  %v6117 = vpop.f32.mrf.mxu0
  %v6118 = vadd.f32 %v5869, %v6117
  %6119 = vmatmul.bf16.gmra.mxu0 %v3102
  %v6120 = vpop.f32.mrf.mxu0
  %v6121 = vadd.f32 %v5872, %v6120
  %v6122 = vpop.f32.mrf.mxu0
  %v6123 = vadd.f32 %v5874, %v6122
  %6124 = vmatmul.bf16.gmra.mxu0 %v3115
  %v6125 = vpop.f32.mrf.mxu0
  %v6126 = vadd.f32 %v5877, %v6125
  %v6127 = vpop.f32.mrf.mxu0
  %v6128 = vadd.f32 %v5879, %v6127
  %6129 = vmatmul.bf16.gmra.mxu0 %v3128
  %v6130 = vpop.f32.mrf.mxu0
  %v6131 = vadd.f32 %v5882, %v6130
  %v6132 = vpop.f32.mrf.mxu0
  %v6133 = vadd.f32 %v5884, %v6132
  %6134 = vmatmul.bf16.gmra.mxu0 %v3141
  %v6135 = vpop.f32.mrf.mxu0
  %v6136 = vadd.f32 %v5887, %v6135
  %v6137 = vpop.f32.mrf.mxu0
  %v6138 = vadd.f32 %v5889, %v6137
  %6139 = vmatmul.bf16.gmra.mxu0 %v3154
  %v6140 = vpop.f32.mrf.mxu0
  %v6141 = vadd.f32 %v5892, %v6140
  %v6142 = vpop.f32.mrf.mxu0
  %v6143 = vadd.f32 %v5894, %v6142
  %6144 = vmatmul.bf16.gmra.mxu0 %v3167
  %v6145 = vpop.f32.mrf.mxu0
  %v6146 = vadd.f32 %v5897, %v6145
  %v6147 = vpop.f32.mrf.mxu0
  %v6148 = vadd.f32 %v5899, %v6147
  %6149 = vmatmul.bf16.gmra.mxu0 %v3180
  %v6150 = vpop.f32.mrf.mxu0
  %v6151 = vadd.f32 %v5902, %v6150
  %v6152 = vpop.f32.mrf.mxu0
  %v6153 = vadd.f32 %v5904, %v6152
  %6154 = vmatmul.bf16.gmra.mxu0 %v3193
  %v6155 = vpop.f32.mrf.mxu0
  %v6156 = vadd.f32 %v5907, %v6155
  %v6157 = vpop.f32.mrf.mxu0
  %v6158 = vadd.f32 %v5909, %v6157
  %6159 = vmatmul.bf16.gmra.mxu0 %v3206
  %v6160 = vpop.f32.mrf.mxu0
  %v6161 = vadd.f32 %v5912, %v6160
  %v6162 = vpop.f32.mrf.mxu0
  %v6163 = vadd.f32 %v5914, %v6162
  %6164 = vmatmul.bf16.gmra.mxu0 %v3219
  %v6165 = vpop.f32.mrf.mxu0
  %v6166 = vadd.f32 %v5917, %v6165
  %v6167 = vpop.f32.mrf.mxu0
  %v6168 = vadd.f32 %v5919, %v6167
  %6169 = vmatmul.bf16.gmra.mxu0 %v3232
  %v6170 = vpop.f32.mrf.mxu0
  %v6171 = vadd.f32 %v5922, %v6170
  %v6172 = vpop.f32.mrf.mxu0
  %v6173 = vadd.f32 %v5924, %v6172
  %6174 = vmatmul.bf16.gmra.mxu0 %v3245
  %v6175 = vpop.f32.mrf.mxu0
  %v6176 = vadd.f32 %v5927, %v6175
  %v6177 = vpop.f32.mrf.mxu0
  %v6178 = vadd.f32 %v5929, %v6177
  %6179 = vmatmul.bf16.gmra.mxu0 %v3258
  %v6180 = vpop.f32.mrf.mxu0
  %v6181 = vadd.f32 %v5932, %v6180
  %v6182 = vpop.f32.mrf.mxu0
  %v6183 = vadd.f32 %v5934, %v6182
  %6184 = vmatmul.bf16.gmra.mxu0 %v3271
  %v6185 = vpop.f32.mrf.mxu0
  %v6186 = vadd.f32 %v5937, %v6185
  %v6187 = vpop.f32.mrf.mxu0
  %v6188 = vadd.f32 %v5939, %v6187
  %6189 = vmatmul.bf16.gmra.mxu0 %v3284
  %v6190 = vpop.f32.mrf.mxu0
  %v6191 = vadd.f32 %v5942, %v6190
  %v6192 = vpop.f32.mrf.mxu0
  %v6193 = vadd.f32 %v5944, %v6192
  %6194 = vmatmul.bf16.gmra.mxu0 %v3297
  %v6195 = vpop.f32.mrf.mxu0
  %v6196 = vadd.f32 %v5947, %v6195
  %v6197 = vpop.f32.mrf.mxu0
  %v6198 = vadd.f32 %v5949, %v6197
  %6199 = vmatmul.bf16.gmra.mxu0 %v3310
  %v6200 = vpop.f32.mrf.mxu0
  %v6201 = vadd.f32 %v5952, %v6200
  %v6202 = vpop.f32.mrf.mxu0
  %v6203 = vadd.f32 %v5954, %v6202
  %6204 = vmatmul.bf16.gmra.mxu0 %v3323
  %v6205 = vpop.f32.mrf.mxu0
  %v6206 = vadd.f32 %v5957, %v6205
  %v6207 = vpop.f32.mrf.mxu0
  %v6208 = vadd.f32 %v5959, %v6207
  %6209 = vmatmul.bf16.gmra.mxu0 %v3336
  %v6210 = vpop.f32.mrf.mxu0
  %v6211 = vadd.f32 %v5962, %v6210
  %v6212 = vpop.f32.mrf.mxu0
  %v6213 = vadd.f32 %v5964, %v6212
  %6214 = vmatmul.bf16.gmra.mxu0 %v3349
  %v6215 = vpop.f32.mrf.mxu0
  %v6216 = vadd.f32 %v5967, %v6215
  %v6217 = vpop.f32.mrf.mxu0
  %v6218 = vadd.f32 %v5969, %v6217
  %6219 = vmatmul.bf16.gmra.mxu0 %v3362
  %v6220 = vpop.f32.mrf.mxu0
  %v6221 = vadd.f32 %v5972, %v6220
  %v6222 = vpop.f32.mrf.mxu0
  %v6223 = vadd.f32 %v5974, %v6222
  %6224 = vmatmul.bf16.gmra.mxu0 %v3375
  %v6225 = vpop.f32.mrf.mxu0
  %v6226 = vadd.f32 %v5977, %v6225
  %v6227 = vpop.f32.mrf.mxu0
  %v6228 = vadd.f32 %v5979, %v6227
  %6229 = vmatmul.bf16.gmra.mxu0 %v3388
  %v6230 = vpop.f32.mrf.mxu0
  %v6231 = vadd.f32 %v5982, %v6230
  %v6232 = vpop.f32.mrf.mxu0
  %v6233 = vadd.f32 %v5984, %v6232
  %6234 = vmatmul.bf16.gmra.mxu0 %v3401
  %v6235 = vpop.f32.mrf.mxu0
  %v6236 = vadd.f32 %v5987, %v6235
  %v6237 = vpop.f32.mrf.mxu0
  %v6238 = vadd.f32 %v5989, %v6237
  %6239 = vmatmul.bf16.gmra.mxu0 %v3414
  %v6240 = vpop.f32.mrf.mxu0
  %v6241 = vadd.f32 %v5992, %v6240
  %v6242 = vpop.f32.mrf.mxu0
  %v6243 = vadd.f32 %v5994, %v6242
  %6244 = vmatmul.bf16.gmra.mxu0 %v3427
  %v6245 = vpop.f32.mrf.mxu0
  %v6246 = vadd.f32 %v5997, %v6245
  %v6247 = vpop.f32.mrf.mxu0
  %v6248 = vadd.f32 %v5999, %v6247
  %6249 = vdwg.mxu0
  %6250 = vmatpush.bf16.msra.mxu0 %v4466
  %6251 = vmatpush.bf16.msra.mxu0 %v4465
  %6252 = vmatpush.bf16.msra.mxu0 %v4464
  %6253 = vmatpush.bf16.msra.mxu0 %v4463
  %6254 = vmatpush.bf16.msra.mxu0 %v4462
  %6255 = vmatpush.bf16.msra.mxu0 %v4461
  %6256 = vmatpush.bf16.msra.mxu0 %v4460
  %6257 = vmatpush.bf16.msra.mxu0 %v4459
  %6258 = vmatmul.bf16.gmra.mxu0 %v2817
  %v6259 = vpop.f32.mrf.mxu0
  %v6260 = vadd.f32 %v6011, %v6259
  %v6261 = vpop.f32.mrf.mxu0
  %v6262 = vadd.f32 %v6013, %v6261
  %6263 = vmatmul.bf16.gmra.mxu0 %v2830
  %v6264 = vpop.f32.mrf.mxu0
  %v6265 = vadd.f32 %v6016, %v6264
  %v6266 = vpop.f32.mrf.mxu0
  %v6267 = vadd.f32 %v6018, %v6266
  %6268 = vmatmul.bf16.gmra.mxu0 %v2843
  %v6269 = vpop.f32.mrf.mxu0
  %v6270 = vadd.f32 %v6021, %v6269
  %v6271 = vpop.f32.mrf.mxu0
  %v6272 = vadd.f32 %v6023, %v6271
  %6273 = vmatmul.bf16.gmra.mxu0 %v2856
  %v6274 = vpop.f32.mrf.mxu0
  %v6275 = vadd.f32 %v6026, %v6274
  %v6276 = vpop.f32.mrf.mxu0
  %v6277 = vadd.f32 %v6028, %v6276
  %6278 = vmatmul.bf16.gmra.mxu0 %v2869
  %v6279 = vpop.f32.mrf.mxu0
  %v6280 = vadd.f32 %v6031, %v6279
  %v6281 = vpop.f32.mrf.mxu0
  %v6282 = vadd.f32 %v6033, %v6281
  %6283 = vmatmul.bf16.gmra.mxu0 %v2882
  %v6284 = vpop.f32.mrf.mxu0
  %v6285 = vadd.f32 %v6036, %v6284
  %v6286 = vpop.f32.mrf.mxu0
  %v6287 = vadd.f32 %v6038, %v6286
  %6288 = vmatmul.bf16.gmra.mxu0 %v2895
  %v6289 = vpop.f32.mrf.mxu0
  %v6290 = vadd.f32 %v6041, %v6289
  %v6291 = vpop.f32.mrf.mxu0
  %v6292 = vadd.f32 %v6043, %v6291
  %6293 = vmatmul.bf16.gmra.mxu0 %v2908
  %v6294 = vpop.f32.mrf.mxu0
  %v6295 = vadd.f32 %v6046, %v6294
  %v6296 = vpop.f32.mrf.mxu0
  %v6297 = vadd.f32 %v6048, %v6296
  %6298 = vmatmul.bf16.gmra.mxu0 %v2921
  %v6299 = vpop.f32.mrf.mxu0
  %v6300 = vadd.f32 %v6051, %v6299
  %v6301 = vpop.f32.mrf.mxu0
  %v6302 = vadd.f32 %v6053, %v6301
  %6303 = vmatmul.bf16.gmra.mxu0 %v2934
  %v6304 = vpop.f32.mrf.mxu0
  %v6305 = vadd.f32 %v6056, %v6304
  %v6306 = vpop.f32.mrf.mxu0
  %v6307 = vadd.f32 %v6058, %v6306
  %6308 = vmatmul.bf16.gmra.mxu0 %v2947
  %v6309 = vpop.f32.mrf.mxu0
  %v6310 = vadd.f32 %v6061, %v6309
  %v6311 = vpop.f32.mrf.mxu0
  %v6312 = vadd.f32 %v6063, %v6311
  %6313 = vmatmul.bf16.gmra.mxu0 %v2960
  %v6314 = vpop.f32.mrf.mxu0
  %v6315 = vadd.f32 %v6066, %v6314
  %v6316 = vpop.f32.mrf.mxu0
  %v6317 = vadd.f32 %v6068, %v6316
  %6318 = vmatmul.bf16.gmra.mxu0 %v2973
  %v6319 = vpop.f32.mrf.mxu0
  %v6320 = vadd.f32 %v6071, %v6319
  %v6321 = vpop.f32.mrf.mxu0
  %v6322 = vadd.f32 %v6073, %v6321
  %6323 = vmatmul.bf16.gmra.mxu0 %v2986
  %v6324 = vpop.f32.mrf.mxu0
  %v6325 = vadd.f32 %v6076, %v6324
  %v6326 = vpop.f32.mrf.mxu0
  %v6327 = vadd.f32 %v6078, %v6326
  %6328 = vmatmul.bf16.gmra.mxu0 %v2999
  %v6329 = vpop.f32.mrf.mxu0
  %v6330 = vadd.f32 %v6081, %v6329
  %v6331 = vpop.f32.mrf.mxu0
  %v6332 = vadd.f32 %v6083, %v6331
  %6333 = vmatmul.bf16.gmra.mxu0 %v3012
  %v6334 = vpop.f32.mrf.mxu0
  %v6335 = vadd.f32 %v6086, %v6334
  %v6336 = vpop.f32.mrf.mxu0
  %v6337 = vadd.f32 %v6088, %v6336
  %6338 = vmatmul.bf16.gmra.mxu0 %v3025
  %v6339 = vpop.f32.mrf.mxu0
  %v6340 = vadd.f32 %v6091, %v6339
  %v6341 = vpop.f32.mrf.mxu0
  %v6342 = vadd.f32 %v6093, %v6341
  %6343 = vmatmul.bf16.gmra.mxu0 %v3038
  %v6344 = vpop.f32.mrf.mxu0
  %v6345 = vadd.f32 %v6096, %v6344
  %v6346 = vpop.f32.mrf.mxu0
  %v6347 = vadd.f32 %v6098, %v6346
  %6348 = vmatmul.bf16.gmra.mxu0 %v3051
  %v6349 = vpop.f32.mrf.mxu0
  %v6350 = vadd.f32 %v6101, %v6349
  %v6351 = vpop.f32.mrf.mxu0
  %v6352 = vadd.f32 %v6103, %v6351
  %6353 = vmatmul.bf16.gmra.mxu0 %v3064
  %v6354 = vpop.f32.mrf.mxu0
  %v6355 = vadd.f32 %v6106, %v6354
  %v6356 = vpop.f32.mrf.mxu0
  %v6357 = vadd.f32 %v6108, %v6356
  %6358 = vmatmul.bf16.gmra.mxu0 %v3077
  %v6359 = vpop.f32.mrf.mxu0
  %v6360 = vadd.f32 %v6111, %v6359
  %v6361 = vpop.f32.mrf.mxu0
  %v6362 = vadd.f32 %v6113, %v6361
  %6363 = vmatmul.bf16.gmra.mxu0 %v3090
  %v6364 = vpop.f32.mrf.mxu0
  %v6365 = vadd.f32 %v6116, %v6364
  %v6366 = vpop.f32.mrf.mxu0
  %v6367 = vadd.f32 %v6118, %v6366
  %6368 = vmatmul.bf16.gmra.mxu0 %v3103
  %v6369 = vpop.f32.mrf.mxu0
  %v6370 = vadd.f32 %v6121, %v6369
  %v6371 = vpop.f32.mrf.mxu0
  %v6372 = vadd.f32 %v6123, %v6371
  %6373 = vmatmul.bf16.gmra.mxu0 %v3116
  %v6374 = vpop.f32.mrf.mxu0
  %v6375 = vadd.f32 %v6126, %v6374
  %v6376 = vpop.f32.mrf.mxu0
  %v6377 = vadd.f32 %v6128, %v6376
  %6378 = vmatmul.bf16.gmra.mxu0 %v3129
  %v6379 = vpop.f32.mrf.mxu0
  %v6380 = vadd.f32 %v6131, %v6379
  %v6381 = vpop.f32.mrf.mxu0
  %v6382 = vadd.f32 %v6133, %v6381
  %6383 = vmatmul.bf16.gmra.mxu0 %v3142
  %v6384 = vpop.f32.mrf.mxu0
  %v6385 = vadd.f32 %v6136, %v6384
  %v6386 = vpop.f32.mrf.mxu0
  %v6387 = vadd.f32 %v6138, %v6386
  %6388 = vmatmul.bf16.gmra.mxu0 %v3155
  %v6389 = vpop.f32.mrf.mxu0
  %v6390 = vadd.f32 %v6141, %v6389
  %v6391 = vpop.f32.mrf.mxu0
  %v6392 = vadd.f32 %v6143, %v6391
  %6393 = vmatmul.bf16.gmra.mxu0 %v3168
  %v6394 = vpop.f32.mrf.mxu0
  %v6395 = vadd.f32 %v6146, %v6394
  %v6396 = vpop.f32.mrf.mxu0
  %v6397 = vadd.f32 %v6148, %v6396
  %6398 = vmatmul.bf16.gmra.mxu0 %v3181
  %v6399 = vpop.f32.mrf.mxu0
  %v6400 = vadd.f32 %v6151, %v6399
  %v6401 = vpop.f32.mrf.mxu0
  %v6402 = vadd.f32 %v6153, %v6401
  %6403 = vmatmul.bf16.gmra.mxu0 %v3194
  %v6404 = vpop.f32.mrf.mxu0
  %v6405 = vadd.f32 %v6156, %v6404
  %v6406 = vpop.f32.mrf.mxu0
  %v6407 = vadd.f32 %v6158, %v6406
  %6408 = vmatmul.bf16.gmra.mxu0 %v3207
  %v6409 = vpop.f32.mrf.mxu0
  %v6410 = vadd.f32 %v6161, %v6409
  %v6411 = vpop.f32.mrf.mxu0
  %v6412 = vadd.f32 %v6163, %v6411
  %6413 = vmatmul.bf16.gmra.mxu0 %v3220
  %v6414 = vpop.f32.mrf.mxu0
  %v6415 = vadd.f32 %v6166, %v6414
  %v6416 = vpop.f32.mrf.mxu0
  %v6417 = vadd.f32 %v6168, %v6416
  %6418 = vmatmul.bf16.gmra.mxu0 %v3233
  %v6419 = vpop.f32.mrf.mxu0
  %v6420 = vadd.f32 %v6171, %v6419
  %v6421 = vpop.f32.mrf.mxu0
  %v6422 = vadd.f32 %v6173, %v6421
  %6423 = vmatmul.bf16.gmra.mxu0 %v3246
  %v6424 = vpop.f32.mrf.mxu0
  %v6425 = vadd.f32 %v6176, %v6424
  %v6426 = vpop.f32.mrf.mxu0
  %v6427 = vadd.f32 %v6178, %v6426
  %6428 = vmatmul.bf16.gmra.mxu0 %v3259
  %v6429 = vpop.f32.mrf.mxu0
  %v6430 = vadd.f32 %v6181, %v6429
  %v6431 = vpop.f32.mrf.mxu0
  %v6432 = vadd.f32 %v6183, %v6431
  %6433 = vmatmul.bf16.gmra.mxu0 %v3272
  %v6434 = vpop.f32.mrf.mxu0
  %v6435 = vadd.f32 %v6186, %v6434
  %v6436 = vpop.f32.mrf.mxu0
  %v6437 = vadd.f32 %v6188, %v6436
  %6438 = vmatmul.bf16.gmra.mxu0 %v3285
  %v6439 = vpop.f32.mrf.mxu0
  %v6440 = vadd.f32 %v6191, %v6439
  %v6441 = vpop.f32.mrf.mxu0
  %v6442 = vadd.f32 %v6193, %v6441
  %6443 = vmatmul.bf16.gmra.mxu0 %v3298
  %v6444 = vpop.f32.mrf.mxu0
  %v6445 = vadd.f32 %v6196, %v6444
  %v6446 = vpop.f32.mrf.mxu0
  %v6447 = vadd.f32 %v6198, %v6446
  %6448 = vmatmul.bf16.gmra.mxu0 %v3311
  %v6449 = vpop.f32.mrf.mxu0
  %v6450 = vadd.f32 %v6201, %v6449
  %v6451 = vpop.f32.mrf.mxu0
  %v6452 = vadd.f32 %v6203, %v6451
  %6453 = vmatmul.bf16.gmra.mxu0 %v3324
  %v6454 = vpop.f32.mrf.mxu0
  %v6455 = vadd.f32 %v6206, %v6454
  %v6456 = vpop.f32.mrf.mxu0
  %v6457 = vadd.f32 %v6208, %v6456
  %6458 = vmatmul.bf16.gmra.mxu0 %v3337
  %v6459 = vpop.f32.mrf.mxu0
  %v6460 = vadd.f32 %v6211, %v6459
  %v6461 = vpop.f32.mrf.mxu0
  %v6462 = vadd.f32 %v6213, %v6461
  %6463 = vmatmul.bf16.gmra.mxu0 %v3350
  %v6464 = vpop.f32.mrf.mxu0
  %v6465 = vadd.f32 %v6216, %v6464
  %v6466 = vpop.f32.mrf.mxu0
  %v6467 = vadd.f32 %v6218, %v6466
  %6468 = vmatmul.bf16.gmra.mxu0 %v3363
  %v6469 = vpop.f32.mrf.mxu0
  %v6470 = vadd.f32 %v6221, %v6469
  %v6471 = vpop.f32.mrf.mxu0
  %v6472 = vadd.f32 %v6223, %v6471
  %6473 = vmatmul.bf16.gmra.mxu0 %v3376
  %v6474 = vpop.f32.mrf.mxu0
  %v6475 = vadd.f32 %v6226, %v6474
  %v6476 = vpop.f32.mrf.mxu0
  %v6477 = vadd.f32 %v6228, %v6476
  %6478 = vmatmul.bf16.gmra.mxu0 %v3389
  %v6479 = vpop.f32.mrf.mxu0
  %v6480 = vadd.f32 %v6231, %v6479
  %v6481 = vpop.f32.mrf.mxu0
  %v6482 = vadd.f32 %v6233, %v6481
  %6483 = vmatmul.bf16.gmra.mxu0 %v3402
  %v6484 = vpop.f32.mrf.mxu0
  %v6485 = vadd.f32 %v6236, %v6484
  %v6486 = vpop.f32.mrf.mxu0
  %v6487 = vadd.f32 %v6238, %v6486
  %6488 = vmatmul.bf16.gmra.mxu0 %v3415
  %v6489 = vpop.f32.mrf.mxu0
  %v6490 = vadd.f32 %v6241, %v6489
  %v6491 = vpop.f32.mrf.mxu0
  %v6492 = vadd.f32 %v6243, %v6491
  %6493 = vmatmul.bf16.gmra.mxu0 %v3428
  %v6494 = vpop.f32.mrf.mxu0
  %v6495 = vadd.f32 %v6246, %v6494
  %v6496 = vpop.f32.mrf.mxu0
  %v6497 = vadd.f32 %v6248, %v6496
  %6498 = vdwg.mxu0
  %6499 = vmatpush.bf16.msra.mxu0 %v4474
  %6500 = vmatpush.bf16.msra.mxu0 %v4473
  %6501 = vmatpush.bf16.msra.mxu0 %v4472
  %6502 = vmatpush.bf16.msra.mxu0 %v4471
  %6503 = vmatpush.bf16.msra.mxu0 %v4470
  %6504 = vmatpush.bf16.msra.mxu0 %v4469
  %6505 = vmatpush.bf16.msra.mxu0 %v4468
  %6506 = vmatpush.bf16.msra.mxu0 %v4467
  %6507 = vmatmul.bf16.gmra.mxu0 %v2818
  %v6508 = vpop.f32.mrf.mxu0
  %v6509 = vadd.f32 %v6260, %v6508
  %v6510 = vpop.f32.mrf.mxu0
  %v6511 = vadd.f32 %v6262, %v6510
  %6512 = vmatmul.bf16.gmra.mxu0 %v2831
  %v6513 = vpop.f32.mrf.mxu0
  %v6514 = vadd.f32 %v6265, %v6513
  %v6515 = vpop.f32.mrf.mxu0
  %v6516 = vadd.f32 %v6267, %v6515
  %6517 = vmatmul.bf16.gmra.mxu0 %v2844
  %v6518 = vpop.f32.mrf.mxu0
  %v6519 = vadd.f32 %v6270, %v6518
  %v6520 = vpop.f32.mrf.mxu0
  %v6521 = vadd.f32 %v6272, %v6520
  %6522 = vmatmul.bf16.gmra.mxu0 %v2857
  %v6523 = vpop.f32.mrf.mxu0
  %v6524 = vadd.f32 %v6275, %v6523
  %v6525 = vpop.f32.mrf.mxu0
  %v6526 = vadd.f32 %v6277, %v6525
  %6527 = vmatmul.bf16.gmra.mxu0 %v2870
  %v6528 = vpop.f32.mrf.mxu0
  %v6529 = vadd.f32 %v6280, %v6528
  %v6530 = vpop.f32.mrf.mxu0
  %v6531 = vadd.f32 %v6282, %v6530
  %6532 = vmatmul.bf16.gmra.mxu0 %v2883
  %v6533 = vpop.f32.mrf.mxu0
  %v6534 = vadd.f32 %v6285, %v6533
  %v6535 = vpop.f32.mrf.mxu0
  %v6536 = vadd.f32 %v6287, %v6535
  %6537 = vmatmul.bf16.gmra.mxu0 %v2896
  %v6538 = vpop.f32.mrf.mxu0
  %v6539 = vadd.f32 %v6290, %v6538
  %v6540 = vpop.f32.mrf.mxu0
  %v6541 = vadd.f32 %v6292, %v6540
  %6542 = vmatmul.bf16.gmra.mxu0 %v2909
  %v6543 = vpop.f32.mrf.mxu0
  %v6544 = vadd.f32 %v6295, %v6543
  %v6545 = vpop.f32.mrf.mxu0
  %v6546 = vadd.f32 %v6297, %v6545
  %6547 = vmatmul.bf16.gmra.mxu0 %v2922
  %v6548 = vpop.f32.mrf.mxu0
  %v6549 = vadd.f32 %v6300, %v6548
  %v6550 = vpop.f32.mrf.mxu0
  %v6551 = vadd.f32 %v6302, %v6550
  %6552 = vmatmul.bf16.gmra.mxu0 %v2935
  %v6553 = vpop.f32.mrf.mxu0
  %v6554 = vadd.f32 %v6305, %v6553
  %v6555 = vpop.f32.mrf.mxu0
  %v6556 = vadd.f32 %v6307, %v6555
  %6557 = vmatmul.bf16.gmra.mxu0 %v2948
  %v6558 = vpop.f32.mrf.mxu0
  %v6559 = vadd.f32 %v6310, %v6558
  %v6560 = vpop.f32.mrf.mxu0
  %v6561 = vadd.f32 %v6312, %v6560
  %6562 = vmatmul.bf16.gmra.mxu0 %v2961
  %v6563 = vpop.f32.mrf.mxu0
  %v6564 = vadd.f32 %v6315, %v6563
  %v6565 = vpop.f32.mrf.mxu0
  %v6566 = vadd.f32 %v6317, %v6565
  %6567 = vmatmul.bf16.gmra.mxu0 %v2974
  %v6568 = vpop.f32.mrf.mxu0
  %v6569 = vadd.f32 %v6320, %v6568
  %v6570 = vpop.f32.mrf.mxu0
  %v6571 = vadd.f32 %v6322, %v6570
  %6572 = vmatmul.bf16.gmra.mxu0 %v2987
  %v6573 = vpop.f32.mrf.mxu0
  %v6574 = vadd.f32 %v6325, %v6573
  %v6575 = vpop.f32.mrf.mxu0
  %v6576 = vadd.f32 %v6327, %v6575
  %6577 = vmatmul.bf16.gmra.mxu0 %v3000
  %v6578 = vpop.f32.mrf.mxu0
  %v6579 = vadd.f32 %v6330, %v6578
  %v6580 = vpop.f32.mrf.mxu0
  %v6581 = vadd.f32 %v6332, %v6580
  %6582 = vmatmul.bf16.gmra.mxu0 %v3013
  %v6583 = vpop.f32.mrf.mxu0
  %v6584 = vadd.f32 %v6335, %v6583
  %v6585 = vpop.f32.mrf.mxu0
  %v6586 = vadd.f32 %v6337, %v6585
  %6587 = vmatmul.bf16.gmra.mxu0 %v3026
  %v6588 = vpop.f32.mrf.mxu0
  %v6589 = vadd.f32 %v6340, %v6588
  %v6590 = vpop.f32.mrf.mxu0
  %v6591 = vadd.f32 %v6342, %v6590
  %6592 = vmatmul.bf16.gmra.mxu0 %v3039
  %v6593 = vpop.f32.mrf.mxu0
  %v6594 = vadd.f32 %v6345, %v6593
  %v6595 = vpop.f32.mrf.mxu0
  %v6596 = vadd.f32 %v6347, %v6595
  %6597 = vmatmul.bf16.gmra.mxu0 %v3052
  %v6598 = vpop.f32.mrf.mxu0
  %v6599 = vadd.f32 %v6350, %v6598
  %v6600 = vpop.f32.mrf.mxu0
  %v6601 = vadd.f32 %v6352, %v6600
  %6602 = vmatmul.bf16.gmra.mxu0 %v3065
  %v6603 = vpop.f32.mrf.mxu0
  %v6604 = vadd.f32 %v6355, %v6603
  %v6605 = vpop.f32.mrf.mxu0
  %v6606 = vadd.f32 %v6357, %v6605
  %6607 = vmatmul.bf16.gmra.mxu0 %v3078
  %v6608 = vpop.f32.mrf.mxu0
  %v6609 = vadd.f32 %v6360, %v6608
  %v6610 = vpop.f32.mrf.mxu0
  %v6611 = vadd.f32 %v6362, %v6610
  %6612 = vmatmul.bf16.gmra.mxu0 %v3091
  %v6613 = vpop.f32.mrf.mxu0
  %v6614 = vadd.f32 %v6365, %v6613
  %v6615 = vpop.f32.mrf.mxu0
  %v6616 = vadd.f32 %v6367, %v6615
  %6617 = vmatmul.bf16.gmra.mxu0 %v3104
  %v6618 = vpop.f32.mrf.mxu0
  %v6619 = vadd.f32 %v6370, %v6618
  %v6620 = vpop.f32.mrf.mxu0
  %v6621 = vadd.f32 %v6372, %v6620
  %6622 = vmatmul.bf16.gmra.mxu0 %v3117
  %v6623 = vpop.f32.mrf.mxu0
  %v6624 = vadd.f32 %v6375, %v6623
  %v6625 = vpop.f32.mrf.mxu0
  %v6626 = vadd.f32 %v6377, %v6625
  %6627 = vmatmul.bf16.gmra.mxu0 %v3130
  %v6628 = vpop.f32.mrf.mxu0
  %v6629 = vadd.f32 %v6380, %v6628
  %v6630 = vpop.f32.mrf.mxu0
  %v6631 = vadd.f32 %v6382, %v6630
  %6632 = vmatmul.bf16.gmra.mxu0 %v3143
  %v6633 = vpop.f32.mrf.mxu0
  %v6634 = vadd.f32 %v6385, %v6633
  %v6635 = vpop.f32.mrf.mxu0
  %v6636 = vadd.f32 %v6387, %v6635
  %6637 = vmatmul.bf16.gmra.mxu0 %v3156
  %v6638 = vpop.f32.mrf.mxu0
  %v6639 = vadd.f32 %v6390, %v6638
  %v6640 = vpop.f32.mrf.mxu0
  %v6641 = vadd.f32 %v6392, %v6640
  %6642 = vmatmul.bf16.gmra.mxu0 %v3169
  %v6643 = vpop.f32.mrf.mxu0
  %v6644 = vadd.f32 %v6395, %v6643
  %v6645 = vpop.f32.mrf.mxu0
  %v6646 = vadd.f32 %v6397, %v6645
  %6647 = vmatmul.bf16.gmra.mxu0 %v3182
  %v6648 = vpop.f32.mrf.mxu0
  %v6649 = vadd.f32 %v6400, %v6648
  %v6650 = vpop.f32.mrf.mxu0
  %v6651 = vadd.f32 %v6402, %v6650
  %6652 = vmatmul.bf16.gmra.mxu0 %v3195
  %v6653 = vpop.f32.mrf.mxu0
  %v6654 = vadd.f32 %v6405, %v6653
  %v6655 = vpop.f32.mrf.mxu0
  %v6656 = vadd.f32 %v6407, %v6655
  %6657 = vmatmul.bf16.gmra.mxu0 %v3208
  %v6658 = vpop.f32.mrf.mxu0
  %v6659 = vadd.f32 %v6410, %v6658
  %v6660 = vpop.f32.mrf.mxu0
  %v6661 = vadd.f32 %v6412, %v6660
  %6662 = vmatmul.bf16.gmra.mxu0 %v3221
  %v6663 = vpop.f32.mrf.mxu0
  %v6664 = vadd.f32 %v6415, %v6663
  %v6665 = vpop.f32.mrf.mxu0
  %v6666 = vadd.f32 %v6417, %v6665
  %6667 = vmatmul.bf16.gmra.mxu0 %v3234
  %v6668 = vpop.f32.mrf.mxu0
  %v6669 = vadd.f32 %v6420, %v6668
  %v6670 = vpop.f32.mrf.mxu0
  %v6671 = vadd.f32 %v6422, %v6670
  %6672 = vmatmul.bf16.gmra.mxu0 %v3247
  %v6673 = vpop.f32.mrf.mxu0
  %v6674 = vadd.f32 %v6425, %v6673
  %v6675 = vpop.f32.mrf.mxu0
  %v6676 = vadd.f32 %v6427, %v6675
  %6677 = vmatmul.bf16.gmra.mxu0 %v3260
  %v6678 = vpop.f32.mrf.mxu0
  %v6679 = vadd.f32 %v6430, %v6678
  %v6680 = vpop.f32.mrf.mxu0
  %v6681 = vadd.f32 %v6432, %v6680
  %6682 = vmatmul.bf16.gmra.mxu0 %v3273
  %v6683 = vpop.f32.mrf.mxu0
  %v6684 = vadd.f32 %v6435, %v6683
  %v6685 = vpop.f32.mrf.mxu0
  %v6686 = vadd.f32 %v6437, %v6685
  %6687 = vmatmul.bf16.gmra.mxu0 %v3286
  %v6688 = vpop.f32.mrf.mxu0
  %v6689 = vadd.f32 %v6440, %v6688
  %v6690 = vpop.f32.mrf.mxu0
  %v6691 = vadd.f32 %v6442, %v6690
  %6692 = vmatmul.bf16.gmra.mxu0 %v3299
  %v6693 = vpop.f32.mrf.mxu0
  %v6694 = vadd.f32 %v6445, %v6693
  %v6695 = vpop.f32.mrf.mxu0
  %v6696 = vadd.f32 %v6447, %v6695
  %6697 = vmatmul.bf16.gmra.mxu0 %v3312
  %v6698 = vpop.f32.mrf.mxu0
  %v6699 = vadd.f32 %v6450, %v6698
  %v6700 = vpop.f32.mrf.mxu0
  %v6701 = vadd.f32 %v6452, %v6700
  %6702 = vmatmul.bf16.gmra.mxu0 %v3325
  %v6703 = vpop.f32.mrf.mxu0
  %v6704 = vadd.f32 %v6455, %v6703
  %v6705 = vpop.f32.mrf.mxu0
  %v6706 = vadd.f32 %v6457, %v6705
  %6707 = vmatmul.bf16.gmra.mxu0 %v3338
  %v6708 = vpop.f32.mrf.mxu0
  %v6709 = vadd.f32 %v6460, %v6708
  %v6710 = vpop.f32.mrf.mxu0
  %v6711 = vadd.f32 %v6462, %v6710
  %6712 = vmatmul.bf16.gmra.mxu0 %v3351
  %v6713 = vpop.f32.mrf.mxu0
  %v6714 = vadd.f32 %v6465, %v6713
  %v6715 = vpop.f32.mrf.mxu0
  %v6716 = vadd.f32 %v6467, %v6715
  %6717 = vmatmul.bf16.gmra.mxu0 %v3364
  %v6718 = vpop.f32.mrf.mxu0
  %v6719 = vadd.f32 %v6470, %v6718
  %v6720 = vpop.f32.mrf.mxu0
  %v6721 = vadd.f32 %v6472, %v6720
  %6722 = vmatmul.bf16.gmra.mxu0 %v3377
  %v6723 = vpop.f32.mrf.mxu0
  %v6724 = vadd.f32 %v6475, %v6723
  %v6725 = vpop.f32.mrf.mxu0
  %v6726 = vadd.f32 %v6477, %v6725
  %6727 = vmatmul.bf16.gmra.mxu0 %v3390
  %v6728 = vpop.f32.mrf.mxu0
  %v6729 = vadd.f32 %v6480, %v6728
  %v6730 = vpop.f32.mrf.mxu0
  %v6731 = vadd.f32 %v6482, %v6730
  %6732 = vmatmul.bf16.gmra.mxu0 %v3403
  %v6733 = vpop.f32.mrf.mxu0
  %v6734 = vadd.f32 %v6485, %v6733
  %v6735 = vpop.f32.mrf.mxu0
  %v6736 = vadd.f32 %v6487, %v6735
  %6737 = vmatmul.bf16.gmra.mxu0 %v3416
  %v6738 = vpop.f32.mrf.mxu0
  %v6739 = vadd.f32 %v6490, %v6738
  %v6740 = vpop.f32.mrf.mxu0
  %v6741 = vadd.f32 %v6492, %v6740
  %6742 = vmatmul.bf16.gmra.mxu0 %v3429
  %v6743 = vpop.f32.mrf.mxu0
  %v6744 = vadd.f32 %v6495, %v6743
  %v6745 = vpop.f32.mrf.mxu0
  %v6746 = vadd.f32 %v6497, %v6745
  %6747 = vdwg.mxu0
  %6748 = vmatpush.bf16.msra.mxu0 %v4482
  %6749 = vmatpush.bf16.msra.mxu0 %v4481
  %6750 = vmatpush.bf16.msra.mxu0 %v4480
  %6751 = vmatpush.bf16.msra.mxu0 %v4479
  %6752 = vmatpush.bf16.msra.mxu0 %v4478
  %6753 = vmatpush.bf16.msra.mxu0 %v4477
  %6754 = vmatpush.bf16.msra.mxu0 %v4476
  %6755 = vmatpush.bf16.msra.mxu0 %v4475
  %6756 = vmatmul.bf16.gmra.mxu0 %v2819
  %v6757 = vpop.f32.mrf.mxu0
  %v6758 = vadd.f32 %v6509, %v6757
  %v6759 = vpop.f32.mrf.mxu0
  %v6760 = vadd.f32 %v6511, %v6759
  %6761 = vmatmul.bf16.gmra.mxu0 %v2832
  %v6762 = vpop.f32.mrf.mxu0
  %v6763 = vadd.f32 %v6514, %v6762
  %v6764 = vpop.f32.mrf.mxu0
  %v6765 = vadd.f32 %v6516, %v6764
  %6766 = vmatmul.bf16.gmra.mxu0 %v2845
  %v6767 = vpop.f32.mrf.mxu0
  %v6768 = vadd.f32 %v6519, %v6767
  %v6769 = vpop.f32.mrf.mxu0
  %v6770 = vadd.f32 %v6521, %v6769
  %6771 = vmatmul.bf16.gmra.mxu0 %v2858
  %v6772 = vpop.f32.mrf.mxu0
  %v6773 = vadd.f32 %v6524, %v6772
  %v6774 = vpop.f32.mrf.mxu0
  %v6775 = vadd.f32 %v6526, %v6774
  %6776 = vmatmul.bf16.gmra.mxu0 %v2871
  %v6777 = vpop.f32.mrf.mxu0
  %v6778 = vadd.f32 %v6529, %v6777
  %v6779 = vpop.f32.mrf.mxu0
  %v6780 = vadd.f32 %v6531, %v6779
  %6781 = vmatmul.bf16.gmra.mxu0 %v2884
  %v6782 = vpop.f32.mrf.mxu0
  %v6783 = vadd.f32 %v6534, %v6782
  %v6784 = vpop.f32.mrf.mxu0
  %v6785 = vadd.f32 %v6536, %v6784
  %6786 = vmatmul.bf16.gmra.mxu0 %v2897
  %v6787 = vpop.f32.mrf.mxu0
  %v6788 = vadd.f32 %v6539, %v6787
  %v6789 = vpop.f32.mrf.mxu0
  %v6790 = vadd.f32 %v6541, %v6789
  %6791 = vmatmul.bf16.gmra.mxu0 %v2910
  %v6792 = vpop.f32.mrf.mxu0
  %v6793 = vadd.f32 %v6544, %v6792
  %v6794 = vpop.f32.mrf.mxu0
  %v6795 = vadd.f32 %v6546, %v6794
  %6796 = vmatmul.bf16.gmra.mxu0 %v2923
  %v6797 = vpop.f32.mrf.mxu0
  %v6798 = vadd.f32 %v6549, %v6797
  %v6799 = vpop.f32.mrf.mxu0
  %v6800 = vadd.f32 %v6551, %v6799
  %6801 = vmatmul.bf16.gmra.mxu0 %v2936
  %v6802 = vpop.f32.mrf.mxu0
  %v6803 = vadd.f32 %v6554, %v6802
  %v6804 = vpop.f32.mrf.mxu0
  %v6805 = vadd.f32 %v6556, %v6804
  %6806 = vmatmul.bf16.gmra.mxu0 %v2949
  %v6807 = vpop.f32.mrf.mxu0
  %v6808 = vadd.f32 %v6559, %v6807
  %v6809 = vpop.f32.mrf.mxu0
  %v6810 = vadd.f32 %v6561, %v6809
  %6811 = vmatmul.bf16.gmra.mxu0 %v2962
  %v6812 = vpop.f32.mrf.mxu0
  %v6813 = vadd.f32 %v6564, %v6812
  %v6814 = vpop.f32.mrf.mxu0
  %v6815 = vadd.f32 %v6566, %v6814
  %6816 = vmatmul.bf16.gmra.mxu0 %v2975
  %v6817 = vpop.f32.mrf.mxu0
  %v6818 = vadd.f32 %v6569, %v6817
  %v6819 = vpop.f32.mrf.mxu0
  %v6820 = vadd.f32 %v6571, %v6819
  %6821 = vmatmul.bf16.gmra.mxu0 %v2988
  %v6822 = vpop.f32.mrf.mxu0
  %v6823 = vadd.f32 %v6574, %v6822
  %v6824 = vpop.f32.mrf.mxu0
  %v6825 = vadd.f32 %v6576, %v6824
  %6826 = vmatmul.bf16.gmra.mxu0 %v3001
  %v6827 = vpop.f32.mrf.mxu0
  %v6828 = vadd.f32 %v6579, %v6827
  %v6829 = vpop.f32.mrf.mxu0
  %v6830 = vadd.f32 %v6581, %v6829
  %6831 = vmatmul.bf16.gmra.mxu0 %v3014
  %v6832 = vpop.f32.mrf.mxu0
  %v6833 = vadd.f32 %v6584, %v6832
  %v6834 = vpop.f32.mrf.mxu0
  %v6835 = vadd.f32 %v6586, %v6834
  %6836 = vmatmul.bf16.gmra.mxu0 %v3027
  %v6837 = vpop.f32.mrf.mxu0
  %v6838 = vadd.f32 %v6589, %v6837
  %v6839 = vpop.f32.mrf.mxu0
  %v6840 = vadd.f32 %v6591, %v6839
  %6841 = vmatmul.bf16.gmra.mxu0 %v3040
  %v6842 = vpop.f32.mrf.mxu0
  %v6843 = vadd.f32 %v6594, %v6842
  %v6844 = vpop.f32.mrf.mxu0
  %v6845 = vadd.f32 %v6596, %v6844
  %6846 = vmatmul.bf16.gmra.mxu0 %v3053
  %v6847 = vpop.f32.mrf.mxu0
  %v6848 = vadd.f32 %v6599, %v6847
  %v6849 = vpop.f32.mrf.mxu0
  %v6850 = vadd.f32 %v6601, %v6849
  %6851 = vmatmul.bf16.gmra.mxu0 %v3066
  %v6852 = vpop.f32.mrf.mxu0
  %v6853 = vadd.f32 %v6604, %v6852
  %v6854 = vpop.f32.mrf.mxu0
  %v6855 = vadd.f32 %v6606, %v6854
  %6856 = vmatmul.bf16.gmra.mxu0 %v3079
  %v6857 = vpop.f32.mrf.mxu0
  %v6858 = vadd.f32 %v6609, %v6857
  %v6859 = vpop.f32.mrf.mxu0
  %v6860 = vadd.f32 %v6611, %v6859
  %6861 = vmatmul.bf16.gmra.mxu0 %v3092
  %v6862 = vpop.f32.mrf.mxu0
  %v6863 = vadd.f32 %v6614, %v6862
  %v6864 = vpop.f32.mrf.mxu0
  %v6865 = vadd.f32 %v6616, %v6864
  %6866 = vmatmul.bf16.gmra.mxu0 %v3105
  %v6867 = vpop.f32.mrf.mxu0
  %v6868 = vadd.f32 %v6619, %v6867
  %v6869 = vpop.f32.mrf.mxu0
  %v6870 = vadd.f32 %v6621, %v6869
  %6871 = vmatmul.bf16.gmra.mxu0 %v3118
  %v6872 = vpop.f32.mrf.mxu0
  %v6873 = vadd.f32 %v6624, %v6872
  %v6874 = vpop.f32.mrf.mxu0
  %v6875 = vadd.f32 %v6626, %v6874
  %6876 = vmatmul.bf16.gmra.mxu0 %v3131
  %v6877 = vpop.f32.mrf.mxu0
  %v6878 = vadd.f32 %v6629, %v6877
  %v6879 = vpop.f32.mrf.mxu0
  %v6880 = vadd.f32 %v6631, %v6879
  %6881 = vmatmul.bf16.gmra.mxu0 %v3144
  %v6882 = vpop.f32.mrf.mxu0
  %v6883 = vadd.f32 %v6634, %v6882
  %v6884 = vpop.f32.mrf.mxu0
  %v6885 = vadd.f32 %v6636, %v6884
  %6886 = vmatmul.bf16.gmra.mxu0 %v3157
  %v6887 = vpop.f32.mrf.mxu0
  %v6888 = vadd.f32 %v6639, %v6887
  %v6889 = vpop.f32.mrf.mxu0
  %v6890 = vadd.f32 %v6641, %v6889
  %6891 = vmatmul.bf16.gmra.mxu0 %v3170
  %v6892 = vpop.f32.mrf.mxu0
  %v6893 = vadd.f32 %v6644, %v6892
  %v6894 = vpop.f32.mrf.mxu0
  %v6895 = vadd.f32 %v6646, %v6894
  %6896 = vmatmul.bf16.gmra.mxu0 %v3183
  %v6897 = vpop.f32.mrf.mxu0
  %v6898 = vadd.f32 %v6649, %v6897
  %v6899 = vpop.f32.mrf.mxu0
  %v6900 = vadd.f32 %v6651, %v6899
  %6901 = vmatmul.bf16.gmra.mxu0 %v3196
  %v6902 = vpop.f32.mrf.mxu0
  %v6903 = vadd.f32 %v6654, %v6902
  %v6904 = vpop.f32.mrf.mxu0
  %v6905 = vadd.f32 %v6656, %v6904
  %6906 = vmatmul.bf16.gmra.mxu0 %v3209
  %v6907 = vpop.f32.mrf.mxu0
  %v6908 = vadd.f32 %v6659, %v6907
  %v6909 = vpop.f32.mrf.mxu0
  %v6910 = vadd.f32 %v6661, %v6909
  %6911 = vmatmul.bf16.gmra.mxu0 %v3222
  %v6912 = vpop.f32.mrf.mxu0
  %v6913 = vadd.f32 %v6664, %v6912
  %v6914 = vpop.f32.mrf.mxu0
  %v6915 = vadd.f32 %v6666, %v6914
  %6916 = vmatmul.bf16.gmra.mxu0 %v3235
  %v6917 = vpop.f32.mrf.mxu0
  %v6918 = vadd.f32 %v6669, %v6917
  %v6919 = vpop.f32.mrf.mxu0
  %v6920 = vadd.f32 %v6671, %v6919
  %6921 = vmatmul.bf16.gmra.mxu0 %v3248
  %v6922 = vpop.f32.mrf.mxu0
  %v6923 = vadd.f32 %v6674, %v6922
  %v6924 = vpop.f32.mrf.mxu0
  %v6925 = vadd.f32 %v6676, %v6924
  %6926 = vmatmul.bf16.gmra.mxu0 %v3261
  %v6927 = vpop.f32.mrf.mxu0
  %v6928 = vadd.f32 %v6679, %v6927
  %v6929 = vpop.f32.mrf.mxu0
  %v6930 = vadd.f32 %v6681, %v6929
  %6931 = vmatmul.bf16.gmra.mxu0 %v3274
  %v6932 = vpop.f32.mrf.mxu0
  %v6933 = vadd.f32 %v6684, %v6932
  %v6934 = vpop.f32.mrf.mxu0
  %v6935 = vadd.f32 %v6686, %v6934
  %6936 = vmatmul.bf16.gmra.mxu0 %v3287
  %v6937 = vpop.f32.mrf.mxu0
  %v6938 = vadd.f32 %v6689, %v6937
  %v6939 = vpop.f32.mrf.mxu0
  %v6940 = vadd.f32 %v6691, %v6939
  %6941 = vmatmul.bf16.gmra.mxu0 %v3300
  %v6942 = vpop.f32.mrf.mxu0
  %v6943 = vadd.f32 %v6694, %v6942
  %v6944 = vpop.f32.mrf.mxu0
  %v6945 = vadd.f32 %v6696, %v6944
  %6946 = vmatmul.bf16.gmra.mxu0 %v3313
  %v6947 = vpop.f32.mrf.mxu0
  %v6948 = vadd.f32 %v6699, %v6947
  %v6949 = vpop.f32.mrf.mxu0
  %v6950 = vadd.f32 %v6701, %v6949
  %6951 = vmatmul.bf16.gmra.mxu0 %v3326
  %v6952 = vpop.f32.mrf.mxu0
  %v6953 = vadd.f32 %v6704, %v6952
  %v6954 = vpop.f32.mrf.mxu0
  %v6955 = vadd.f32 %v6706, %v6954
  %6956 = vmatmul.bf16.gmra.mxu0 %v3339
  %v6957 = vpop.f32.mrf.mxu0
  %v6958 = vadd.f32 %v6709, %v6957
  %v6959 = vpop.f32.mrf.mxu0
  %v6960 = vadd.f32 %v6711, %v6959
  %6961 = vmatmul.bf16.gmra.mxu0 %v3352
  %v6962 = vpop.f32.mrf.mxu0
  %v6963 = vadd.f32 %v6714, %v6962
  %v6964 = vpop.f32.mrf.mxu0
  %v6965 = vadd.f32 %v6716, %v6964
  %6966 = vmatmul.bf16.gmra.mxu0 %v3365
  %v6967 = vpop.f32.mrf.mxu0
  %v6968 = vadd.f32 %v6719, %v6967
  %v6969 = vpop.f32.mrf.mxu0
  %v6970 = vadd.f32 %v6721, %v6969
  %6971 = vmatmul.bf16.gmra.mxu0 %v3378
  %v6972 = vpop.f32.mrf.mxu0
  %v6973 = vadd.f32 %v6724, %v6972
  %v6974 = vpop.f32.mrf.mxu0
  %v6975 = vadd.f32 %v6726, %v6974
  %6976 = vmatmul.bf16.gmra.mxu0 %v3391
  %v6977 = vpop.f32.mrf.mxu0
  %v6978 = vadd.f32 %v6729, %v6977
  %v6979 = vpop.f32.mrf.mxu0
  %v6980 = vadd.f32 %v6731, %v6979
  %6981 = vmatmul.bf16.gmra.mxu0 %v3404
  %v6982 = vpop.f32.mrf.mxu0
  %v6983 = vadd.f32 %v6734, %v6982
  %v6984 = vpop.f32.mrf.mxu0
  %v6985 = vadd.f32 %v6736, %v6984
  %6986 = vmatmul.bf16.gmra.mxu0 %v3417
  %v6987 = vpop.f32.mrf.mxu0
  %v6988 = vadd.f32 %v6739, %v6987
  %v6989 = vpop.f32.mrf.mxu0
  %v6990 = vadd.f32 %v6741, %v6989
  %6991 = vmatmul.bf16.gmra.mxu0 %v3430
  %v6992 = vpop.f32.mrf.mxu0
  %v6993 = vadd.f32 %v6744, %v6992
  %v6994 = vpop.f32.mrf.mxu0
  %v6995 = vadd.f32 %v6746, %v6994
  %6996 = vdwg.mxu0
  %6997 = vmatpush.bf16.msra.mxu0 %v4490
  %6998 = vmatpush.bf16.msra.mxu0 %v4489
  %6999 = vmatpush.bf16.msra.mxu0 %v4488
  %7000 = vmatpush.bf16.msra.mxu0 %v4487
  %7001 = vmatpush.bf16.msra.mxu0 %v4486
  %7002 = vmatpush.bf16.msra.mxu0 %v4485
  %7003 = vmatpush.bf16.msra.mxu0 %v4484
  %7004 = vmatpush.bf16.msra.mxu0 %v4483
  %7005 = vmatmul.bf16.gmra.mxu0 %v2820
  %v7006 = vpop.f32.mrf.mxu0
  %v7007 = vadd.f32 %v6758, %v7006
  %v7008 = vpop.f32.mrf.mxu0
  %v7009 = vadd.f32 %v6760, %v7008
  %7010 = vmatmul.bf16.gmra.mxu0 %v2833
  %v7011 = vpop.f32.mrf.mxu0
  %v7012 = vadd.f32 %v6763, %v7011
  %v7013 = vpop.f32.mrf.mxu0
  %v7014 = vadd.f32 %v6765, %v7013
  %7015 = vmatmul.bf16.gmra.mxu0 %v2846
  %v7016 = vpop.f32.mrf.mxu0
  %v7017 = vadd.f32 %v6768, %v7016
  %v7018 = vpop.f32.mrf.mxu0
  %v7019 = vadd.f32 %v6770, %v7018
  %7020 = vmatmul.bf16.gmra.mxu0 %v2859
  %v7021 = vpop.f32.mrf.mxu0
  %v7022 = vadd.f32 %v6773, %v7021
  %v7023 = vpop.f32.mrf.mxu0
  %v7024 = vadd.f32 %v6775, %v7023
  %7025 = vmatmul.bf16.gmra.mxu0 %v2872
  %v7026 = vpop.f32.mrf.mxu0
  %v7027 = vadd.f32 %v6778, %v7026
  %v7028 = vpop.f32.mrf.mxu0
  %v7029 = vadd.f32 %v6780, %v7028
  %7030 = vmatmul.bf16.gmra.mxu0 %v2885
  %v7031 = vpop.f32.mrf.mxu0
  %v7032 = vadd.f32 %v6783, %v7031
  %v7033 = vpop.f32.mrf.mxu0
  %v7034 = vadd.f32 %v6785, %v7033
  %7035 = vmatmul.bf16.gmra.mxu0 %v2898
  %v7036 = vpop.f32.mrf.mxu0
  %v7037 = vadd.f32 %v6788, %v7036
  %v7038 = vpop.f32.mrf.mxu0
  %v7039 = vadd.f32 %v6790, %v7038
  %7040 = vmatmul.bf16.gmra.mxu0 %v2911
  %v7041 = vpop.f32.mrf.mxu0
  %v7042 = vadd.f32 %v6793, %v7041
  %v7043 = vpop.f32.mrf.mxu0
  %v7044 = vadd.f32 %v6795, %v7043
  %7045 = vmatmul.bf16.gmra.mxu0 %v2924
  %v7046 = vpop.f32.mrf.mxu0
  %v7047 = vadd.f32 %v6798, %v7046
  %v7048 = vpop.f32.mrf.mxu0
  %v7049 = vadd.f32 %v6800, %v7048
  %7050 = vmatmul.bf16.gmra.mxu0 %v2937
  %v7051 = vpop.f32.mrf.mxu0
  %v7052 = vadd.f32 %v6803, %v7051
  %v7053 = vpop.f32.mrf.mxu0
  %v7054 = vadd.f32 %v6805, %v7053
  %7055 = vmatmul.bf16.gmra.mxu0 %v2950
  %v7056 = vpop.f32.mrf.mxu0
  %v7057 = vadd.f32 %v6808, %v7056
  %v7058 = vpop.f32.mrf.mxu0
  %v7059 = vadd.f32 %v6810, %v7058
  %7060 = vmatmul.bf16.gmra.mxu0 %v2963
  %v7061 = vpop.f32.mrf.mxu0
  %v7062 = vadd.f32 %v6813, %v7061
  %v7063 = vpop.f32.mrf.mxu0
  %v7064 = vadd.f32 %v6815, %v7063
  %7065 = vmatmul.bf16.gmra.mxu0 %v2976
  %v7066 = vpop.f32.mrf.mxu0
  %v7067 = vadd.f32 %v6818, %v7066
  %v7068 = vpop.f32.mrf.mxu0
  %v7069 = vadd.f32 %v6820, %v7068
  %7070 = vmatmul.bf16.gmra.mxu0 %v2989
  %v7071 = vpop.f32.mrf.mxu0
  %v7072 = vadd.f32 %v6823, %v7071
  %v7073 = vpop.f32.mrf.mxu0
  %v7074 = vadd.f32 %v6825, %v7073
  %7075 = vmatmul.bf16.gmra.mxu0 %v3002
  %v7076 = vpop.f32.mrf.mxu0
  %v7077 = vadd.f32 %v6828, %v7076
  %v7078 = vpop.f32.mrf.mxu0
  %v7079 = vadd.f32 %v6830, %v7078
  %7080 = vmatmul.bf16.gmra.mxu0 %v3015
  %v7081 = vpop.f32.mrf.mxu0
  %v7082 = vadd.f32 %v6833, %v7081
  %v7083 = vpop.f32.mrf.mxu0
  %v7084 = vadd.f32 %v6835, %v7083
  %7085 = vmatmul.bf16.gmra.mxu0 %v3028
  %v7086 = vpop.f32.mrf.mxu0
  %v7087 = vadd.f32 %v6838, %v7086
  %v7088 = vpop.f32.mrf.mxu0
  %v7089 = vadd.f32 %v6840, %v7088
  %7090 = vmatmul.bf16.gmra.mxu0 %v3041
  %v7091 = vpop.f32.mrf.mxu0
  %v7092 = vadd.f32 %v6843, %v7091
  %v7093 = vpop.f32.mrf.mxu0
  %v7094 = vadd.f32 %v6845, %v7093
  %7095 = vmatmul.bf16.gmra.mxu0 %v3054
  %v7096 = vpop.f32.mrf.mxu0
  %v7097 = vadd.f32 %v6848, %v7096
  %v7098 = vpop.f32.mrf.mxu0
  %v7099 = vadd.f32 %v6850, %v7098
  %7100 = vmatmul.bf16.gmra.mxu0 %v3067
  %v7101 = vpop.f32.mrf.mxu0
  %v7102 = vadd.f32 %v6853, %v7101
  %v7103 = vpop.f32.mrf.mxu0
  %v7104 = vadd.f32 %v6855, %v7103
  %7105 = vmatmul.bf16.gmra.mxu0 %v3080
  %v7106 = vpop.f32.mrf.mxu0
  %v7107 = vadd.f32 %v6858, %v7106
  %v7108 = vpop.f32.mrf.mxu0
  %v7109 = vadd.f32 %v6860, %v7108
  %7110 = vmatmul.bf16.gmra.mxu0 %v3093
  %v7111 = vpop.f32.mrf.mxu0
  %v7112 = vadd.f32 %v6863, %v7111
  %v7113 = vpop.f32.mrf.mxu0
  %v7114 = vadd.f32 %v6865, %v7113
  %7115 = vmatmul.bf16.gmra.mxu0 %v3106
  %v7116 = vpop.f32.mrf.mxu0
  %v7117 = vadd.f32 %v6868, %v7116
  %v7118 = vpop.f32.mrf.mxu0
  %v7119 = vadd.f32 %v6870, %v7118
  %7120 = vmatmul.bf16.gmra.mxu0 %v3119
  %v7121 = vpop.f32.mrf.mxu0
  %v7122 = vadd.f32 %v6873, %v7121
  %v7123 = vpop.f32.mrf.mxu0
  %v7124 = vadd.f32 %v6875, %v7123
  %7125 = vmatmul.bf16.gmra.mxu0 %v3132
  %v7126 = vpop.f32.mrf.mxu0
  %v7127 = vadd.f32 %v6878, %v7126
  %v7128 = vpop.f32.mrf.mxu0
  %v7129 = vadd.f32 %v6880, %v7128
  %7130 = vmatmul.bf16.gmra.mxu0 %v3145
  %v7131 = vpop.f32.mrf.mxu0
  %v7132 = vadd.f32 %v6883, %v7131
  %v7133 = vpop.f32.mrf.mxu0
  %v7134 = vadd.f32 %v6885, %v7133
  %7135 = vmatmul.bf16.gmra.mxu0 %v3158
  %v7136 = vpop.f32.mrf.mxu0
  %v7137 = vadd.f32 %v6888, %v7136
  %v7138 = vpop.f32.mrf.mxu0
  %v7139 = vadd.f32 %v6890, %v7138
  %7140 = vmatmul.bf16.gmra.mxu0 %v3171
  %v7141 = vpop.f32.mrf.mxu0
  %v7142 = vadd.f32 %v6893, %v7141
  %v7143 = vpop.f32.mrf.mxu0
  %v7144 = vadd.f32 %v6895, %v7143
  %7145 = vmatmul.bf16.gmra.mxu0 %v3184
  %v7146 = vpop.f32.mrf.mxu0
  %v7147 = vadd.f32 %v6898, %v7146
  %v7148 = vpop.f32.mrf.mxu0
  %v7149 = vadd.f32 %v6900, %v7148
  %7150 = vmatmul.bf16.gmra.mxu0 %v3197
  %v7151 = vpop.f32.mrf.mxu0
  %v7152 = vadd.f32 %v6903, %v7151
  %v7153 = vpop.f32.mrf.mxu0
  %v7154 = vadd.f32 %v6905, %v7153
  %7155 = vmatmul.bf16.gmra.mxu0 %v3210
  %v7156 = vpop.f32.mrf.mxu0
  %v7157 = vadd.f32 %v6908, %v7156
  %v7158 = vpop.f32.mrf.mxu0
  %v7159 = vadd.f32 %v6910, %v7158
  %7160 = vmatmul.bf16.gmra.mxu0 %v3223
  %v7161 = vpop.f32.mrf.mxu0
  %v7162 = vadd.f32 %v6913, %v7161
  %v7163 = vpop.f32.mrf.mxu0
  %v7164 = vadd.f32 %v6915, %v7163
  %7165 = vmatmul.bf16.gmra.mxu0 %v3236
  %v7166 = vpop.f32.mrf.mxu0
  %v7167 = vadd.f32 %v6918, %v7166
  %v7168 = vpop.f32.mrf.mxu0
  %v7169 = vadd.f32 %v6920, %v7168
  %7170 = vmatmul.bf16.gmra.mxu0 %v3249
  %v7171 = vpop.f32.mrf.mxu0
  %v7172 = vadd.f32 %v6923, %v7171
  %v7173 = vpop.f32.mrf.mxu0
  %v7174 = vadd.f32 %v6925, %v7173
  %7175 = vmatmul.bf16.gmra.mxu0 %v3262
  %v7176 = vpop.f32.mrf.mxu0
  %v7177 = vadd.f32 %v6928, %v7176
  %v7178 = vpop.f32.mrf.mxu0
  %v7179 = vadd.f32 %v6930, %v7178
  %7180 = vmatmul.bf16.gmra.mxu0 %v3275
  %v7181 = vpop.f32.mrf.mxu0
  %v7182 = vadd.f32 %v6933, %v7181
  %v7183 = vpop.f32.mrf.mxu0
  %v7184 = vadd.f32 %v6935, %v7183
  %7185 = vmatmul.bf16.gmra.mxu0 %v3288
  %v7186 = vpop.f32.mrf.mxu0
  %v7187 = vadd.f32 %v6938, %v7186
  %v7188 = vpop.f32.mrf.mxu0
  %v7189 = vadd.f32 %v6940, %v7188
  %7190 = vmatmul.bf16.gmra.mxu0 %v3301
  %v7191 = vpop.f32.mrf.mxu0
  %v7192 = vadd.f32 %v6943, %v7191
  %v7193 = vpop.f32.mrf.mxu0
  %v7194 = vadd.f32 %v6945, %v7193
  %7195 = vmatmul.bf16.gmra.mxu0 %v3314
  %v7196 = vpop.f32.mrf.mxu0
  %v7197 = vadd.f32 %v6948, %v7196
  %v7198 = vpop.f32.mrf.mxu0
  %v7199 = vadd.f32 %v6950, %v7198
  %7200 = vmatmul.bf16.gmra.mxu0 %v3327
  %v7201 = vpop.f32.mrf.mxu0
  %v7202 = vadd.f32 %v6953, %v7201
  %v7203 = vpop.f32.mrf.mxu0
  %v7204 = vadd.f32 %v6955, %v7203
  %7205 = vmatmul.bf16.gmra.mxu0 %v3340
  %v7206 = vpop.f32.mrf.mxu0
  %v7207 = vadd.f32 %v6958, %v7206
  %v7208 = vpop.f32.mrf.mxu0
  %v7209 = vadd.f32 %v6960, %v7208
  %7210 = vmatmul.bf16.gmra.mxu0 %v3353
  %v7211 = vpop.f32.mrf.mxu0
  %v7212 = vadd.f32 %v6963, %v7211
  %v7213 = vpop.f32.mrf.mxu0
  %v7214 = vadd.f32 %v6965, %v7213
  %7215 = vmatmul.bf16.gmra.mxu0 %v3366
  %v7216 = vpop.f32.mrf.mxu0
  %v7217 = vadd.f32 %v6968, %v7216
  %v7218 = vpop.f32.mrf.mxu0
  %v7219 = vadd.f32 %v6970, %v7218
  %7220 = vmatmul.bf16.gmra.mxu0 %v3379
  %v7221 = vpop.f32.mrf.mxu0
  %v7222 = vadd.f32 %v6973, %v7221
  %v7223 = vpop.f32.mrf.mxu0
  %v7224 = vadd.f32 %v6975, %v7223
  %7225 = vmatmul.bf16.gmra.mxu0 %v3392
  %v7226 = vpop.f32.mrf.mxu0
  %v7227 = vadd.f32 %v6978, %v7226
  %v7228 = vpop.f32.mrf.mxu0
  %v7229 = vadd.f32 %v6980, %v7228
  %7230 = vmatmul.bf16.gmra.mxu0 %v3405
  %v7231 = vpop.f32.mrf.mxu0
  %v7232 = vadd.f32 %v6983, %v7231
  %v7233 = vpop.f32.mrf.mxu0
  %v7234 = vadd.f32 %v6985, %v7233
  %7235 = vmatmul.bf16.gmra.mxu0 %v3418
  %v7236 = vpop.f32.mrf.mxu0
  %v7237 = vadd.f32 %v6988, %v7236
  %v7238 = vpop.f32.mrf.mxu0
  %v7239 = vadd.f32 %v6990, %v7238
  %7240 = vmatmul.bf16.gmra.mxu0 %v3431
  %v7241 = vpop.f32.mrf.mxu0
  %v7242 = vadd.f32 %v6993, %v7241
  %v7243 = vpop.f32.mrf.mxu0
  %v7244 = vadd.f32 %v6995, %v7243
  %7245 = vdwg.mxu0
  %7246 = vmatpush.bf16.msra.mxu0 %v4498
  %7247 = vmatpush.bf16.msra.mxu0 %v4497
  %7248 = vmatpush.bf16.msra.mxu0 %v4496
  %7249 = vmatpush.bf16.msra.mxu0 %v4495
  %7250 = vmatpush.bf16.msra.mxu0 %v4494
  %7251 = vmatpush.bf16.msra.mxu0 %v4493
  %7252 = vmatpush.bf16.msra.mxu0 %v4492
  %7253 = vmatpush.bf16.msra.mxu0 %v4491
  %7254 = vmatmul.bf16.gmra.mxu0 %v2821
  %v7255 = vpop.f32.mrf.mxu0
  %v7256 = vadd.f32 %v7007, %v7255
  %v7257 = vpop.f32.mrf.mxu0
  %v7258 = vadd.f32 %v7009, %v7257
  %7259 = vmatmul.bf16.gmra.mxu0 %v2834
  %v7260 = vpop.f32.mrf.mxu0
  %v7261 = vadd.f32 %v7012, %v7260
  %v7262 = vpop.f32.mrf.mxu0
  %v7263 = vadd.f32 %v7014, %v7262
  %7264 = vmatmul.bf16.gmra.mxu0 %v2847
  %v7265 = vpop.f32.mrf.mxu0
  %v7266 = vadd.f32 %v7017, %v7265
  %v7267 = vpop.f32.mrf.mxu0
  %v7268 = vadd.f32 %v7019, %v7267
  %7269 = vmatmul.bf16.gmra.mxu0 %v2860
  %v7270 = vpop.f32.mrf.mxu0
  %v7271 = vadd.f32 %v7022, %v7270
  %v7272 = vpop.f32.mrf.mxu0
  %v7273 = vadd.f32 %v7024, %v7272
  %7274 = vmatmul.bf16.gmra.mxu0 %v2873
  %v7275 = vpop.f32.mrf.mxu0
  %v7276 = vadd.f32 %v7027, %v7275
  %v7277 = vpop.f32.mrf.mxu0
  %v7278 = vadd.f32 %v7029, %v7277
  %7279 = vmatmul.bf16.gmra.mxu0 %v2886
  %v7280 = vpop.f32.mrf.mxu0
  %v7281 = vadd.f32 %v7032, %v7280
  %v7282 = vpop.f32.mrf.mxu0
  %v7283 = vadd.f32 %v7034, %v7282
  %7284 = vmatmul.bf16.gmra.mxu0 %v2899
  %v7285 = vpop.f32.mrf.mxu0
  %v7286 = vadd.f32 %v7037, %v7285
  %v7287 = vpop.f32.mrf.mxu0
  %v7288 = vadd.f32 %v7039, %v7287
  %7289 = vmatmul.bf16.gmra.mxu0 %v2912
  %v7290 = vpop.f32.mrf.mxu0
  %v7291 = vadd.f32 %v7042, %v7290
  %v7292 = vpop.f32.mrf.mxu0
  %v7293 = vadd.f32 %v7044, %v7292
  %7294 = vmatmul.bf16.gmra.mxu0 %v2925
  %v7295 = vpop.f32.mrf.mxu0
  %v7296 = vadd.f32 %v7047, %v7295
  %v7297 = vpop.f32.mrf.mxu0
  %v7298 = vadd.f32 %v7049, %v7297
  %7299 = vmatmul.bf16.gmra.mxu0 %v2938
  %v7300 = vpop.f32.mrf.mxu0
  %v7301 = vadd.f32 %v7052, %v7300
  %v7302 = vpop.f32.mrf.mxu0
  %v7303 = vadd.f32 %v7054, %v7302
  %7304 = vmatmul.bf16.gmra.mxu0 %v2951
  %v7305 = vpop.f32.mrf.mxu0
  %v7306 = vadd.f32 %v7057, %v7305
  %v7307 = vpop.f32.mrf.mxu0
  %v7308 = vadd.f32 %v7059, %v7307
  %7309 = vmatmul.bf16.gmra.mxu0 %v2964
  %v7310 = vpop.f32.mrf.mxu0
  %v7311 = vadd.f32 %v7062, %v7310
  %v7312 = vpop.f32.mrf.mxu0
  %v7313 = vadd.f32 %v7064, %v7312
  %7314 = vmatmul.bf16.gmra.mxu0 %v2977
  %v7315 = vpop.f32.mrf.mxu0
  %v7316 = vadd.f32 %v7067, %v7315
  %v7317 = vpop.f32.mrf.mxu0
  %v7318 = vadd.f32 %v7069, %v7317
  %7319 = vmatmul.bf16.gmra.mxu0 %v2990
  %v7320 = vpop.f32.mrf.mxu0
  %v7321 = vadd.f32 %v7072, %v7320
  %v7322 = vpop.f32.mrf.mxu0
  %v7323 = vadd.f32 %v7074, %v7322
  %7324 = vmatmul.bf16.gmra.mxu0 %v3003
  %v7325 = vpop.f32.mrf.mxu0
  %v7326 = vadd.f32 %v7077, %v7325
  %v7327 = vpop.f32.mrf.mxu0
  %v7328 = vadd.f32 %v7079, %v7327
  %7329 = vmatmul.bf16.gmra.mxu0 %v3016
  %v7330 = vpop.f32.mrf.mxu0
  %v7331 = vadd.f32 %v7082, %v7330
  %v7332 = vpop.f32.mrf.mxu0
  %v7333 = vadd.f32 %v7084, %v7332
  %7334 = vmatmul.bf16.gmra.mxu0 %v3029
  %v7335 = vpop.f32.mrf.mxu0
  %v7336 = vadd.f32 %v7087, %v7335
  %v7337 = vpop.f32.mrf.mxu0
  %v7338 = vadd.f32 %v7089, %v7337
  %7339 = vmatmul.bf16.gmra.mxu0 %v3042
  %v7340 = vpop.f32.mrf.mxu0
  %v7341 = vadd.f32 %v7092, %v7340
  %v7342 = vpop.f32.mrf.mxu0
  %v7343 = vadd.f32 %v7094, %v7342
  %7344 = vmatmul.bf16.gmra.mxu0 %v3055
  %v7345 = vpop.f32.mrf.mxu0
  %v7346 = vadd.f32 %v7097, %v7345
  %v7347 = vpop.f32.mrf.mxu0
  %v7348 = vadd.f32 %v7099, %v7347
  %7349 = vmatmul.bf16.gmra.mxu0 %v3068
  %v7350 = vpop.f32.mrf.mxu0
  %v7351 = vadd.f32 %v7102, %v7350
  %v7352 = vpop.f32.mrf.mxu0
  %v7353 = vadd.f32 %v7104, %v7352
  %7354 = vmatmul.bf16.gmra.mxu0 %v3081
  %v7355 = vpop.f32.mrf.mxu0
  %v7356 = vadd.f32 %v7107, %v7355
  %v7357 = vpop.f32.mrf.mxu0
  %v7358 = vadd.f32 %v7109, %v7357
  %7359 = vmatmul.bf16.gmra.mxu0 %v3094
  %v7360 = vpop.f32.mrf.mxu0
  %v7361 = vadd.f32 %v7112, %v7360
  %v7362 = vpop.f32.mrf.mxu0
  %v7363 = vadd.f32 %v7114, %v7362
  %7364 = vmatmul.bf16.gmra.mxu0 %v3107
  %v7365 = vpop.f32.mrf.mxu0
  %v7366 = vadd.f32 %v7117, %v7365
  %v7367 = vpop.f32.mrf.mxu0
  %v7368 = vadd.f32 %v7119, %v7367
  %7369 = vmatmul.bf16.gmra.mxu0 %v3120
  %v7370 = vpop.f32.mrf.mxu0
  %v7371 = vadd.f32 %v7122, %v7370
  %v7372 = vpop.f32.mrf.mxu0
  %v7373 = vadd.f32 %v7124, %v7372
  %7374 = vmatmul.bf16.gmra.mxu0 %v3133
  %v7375 = vpop.f32.mrf.mxu0
  %v7376 = vadd.f32 %v7127, %v7375
  %v7377 = vpop.f32.mrf.mxu0
  %v7378 = vadd.f32 %v7129, %v7377
  %7379 = vmatmul.bf16.gmra.mxu0 %v3146
  %v7380 = vpop.f32.mrf.mxu0
  %v7381 = vadd.f32 %v7132, %v7380
  %v7382 = vpop.f32.mrf.mxu0
  %v7383 = vadd.f32 %v7134, %v7382
  %7384 = vmatmul.bf16.gmra.mxu0 %v3159
  %v7385 = vpop.f32.mrf.mxu0
  %v7386 = vadd.f32 %v7137, %v7385
  %v7387 = vpop.f32.mrf.mxu0
  %v7388 = vadd.f32 %v7139, %v7387
  %7389 = vmatmul.bf16.gmra.mxu0 %v3172
  %v7390 = vpop.f32.mrf.mxu0
  %v7391 = vadd.f32 %v7142, %v7390
  %v7392 = vpop.f32.mrf.mxu0
  %v7393 = vadd.f32 %v7144, %v7392
  %7394 = vmatmul.bf16.gmra.mxu0 %v3185
  %v7395 = vpop.f32.mrf.mxu0
  %v7396 = vadd.f32 %v7147, %v7395
  %v7397 = vpop.f32.mrf.mxu0
  %v7398 = vadd.f32 %v7149, %v7397
  %7399 = vmatmul.bf16.gmra.mxu0 %v3198
  %v7400 = vpop.f32.mrf.mxu0
  %v7401 = vadd.f32 %v7152, %v7400
  %v7402 = vpop.f32.mrf.mxu0
  %v7403 = vadd.f32 %v7154, %v7402
  %7404 = vmatmul.bf16.gmra.mxu0 %v3211
  %v7405 = vpop.f32.mrf.mxu0
  %v7406 = vadd.f32 %v7157, %v7405
  %v7407 = vpop.f32.mrf.mxu0
  %v7408 = vadd.f32 %v7159, %v7407
  %7409 = vmatmul.bf16.gmra.mxu0 %v3224
  %v7410 = vpop.f32.mrf.mxu0
  %v7411 = vadd.f32 %v7162, %v7410
  %v7412 = vpop.f32.mrf.mxu0
  %v7413 = vadd.f32 %v7164, %v7412
  %7414 = vmatmul.bf16.gmra.mxu0 %v3237
  %v7415 = vpop.f32.mrf.mxu0
  %v7416 = vadd.f32 %v7167, %v7415
  %v7417 = vpop.f32.mrf.mxu0
  %v7418 = vadd.f32 %v7169, %v7417
  %7419 = vmatmul.bf16.gmra.mxu0 %v3250
  %v7420 = vpop.f32.mrf.mxu0
  %v7421 = vadd.f32 %v7172, %v7420
  %v7422 = vpop.f32.mrf.mxu0
  %v7423 = vadd.f32 %v7174, %v7422
  %7424 = vmatmul.bf16.gmra.mxu0 %v3263
  %v7425 = vpop.f32.mrf.mxu0
  %v7426 = vadd.f32 %v7177, %v7425
  %v7427 = vpop.f32.mrf.mxu0
  %v7428 = vadd.f32 %v7179, %v7427
  %7429 = vmatmul.bf16.gmra.mxu0 %v3276
  %v7430 = vpop.f32.mrf.mxu0
  %v7431 = vadd.f32 %v7182, %v7430
  %v7432 = vpop.f32.mrf.mxu0
  %v7433 = vadd.f32 %v7184, %v7432
  %7434 = vmatmul.bf16.gmra.mxu0 %v3289
  %v7435 = vpop.f32.mrf.mxu0
  %v7436 = vadd.f32 %v7187, %v7435
  %v7437 = vpop.f32.mrf.mxu0
  %v7438 = vadd.f32 %v7189, %v7437
  %7439 = vmatmul.bf16.gmra.mxu0 %v3302
  %v7440 = vpop.f32.mrf.mxu0
  %v7441 = vadd.f32 %v7192, %v7440
  %v7442 = vpop.f32.mrf.mxu0
  %v7443 = vadd.f32 %v7194, %v7442
  %7444 = vmatmul.bf16.gmra.mxu0 %v3315
  %v7445 = vpop.f32.mrf.mxu0
  %v7446 = vadd.f32 %v7197, %v7445
  %v7447 = vpop.f32.mrf.mxu0
  %v7448 = vadd.f32 %v7199, %v7447
  %7449 = vmatmul.bf16.gmra.mxu0 %v3328
  %v7450 = vpop.f32.mrf.mxu0
  %v7451 = vadd.f32 %v7202, %v7450
  %v7452 = vpop.f32.mrf.mxu0
  %v7453 = vadd.f32 %v7204, %v7452
  %7454 = vmatmul.bf16.gmra.mxu0 %v3341
  %v7455 = vpop.f32.mrf.mxu0
  %v7456 = vadd.f32 %v7207, %v7455
  %v7457 = vpop.f32.mrf.mxu0
  %v7458 = vadd.f32 %v7209, %v7457
  %7459 = vmatmul.bf16.gmra.mxu0 %v3354
  %v7460 = vpop.f32.mrf.mxu0
  %v7461 = vadd.f32 %v7212, %v7460
  %v7462 = vpop.f32.mrf.mxu0
  %v7463 = vadd.f32 %v7214, %v7462
  %7464 = vmatmul.bf16.gmra.mxu0 %v3367
  %v7465 = vpop.f32.mrf.mxu0
  %v7466 = vadd.f32 %v7217, %v7465
  %v7467 = vpop.f32.mrf.mxu0
  %v7468 = vadd.f32 %v7219, %v7467
  %7469 = vmatmul.bf16.gmra.mxu0 %v3380
  %v7470 = vpop.f32.mrf.mxu0
  %v7471 = vadd.f32 %v7222, %v7470
  %v7472 = vpop.f32.mrf.mxu0
  %v7473 = vadd.f32 %v7224, %v7472
  %7474 = vmatmul.bf16.gmra.mxu0 %v3393
  %v7475 = vpop.f32.mrf.mxu0
  %v7476 = vadd.f32 %v7227, %v7475
  %v7477 = vpop.f32.mrf.mxu0
  %v7478 = vadd.f32 %v7229, %v7477
  %7479 = vmatmul.bf16.gmra.mxu0 %v3406
  %v7480 = vpop.f32.mrf.mxu0
  %v7481 = vadd.f32 %v7232, %v7480
  %v7482 = vpop.f32.mrf.mxu0
  %v7483 = vadd.f32 %v7234, %v7482
  %7484 = vmatmul.bf16.gmra.mxu0 %v3419
  %v7485 = vpop.f32.mrf.mxu0
  %v7486 = vadd.f32 %v7237, %v7485
  %v7487 = vpop.f32.mrf.mxu0
  %v7488 = vadd.f32 %v7239, %v7487
  %7489 = vmatmul.bf16.gmra.mxu0 %v3432
  %v7490 = vpop.f32.mrf.mxu0
  %v7491 = vadd.f32 %v7242, %v7490
  %v7492 = vpop.f32.mrf.mxu0
  %v7493 = vadd.f32 %v7244, %v7492
  %7494 = vdwg.mxu0
  %7495 = vmatpush.bf16.msra.mxu0 %v4506
  %7496 = vmatpush.bf16.msra.mxu0 %v4505
  %7497 = vmatpush.bf16.msra.mxu0 %v4504
  %7498 = vmatpush.bf16.msra.mxu0 %v4503
  %7499 = vmatpush.bf16.msra.mxu0 %v4502
  %7500 = vmatpush.bf16.msra.mxu0 %v4501
  %7501 = vmatpush.bf16.msra.mxu0 %v4500
  %7502 = vmatpush.bf16.msra.mxu0 %v4499
  %7503 = vmatmul.bf16.gmra.mxu0 %v2822
  %v7504 = vpop.f32.mrf.mxu0
  %v7505 = vadd.f32 %v7256, %v7504
  %v7506 = vpop.f32.mrf.mxu0
  %v7507 = vadd.f32 %v7258, %v7506
  %7508 = vmatmul.bf16.gmra.mxu0 %v2835
  %v7509 = vpop.f32.mrf.mxu0
  %v7510 = vadd.f32 %v7261, %v7509
  %v7511 = vpop.f32.mrf.mxu0
  %v7512 = vadd.f32 %v7263, %v7511
  %7513 = vmatmul.bf16.gmra.mxu0 %v2848
  %v7514 = vpop.f32.mrf.mxu0
  %v7515 = vadd.f32 %v7266, %v7514
  %v7516 = vpop.f32.mrf.mxu0
  %v7517 = vadd.f32 %v7268, %v7516
  %7518 = vmatmul.bf16.gmra.mxu0 %v2861
  %v7519 = vpop.f32.mrf.mxu0
  %v7520 = vadd.f32 %v7271, %v7519
  %v7521 = vpop.f32.mrf.mxu0
  %v7522 = vadd.f32 %v7273, %v7521
  %7523 = vmatmul.bf16.gmra.mxu0 %v2874
  %v7524 = vpop.f32.mrf.mxu0
  %v7525 = vadd.f32 %v7276, %v7524
  %v7526 = vpop.f32.mrf.mxu0
  %v7527 = vadd.f32 %v7278, %v7526
  %7528 = vmatmul.bf16.gmra.mxu0 %v2887
  %v7529 = vpop.f32.mrf.mxu0
  %v7530 = vadd.f32 %v7281, %v7529
  %v7531 = vpop.f32.mrf.mxu0
  %v7532 = vadd.f32 %v7283, %v7531
  %7533 = vmatmul.bf16.gmra.mxu0 %v2900
  %v7534 = vpop.f32.mrf.mxu0
  %v7535 = vadd.f32 %v7286, %v7534
  %v7536 = vpop.f32.mrf.mxu0
  %v7537 = vadd.f32 %v7288, %v7536
  %7538 = vmatmul.bf16.gmra.mxu0 %v2913
  %v7539 = vpop.f32.mrf.mxu0
  %v7540 = vadd.f32 %v7291, %v7539
  %v7541 = vpop.f32.mrf.mxu0
  %v7542 = vadd.f32 %v7293, %v7541
  %7543 = vmatmul.bf16.gmra.mxu0 %v2926
  %v7544 = vpop.f32.mrf.mxu0
  %v7545 = vadd.f32 %v7296, %v7544
  %v7546 = vpop.f32.mrf.mxu0
  %v7547 = vadd.f32 %v7298, %v7546
  %7548 = vmatmul.bf16.gmra.mxu0 %v2939
  %v7549 = vpop.f32.mrf.mxu0
  %v7550 = vadd.f32 %v7301, %v7549
  %v7551 = vpop.f32.mrf.mxu0
  %v7552 = vadd.f32 %v7303, %v7551
  %7553 = vmatmul.bf16.gmra.mxu0 %v2952
  %v7554 = vpop.f32.mrf.mxu0
  %v7555 = vadd.f32 %v7306, %v7554
  %v7556 = vpop.f32.mrf.mxu0
  %v7557 = vadd.f32 %v7308, %v7556
  %7558 = vmatmul.bf16.gmra.mxu0 %v2965
  %v7559 = vpop.f32.mrf.mxu0
  %v7560 = vadd.f32 %v7311, %v7559
  %v7561 = vpop.f32.mrf.mxu0
  %v7562 = vadd.f32 %v7313, %v7561
  %7563 = vmatmul.bf16.gmra.mxu0 %v2978
  %v7564 = vpop.f32.mrf.mxu0
  %v7565 = vadd.f32 %v7316, %v7564
  %v7566 = vpop.f32.mrf.mxu0
  %v7567 = vadd.f32 %v7318, %v7566
  %7568 = vmatmul.bf16.gmra.mxu0 %v2991
  %v7569 = vpop.f32.mrf.mxu0
  %v7570 = vadd.f32 %v7321, %v7569
  %v7571 = vpop.f32.mrf.mxu0
  %v7572 = vadd.f32 %v7323, %v7571
  %7573 = vmatmul.bf16.gmra.mxu0 %v3004
  %v7574 = vpop.f32.mrf.mxu0
  %v7575 = vadd.f32 %v7326, %v7574
  %v7576 = vpop.f32.mrf.mxu0
  %v7577 = vadd.f32 %v7328, %v7576
  %7578 = vmatmul.bf16.gmra.mxu0 %v3017
  %v7579 = vpop.f32.mrf.mxu0
  %v7580 = vadd.f32 %v7331, %v7579
  %v7581 = vpop.f32.mrf.mxu0
  %v7582 = vadd.f32 %v7333, %v7581
  %7583 = vmatmul.bf16.gmra.mxu0 %v3030
  %v7584 = vpop.f32.mrf.mxu0
  %v7585 = vadd.f32 %v7336, %v7584
  %v7586 = vpop.f32.mrf.mxu0
  %v7587 = vadd.f32 %v7338, %v7586
  %7588 = vmatmul.bf16.gmra.mxu0 %v3043
  %v7589 = vpop.f32.mrf.mxu0
  %v7590 = vadd.f32 %v7341, %v7589
  %v7591 = vpop.f32.mrf.mxu0
  %v7592 = vadd.f32 %v7343, %v7591
  %7593 = vmatmul.bf16.gmra.mxu0 %v3056
  %v7594 = vpop.f32.mrf.mxu0
  %v7595 = vadd.f32 %v7346, %v7594
  %v7596 = vpop.f32.mrf.mxu0
  %v7597 = vadd.f32 %v7348, %v7596
  %7598 = vmatmul.bf16.gmra.mxu0 %v3069
  %v7599 = vpop.f32.mrf.mxu0
  %v7600 = vadd.f32 %v7351, %v7599
  %v7601 = vpop.f32.mrf.mxu0
  %v7602 = vadd.f32 %v7353, %v7601
  %7603 = vmatmul.bf16.gmra.mxu0 %v3082
  %v7604 = vpop.f32.mrf.mxu0
  %v7605 = vadd.f32 %v7356, %v7604
  %v7606 = vpop.f32.mrf.mxu0
  %v7607 = vadd.f32 %v7358, %v7606
  %7608 = vmatmul.bf16.gmra.mxu0 %v3095
  %v7609 = vpop.f32.mrf.mxu0
  %v7610 = vadd.f32 %v7361, %v7609
  %v7611 = vpop.f32.mrf.mxu0
  %v7612 = vadd.f32 %v7363, %v7611
  %7613 = vmatmul.bf16.gmra.mxu0 %v3108
  %v7614 = vpop.f32.mrf.mxu0
  %v7615 = vadd.f32 %v7366, %v7614
  %v7616 = vpop.f32.mrf.mxu0
  %v7617 = vadd.f32 %v7368, %v7616
  %7618 = vmatmul.bf16.gmra.mxu0 %v3121
  %v7619 = vpop.f32.mrf.mxu0
  %v7620 = vadd.f32 %v7371, %v7619
  %v7621 = vpop.f32.mrf.mxu0
  %v7622 = vadd.f32 %v7373, %v7621
  %7623 = vmatmul.bf16.gmra.mxu0 %v3134
  %v7624 = vpop.f32.mrf.mxu0
  %v7625 = vadd.f32 %v7376, %v7624
  %v7626 = vpop.f32.mrf.mxu0
  %v7627 = vadd.f32 %v7378, %v7626
  %7628 = vmatmul.bf16.gmra.mxu0 %v3147
  %v7629 = vpop.f32.mrf.mxu0
  %v7630 = vadd.f32 %v7381, %v7629
  %v7631 = vpop.f32.mrf.mxu0
  %v7632 = vadd.f32 %v7383, %v7631
  %7633 = vmatmul.bf16.gmra.mxu0 %v3160
  %v7634 = vpop.f32.mrf.mxu0
  %v7635 = vadd.f32 %v7386, %v7634
  %v7636 = vpop.f32.mrf.mxu0
  %v7637 = vadd.f32 %v7388, %v7636
  %7638 = vmatmul.bf16.gmra.mxu0 %v3173
  %v7639 = vpop.f32.mrf.mxu0
  %v7640 = vadd.f32 %v7391, %v7639
  %v7641 = vpop.f32.mrf.mxu0
  %v7642 = vadd.f32 %v7393, %v7641
  %7643 = vmatmul.bf16.gmra.mxu0 %v3186
  %v7644 = vpop.f32.mrf.mxu0
  %v7645 = vadd.f32 %v7396, %v7644
  %v7646 = vpop.f32.mrf.mxu0
  %v7647 = vadd.f32 %v7398, %v7646
  %7648 = vmatmul.bf16.gmra.mxu0 %v3199
  %v7649 = vpop.f32.mrf.mxu0
  %v7650 = vadd.f32 %v7401, %v7649
  %v7651 = vpop.f32.mrf.mxu0
  %v7652 = vadd.f32 %v7403, %v7651
  %7653 = vmatmul.bf16.gmra.mxu0 %v3212
  %v7654 = vpop.f32.mrf.mxu0
  %v7655 = vadd.f32 %v7406, %v7654
  %v7656 = vpop.f32.mrf.mxu0
  %v7657 = vadd.f32 %v7408, %v7656
  %7658 = vmatmul.bf16.gmra.mxu0 %v3225
  %v7659 = vpop.f32.mrf.mxu0
  %v7660 = vadd.f32 %v7411, %v7659
  %v7661 = vpop.f32.mrf.mxu0
  %v7662 = vadd.f32 %v7413, %v7661
  %7663 = vmatmul.bf16.gmra.mxu0 %v3238
  %v7664 = vpop.f32.mrf.mxu0
  %v7665 = vadd.f32 %v7416, %v7664
  %v7666 = vpop.f32.mrf.mxu0
  %v7667 = vadd.f32 %v7418, %v7666
  %7668 = vmatmul.bf16.gmra.mxu0 %v3251
  %v7669 = vpop.f32.mrf.mxu0
  %v7670 = vadd.f32 %v7421, %v7669
  %v7671 = vpop.f32.mrf.mxu0
  %v7672 = vadd.f32 %v7423, %v7671
  %7673 = vmatmul.bf16.gmra.mxu0 %v3264
  %v7674 = vpop.f32.mrf.mxu0
  %v7675 = vadd.f32 %v7426, %v7674
  %v7676 = vpop.f32.mrf.mxu0
  %v7677 = vadd.f32 %v7428, %v7676
  %7678 = vmatmul.bf16.gmra.mxu0 %v3277
  %v7679 = vpop.f32.mrf.mxu0
  %v7680 = vadd.f32 %v7431, %v7679
  %v7681 = vpop.f32.mrf.mxu0
  %v7682 = vadd.f32 %v7433, %v7681
  %7683 = vmatmul.bf16.gmra.mxu0 %v3290
  %v7684 = vpop.f32.mrf.mxu0
  %v7685 = vadd.f32 %v7436, %v7684
  %v7686 = vpop.f32.mrf.mxu0
  %v7687 = vadd.f32 %v7438, %v7686
  %7688 = vmatmul.bf16.gmra.mxu0 %v3303
  %v7689 = vpop.f32.mrf.mxu0
  %v7690 = vadd.f32 %v7441, %v7689
  %v7691 = vpop.f32.mrf.mxu0
  %v7692 = vadd.f32 %v7443, %v7691
  %7693 = vmatmul.bf16.gmra.mxu0 %v3316
  %v7694 = vpop.f32.mrf.mxu0
  %v7695 = vadd.f32 %v7446, %v7694
  %v7696 = vpop.f32.mrf.mxu0
  %v7697 = vadd.f32 %v7448, %v7696
  %7698 = vmatmul.bf16.gmra.mxu0 %v3329
  %v7699 = vpop.f32.mrf.mxu0
  %v7700 = vadd.f32 %v7451, %v7699
  %v7701 = vpop.f32.mrf.mxu0
  %v7702 = vadd.f32 %v7453, %v7701
  %7703 = vmatmul.bf16.gmra.mxu0 %v3342
  %v7704 = vpop.f32.mrf.mxu0
  %v7705 = vadd.f32 %v7456, %v7704
  %v7706 = vpop.f32.mrf.mxu0
  %v7707 = vadd.f32 %v7458, %v7706
  %7708 = vmatmul.bf16.gmra.mxu0 %v3355
  %v7709 = vpop.f32.mrf.mxu0
  %v7710 = vadd.f32 %v7461, %v7709
  %v7711 = vpop.f32.mrf.mxu0
  %v7712 = vadd.f32 %v7463, %v7711
  %7713 = vmatmul.bf16.gmra.mxu0 %v3368
  %v7714 = vpop.f32.mrf.mxu0
  %v7715 = vadd.f32 %v7466, %v7714
  %v7716 = vpop.f32.mrf.mxu0
  %v7717 = vadd.f32 %v7468, %v7716
  %7718 = vmatmul.bf16.gmra.mxu0 %v3381
  %v7719 = vpop.f32.mrf.mxu0
  %v7720 = vadd.f32 %v7471, %v7719
  %v7721 = vpop.f32.mrf.mxu0
  %v7722 = vadd.f32 %v7473, %v7721
  %7723 = vmatmul.bf16.gmra.mxu0 %v3394
  %v7724 = vpop.f32.mrf.mxu0
  %v7725 = vadd.f32 %v7476, %v7724
  %v7726 = vpop.f32.mrf.mxu0
  %v7727 = vadd.f32 %v7478, %v7726
  %7728 = vmatmul.bf16.gmra.mxu0 %v3407
  %v7729 = vpop.f32.mrf.mxu0
  %v7730 = vadd.f32 %v7481, %v7729
  %v7731 = vpop.f32.mrf.mxu0
  %v7732 = vadd.f32 %v7483, %v7731
  %7733 = vmatmul.bf16.gmra.mxu0 %v3420
  %v7734 = vpop.f32.mrf.mxu0
  %v7735 = vadd.f32 %v7486, %v7734
  %v7736 = vpop.f32.mrf.mxu0
  %v7737 = vadd.f32 %v7488, %v7736
  %7738 = vmatmul.bf16.gmra.mxu0 %v3433
  %v7739 = vpop.f32.mrf.mxu0
  %v7740 = vadd.f32 %v7491, %v7739
  %v7741 = vpop.f32.mrf.mxu0
  %v7742 = vadd.f32 %v7493, %v7741
  %7743 = vdwg.mxu0
  %7744 = vmatpush.bf16.msra.mxu0 0
  %7745 = vmatpush.bf16.msra.mxu0 0
  %7746 = vmatpush.bf16.msra.mxu0 0
  %7747 = vmatpush.bf16.msra.mxu0 0
  %7748 = vmatpush.bf16.msra.mxu0 %v4510
  %7749 = vmatpush.bf16.msra.mxu0 %v4509
  %7750 = vmatpush.bf16.msra.mxu0 %v4508
  %7751 = vmatpush.bf16.msra.mxu0 %v4507
  %7752 = vmatmul.bf16.gmra.mxu0 %v4613
  %v7753 = vpop.f32.mrf.mxu0
  %v7754 = vadd.f32 %v7505, %v7753
  %v7755 = vpop.f32.mrf.mxu0
  %v7756 = vadd.f32 %v7507, %v7755
  %7757 = vmatmul.bf16.gmra.mxu0 %v4616
  %v7758 = vpop.f32.mrf.mxu0
  %v7759 = vadd.f32 %v7510, %v7758
  %v7760 = vpop.f32.mrf.mxu0
  %v7761 = vadd.f32 %v7512, %v7760
  %7762 = vmatmul.bf16.gmra.mxu0 %v4619
  %v7763 = vpop.f32.mrf.mxu0
  %v7764 = vadd.f32 %v7515, %v7763
  %v7765 = vpop.f32.mrf.mxu0
  %v7766 = vadd.f32 %v7517, %v7765
  %7767 = vmatmul.bf16.gmra.mxu0 %v4622
  %v7768 = vpop.f32.mrf.mxu0
  %v7769 = vadd.f32 %v7520, %v7768
  %v7770 = vpop.f32.mrf.mxu0
  %v7771 = vadd.f32 %v7522, %v7770
  %7772 = vmatmul.bf16.gmra.mxu0 %v4625
  %v7773 = vpop.f32.mrf.mxu0
  %v7774 = vadd.f32 %v7525, %v7773
  %v7775 = vpop.f32.mrf.mxu0
  %v7776 = vadd.f32 %v7527, %v7775
  %7777 = vmatmul.bf16.gmra.mxu0 %v4628
  %v7778 = vpop.f32.mrf.mxu0
  %v7779 = vadd.f32 %v7530, %v7778
  %v7780 = vpop.f32.mrf.mxu0
  %v7781 = vadd.f32 %v7532, %v7780
  %7782 = vmatmul.bf16.gmra.mxu0 %v4631
  %v7783 = vpop.f32.mrf.mxu0
  %v7784 = vadd.f32 %v7535, %v7783
  %v7785 = vpop.f32.mrf.mxu0
  %v7786 = vadd.f32 %v7537, %v7785
  %7787 = vmatmul.bf16.gmra.mxu0 %v4634
  %v7788 = vpop.f32.mrf.mxu0
  %v7789 = vadd.f32 %v7540, %v7788
  %v7790 = vpop.f32.mrf.mxu0
  %v7791 = vadd.f32 %v7542, %v7790
  %7792 = vmatmul.bf16.gmra.mxu0 %v4637
  %v7793 = vpop.f32.mrf.mxu0
  %v7794 = vadd.f32 %v7545, %v7793
  %v7795 = vpop.f32.mrf.mxu0
  %v7796 = vadd.f32 %v7547, %v7795
  %7797 = vmatmul.bf16.gmra.mxu0 %v4640
  %v7798 = vpop.f32.mrf.mxu0
  %v7799 = vadd.f32 %v7550, %v7798
  %v7800 = vpop.f32.mrf.mxu0
  %v7801 = vadd.f32 %v7552, %v7800
  %7802 = vmatmul.bf16.gmra.mxu0 %v4643
  %v7803 = vpop.f32.mrf.mxu0
  %v7804 = vadd.f32 %v7555, %v7803
  %v7805 = vpop.f32.mrf.mxu0
  %v7806 = vadd.f32 %v7557, %v7805
  %7807 = vmatmul.bf16.gmra.mxu0 %v4646
  %v7808 = vpop.f32.mrf.mxu0
  %v7809 = vadd.f32 %v7560, %v7808
  %v7810 = vpop.f32.mrf.mxu0
  %v7811 = vadd.f32 %v7562, %v7810
  %7812 = vmatmul.bf16.gmra.mxu0 %v4649
  %v7813 = vpop.f32.mrf.mxu0
  %v7814 = vadd.f32 %v7565, %v7813
  %v7815 = vpop.f32.mrf.mxu0
  %v7816 = vadd.f32 %v7567, %v7815
  %7817 = vmatmul.bf16.gmra.mxu0 %v4652
  %v7818 = vpop.f32.mrf.mxu0
  %v7819 = vadd.f32 %v7570, %v7818
  %v7820 = vpop.f32.mrf.mxu0
  %v7821 = vadd.f32 %v7572, %v7820
  %7822 = vmatmul.bf16.gmra.mxu0 %v4655
  %v7823 = vpop.f32.mrf.mxu0
  %v7824 = vadd.f32 %v7575, %v7823
  %v7825 = vpop.f32.mrf.mxu0
  %v7826 = vadd.f32 %v7577, %v7825
  %7827 = vmatmul.bf16.gmra.mxu0 %v4658
  %v7828 = vpop.f32.mrf.mxu0
  %v7829 = vadd.f32 %v7580, %v7828
  %v7830 = vpop.f32.mrf.mxu0
  %v7831 = vadd.f32 %v7582, %v7830
  %7832 = vmatmul.bf16.gmra.mxu0 %v4661
  %v7833 = vpop.f32.mrf.mxu0
  %v7834 = vadd.f32 %v7585, %v7833
  %v7835 = vpop.f32.mrf.mxu0
  %v7836 = vadd.f32 %v7587, %v7835
  %7837 = vmatmul.bf16.gmra.mxu0 %v4664
  %v7838 = vpop.f32.mrf.mxu0
  %v7839 = vadd.f32 %v7590, %v7838
  %v7840 = vpop.f32.mrf.mxu0
  %v7841 = vadd.f32 %v7592, %v7840
  %7842 = vmatmul.bf16.gmra.mxu0 %v4667
  %v7843 = vpop.f32.mrf.mxu0
  %v7844 = vadd.f32 %v7595, %v7843
  %v7845 = vpop.f32.mrf.mxu0
  %v7846 = vadd.f32 %v7597, %v7845
  %7847 = vmatmul.bf16.gmra.mxu0 %v4670
  %v7848 = vpop.f32.mrf.mxu0
  %v7849 = vadd.f32 %v7600, %v7848
  %v7850 = vpop.f32.mrf.mxu0
  %v7851 = vadd.f32 %v7602, %v7850
  %7852 = vmatmul.bf16.gmra.mxu0 %v4673
  %v7853 = vpop.f32.mrf.mxu0
  %v7854 = vadd.f32 %v7605, %v7853
  %v7855 = vpop.f32.mrf.mxu0
  %v7856 = vadd.f32 %v7607, %v7855
  %7857 = vmatmul.bf16.gmra.mxu0 %v4676
  %v7858 = vpop.f32.mrf.mxu0
  %v7859 = vadd.f32 %v7610, %v7858
  %v7860 = vpop.f32.mrf.mxu0
  %v7861 = vadd.f32 %v7612, %v7860
  %7862 = vmatmul.bf16.gmra.mxu0 %v4679
  %v7863 = vpop.f32.mrf.mxu0
  %v7864 = vadd.f32 %v7615, %v7863
  %v7865 = vpop.f32.mrf.mxu0
  %v7866 = vadd.f32 %v7617, %v7865
  %7867 = vmatmul.bf16.gmra.mxu0 %v4682
  %v7868 = vpop.f32.mrf.mxu0
  %v7869 = vadd.f32 %v7620, %v7868
  %v7870 = vpop.f32.mrf.mxu0
  %v7871 = vadd.f32 %v7622, %v7870
  %7872 = vmatmul.bf16.gmra.mxu0 %v4685
  %v7873 = vpop.f32.mrf.mxu0
  %v7874 = vadd.f32 %v7625, %v7873
  %v7875 = vpop.f32.mrf.mxu0
  %v7876 = vadd.f32 %v7627, %v7875
  %7877 = vmatmul.bf16.gmra.mxu0 %v4688
  %v7878 = vpop.f32.mrf.mxu0
  %v7879 = vadd.f32 %v7630, %v7878
  %v7880 = vpop.f32.mrf.mxu0
  %v7881 = vadd.f32 %v7632, %v7880
  %7882 = vmatmul.bf16.gmra.mxu0 %v4691
  %v7883 = vpop.f32.mrf.mxu0
  %v7884 = vadd.f32 %v7635, %v7883
  %v7885 = vpop.f32.mrf.mxu0
  %v7886 = vadd.f32 %v7637, %v7885
  %7887 = vmatmul.bf16.gmra.mxu0 %v4694
  %v7888 = vpop.f32.mrf.mxu0
  %v7889 = vadd.f32 %v7640, %v7888
  %v7890 = vpop.f32.mrf.mxu0
  %v7891 = vadd.f32 %v7642, %v7890
  %7892 = vmatmul.bf16.gmra.mxu0 %v4697
  %v7893 = vpop.f32.mrf.mxu0
  %v7894 = vadd.f32 %v7645, %v7893
  %v7895 = vpop.f32.mrf.mxu0
  %v7896 = vadd.f32 %v7647, %v7895
  %7897 = vmatmul.bf16.gmra.mxu0 %v4700
  %v7898 = vpop.f32.mrf.mxu0
  %v7899 = vadd.f32 %v7650, %v7898
  %v7900 = vpop.f32.mrf.mxu0
  %v7901 = vadd.f32 %v7652, %v7900
  %7902 = vmatmul.bf16.gmra.mxu0 %v4703
  %v7903 = vpop.f32.mrf.mxu0
  %v7904 = vadd.f32 %v7655, %v7903
  %v7905 = vpop.f32.mrf.mxu0
  %v7906 = vadd.f32 %v7657, %v7905
  %7907 = vmatmul.bf16.gmra.mxu0 %v4706
  %v7908 = vpop.f32.mrf.mxu0
  %v7909 = vadd.f32 %v7660, %v7908
  %v7910 = vpop.f32.mrf.mxu0
  %v7911 = vadd.f32 %v7662, %v7910
  %7912 = vmatmul.bf16.gmra.mxu0 %v4709
  %v7913 = vpop.f32.mrf.mxu0
  %v7914 = vadd.f32 %v7665, %v7913
  %v7915 = vpop.f32.mrf.mxu0
  %v7916 = vadd.f32 %v7667, %v7915
  %7917 = vmatmul.bf16.gmra.mxu0 %v4712
  %v7918 = vpop.f32.mrf.mxu0
  %v7919 = vadd.f32 %v7670, %v7918
  %v7920 = vpop.f32.mrf.mxu0
  %v7921 = vadd.f32 %v7672, %v7920
  %7922 = vmatmul.bf16.gmra.mxu0 %v4715
  %v7923 = vpop.f32.mrf.mxu0
  %v7924 = vadd.f32 %v7675, %v7923
  %v7925 = vpop.f32.mrf.mxu0
  %v7926 = vadd.f32 %v7677, %v7925
  %7927 = vmatmul.bf16.gmra.mxu0 %v4718
  %v7928 = vpop.f32.mrf.mxu0
  %v7929 = vadd.f32 %v7680, %v7928
  %v7930 = vpop.f32.mrf.mxu0
  %v7931 = vadd.f32 %v7682, %v7930
  %7932 = vmatmul.bf16.gmra.mxu0 %v4721
  %v7933 = vpop.f32.mrf.mxu0
  %v7934 = vadd.f32 %v7685, %v7933
  %v7935 = vpop.f32.mrf.mxu0
  %v7936 = vadd.f32 %v7687, %v7935
  %7937 = vmatmul.bf16.gmra.mxu0 %v4724
  %v7938 = vpop.f32.mrf.mxu0
  %v7939 = vadd.f32 %v7690, %v7938
  %v7940 = vpop.f32.mrf.mxu0
  %v7941 = vadd.f32 %v7692, %v7940
  %7942 = vmatmul.bf16.gmra.mxu0 %v4727
  %v7943 = vpop.f32.mrf.mxu0
  %v7944 = vadd.f32 %v7695, %v7943
  %v7945 = vpop.f32.mrf.mxu0
  %v7946 = vadd.f32 %v7697, %v7945
  %7947 = vmatmul.bf16.gmra.mxu0 %v4730
  %v7948 = vpop.f32.mrf.mxu0
  %v7949 = vadd.f32 %v7700, %v7948
  %v7950 = vpop.f32.mrf.mxu0
  %v7951 = vadd.f32 %v7702, %v7950
  %7952 = vmatmul.bf16.gmra.mxu0 %v4733
  %v7953 = vpop.f32.mrf.mxu0
  %v7954 = vadd.f32 %v7705, %v7953
  %v7955 = vpop.f32.mrf.mxu0
  %v7956 = vadd.f32 %v7707, %v7955
  %7957 = vmatmul.bf16.gmra.mxu0 %v4736
  %v7958 = vpop.f32.mrf.mxu0
  %v7959 = vadd.f32 %v7710, %v7958
  %v7960 = vpop.f32.mrf.mxu0
  %v7961 = vadd.f32 %v7712, %v7960
  %7962 = vmatmul.bf16.gmra.mxu0 %v4739
  %v7963 = vpop.f32.mrf.mxu0
  %v7964 = vadd.f32 %v7715, %v7963
  %v7965 = vpop.f32.mrf.mxu0
  %v7966 = vadd.f32 %v7717, %v7965
  %7967 = vmatmul.bf16.gmra.mxu0 %v4742
  %v7968 = vpop.f32.mrf.mxu0
  %v7969 = vadd.f32 %v7720, %v7968
  %v7970 = vpop.f32.mrf.mxu0
  %v7971 = vadd.f32 %v7722, %v7970
  %7972 = vmatmul.bf16.gmra.mxu0 %v4745
  %v7973 = vpop.f32.mrf.mxu0
  %v7974 = vadd.f32 %v7725, %v7973
  %v7975 = vpop.f32.mrf.mxu0
  %v7976 = vadd.f32 %v7727, %v7975
  %7977 = vmatmul.bf16.gmra.mxu0 %v4748
  %v7978 = vpop.f32.mrf.mxu0
  %v7979 = vadd.f32 %v7730, %v7978
  %v7980 = vpop.f32.mrf.mxu0
  %v7981 = vadd.f32 %v7732, %v7980
  %7982 = vmatmul.bf16.gmra.mxu0 %v4751
  %v7983 = vpop.f32.mrf.mxu0
  %v7984 = vadd.f32 %v7735, %v7983
  %v7985 = vpop.f32.mrf.mxu0
  %v7986 = vadd.f32 %v7737, %v7985
  %7987 = vmatmul.bf16.gmra.mxu0 %v4754
  %v7988 = vpop.f32.mrf.mxu0
  %v7989 = vadd.f32 %v7740, %v7988
  %v7990 = vpop.f32.mrf.mxu0
  %v7991 = vadd.f32 %v7742, %v7990
  %7992 = vdwg.mxu0
  %v7993 = vmax.f32 %v7754, 0.0
  %v7994 = vmax.f32 %v7756, 0.0
  %v7995 = vmax.f32 %v7759, 0.0
  %v7996 = vmax.f32 %v7761, 0.0
  %v7997 = vmax.f32 %v7764, 0.0
  %v7998 = vmax.f32 %v7766, 0.0
  %v7999 = vmax.f32 %v7769, 0.0
  %v8000 = vmax.f32 %v7771, 0.0
  %v8001 = vmax.f32 %v7774, 0.0
  %v8002 = vmax.f32 %v7776, 0.0
  %v8003 = vmax.f32 %v7779, 0.0
  %v8004 = vmax.f32 %v7781, 0.0
  %v8005 = vmax.f32 %v7784, 0.0
  %v8006 = vmax.f32 %v7786, 0.0
  %v8007 = vmax.f32 %v7789, 0.0
  %v8008 = vmax.f32 %v7791, 0.0
  %v8009 = vmax.f32 %v7794, 0.0
  %v8010 = vmax.f32 %v7796, 0.0
  %v8011 = vmax.f32 %v7799, 0.0
  %v8012 = vmax.f32 %v7801, 0.0
  %v8013 = vmax.f32 %v7804, 0.0
  %v8014 = vmax.f32 %v7806, 0.0
  %v8015 = vmax.f32 %v7809, 0.0
  %v8016 = vmax.f32 %v7811, 0.0
  %v8017 = vmax.f32 %v7814, 0.0
  %v8018 = vmax.f32 %v7816, 0.0
  %v8019 = vmax.f32 %v7819, 0.0
  %v8020 = vmax.f32 %v7821, 0.0
  %v8021 = vmax.f32 %v7824, 0.0
  %v8022 = vmax.f32 %v7826, 0.0
  %v8023 = vmax.f32 %v7829, 0.0
  %v8024 = vmax.f32 %v7831, 0.0
  %v8025 = vmax.f32 %v7834, 0.0
  %v8026 = vmax.f32 %v7836, 0.0
  %v8027 = vmax.f32 %v7839, 0.0
  %v8028 = vmax.f32 %v7841, 0.0
  %v8029 = vmax.f32 %v7844, 0.0
  %v8030 = vmax.f32 %v7846, 0.0
  %v8031 = vmax.f32 %v7849, 0.0
  %v8032 = vmax.f32 %v7851, 0.0
  %v8033 = vmax.f32 %v7854, 0.0
  %v8034 = vmax.f32 %v7856, 0.0
  %v8035 = vmax.f32 %v7859, 0.0
  %v8036 = vmax.f32 %v7861, 0.0
  %v8037 = vmax.f32 %v7864, 0.0
  %v8038 = vmax.f32 %v7866, 0.0
  %v8039 = vmax.f32 %v7869, 0.0
  %v8040 = vmax.f32 %v7871, 0.0
  %v8041 = vmax.f32 %v7874, 0.0
  %v8042 = vmax.f32 %v7876, 0.0
  %v8043 = vmax.f32 %v7879, 0.0
  %v8044 = vmax.f32 %v7881, 0.0
  %v8045 = vmax.f32 %v7884, 0.0
  %v8046 = vmax.f32 %v7886, 0.0
  %v8047 = vmax.f32 %v7889, 0.0
  %v8048 = vmax.f32 %v7891, 0.0
  %v8049 = vmax.f32 %v7894, 0.0
  %v8050 = vmax.f32 %v7896, 0.0
  %v8051 = vmax.f32 %v7899, 0.0
  %v8052 = vmax.f32 %v7901, 0.0
  %v8053 = vmax.f32 %v7904, 0.0
  %v8054 = vmax.f32 %v7906, 0.0
  %v8055 = vmax.f32 %v7909, 0.0
  %v8056 = vmax.f32 %v7911, 0.0
  %v8057 = vmax.f32 %v7914, 0.0
  %v8058 = vmax.f32 %v7916, 0.0
  %v8059 = vmax.f32 %v7919, 0.0
  %v8060 = vmax.f32 %v7921, 0.0
  %v8061 = vmax.f32 %v7924, 0.0
  %v8062 = vmax.f32 %v7926, 0.0
  %v8063 = vmax.f32 %v7929, 0.0
  %v8064 = vmax.f32 %v7931, 0.0
  %v8065 = vmax.f32 %v7934, 0.0
  %v8066 = vmax.f32 %v7936, 0.0
  %v8067 = vmax.f32 %v7939, 0.0
  %v8068 = vmax.f32 %v7941, 0.0
  %v8069 = vmax.f32 %v7944, 0.0
  %v8070 = vmax.f32 %v7946, 0.0
  %v8071 = vmax.f32 %v7949, 0.0
  %v8072 = vmax.f32 %v7951, 0.0
  %v8073 = vmax.f32 %v7954, 0.0
  %v8074 = vmax.f32 %v7956, 0.0
  %v8075 = vmax.f32 %v7959, 0.0
  %v8076 = vmax.f32 %v7961, 0.0
  %v8077 = vmax.f32 %v7964, 0.0
  %v8078 = vmax.f32 %v7966, 0.0
  %v8079 = vmax.f32 %v7969, 0.0
  %v8080 = vmax.f32 %v7971, 0.0
  %v8081 = vmax.f32 %v7974, 0.0
  %v8082 = vmax.f32 %v7976, 0.0
  %v8083 = vmax.f32 %v7979, 0.0
  %v8084 = vmax.f32 %v7981, 0.0
  %v8085 = vmax.f32 %v7984, 0.0
  %v8086 = vmax.f32 %v7986, 0.0
  %v8087 = vmax.f32 %v7989, 0.0
  %v8088 = vmax.f32 %v7991, 0.0
  %v8089 = vmax.f32 %v7993, %v8025
  %v8090 = vmax.f32 %v7994, %v8026
  %v8091 = vmax.f32 %v7995, %v8027
  %v8092 = vmax.f32 %v7996, %v8028
  %v8093 = vmax.f32 %v7997, %v8029
  %v8094 = vmax.f32 %v7998, %v8030
  %v8095 = vmax.f32 %v7999, %v8031
  %v8096 = vmax.f32 %v8000, %v8032
  %v8097 = vmax.f32 %v8001, %v8033
  %v8098 = vmax.f32 %v8002, %v8034
  %v8099 = vmax.f32 %v8003, %v8035
  %v8100 = vmax.f32 %v8004, %v8036
  %v8101 = vmax.f32 %v8005, %v8037
  %v8102 = vmax.f32 %v8006, %v8038
  %v8103 = vmax.f32 %v8007, %v8039
  %v8104 = vmax.f32 %v8008, %v8040
  %v8105 = vmax.f32 %v8009, %v8041
  %v8106 = vmax.f32 %v8010, %v8042
  %v8107 = vmax.f32 %v8011, %v8043
  %v8108 = vmax.f32 %v8012, %v8044
  %v8109 = vmax.f32 %v8013, %v8045
  %v8110 = vmax.f32 %v8014, %v8046
  %v8111 = vmax.f32 %v8015, %v8047
  %v8112 = vmax.f32 %v8016, %v8048
  %v8113 = vmax.f32 %v8017, %v8049
  %v8114 = vmax.f32 %v8018, %v8050
  %v8115 = vmax.f32 %v8019, %v8051
  %v8116 = vmax.f32 %v8020, %v8052
  %v8117 = vmax.f32 %v8021, %v8053
  %v8118 = vmax.f32 %v8022, %v8054
  %v8119 = vmax.f32 %v8023, %v8055
  %v8120 = vmax.f32 %v8024, %v8056
  %v8121 = vmax.f32 %v8089, %v8057
  %v8122 = vmax.f32 %v8090, %v8058
  %v8123 = vmax.f32 %v8091, %v8059
  %v8124 = vmax.f32 %v8092, %v8060
  %v8125 = vmax.f32 %v8093, %v8061
  %v8126 = vmax.f32 %v8094, %v8062
  %v8127 = vmax.f32 %v8095, %v8063
  %v8128 = vmax.f32 %v8096, %v8064
  %v8129 = vmax.f32 %v8097, %v8065
  %v8130 = vmax.f32 %v8098, %v8066
  %v8131 = vmax.f32 %v8099, %v8067
  %v8132 = vmax.f32 %v8100, %v8068
  %v8133 = vmax.f32 %v8101, %v8069
  %v8134 = vmax.f32 %v8102, %v8070
  %v8135 = vmax.f32 %v8103, %v8071
  %v8136 = vmax.f32 %v8104, %v8072
  %v8137 = vmax.f32 %v8105, %v8073
  %v8138 = vmax.f32 %v8106, %v8074
  %v8139 = vmax.f32 %v8107, %v8075
  %v8140 = vmax.f32 %v8108, %v8076
  %v8141 = vmax.f32 %v8109, %v8077
  %v8142 = vmax.f32 %v8110, %v8078
  %v8143 = vmax.f32 %v8111, %v8079
  %v8144 = vmax.f32 %v8112, %v8080
  %v8145 = vmax.f32 %v8113, %v8081
  %v8146 = vmax.f32 %v8114, %v8082
  %v8147 = vmax.f32 %v8115, %v8083
  %v8148 = vmax.f32 %v8116, %v8084
  %v8149 = vmax.f32 %v8117, %v8085
  %v8150 = vmax.f32 %v8118, %v8086
  %v8151 = vmax.f32 %v8119, %v8087
  %v8152 = vmax.f32 %v8120, %v8088
  %v8153 = vmax.f32 %v8121, %v8122
  %v8154 = vmax.f32 %v8123, %v8124
  %v8155 = vmax.f32 %v8125, %v8126
  %v8156 = vmax.f32 %v8127, %v8128
  %v8157 = vmax.f32 %v8129, %v8130
  %v8158 = vmax.f32 %v8131, %v8132
  %v8159 = vmax.f32 %v8133, %v8134
  %v8160 = vmax.f32 %v8135, %v8136
  %v8161 = vmax.f32 %v8137, %v8138
  %v8162 = vmax.f32 %v8139, %v8140
  %v8163 = vmax.f32 %v8141, %v8142
  %v8164 = vmax.f32 %v8143, %v8144
  %v8165 = vmax.f32 %v8145, %v8146
  %v8166 = vmax.f32 %v8147, %v8148
  %v8167 = vmax.f32 %v8149, %v8150
  %v8168 = vmax.f32 %v8151, %v8152
  %v8169 = vmax.f32 %v8153, %v8123
  %v8170 = vmax.f32 %v8154, %v8125
  %v8171 = vmax.f32 %v8155, %v8127
  %v8172 = vmax.f32 %v8156, %v8129
  %v8173 = vmax.f32 %v8157, %v8131
  %v8174 = vmax.f32 %v8158, %v8133
  %v8175 = vmax.f32 %v8159, %v8135
  %v8176 = vmax.f32 %v8160, %v8137
  %v8177 = vmax.f32 %v8161, %v8139
  %v8178 = vmax.f32 %v8162, %v8141
  %v8179 = vmax.f32 %v8163, %v8143
  %v8180 = vmax.f32 %v8164, %v8145
  %v8181 = vmax.f32 %v8165, %v8147
  %v8182 = vmax.f32 %v8166, %v8149
  %v8183 = vmax.f32 %v8167, %v8151
  %v8184 = vmax.f32 %v8168, %v8151
  %8185 = vst.msk [vmem:[%s3] sm:$0xff] %vm4611, %v8169
  %8186 = vst.msk [vmem:[%s3 + $0x8] sm:$0xff] %vm4611, %v8170
  %8187 = vst.msk [vmem:[%s3 + $0x10] sm:$0xff] %vm4611, %v8171
  %8188 = vst.msk [vmem:[%s3 + $0x18] sm:$0xff] %vm4611, %v8172
  %8189 = vst.msk [vmem:[%s3 + $0x20] sm:$0xff] %vm4611, %v8173
  %8190 = vst.msk [vmem:[%s3 + $0x28] sm:$0xff] %vm4611, %v8174
  %8191 = vst.msk [vmem:[%s3 + $0x30] sm:$0xff] %vm4611, %v8175
  %8192 = vst.msk [vmem:[%s3 + $0x38] sm:$0xff] %vm4611, %v8176
  %8193 = vst.msk [vmem:[%s3 + $0x40] sm:$0xff] %vm4611, %v8177
  %8194 = vst.msk [vmem:[%s3 + $0x48] sm:$0xff] %vm4611, %v8178
  %8195 = vst.msk [vmem:[%s3 + $0x50] sm:$0xff] %vm4611, %v8179
  %8196 = vst.msk [vmem:[%s3 + $0x58] sm:$0xff] %vm4611, %v8180
  %8197 = vst.msk [vmem:[%s3 + $0x60] sm:$0xff] %vm4611, %v8181
  %8198 = vst.msk [vmem:[%s3 + $0x68] sm:$0xff] %vm4611, %v8182
  %8199 = vst.msk [vmem:[%s3 + $0x70] sm:$0xff] %vm4611, %v8183
  %8200 = vst.msk [vmem:[%s3 + $0x78] sm:$0xff] %vm4611, %v8184
  // Predicated region
  $region14: #{small_forward.4} parent=0 // pred_check
    _
  $region15: #{small_forward.4} parent=0 // pred_check_branch
    %8202 = sbr.rel (0) target = $region17
  $region16: #{small_forward.4} parent=0 // pred_region
    _
  $region17: #{small_forward.4} parent=0 // pred_fallthru
    _
  // Predicated region
  $region18: #{small_forward.4} parent=0 // pred_check
    _
  $region19: #{small_forward.4} parent=0 // pred_check_branch
    %8204 = sbr.rel (0) target = $region21
  $region20: #{small_forward.4} parent=0 // pred_region
    _
  $region21: #{small_forward.4} parent=0 // pred_fallthru
    _

</llo_original>
